<compile_context>
chip_gen: v6e
topology: v6e:2x2x1
jax: 0.10.0
libtpu: 0.0.40
codegen_flags: <defaults>
</compile_context>

<pallas_src>
import functools

import jax
import jax.numpy as jnp
from jax.experimental import pallas as pl
from jax.experimental.pallas import tpu as pltpu


# ------------------------------ tiling helpers ------------------------------


def _round_up(x, m):
    return -(-x // m) * m


def _pick_tile(total, bytes_per_row, target_bytes, cap):
    """Largest multiple-of-8 row tile <= cap whose block stays ~target_bytes."""
    t = max(8, min(cap, target_bytes // max(1, bytes_per_row)))
    t = max(8, (t // 8) * 8)
    t = min(t, _round_up(total, 8))
    return t


# ----------------------------- Pallas kernels -------------------------------


def _conv1x1_kernel(x_ref, w_ref, scale_ref, bias_ref, o_ref, *, act):
    # x: (tm, Cin), w: (Cin, Cout), scale/bias: (1, Cout)
    y = jnp.dot(x_ref[...], w_ref[...], preferred_element_type=jnp.float32)
    y = y * scale_ref[...] + bias_ref[...]
    if act == "relu":
        y = jnp.maximum(y, 0.0)
    elif act == "leaky":
        y = jnp.where(y >= 0.0, y, 0.2 * y)
    o_ref[...] = y.astype(o_ref.dtype)


def conv1x1_bn(x, w, scale, bias, act=None):
    """Fused 1x1 conv + folded-BN affine + activation.  x: (..., Cin)."""
    orig_shape = x.shape
    cin = orig_shape[-1]
    cout = w.shape[1]
    x2 = x.reshape(-1, cin)
    m = x2.shape[0]
    # Big row tiles (HBM-bound kernel): budget ~2 MB/block, cap 4096 rows.
    tm = _pick_tile(m, (cin + cout) * 4, target_bytes=2 << 20, cap=4096)
    m_pad = _round_up(m, tm)
    if m_pad != m:
        x2 = jnp.pad(x2, ((0, m_pad - m), (0, 0)))
    out = pl.pallas_call(
        functools.partial(_conv1x1_kernel, act=act),
        out_shape=jax.ShapeDtypeStruct((m_pad, cout), x.dtype),
        grid_spec=pltpu.PrefetchScalarGridSpec(
            num_scalar_prefetch=0,
            grid=(m_pad // tm,),
            in_specs=[
                pl.BlockSpec((tm, cin), lambda i: (i, 0)),
                pl.BlockSpec((cin, cout), lambda i: (0, 0)),
                pl.BlockSpec((1, cout), lambda i: (0, 0)),
                pl.BlockSpec((1, cout), lambda i: (0, 0)),
            ],
            out_specs=pl.BlockSpec((tm, cout), lambda i: (i, 0)),
        ),
        compiler_params=pltpu.CompilerParams(dimension_semantics=("parallel",)),
    )(x2, w, scale.reshape(1, cout), bias.reshape(1, cout))
    if m_pad != m:
        out = out[:m]
    return out.reshape(orig_shape[:-1] + (cout,))


def _softmax_over_k(a):
    # a: (tn, K, C); softmax over the neighbour axis (K), per channel.
    a = a - jnp.max(a, axis=1, keepdims=True)
    e = jnp.exp(a)
    return e / jnp.sum(e, axis=1, keepdims=True)


def _lfa1_kernel(fxyz10_ref, fneigh_ref,
                 wbb1_ref, sbb1_ref, bbb1_ref,
                 wnn_ref, wxn_ref, wnx_ref, wxx_ref,
                 wmn_ref, wmx_ref, sm_ref, bm_ref,
                 wbb2_ref, sbb2_ref, bbb2_ref,
                 agg_ref, fxyz2_ref):
    """bb.mlp1 + att1(fc, softmax-K, pool, mlp) + bb.mlp2, all VMEM-resident."""
    _, tn, k, c10 = fxyz10_ref.shape
    ch = fneigh_ref.shape[3]

    fxyz10 = fxyz10_ref[0].reshape(tn * k, c10)          # (tn*K, 10)
    fneigh3 = fneigh_ref[0]                              # (tn, K, Ch)
    fneigh = fneigh3.reshape(tn * k, ch)                 # (tn*K, Ch)

    # Building_block.mlp1 : conv1x1 + BN + ReLU (never written to HBM)
    fxyz = jnp.dot(fxyz10, wbb1_ref[...], preferred_element_type=jnp.float32)
    fxyz = jnp.maximum(fxyz * sbb1_ref[...] + bbb1_ref[...], 0.0)   # (tn*K, Ch)

    # Att_pooling_1.fc on the *virtual* concat [f_neigh, f_xyz]:
    # att[:, :Ch] = fneigh@Wnn + fxyz@Wxn ; att[:, Ch:] = fneigh@Wnx + fxyz@Wxx
    att_n = (jnp.dot(fneigh, wnn_ref[...], preferred_element_type=jnp.float32)
             + jnp.dot(fxyz, wxn_ref[...], preferred_element_type=jnp.float32))
    att_x = (jnp.dot(fneigh, wnx_ref[...], preferred_element_type=jnp.float32)
             + jnp.dot(fxyz, wxx_ref[...], preferred_element_type=jnp.float32))
    fxyz3 = fxyz.reshape(tn, k, ch)

    # softmax over K is independent per channel => split form is exact
    agg_n = jnp.sum(fneigh3 * _softmax_over_k(att_n.reshape(tn, k, ch)), axis=1)
    agg_x = jnp.sum(fxyz3 * _softmax_over_k(att_x.reshape(tn, k, ch)), axis=1)

    # Att_pooling_1.mlp : conv1x1 + BN + ReLU on the pooled features
    y = (jnp.dot(agg_n, wmn_ref[...], preferred_element_type=jnp.float32)
         + jnp.dot(agg_x, wmx_ref[...], preferred_element_type=jnp.float32))
    y = jnp.maximum(y * sm_ref[...] + bm_ref[...], 0.0)
    agg_ref[0] = y.astype(agg_ref.dtype)

    # Building_block.mlp2 on f_xyz while it is still resident in VMEM
    fxyz2 = jnp.dot(fxyz, wbb2_ref[...], preferred_element_type=jnp.float32)
    fxyz2 = jnp.maximum(fxyz2 * sbb2_ref[...] + bbb2_ref[...], 0.0)
    fxyz2_ref[0] = fxyz2.reshape(tn, k, ch).astype(fxyz2_ref.dtype)


def lfa_stage1(f_xyz10, f_neigh, fc_w, bb1, att_mlp, bb2):
    """(B,N,K,10),(B,N,K,Ch) -> pooled (B,N,Ch), f_xyz2 (B,N,K,Ch)."""
    b, n, k, ch = f_neigh.shape
    c10 = f_xyz10.shape[-1]

    tn = _pick_tile(n, k * (c10 + 3 * ch) * 4, target_bytes=2 << 20, cap=1024)
    n_pad = _round_up(n, tn)
    if n_pad != n:
        f_xyz10 = jnp.pad(f_xyz10, ((0, 0), (0, n_pad - n), (0, 0), (0, 0)))
        f_neigh = jnp.pad(f_neigh, ((0, 0), (0, n_pad - n), (0, 0), (0, 0)))

    wnn, wnx = fc_w[:ch, :ch], fc_w[:ch, ch:]
    wxn, wxx = fc_w[ch:, :ch], fc_w[ch:, ch:]
    wm_n, wm_x = att_mlp["w"][:ch], att_mlp["w"][ch:]
    c_mlp = att_mlp["w"].shape[1]

    wspec2 = lambda shape: pl.BlockSpec(shape, lambda bi, ti: (0, 0))

    agg, f_xyz2 = pl.pallas_call(
        _lfa1_kernel,
        out_shape=(jax.ShapeDtypeStruct((b, n_pad, c_mlp), f_neigh.dtype),
                   jax.ShapeDtypeStruct((b, n_pad, k, ch), f_neigh.dtype)),
        grid_spec=pltpu.PrefetchScalarGridSpec(
            num_scalar_prefetch=0,
            grid=(b, n_pad // tn),
            in_specs=[
                pl.BlockSpec((1, tn, k, c10), lambda bi, ti: (bi, ti, 0, 0)),
                pl.BlockSpec((1, tn, k, ch), lambda bi, ti: (bi, ti, 0, 0)),
                wspec2((c10, ch)), wspec2((1, ch)), wspec2((1, ch)),      # bb.mlp1
                wspec2((ch, ch)), wspec2((ch, ch)),                        # fc (n col)
                wspec2((ch, ch)), wspec2((ch, ch)),                        # fc (x col)
                wspec2((ch, c_mlp)), wspec2((ch, c_mlp)),                  # att1.mlp w
                wspec2((1, c_mlp)), wspec2((1, c_mlp)),                    # att1.mlp bn
                wspec2((ch, ch)), wspec2((1, ch)), wspec2((1, ch)),        # bb.mlp2
            ],
            out_specs=(pl.BlockSpec((1, tn, c_mlp), lambda bi, ti: (bi, ti, 0)),
                       pl.BlockSpec((1, tn, k, ch), lambda bi, ti: (bi, ti, 0, 0))),
        ),
        compiler_params=pltpu.CompilerParams(
            dimension_semantics=("parallel", "parallel")),
    )(f_xyz10, f_neigh,
      bb1["w"], bb1["scale"].reshape(1, -1), bb1["bias"].reshape(1, -1),
      wnn, wxn, wnx, wxx,
      wm_n, wm_x, att_mlp["scale"].reshape(1, -1), att_mlp["bias"].reshape(1, -1),
      bb2["w"], bb2["scale"].reshape(1, -1), bb2["bias"].reshape(1, -1))

    if n_pad != n:
        agg, f_xyz2 = agg[:, :n], f_xyz2[:, :n]
    return agg, f_xyz2


def _lfa2_head_kernel(fneigh_ref, fxyz_ref, feat_ref,
                      wnn_ref, wxn_ref, wnx_ref, wxx_ref,
                      wmn_ref, wmx_ref, sm_ref, bm_ref,
                      wm2_ref, sm2_ref, bm2_ref,
                      wsc_ref, ssc_ref, bsc_ref,
                      o_ref):
    """att2(fc, softmax-K, pool, mlp) + res-head mlp2 + shortcut + leaky."""
    _, tn, k, ch = fneigh_ref.shape

    fneigh3 = fneigh_ref[0]                              # (tn, K, Ch)
    fxyz3 = fxyz_ref[0]                                  # (tn, K, Ch)
    fneigh = fneigh3.reshape(tn * k, ch)
    fxyz = fxyz3.reshape(tn * k, ch)

    att_n = (jnp.dot(fneigh, wnn_ref[...], preferred_element_type=jnp.float32)
             + jnp.dot(fxyz, wxn_ref[...], preferred_element_type=jnp.float32))
    att_x = (jnp.dot(fneigh, wnx_ref[...], preferred_element_type=jnp.float32)
             + jnp.dot(fxyz, wxx_ref[...], preferred_element_type=jnp.float32))

    agg_n = jnp.sum(fneigh3 * _softmax_over_k(att_n.reshape(tn, k, ch)), axis=1)
    agg_x = jnp.sum(fxyz3 * _softmax_over_k(att_x.reshape(tn, k, ch)), axis=1)

    # Att_pooling_2.mlp (ReLU)
    y = (jnp.dot(agg_n, wmn_ref[...], preferred_element_type=jnp.float32)
         + jnp.dot(agg_x, wmx_ref[...], preferred_element_type=jnp.float32))
    y = jnp.maximum(y * sm_ref[...] + bm_ref[...], 0.0)            # (tn, d_out)

    # Dilated_res_block.mlp2 (no activation)
    f_out = jnp.dot(y, wm2_ref[...], preferred_element_type=jnp.float32)
    f_out = f_out * sm2_ref[...] + bm2_ref[...]                    # (tn, 2*d_out)

    # shortcut conv (no activation) + residual add + leaky_relu(0.2)
    sc = jnp.dot(feat_ref[0], wsc_ref[...], preferred_element_type=jnp.float32)
    sc = sc * ssc_ref[...] + bsc_ref[...]
    z = f_out + sc
    o_ref[0] = jnp.where(z >= 0.0, z, 0.2 * z).astype(o_ref.dtype)


def lfa_stage2_head(f_neigh, f_xyz, feature, fc_w, att_mlp, mlp2, shortcut):
    """(B,N,K,Ch)x2, feature (B,N,d_in) -> (B,N,2*d_out)."""
    b, n, k, ch = f_neigh.shape
    d_in = feature.shape[-1]
    d_out = att_mlp["w"].shape[1]
    d_fin = mlp2["w"].shape[1]

    tn = _pick_tile(n, k * (2 * ch) * 4 + (d_in + d_fin) * 4,
                    target_bytes=2 << 20, cap=1024)
    n_pad = _round_up(n, tn)
    if n_pad != n:
        f_neigh = jnp.pad(f_neigh, ((0, 0), (0, n_pad - n), (0, 0), (0, 0)))
        f_xyz = jnp.pad(f_xyz, ((0, 0), (0, n_pad - n), (0, 0), (0, 0)))
        feature = jnp.pad(feature, ((0, 0), (0, n_pad - n), (0, 0)))

    wnn, wnx = fc_w[:ch, :ch], fc_w[:ch, ch:]
    wxn, wxx = fc_w[ch:, :ch], fc_w[ch:, ch:]
    wm_n, wm_x = att_mlp["w"][:ch], att_mlp["w"][ch:]

    wspec2 = lambda shape: pl.BlockSpec(shape, lambda bi, ti: (0, 0))

    out = pl.pallas_call(
        _lfa2_head_kernel,
        out_shape=jax.ShapeDtypeStruct((b, n_pad, d_fin), feature.dtype),
        grid_spec=pltpu.PrefetchScalarGridSpec(
            num_scalar_prefetch=0,
            grid=(b, n_pad // tn),
            in_specs=[
                pl.BlockSpec((1, tn, k, ch), lambda bi, ti: (bi, ti, 0, 0)),
                pl.BlockSpec((1, tn, k, ch), lambda bi, ti: (bi, ti, 0, 0)),
                pl.BlockSpec((1, tn, d_in), lambda bi, ti: (bi, ti, 0)),
                wspec2((ch, ch)), wspec2((ch, ch)),                        # fc (n col)
                wspec2((ch, ch)), wspec2((ch, ch)),                        # fc (x col)
                wspec2((ch, d_out)), wspec2((ch, d_out)),                  # att2.mlp w
                wspec2((1, d_out)), wspec2((1, d_out)),                    # att2.mlp bn
                wspec2((d_out, d_fin)), wspec2((1, d_fin)), wspec2((1, d_fin)),  # mlp2
                wspec2((d_in, d_fin)), wspec2((1, d_fin)), wspec2((1, d_fin)),   # shortcut
            ],
            out_specs=pl.BlockSpec((1, tn, d_fin), lambda bi, ti: (bi, ti, 0)),
        ),
        compiler_params=pltpu.CompilerParams(
            dimension_semantics=("parallel", "parallel")),
    )(f_neigh, f_xyz, feature,
      wnn, wxn, wnx, wxx,
      wm_n, wm_x, att_mlp["scale"].reshape(1, -1), att_mlp["bias"].reshape(1, -1),
      mlp2["w"], mlp2["scale"].reshape(1, -1), mlp2["bias"].reshape(1, -1),
      shortcut["w"], shortcut["scale"].reshape(1, -1), shortcut["bias"].reshape(1, -1))

    if n_pad != n:
        out = out[:, :n]
    return out


# -------------------------------- JAX glue ----------------------------------


def gather_neighbour(pc, neigh_idx):
    # pc: (B, N, C), neigh_idx: (B, N, K) -> (B, N, K, C)
    b, n, c = pc.shape
    k = neigh_idx.shape[-1]
    flat = neigh_idx.reshape(b, n * k)
    g = jnp.take_along_axis(pc, flat[..., None], axis=1)
    return g.reshape(b, n, k, c)


def relative_pos_encoding(xyz, neigh_idx):
    # xyz: (B, N, 3), neigh_idx: (B, N, K) -> (B, N, K, 10)
    neighbor_xyz = gather_neighbour(xyz, neigh_idx)
    xyz_tile = jnp.broadcast_to(xyz[:, :, None, :], neighbor_xyz.shape)
    relative_xyz = xyz_tile - neighbor_xyz
    relative_dis = jnp.sqrt(jnp.sum(relative_xyz ** 2, axis=-1, keepdims=True))
    return jnp.concatenate(
        [relative_dis, relative_xyz, xyz_tile, neighbor_xyz], axis=-1)


# ----------------------------- parameter setup ------------------------------


def make_conv_bn(key, cin, cout):
    kw, kg, kb, km, kv = jax.random.split(key, 5)
    w = jax.random.normal(kw, (cin, cout), jnp.float32) / jnp.sqrt(float(cin))
    gamma = 1.0 + 0.1 * jax.random.normal(kg, (cout,), jnp.float32)
    beta = 0.1 * jax.random.normal(kb, (cout,), jnp.float32)
    mean = 0.1 * jax.random.normal(km, (cout,), jnp.float32)
    var = 1.0 + 0.1 * jnp.abs(jax.random.normal(kv, (cout,), jnp.float32))
    eps = 1e-5
    scale = gamma / jnp.sqrt(var + eps)
    bias = beta - mean * scale
    return dict(w=w, scale=scale, bias=bias)


def init_params(key, d_in, d_out):
    ks = jax.random.split(key, 9)
    return {
        "mlp1": make_conv_bn(ks[0], d_in, d_out // 2),
        "bb_mlp1": make_conv_bn(ks[1], 10, d_out // 2),
        "att1_fc": jax.random.normal(ks[2], (d_out, d_out), jnp.float32)
                   / jnp.sqrt(float(d_out)),
        "att1_mlp": make_conv_bn(ks[3], d_out, d_out // 2),
        "bb_mlp2": make_conv_bn(ks[4], d_out // 2, d_out // 2),
        "att2_fc": jax.random.normal(ks[5], (d_out, d_out), jnp.float32)
                   / jnp.sqrt(float(d_out)),
        "att2_mlp": make_conv_bn(ks[6], d_out, d_out),
        "mlp2": make_conv_bn(ks[7], d_out, 2 * d_out),
        "shortcut": make_conv_bn(ks[8], d_in, 2 * d_out),
    }


# ------------------------------ forward pass ---------------------------------


def dilated_res_block(params, feature, xyz, neigh_idx):
    """feature: (B,N,d_in), xyz: (B,N,3), neigh_idx: (B,N,K) -> (B,N,2*d_out)."""
    p = params
    # mlp1 (pt_utils.Conv2d default activation = ReLU)
    f_pc = conv1x1_bn(feature, **p["mlp1"], act="relu")            # (B,N,do/2)

    # ---- Building_block (local feature aggregation), two fused stages ----
    f_xyz10 = relative_pos_encoding(xyz, neigh_idx)                # (B,N,K,10)
    # TODO(synk): the global neighbour gather (arbitrary indices over all N)
    # stays in XLA; everything downstream of each gather is fused in Pallas.
    f_neigh = gather_neighbour(f_pc, neigh_idx)                    # (B,N,K,do/2)
    f_pc_agg, f_xyz2 = lfa_stage1(                                 # (B,N,do/2),(B,N,K,do/2)
        f_xyz10, f_neigh, p["att1_fc"], p["bb_mlp1"], p["att1_mlp"], p["bb_mlp2"])

    f_neigh2 = gather_neighbour(f_pc_agg, neigh_idx)               # (B,N,K,do/2)
    # att2 + att2.mlp + mlp2 + shortcut + residual + leaky_relu, fused
    out = lfa_stage2_head(f_neigh2, f_xyz2, feature, p["att2_fc"],
                          p["att2_mlp"], p["mlp2"], p["shortcut"])
    return out


# --------------------------- pure-JAX reference ------------------------------


def reference(params, feature, xyz, neigh_idx):
    def conv(x, pp, act=None):
        y = jnp.einsum("...c,cd->...d", x, pp["w"]) * pp["scale"] + pp["bias"]
        if act == "relu":
            y = jnp.maximum(y, 0.0)
        return y

    def attp(feat, wfc):
        att = jnp.einsum("bnkc,cd->bnkd", feat, wfc)
        sc = jax.nn.softmax(att, axis=2)
        return jnp.sum(feat * sc, axis=2)

    p = params
    f_pc = conv(feature, p["mlp1"], "relu")
    f_xyz10 = relative_pos_encoding(xyz, neigh_idx)
    f_xyz = conv(f_xyz10, p["bb_mlp1"], "relu")
    f_neigh = gather_neighbour(f_pc, neigh_idx)
    f_concat = jnp.concatenate([f_neigh, f_xyz], axis=-1)
    f_pc_agg = conv(attp(f_concat, p["att1_fc"]), p["att1_mlp"], "relu")
    f_xyz = conv(f_xyz, p["bb_mlp2"], "relu")
    f_neigh = gather_neighbour(f_pc_agg, neigh_idx)
    f_concat = jnp.concatenate([f_neigh, f_xyz], axis=-1)
    f_pc_agg = conv(attp(f_concat, p["att2_fc"]), p["att2_mlp"], "relu")
    f_out = conv(f_pc_agg, p["mlp2"], None)
    sc = conv(feature, p["shortcut"], None)
    y = f_out + sc
    return jnp.where(y >= 0.0, y, 0.2 * y)


# ----------------------------------- main ------------------------------------


if __name__ == "__main__":
    key = jax.random.PRNGKey(0)
    B, N, K = 2, 16, 8
    d_in, d_out = 8, 16

    k_feat, k_xyz, k_idx, k_par = jax.random.split(key, 4)
    # channels-last representation of the NCHW input (B, d_in, N, 1)
    feature = jax.random.normal(k_feat, (B, N, d_in), jnp.float32)
    xyz = jax.random.normal(k_xyz, (B, N, 3), jnp.float32)
    neigh_idx = jax.random.randint(k_idx, (B, N, K), 0, N, jnp.int32)

    params = init_params(k_par, d_in, d_out)

    fwd = jax.jit(dilated_res_block)
    out = jax.block_until_ready(fwd(params, feature, xyz, neigh_idx))
    ref = reference(params, feature, xyz, neigh_idx)

    assert out.shape == (B, N, 2 * d_out), out.shape
    assert jnp.allclose(out, ref, atol=1e-4, rtol=1e-4), \
        float(jnp.max(jnp.abs(out - ref)))
    print("KERNEL_OK")
</pallas_src>

<mosaic_0001>
module attributes {stable_mosaic.version = 11 : i64} {
  func.func @_conv1x1_kernel(%arg0: i32, %arg1: memref<32x8xf32, #tpu.memory_space<vmem>>, %arg2: memref<8x8xf32, #tpu.memory_space<vmem>>, %arg3: memref<1x8xf32, #tpu.memory_space<vmem>>, %arg4: memref<1x8xf32, #tpu.memory_space<vmem>>, %arg5: memref<32x8xf32, #tpu.memory_space<vmem>>) attributes {dimension_semantics = [#tpu.dimension_semantics<parallel>], iteration_bounds = array<i64: 1>, scalar_prefetch = 0 : i64, scratch_operands = 0 : i64, tpu.core_type = #tpu.core_type<tc>, window_params = [{transform_indices = @transform_0, window_bounds = array<i64: 32, 8>}, {pipeline_mode = #tpu.pipeline_mode<synchronous>, transform_indices = @transform_1, window_bounds = array<i64: 8, 8>}, {pipeline_mode = #tpu.pipeline_mode<synchronous>, transform_indices = @transform_2, window_bounds = array<i64: 1, 8>}, {pipeline_mode = #tpu.pipeline_mode<synchronous>, transform_indices = @transform_3, window_bounds = array<i64: 1, 8>}, {transform_indices = @transform_4, window_bounds = array<i64: 32, 8>}]} {
    %c0 = arith.constant 0 : index
    %c0_0 = arith.constant 0 : index
    %0 = vector.load %arg1[%c0, %c0_0] : memref<32x8xf32, #tpu.memory_space<vmem>>, vector<32x8xf32>
    %c0_1 = arith.constant 0 : index
    %c0_2 = arith.constant 0 : index
    %1 = vector.load %arg2[%c0_1, %c0_2] : memref<8x8xf32, #tpu.memory_space<vmem>>, vector<8x8xf32>
    %cst = arith.constant dense<0.000000e+00> : vector<32x8xf32>
    %2 = tpu.matmul %0, %1, %cst {dimension_numbers = #tpu.dot_dimension_numbers<[1], [0], [0], [1], [0, 0, 1, 1], [], []>} : vector<32x8xf32>, vector<8x8xf32>, vector<32x8xf32> -> vector<32x8xf32>
    %c0_3 = arith.constant 0 : index
    %c0_4 = arith.constant 0 : index
    %3 = vector.load %arg3[%c0_3, %c0_4] : memref<1x8xf32, #tpu.memory_space<vmem>>, vector<1x8xf32>
    %4 = vector.broadcast %3 : vector<1x8xf32> to vector<32x8xf32>
    %5 = arith.mulf %2, %4 : vector<32x8xf32>
    %c0_5 = arith.constant 0 : index
    %c0_6 = arith.constant 0 : index
    %6 = vector.load %arg4[%c0_5, %c0_6] : memref<1x8xf32, #tpu.memory_space<vmem>>, vector<1x8xf32>
    %7 = vector.broadcast %6 : vector<1x8xf32> to vector<32x8xf32>
    %8 = arith.addf %5, %7 : vector<32x8xf32>
    %cst_7 = arith.constant 0.000000e+00 : f32
    %9 = vector.broadcast %cst_7 : f32 to vector<32x8xf32>
    %10 = arith.maximumf %8, %9 : vector<32x8xf32>
    %c0_8 = arith.constant 0 : index
    %c0_9 = arith.constant 0 : index
    %11 = vector.load %arg5[%c0_8, %c0_9] : memref<32x8xf32, #tpu.memory_space<vmem>>, vector<32x8xf32>
    tpu.vector_store %arg5[%c0_8, %c0_9], %10 {strides = array<i32>} : memref<32x8xf32, #tpu.memory_space<vmem>>, vector<32x8xf32>,
    return
  }
  func.func @transform_0(%arg0: i32) -> (i32, i32) {
    %c0_i32 = arith.constant 0 : i32
    %c0_i32_0 = arith.constant 0 : i32
    return %arg0, %c0_i32 : i32, i32
  }
  func.func @transform_1(%arg0: i32) -> (i32, i32) {
    %c0_i32 = arith.constant 0 : i32
    %c0_i32_0 = arith.constant 0 : i32
    %c0_i32_1 = arith.constant 0 : i32
    return %c0_i32, %c0_i32_0 : i32, i32
  }
  func.func @transform_2(%arg0: i32) -> (i32, i32) {
    %c0_i32 = arith.constant 0 : i32
    %c0_i32_0 = arith.constant 0 : i32
    %c0_i32_1 = arith.constant 0 : i32
    return %c0_i32, %c0_i32_0 : i32, i32
  }
  func.func @transform_3(%arg0: i32) -> (i32, i32) {
    %c0_i32 = arith.constant 0 : i32
    %c0_i32_0 = arith.constant 0 : i32
    %c0_i32_1 = arith.constant 0 : i32
    return %c0_i32, %c0_i32_0 : i32, i32
  }
  func.func @transform_4(%arg0: i32) -> (i32, i32) {
    %c0_i32 = arith.constant 0 : i32
    %c0_i32_0 = arith.constant 0 : i32
    return %arg0, %c0_i32 : i32, i32
  }
}

module attributes {stable_mosaic.version = 11 : i64} {
  func.func @_lfa1_kernel(%arg0: i32, %arg1: i32, %arg2: memref<1x16x8x10xf32, #tpu.memory_space<vmem>>, %arg3: memref<1x16x8x8xf32, #tpu.memory_space<vmem>>, %arg4: memref<10x8xf32, #tpu.memory_space<vmem>>, %arg5: memref<1x8xf32, #tpu.memory_space<vmem>>, %arg6: memref<1x8xf32, #tpu.memory_space<vmem>>, %arg7: memref<8x8xf32, #tpu.memory_space<vmem>>, %arg8: memref<8x8xf32, #tpu.memory_space<vmem>>, %arg9: memref<8x8xf32, #tpu.memory_space<vmem>>, %arg10: memref<8x8xf32, #tpu.memory_space<vmem>>, %arg11: memref<8x8xf32, #tpu.memory_space<vmem>>, %arg12: memref<8x8xf32, #tpu.memory_space<vmem>>, %arg13: memref<1x8xf32, #tpu.memory_space<vmem>>, %arg14: memref<1x8xf32, #tpu.memory_space<vmem>>, %arg15: memref<8x8xf32, #tpu.memory_space<vmem>>, %arg16: memref<1x8xf32, #tpu.memory_space<vmem>>, %arg17: memref<1x8xf32, #tpu.memory_space<vmem>>, %arg18: memref<1x16x8xf32, #tpu.memory_space<vmem>>, %arg19: memref<1x16x8x8xf32, #tpu.memory_space<vmem>>) attributes {dimension_semantics = [#tpu.dimension_semantics<parallel>, #tpu.dimension_semantics<parallel>], iteration_bounds = array<i64: 2, 1>, scalar_prefetch = 0 : i64, scratch_operands = 0 : i64, tpu.core_type = #tpu.core_type<tc>, window_params = [{transform_indices = @transform_0, window_bounds = array<i64: 1, 16, 8, 10>}, {transform_indices = @transform_1, window_bounds = array<i64: 1, 16, 8, 8>}, {pipeline_mode = #tpu.pipeline_mode<synchronous>, transform_indices = @transform_2, window_bounds = array<i64: 10, 8>}, {pipeline_mode = #tpu.pipeline_mode<synchronous>, transform_indices = @transform_3, window_bounds = array<i64: 1, 8>}, {pipeline_mode = #tpu.pipeline_mode<synchronous>, transform_indices = @transform_4, window_bounds = array<i64: 1, 8>}, {pipeline_mode = #tpu.pipeline_mode<synchronous>, transform_indices = @transform_5, window_bounds = array<i64: 8, 8>}, {pipeline_mode = #tpu.pipeline_mode<synchronous>, transform_indices = @transform_6, window_bounds = array<i64: 8, 8>}, {pipeline_mode = #tpu.pipeline_mode<synchronous>, transform_indices = @transform_7, window_bounds = array<i64: 8, 8>}, {pipeline_mode = #tpu.pipeline_mode<synchronous>, transform_indices = @transform_8, window_bounds = array<i64: 8, 8>}, {pipeline_mode = #tpu.pipeline_mode<synchronous>, transform_indices = @transform_9, window_bounds = array<i64: 8, 8>}, {pipeline_mode = #tpu.pipeline_mode<synchronous>, transform_indices = @transform_10, window_bounds = array<i64: 8, 8>}, {pipeline_mode = #tpu.pipeline_mode<synchronous>, transform_indices = @transform_11, window_bounds = array<i64: 1, 8>}, {pipeline_mode = #tpu.pipeline_mode<synchronous>, transform_indices = @transform_12, window_bounds = array<i64: 1, 8>}, {pipeline_mode = #tpu.pipeline_mode<synchronous>, transform_indices = @transform_13, window_bounds = array<i64: 8, 8>}, {pipeline_mode = #tpu.pipeline_mode<synchronous>, transform_indices = @transform_14, window_bounds = array<i64: 1, 8>}, {pipeline_mode = #tpu.pipeline_mode<synchronous>, transform_indices = @transform_15, window_bounds = array<i64: 1, 8>}, {transform_indices = @transform_16, window_bounds = array<i64: 1, 16, 8>}, {transform_indices = @transform_17, window_bounds = array<i64: 1, 16, 8, 8>}]} {
    %c0 = arith.constant 0 : index
    %c0_0 = arith.constant 0 : index
    %c0_1 = arith.constant 0 : index
    %c0_2 = arith.constant 0 : index
    %0 = vector.load %arg2[%c0, %c0_0, %c0_1, %c0_2] : memref<1x16x8x10xf32, #tpu.memory_space<vmem>>, vector<1x16x8x10xf32>
    %1 = vector.shape_cast %0 : vector<1x16x8x10xf32> to vector<16x8x10xf32>
    %2 = vector.shape_cast %1 : vector<16x8x10xf32> to vector<128x10xf32>
    %c0_3 = arith.constant 0 : index
    %c0_4 = arith.constant 0 : index
    %c0_5 = arith.constant 0 : index
    %c0_6 = arith.constant 0 : index
    %3 = vector.load %arg3[%c0_3, %c0_4, %c0_5, %c0_6] : memref<1x16x8x8xf32, #tpu.memory_space<vmem>>, vector<1x16x8x8xf32>
    %4 = vector.shape_cast %3 : vector<1x16x8x8xf32> to vector<16x8x8xf32>
    %5 = vector.shape_cast %4 : vector<16x8x8xf32> to vector<128x8xf32>
    %c0_7 = arith.constant 0 : index
    %c0_8 = arith.constant 0 : index
    %6 = vector.load %arg4[%c0_7, %c0_8] : memref<10x8xf32, #tpu.memory_space<vmem>>, vector<10x8xf32>
    %cst = arith.constant dense<0.000000e+00> : vector<128x8xf32>
    %7 = tpu.matmul %2, %6, %cst {dimension_numbers = #tpu.dot_dimension_numbers<[1], [0], [0], [1], [0, 0, 1, 1], [], []>} : vector<128x10xf32>, vector<10x8xf32>, vector<128x8xf32> -> vector<128x8xf32>
    %c0_9 = arith.constant 0 : index
    %c0_10 = arith.constant 0 : index
    %8 = vector.load %arg5[%c0_9, %c0_10] : memref<1x8xf32, #tpu.memory_space<vmem>>, vector<1x8xf32>
    %9 = vector.broadcast %8 : vector<1x8xf32> to vector<128x8xf32>
    %10 = arith.mulf %7, %9 : vector<128x8xf32>
    %c0_11 = arith.constant 0 : index
    %c0_12 = arith.constant 0 : index
    %11 = vector.load %arg6[%c0_11, %c0_12] : memref<1x8xf32, #tpu.memory_space<vmem>>, vector<1x8xf32>
    %12 = vector.broadcast %11 : vector<1x8xf32> to vector<128x8xf32>
    %13 = arith.addf %10, %12 : vector<128x8xf32>
    %cst_13 = arith.constant 0.000000e+00 : f32
    %14 = vector.broadcast %cst_13 : f32 to vector<128x8xf32>
    %15 = arith.maximumf %13, %14 : vector<128x8xf32>
    %c0_14 = arith.constant 0 : index
    %c0_15 = arith.constant 0 : index
    %16 = vector.load %arg7[%c0_14, %c0_15] : memref<8x8xf32, #tpu.memory_space<vmem>>, vector<8x8xf32>
    %cst_16 = arith.constant dense<0.000000e+00> : vector<128x8xf32>
    %17 = tpu.matmul %5, %16, %cst_16 {dimension_numbers = #tpu.dot_dimension_numbers<[1], [0], [0], [1], [0, 0, 1, 1], [], []>} : vector<128x8xf32>, vector<8x8xf32>, vector<128x8xf32> -> vector<128x8xf32>
    %c0_17 = arith.constant 0 : index
    %c0_18 = arith.constant 0 : index
    %18 = vector.load %arg8[%c0_17, %c0_18] : memref<8x8xf32, #tpu.memory_space<vmem>>, vector<8x8xf32>
    %cst_19 = arith.constant dense<0.000000e+00> : vector<128x8xf32>
    %19 = tpu.matmul %15, %18, %cst_19 {dimension_numbers = #tpu.dot_dimension_numbers<[1], [0], [0], [1], [0, 0, 1, 1], [], []>} : vector<128x8xf32>, vector<8x8xf32>, vector<128x8xf32> -> vector<128x8xf32>
    %20 = arith.addf %17, %19 : vector<128x8xf32>
    %c0_20 = arith.constant 0 : index
    %c0_21 = arith.constant 0 : index
    %21 = vector.load %arg9[%c0_20, %c0_21] : memref<8x8xf32, #tpu.memory_space<vmem>>, vector<8x8xf32>
    %cst_22 = arith.constant dense<0.000000e+00> : vector<128x8xf32>
    %22 = tpu.matmul %5, %21, %cst_22 {dimension_numbers = #tpu.dot_dimension_numbers<[1], [0], [0], [1], [0, 0, 1, 1], [], []>} : vector<128x8xf32>, vector<8x8xf32>, vector<128x8xf32> -> vector<128x8xf32>
    %c0_23 = arith.constant 0 : index
    %c0_24 = arith.constant 0 : index
    %23 = vector.load %arg10[%c0_23, %c0_24] : memref<8x8xf32, #tpu.memory_space<vmem>>, vector<8x8xf32>
    %cst_25 = arith.constant dense<0.000000e+00> : vector<128x8xf32>
    %24 = tpu.matmul %15, %23, %cst_25 {dimension_numbers = #tpu.dot_dimension_numbers<[1], [0], [0], [1], [0, 0, 1, 1], [], []>} : vector<128x8xf32>, vector<8x8xf32>, vector<128x8xf32> -> vector<128x8xf32>
    %25 = arith.addf %22, %24 : vector<128x8xf32>
    %26 = vector.shape_cast %15 : vector<128x8xf32> to vector<16x8x8xf32>
    %27 = vector.shape_cast %20 : vector<128x8xf32> to vector<16x8x8xf32>
    %cst_26 = arith.constant dense<0xFF800000> : vector<16x8xf32>
    %28 = vector.multi_reduction <maximumf>, %27, %cst_26 [1] : vector<16x8x8xf32> to vector<16x8xf32>
    %29 = vector.shape_cast %28 : vector<16x8xf32> to vector<16x1x8xf32>
    %30 = vector.broadcast %29 : vector<16x1x8xf32> to vector<16x8x8xf32>
    %31 = arith.subf %27, %30 : vector<16x8x8xf32>
    %32 = math.exp %31 : vector<16x8x8xf32>
    %cst_27 = arith.constant dense<0.000000e+00> : vector<16x8xf32>
    %33 = vector.multi_reduction <add>, %32, %cst_27 [1] : vector<16x8x8xf32> to vector<16x8xf32>
    %34 = vector.shape_cast %33 : vector<16x8xf32> to vector<16x1x8xf32>
    %35 = vector.broadcast %34 : vector<16x1x8xf32> to vector<16x8x8xf32>
    %36 = arith.divf %32, %35 : vector<16x8x8xf32>
    %37 = arith.mulf %4, %36 : vector<16x8x8xf32>
    %cst_28 = arith.constant dense<0.000000e+00> : vector<16x8xf32>
    %38 = vector.multi_reduction <add>, %37, %cst_28 [1] : vector<16x8x8xf32> to vector<16x8xf32>
    %39 = vector.shape_cast %25 : vector<128x8xf32> to vector<16x8x8xf32>
    %cst_29 = arith.constant dense<0xFF800000> : vector<16x8xf32>
    %40 = vector.multi_reduction <maximumf>, %39, %cst_29 [1] : vector<16x8x8xf32> to vector<16x8xf32>
    %41 = vector.shape_cast %40 : vector<16x8xf32> to vector<16x1x8xf32>
    %42 = vector.broadcast %41 : vector<16x1x8xf32> to vector<16x8x8xf32>
    %43 = arith.subf %39, %42 : vector<16x8x8xf32>
    %44 = math.exp %43 : vector<16x8x8xf32>
    %cst_30 = arith.constant dense<0.000000e+00> : vector<16x8xf32>
    %45 = vector.multi_reduction <add>, %44, %cst_30 [1] : vector<16x8x8xf32> to vector<16x8xf32>
    %46 = vector.shape_cast %45 : vector<16x8xf32> to vector<16x1x8xf32>
    %47 = vector.broadcast %46 : vector<16x1x8xf32> to vector<16x8x8xf32>
    %48 = arith.divf %44, %47 : vector<16x8x8xf32>
    %49 = arith.mulf %26, %48 : vector<16x8x8xf32>
    %cst_31 = arith.constant dense<0.000000e+00> : vector<16x8xf32>
    %50 = vector.multi_reduction <add>, %49, %cst_31 [1] : vector<16x8x8xf32> to vector<16x8xf32>
    %c0_32 = arith.constant 0 : index
    %c0_33 = arith.constant 0 : index
    %51 = vector.load %arg11[%c0_32, %c0_33] : memref<8x8xf32, #tpu.memory_space<vmem>>, vector<8x8xf32>
    %cst_34 = arith.constant dense<0.000000e+00> : vector<16x8xf32>
    %52 = tpu.matmul %38, %51, %cst_34 {dimension_numbers = #tpu.dot_dimension_numbers<[1], [0], [0], [1], [0, 0, 1, 1], [], []>} : vector<16x8xf32>, vector<8x8xf32>, vector<16x8xf32> -> vector<16x8xf32>
    %c0_35 = arith.constant 0 : index
    %c0_36 = arith.constant 0 : index
    %53 = vector.load %arg12[%c0_35, %c0_36] : memref<8x8xf32, #tpu.memory_space<vmem>>, vector<8x8xf32>
    %cst_37 = arith.constant dense<0.000000e+00> : vector<16x8xf32>
    %54 = tpu.matmul %50, %53, %cst_37 {dimension_numbers = #tpu.dot_dimension_numbers<[1], [0], [0], [1], [0, 0, 1, 1], [], []>} : vector<16x8xf32>, vector<8x8xf32>, vector<16x8xf32> -> vector<16x8xf32>
    %55 = arith.addf %52, %54 : vector<16x8xf32>
    %c0_38 = arith.constant 0 : index
    %c0_39 = arith.constant 0 : index
    %56 = vector.load %arg13[%c0_38, %c0_39] : memref<1x8xf32, #tpu.memory_space<vmem>>, vector<1x8xf32>
    %57 = vector.broadcast %56 : vector<1x8xf32> to vector<16x8xf32>
    %58 = arith.mulf %55, %57 : vector<16x8xf32>
    %c0_40 = arith.constant 0 : index
    %c0_41 = arith.constant 0 : index
    %59 = vector.load %arg14[%c0_40, %c0_41] : memref<1x8xf32, #tpu.memory_space<vmem>>, vector<1x8xf32>
    %60 = vector.broadcast %59 : vector<1x8xf32> to vector<16x8xf32>
    %61 = arith.addf %58, %60 : vector<16x8xf32>
    %cst_42 = arith.constant 0.000000e+00 : f32
    %62 = vector.broadcast %cst_42 : f32 to vector<16x8xf32>
    %63 = arith.maximumf %61, %62 : vector<16x8xf32>
    %c0_43 = arith.constant 0 : index
    %c0_44 = arith.constant 0 : index
    %c0_45 = arith.constant 0 : index
    %64 = vector.load %arg18[%c0_43, %c0_44, %c0_45] : memref<1x16x8xf32, #tpu.memory_space<vmem>>, vector<1x16x8xf32>
    %65 = vector.shape_cast %64 : vector<1x16x8xf32> to vector<16x8xf32>
    %66 = vector.shape_cast %63 : vector<16x8xf32> to vector<1x16x8xf32>
    tpu.vector_store %arg18[%c0_43, %c0_44, %c0_45], %66 {strides = array<i32>} : memref<1x16x8xf32, #tpu.memory_space<vmem>>, vector<1x16x8xf32>,
    %c0_46 = arith.constant 0 : index
    %c0_47 = arith.constant 0 : index
    %67 = vector.load %arg15[%c0_46, %c0_47] : memref<8x8xf32, #tpu.memory_space<vmem>>, vector<8x8xf32>
    %cst_48 = arith.constant dense<0.000000e+00> : vector<128x8xf32>
    %68 = tpu.matmul %15, %67, %cst_48 {dimension_numbers = #tpu.dot_dimension_numbers<[1], [0], [0], [1], [0, 0, 1, 1], [], []>} : vector<128x8xf32>, vector<8x8xf32>, vector<128x8xf32> -> vector<128x8xf32>
    %c0_49 = arith.constant 0 : index
    %c0_50 = arith.constant 0 : index
    %69 = vector.load %arg16[%c0_49, %c0_50] : memref<1x8xf32, #tpu.memory_space<vmem>>, vector<1x8xf32>
    %70 = vector.broadcast %69 : vector<1x8xf32> to vector<128x8xf32>
    %71 = arith.mulf %68, %70 : vector<128x8xf32>
    %c0_51 = arith.constant 0 : index
    %c0_52 = arith.constant 0 : index
    %72 = vector.load %arg17[%c0_51, %c0_52] : memref<1x8xf32, #tpu.memory_space<vmem>>, vector<1x8xf32>
    %73 = vector.broadcast %72 : vector<1x8xf32> to vector<128x8xf32>
    %74 = arith.addf %71, %73 : vector<128x8xf32>
    %cst_53 = arith.constant 0.000000e+00 : f32
    %75 = vector.broadcast %cst_53 : f32 to vector<128x8xf32>
    %76 = arith.maximumf %74, %75 : vector<128x8xf32>
    %77 = vector.shape_cast %76 : vector<128x8xf32> to vector<16x8x8xf32>
    %c0_54 = arith.constant 0 : index
    %c0_55 = arith.constant 0 : index
    %c0_56 = arith.constant 0 : index
    %c0_57 = arith.constant 0 : index
    %78 = vector.load %arg19[%c0_54, %c0_55, %c0_56, %c0_57] : memref<1x16x8x8xf32, #tpu.memory_space<vmem>>, vector<1x16x8x8xf32>
    %79 = vector.shape_cast %78 : vector<1x16x8x8xf32> to vector<16x8x8xf32>
    %80 = vector.shape_cast %77 : vector<16x8x8xf32> to vector<1x16x8x8xf32>
    tpu.vector_store %arg19[%c0_54, %c0_55, %c0_56, %c0_57], %80 {strides = array<i32>} : memref<1x16x8x8xf32, #tpu.memory_space<vmem>>, vector<1x16x8x8xf32>,
    return
  }
  func.func @transform_0(%arg0: i32, %arg1: i32) -> (i32, i32, i32, i32) {
    %c0_i32 = arith.constant 0 : i32
    %c0_i32_0 = arith.constant 0 : i32
    %c0_i32_1 = arith.constant 0 : i32
    return %arg0, %arg1, %c0_i32, %c0_i32_0 : i32, i32, i32, i32
  }
  func.func @transform_1(%arg0: i32, %arg1: i32) -> (i32, i32, i32, i32) {
    %c0_i32 = arith.constant 0 : i32
    %c0_i32_0 = arith.constant 0 : i32
    %c0_i32_1 = arith.constant 0 : i32
    return %arg0, %arg1, %c0_i32, %c0_i32_0 : i32, i32, i32, i32
  }
  func.func @transform_2(%arg0: i32, %arg1: i32) -> (i32, i32) {
    %c0_i32 = arith.constant 0 : i32
    %c0_i32_0 = arith.constant 0 : i32
    %c0_i32_1 = arith.constant 0 : i32
    return %c0_i32, %c0_i32_0 : i32, i32
  }
  func.func @transform_3(%arg0: i32, %arg1: i32) -> (i32, i32) {
    %c0_i32 = arith.constant 0 : i32
    %c0_i32_0 = arith.constant 0 : i32
    %c0_i32_1 = arith.constant 0 : i32
    return %c0_i32, %c0_i32_0 : i32, i32
  }
  func.func @transform_4(%arg0: i32, %arg1: i32) -> (i32, i32) {
    %c0_i32 = arith.constant 0 : i32
    %c0_i32_0 = arith.constant 0 : i32
    %c0_i32_1 = arith.constant 0 : i32
    return %c0_i32, %c0_i32_0 : i32, i32
  }
  func.func @transform_5(%arg0: i32, %arg1: i32) -> (i32, i32) {
    %c0_i32 = arith.constant 0 : i32
    %c0_i32_0 = arith.constant 0 : i32
    %c0_i32_1 = arith.constant 0 : i32
    return %c0_i32, %c0_i32_0 : i32, i32
  }
  func.func @transform_6(%arg0: i32, %arg1: i32) -> (i32, i32) {
    %c0_i32 = arith.constant 0 : i32
    %c0_i32_0 = arith.constant 0 : i32
    %c0_i32_1 = arith.constant 0 : i32
    return %c0_i32, %c0_i32_0 : i32, i32
  }
  func.func @transform_7(%arg0: i32, %arg1: i32) -> (i32, i32) {
    %c0_i32 = arith.constant 0 : i32
    %c0_i32_0 = arith.constant 0 : i32
    %c0_i32_1 = arith.constant 0 : i32
    return %c0_i32, %c0_i32_0 : i32, i32
  }
  func.func @transform_8(%arg0: i32, %arg1: i32) -> (i32, i32) {
    %c0_i32 = arith.constant 0 : i32
    %c0_i32_0 = arith.constant 0 : i32
    %c0_i32_1 = arith.constant 0 : i32
    return %c0_i32, %c0_i32_0 : i32, i32
  }
  func.func @transform_9(%arg0: i32, %arg1: i32) -> (i32, i32) {
    %c0_i32 = arith.constant 0 : i32
    %c0_i32_0 = arith.constant 0 : i32
    %c0_i32_1 = arith.constant 0 : i32
    return %c0_i32, %c0_i32_0 : i32, i32
  }
  func.func @transform_10(%arg0: i32, %arg1: i32) -> (i32, i32) {
    %c0_i32 = arith.constant 0 : i32
    %c0_i32_0 = arith.constant 0 : i32
    %c0_i32_1 = arith.constant 0 : i32
    return %c0_i32, %c0_i32_0 : i32, i32
  }
  func.func @transform_11(%arg0: i32, %arg1: i32) -> (i32, i32) {
    %c0_i32 = arith.constant 0 : i32
    %c0_i32_0 = arith.constant 0 : i32
    %c0_i32_1 = arith.constant 0 : i32
    return %c0_i32, %c0_i32_0 : i32, i32
  }
  func.func @transform_12(%arg0: i32, %arg1: i32) -> (i32, i32) {
    %c0_i32 = arith.constant 0 : i32
    %c0_i32_0 = arith.constant 0 : i32
    %c0_i32_1 = arith.constant 0 : i32
    return %c0_i32, %c0_i32_0 : i32, i32
  }
  func.func @transform_13(%arg0: i32, %arg1: i32) -> (i32, i32) {
    %c0_i32 = arith.constant 0 : i32
    %c0_i32_0 = arith.constant 0 : i32
    %c0_i32_1 = arith.constant 0 : i32
    return %c0_i32, %c0_i32_0 : i32, i32
  }
  func.func @transform_14(%arg0: i32, %arg1: i32) -> (i32, i32) {
    %c0_i32 = arith.constant 0 : i32
    %c0_i32_0 = arith.constant 0 : i32
    %c0_i32_1 = arith.constant 0 : i32
    return %c0_i32, %c0_i32_0 : i32, i32
  }
  func.func @transform_15(%arg0: i32, %arg1: i32) -> (i32, i32) {
    %c0_i32 = arith.constant 0 : i32
    %c0_i32_0 = arith.constant 0 : i32
    %c0_i32_1 = arith.constant 0 : i32
    return %c0_i32, %c0_i32_0 : i32, i32
  }
  func.func @transform_16(%arg0: i32, %arg1: i32) -> (i32, i32, i32) {
    %c0_i32 = arith.constant 0 : i32
    %c0_i32_0 = arith.constant 0 : i32
    return %arg0, %arg1, %c0_i32 : i32, i32, i32
  }
  func.func @transform_17(%arg0: i32, %arg1: i32) -> (i32, i32, i32, i32) {
    %c0_i32 = arith.constant 0 : i32
    %c0_i32_0 = arith.constant 0 : i32
    %c0_i32_1 = arith.constant 0 : i32
    return %arg0, %arg1, %c0_i32, %c0_i32_0 : i32, i32, i32, i32
  }
}

module attributes {stable_mosaic.version = 11 : i64} {
  func.func @_lfa2_head_kernel(%arg0: i32, %arg1: i32, %arg2: memref<1x16x8x8xf32, #tpu.memory_space<vmem>>, %arg3: memref<1x16x8x8xf32, #tpu.memory_space<vmem>>, %arg4: memref<1x16x8xf32, #tpu.memory_space<vmem>>, %arg5: memref<8x8xf32, #tpu.memory_space<vmem>>, %arg6: memref<8x8xf32, #tpu.memory_space<vmem>>, %arg7: memref<8x8xf32, #tpu.memory_space<vmem>>, %arg8: memref<8x8xf32, #tpu.memory_space<vmem>>, %arg9: memref<8x16xf32, #tpu.memory_space<vmem>>, %arg10: memref<8x16xf32, #tpu.memory_space<vmem>>, %arg11: memref<1x16xf32, #tpu.memory_space<vmem>>, %arg12: memref<1x16xf32, #tpu.memory_space<vmem>>, %arg13: memref<16x32xf32, #tpu.memory_space<vmem>>, %arg14: memref<1x32xf32, #tpu.memory_space<vmem>>, %arg15: memref<1x32xf32, #tpu.memory_space<vmem>>, %arg16: memref<8x32xf32, #tpu.memory_space<vmem>>, %arg17: memref<1x32xf32, #tpu.memory_space<vmem>>, %arg18: memref<1x32xf32, #tpu.memory_space<vmem>>, %arg19: memref<1x16x32xf32, #tpu.memory_space<vmem>>) attributes {dimension_semantics = [#tpu.dimension_semantics<parallel>, #tpu.dimension_semantics<parallel>], iteration_bounds = array<i64: 2, 1>, scalar_prefetch = 0 : i64, scratch_operands = 0 : i64, tpu.core_type = #tpu.core_type<tc>, window_params = [{transform_indices = @transform_0, window_bounds = array<i64: 1, 16, 8, 8>}, {transform_indices = @transform_1, window_bounds = array<i64: 1, 16, 8, 8>}, {transform_indices = @transform_2, window_bounds = array<i64: 1, 16, 8>}, {pipeline_mode = #tpu.pipeline_mode<synchronous>, transform_indices = @transform_3, window_bounds = array<i64: 8, 8>}, {pipeline_mode = #tpu.pipeline_mode<synchronous>, transform_indices = @transform_4, window_bounds = array<i64: 8, 8>}, {pipeline_mode = #tpu.pipeline_mode<synchronous>, transform_indices = @transform_5, window_bounds = array<i64: 8, 8>}, {pipeline_mode = #tpu.pipeline_mode<synchronous>, transform_indices = @transform_6, window_bounds = array<i64: 8, 8>}, {pipeline_mode = #tpu.pipeline_mode<synchronous>, transform_indices = @transform_7, window_bounds = array<i64: 8, 16>}, {pipeline_mode = #tpu.pipeline_mode<synchronous>, transform_indices = @transform_8, window_bounds = array<i64: 8, 16>}, {pipeline_mode = #tpu.pipeline_mode<synchronous>, transform_indices = @transform_9, window_bounds = array<i64: 1, 16>}, {pipeline_mode = #tpu.pipeline_mode<synchronous>, transform_indices = @transform_10, window_bounds = array<i64: 1, 16>}, {pipeline_mode = #tpu.pipeline_mode<synchronous>, transform_indices = @transform_11, window_bounds = array<i64: 16, 32>}, {pipeline_mode = #tpu.pipeline_mode<synchronous>, transform_indices = @transform_12, window_bounds = array<i64: 1, 32>}, {pipeline_mode = #tpu.pipeline_mode<synchronous>, transform_indices = @transform_13, window_bounds = array<i64: 1, 32>}, {pipeline_mode = #tpu.pipeline_mode<synchronous>, transform_indices = @transform_14, window_bounds = array<i64: 8, 32>}, {pipeline_mode = #tpu.pipeline_mode<synchronous>, transform_indices = @transform_15, window_bounds = array<i64: 1, 32>}, {pipeline_mode = #tpu.pipeline_mode<synchronous>, transform_indices = @transform_16, window_bounds = array<i64: 1, 32>}, {transform_indices = @transform_17, window_bounds = array<i64: 1, 16, 32>}]} {
    %c0 = arith.constant 0 : index
    %c0_0 = arith.constant 0 : index
    %c0_1 = arith.constant 0 : index
    %c0_2 = arith.constant 0 : index
    %0 = vector.load %arg2[%c0, %c0_0, %c0_1, %c0_2] : memref<1x16x8x8xf32, #tpu.memory_space<vmem>>, vector<1x16x8x8xf32>
    %1 = vector.shape_cast %0 : vector<1x16x8x8xf32> to vector<16x8x8xf32>
    %c0_3 = arith.constant 0 : index
    %c0_4 = arith.constant 0 : index
    %c0_5 = arith.constant 0 : index
    %c0_6 = arith.constant 0 : index
    %2 = vector.load %arg3[%c0_3, %c0_4, %c0_5, %c0_6] : memref<1x16x8x8xf32, #tpu.memory_space<vmem>>, vector<1x16x8x8xf32>
    %3 = vector.shape_cast %2 : vector<1x16x8x8xf32> to vector<16x8x8xf32>
    %4 = vector.shape_cast %1 : vector<16x8x8xf32> to vector<128x8xf32>
    %5 = vector.shape_cast %3 : vector<16x8x8xf32> to vector<128x8xf32>
    %c0_7 = arith.constant 0 : index
    %c0_8 = arith.constant 0 : index
    %6 = vector.load %arg5[%c0_7, %c0_8] : memref<8x8xf32, #tpu.memory_space<vmem>>, vector<8x8xf32>
    %cst = arith.constant dense<0.000000e+00> : vector<128x8xf32>
    %7 = tpu.matmul %4, %6, %cst {dimension_numbers = #tpu.dot_dimension_numbers<[1], [0], [0], [1], [0, 0, 1, 1], [], []>} : vector<128x8xf32>, vector<8x8xf32>, vector<128x8xf32> -> vector<128x8xf32>
    %c0_9 = arith.constant 0 : index
    %c0_10 = arith.constant 0 : index
    %8 = vector.load %arg6[%c0_9, %c0_10] : memref<8x8xf32, #tpu.memory_space<vmem>>, vector<8x8xf32>
    %cst_11 = arith.constant dense<0.000000e+00> : vector<128x8xf32>
    %9 = tpu.matmul %5, %8, %cst_11 {dimension_numbers = #tpu.dot_dimension_numbers<[1], [0], [0], [1], [0, 0, 1, 1], [], []>} : vector<128x8xf32>, vector<8x8xf32>, vector<128x8xf32> -> vector<128x8xf32>
    %10 = arith.addf %7, %9 : vector<128x8xf32>
    %c0_12 = arith.constant 0 : index
    %c0_13 = arith.constant 0 : index
    %11 = vector.load %arg7[%c0_12, %c0_13] : memref<8x8xf32, #tpu.memory_space<vmem>>, vector<8x8xf32>
    %cst_14 = arith.constant dense<0.000000e+00> : vector<128x8xf32>
    %12 = tpu.matmul %4, %11, %cst_14 {dimension_numbers = #tpu.dot_dimension_numbers<[1], [0], [0], [1], [0, 0, 1, 1], [], []>} : vector<128x8xf32>, vector<8x8xf32>, vector<128x8xf32> -> vector<128x8xf32>
    %c0_15 = arith.constant 0 : index
    %c0_16 = arith.constant 0 : index
    %13 = vector.load %arg8[%c0_15, %c0_16] : memref<8x8xf32, #tpu.memory_space<vmem>>, vector<8x8xf32>
    %cst_17 = arith.constant dense<0.000000e+00> : vector<128x8xf32>
    %14 = tpu.matmul %5, %13, %cst_17 {dimension_numbers = #tpu.dot_dimension_numbers<[1], [0], [0], [1], [0, 0, 1, 1], [], []>} : vector<128x8xf32>, vector<8x8xf32>, vector<128x8xf32> -> vector<128x8xf32>
    %15 = arith.addf %12, %14 : vector<128x8xf32>
    %16 = vector.shape_cast %10 : vector<128x8xf32> to vector<16x8x8xf32>
    %cst_18 = arith.constant dense<0xFF800000> : vector<16x8xf32>
    %17 = vector.multi_reduction <maximumf>, %16, %cst_18 [1] : vector<16x8x8xf32> to vector<16x8xf32>
    %18 = vector.shape_cast %17 : vector<16x8xf32> to vector<16x1x8xf32>
    %19 = vector.broadcast %18 : vector<16x1x8xf32> to vector<16x8x8xf32>
    %20 = arith.subf %16, %19 : vector<16x8x8xf32>
    %21 = math.exp %20 : vector<16x8x8xf32>
    %cst_19 = arith.constant dense<0.000000e+00> : vector<16x8xf32>
    %22 = vector.multi_reduction <add>, %21, %cst_19 [1] : vector<16x8x8xf32> to vector<16x8xf32>
    %23 = vector.shape_cast %22 : vector<16x8xf32> to vector<16x1x8xf32>
    %24 = vector.broadcast %23 : vector<16x1x8xf32> to vector<16x8x8xf32>
    %25 = arith.divf %21, %24 : vector<16x8x8xf32>
    %26 = arith.mulf %1, %25 : vector<16x8x8xf32>
    %cst_20 = arith.constant dense<0.000000e+00> : vector<16x8xf32>
    %27 = vector.multi_reduction <add>, %26, %cst_20 [1] : vector<16x8x8xf32> to vector<16x8xf32>
    %28 = vector.shape_cast %15 : vector<128x8xf32> to vector<16x8x8xf32>
    %cst_21 = arith.constant dense<0xFF800000> : vector<16x8xf32>
    %29 = vector.multi_reduction <maximumf>, %28, %cst_21 [1] : vector<16x8x8xf32> to vector<16x8xf32>
    %30 = vector.shape_cast %29 : vector<16x8xf32> to vector<16x1x8xf32>
    %31 = vector.broadcast %30 : vector<16x1x8xf32> to vector<16x8x8xf32>
    %32 = arith.subf %28, %31 : vector<16x8x8xf32>
    %33 = math.exp %32 : vector<16x8x8xf32>
    %cst_22 = arith.constant dense<0.000000e+00> : vector<16x8xf32>
    %34 = vector.multi_reduction <add>, %33, %cst_22 [1] : vector<16x8x8xf32> to vector<16x8xf32>
    %35 = vector.shape_cast %34 : vector<16x8xf32> to vector<16x1x8xf32>
    %36 = vector.broadcast %35 : vector<16x1x8xf32> to vector<16x8x8xf32>
    %37 = arith.divf %33, %36 : vector<16x8x8xf32>
    %38 = arith.mulf %3, %37 : vector<16x8x8xf32>
    %cst_23 = arith.constant dense<0.000000e+00> : vector<16x8xf32>
    %39 = vector.multi_reduction <add>, %38, %cst_23 [1] : vector<16x8x8xf32> to vector<16x8xf32>
    %c0_24 = arith.constant 0 : index
    %c0_25 = arith.constant 0 : index
    %40 = vector.load %arg9[%c0_24, %c0_25] : memref<8x16xf32, #tpu.memory_space<vmem>>, vector<8x16xf32>
    %cst_26 = arith.constant dense<0.000000e+00> : vector<16x16xf32>
    %41 = tpu.matmul %27, %40, %cst_26 {dimension_numbers = #tpu.dot_dimension_numbers<[1], [0], [0], [1], [0, 0, 1, 1], [], []>} : vector<16x8xf32>, vector<8x16xf32>, vector<16x16xf32> -> vector<16x16xf32>
    %c0_27 = arith.constant 0 : index
    %c0_28 = arith.constant 0 : index
    %42 = vector.load %arg10[%c0_27, %c0_28] : memref<8x16xf32, #tpu.memory_space<vmem>>, vector<8x16xf32>
    %cst_29 = arith.constant dense<0.000000e+00> : vector<16x16xf32>
    %43 = tpu.matmul %39, %42, %cst_29 {dimension_numbers = #tpu.dot_dimension_numbers<[1], [0], [0], [1], [0, 0, 1, 1], [], []>} : vector<16x8xf32>, vector<8x16xf32>, vector<16x16xf32> -> vector<16x16xf32>
    %44 = arith.addf %41, %43 : vector<16x16xf32>
    %c0_30 = arith.constant 0 : index
    %c0_31 = arith.constant 0 : index
    %45 = vector.load %arg11[%c0_30, %c0_31] : memref<1x16xf32, #tpu.memory_space<vmem>>, vector<1x16xf32>
    %46 = vector.broadcast %45 : vector<1x16xf32> to vector<16x16xf32>
    %47 = arith.mulf %44, %46 : vector<16x16xf32>
    %c0_32 = arith.constant 0 : index
    %c0_33 = arith.constant 0 : index
    %48 = vector.load %arg12[%c0_32, %c0_33] : memref<1x16xf32, #tpu.memory_space<vmem>>, vector<1x16xf32>
    %49 = vector.broadcast %48 : vector<1x16xf32> to vector<16x16xf32>
    %50 = arith.addf %47, %49 : vector<16x16xf32>
    %cst_34 = arith.constant 0.000000e+00 : f32
    %51 = vector.broadcast %cst_34 : f32 to vector<16x16xf32>
    %52 = arith.maximumf %50, %51 : vector<16x16xf32>
    %c0_35 = arith.constant 0 : index
    %c0_36 = arith.constant 0 : index
    %53 = vector.load %arg13[%c0_35, %c0_36] : memref<16x32xf32, #tpu.memory_space<vmem>>, vector<16x32xf32>
    %cst_37 = arith.constant dense<0.000000e+00> : vector<16x32xf32>
    %54 = tpu.matmul %52, %53, %cst_37 {dimension_numbers = #tpu.dot_dimension_numbers<[1], [0], [0], [1], [0, 0, 1, 1], [], []>} : vector<16x16xf32>, vector<16x32xf32>, vector<16x32xf32> -> vector<16x32xf32>
    %c0_38 = arith.constant 0 : index
    %c0_39 = arith.constant 0 : index
    %55 = vector.load %arg14[%c0_38, %c0_39] : memref<1x32xf32, #tpu.memory_space<vmem>>, vector<1x32xf32>
    %56 = vector.broadcast %55 : vector<1x32xf32> to vector<16x32xf32>
    %57 = arith.mulf %54, %56 : vector<16x32xf32>
    %c0_40 = arith.constant 0 : index
    %c0_41 = arith.constant 0 : index
    %58 = vector.load %arg15[%c0_40, %c0_41] : memref<1x32xf32, #tpu.memory_space<vmem>>, vector<1x32xf32>
    %59 = vector.broadcast %58 : vector<1x32xf32> to vector<16x32xf32>
    %60 = arith.addf %57, %59 : vector<16x32xf32>
    %c0_42 = arith.constant 0 : index
    %c0_43 = arith.constant 0 : index
    %c0_44 = arith.constant 0 : index
    %61 = vector.load %arg4[%c0_42, %c0_43, %c0_44] : memref<1x16x8xf32, #tpu.memory_space<vmem>>, vector<1x16x8xf32>
    %62 = vector.shape_cast %61 : vector<1x16x8xf32> to vector<16x8xf32>
    %c0_45 = arith.constant 0 : index
    %c0_46 = arith.constant 0 : index
    %63 = vector.load %arg16[%c0_45, %c0_46] : memref<8x32xf32, #tpu.memory_space<vmem>>, vector<8x32xf32>
    %cst_47 = arith.constant dense<0.000000e+00> : vector<16x32xf32>
    %64 = tpu.matmul %62, %63, %cst_47 {dimension_numbers = #tpu.dot_dimension_numbers<[1], [0], [0], [1], [0, 0, 1, 1], [], []>} : vector<16x8xf32>, vector<8x32xf32>, vector<16x32xf32> -> vector<16x32xf32>
    %c0_48 = arith.constant 0 : index
    %c0_49 = arith.constant 0 : index
    %65 = vector.load %arg17[%c0_48, %c0_49] : memref<1x32xf32, #tpu.memory_space<vmem>>, vector<1x32xf32>
    %66 = vector.broadcast %65 : vector<1x32xf32> to vector<16x32xf32>
    %67 = arith.mulf %64, %66 : vector<16x32xf32>
    %c0_50 = arith.constant 0 : index
    %c0_51 = arith.constant 0 : index
    %68 = vector.load %arg18[%c0_50, %c0_51] : memref<1x32xf32, #tpu.memory_space<vmem>>, vector<1x32xf32>
    %69 = vector.broadcast %68 : vector<1x32xf32> to vector<16x32xf32>
    %70 = arith.addf %67, %69 : vector<16x32xf32>
    %71 = arith.addf %60, %70 : vector<16x32xf32>
    %cst_52 = arith.constant 0.000000e+00 : f32
    %72 = vector.broadcast %cst_52 : f32 to vector<16x32xf32>
    %73 = arith.cmpf oge, %71, %72 : vector<16x32xf32>
    %cst_53 = arith.constant 2.000000e-01 : f32
    %74 = vector.broadcast %cst_53 : f32 to vector<16x32xf32>
    %75 = arith.mulf %74, %71 : vector<16x32xf32>
    %76 = arith.select %73, %71, %75 : vector<16x32xi1>, vector<16x32xf32>
    %c0_54 = arith.constant 0 : index
    %c0_55 = arith.constant 0 : index
    %c0_56 = arith.constant 0 : index
    %77 = vector.load %arg19[%c0_54, %c0_55, %c0_56] : memref<1x16x32xf32, #tpu.memory_space<vmem>>, vector<1x16x32xf32>
    %78 = vector.shape_cast %77 : vector<1x16x32xf32> to vector<16x32xf32>
    %79 = vector.shape_cast %76 : vector<16x32xf32> to vector<1x16x32xf32>
    tpu.vector_store %arg19[%c0_54, %c0_55, %c0_56], %79 {strides = array<i32>} : memref<1x16x32xf32, #tpu.memory_space<vmem>>, vector<1x16x32xf32>,
    return
  }
  func.func @transform_0(%arg0: i32, %arg1: i32) -> (i32, i32, i32, i32) {
    %c0_i32 = arith.constant 0 : i32
    %c0_i32_0 = arith.constant 0 : i32
    %c0_i32_1 = arith.constant 0 : i32
    return %arg0, %arg1, %c0_i32, %c0_i32_0 : i32, i32, i32, i32
  }
  func.func @transform_1(%arg0: i32, %arg1: i32) -> (i32, i32, i32, i32) {
    %c0_i32 = arith.constant 0 : i32
    %c0_i32_0 = arith.constant 0 : i32
    %c0_i32_1 = arith.constant 0 : i32
    return %arg0, %arg1, %c0_i32, %c0_i32_0 : i32, i32, i32, i32
  }
  func.func @transform_2(%arg0: i32, %arg1: i32) -> (i32, i32, i32) {
    %c0_i32 = arith.constant 0 : i32
    %c0_i32_0 = arith.constant 0 : i32
    return %arg0, %arg1, %c0_i32 : i32, i32, i32
  }
  func.func @transform_3(%arg0: i32, %arg1: i32) -> (i32, i32) {
    %c0_i32 = arith.constant 0 : i32
    %c0_i32_0 = arith.constant 0 : i32
    %c0_i32_1 = arith.constant 0 : i32
    return %c0_i32, %c0_i32_0 : i32, i32
  }
  func.func @transform_4(%arg0: i32, %arg1: i32) -> (i32, i32) {
    %c0_i32 = arith.constant 0 : i32
    %c0_i32_0 = arith.constant 0 : i32
    %c0_i32_1 = arith.constant 0 : i32
    return %c0_i32, %c0_i32_0 : i32, i32
  }
  func.func @transform_5(%arg0: i32, %arg1: i32) -> (i32, i32) {
    %c0_i32 = arith.constant 0 : i32
    %c0_i32_0 = arith.constant 0 : i32
    %c0_i32_1 = arith.constant 0 : i32
    return %c0_i32, %c0_i32_0 : i32, i32
  }
  func.func @transform_6(%arg0: i32, %arg1: i32) -> (i32, i32) {
    %c0_i32 = arith.constant 0 : i32
    %c0_i32_0 = arith.constant 0 : i32
    %c0_i32_1 = arith.constant 0 : i32
    return %c0_i32, %c0_i32_0 : i32, i32
  }
  func.func @transform_7(%arg0: i32, %arg1: i32) -> (i32, i32) {
    %c0_i32 = arith.constant 0 : i32
    %c0_i32_0 = arith.constant 0 : i32
    %c0_i32_1 = arith.constant 0 : i32
    return %c0_i32, %c0_i32_0 : i32, i32
  }
  func.func @transform_8(%arg0: i32, %arg1: i32) -> (i32, i32) {
    %c0_i32 = arith.constant 0 : i32
    %c0_i32_0 = arith.constant 0 : i32
    %c0_i32_1 = arith.constant 0 : i32
    return %c0_i32, %c0_i32_0 : i32, i32
  }
  func.func @transform_9(%arg0: i32, %arg1: i32) -> (i32, i32) {
    %c0_i32 = arith.constant 0 : i32
    %c0_i32_0 = arith.constant 0 : i32
    %c0_i32_1 = arith.constant 0 : i32
    return %c0_i32, %c0_i32_0 : i32, i32
  }
  func.func @transform_10(%arg0: i32, %arg1: i32) -> (i32, i32) {
    %c0_i32 = arith.constant 0 : i32
    %c0_i32_0 = arith.constant 0 : i32
    %c0_i32_1 = arith.constant 0 : i32
    return %c0_i32, %c0_i32_0 : i32, i32
  }
  func.func @transform_11(%arg0: i32, %arg1: i32) -> (i32, i32) {
    %c0_i32 = arith.constant 0 : i32
    %c0_i32_0 = arith.constant 0 : i32
    %c0_i32_1 = arith.constant 0 : i32
    return %c0_i32, %c0_i32_0 : i32, i32
  }
  func.func @transform_12(%arg0: i32, %arg1: i32) -> (i32, i32) {
    %c0_i32 = arith.constant 0 : i32
    %c0_i32_0 = arith.constant 0 : i32
    %c0_i32_1 = arith.constant 0 : i32
    return %c0_i32, %c0_i32_0 : i32, i32
  }
  func.func @transform_13(%arg0: i32, %arg1: i32) -> (i32, i32) {
    %c0_i32 = arith.constant 0 : i32
    %c0_i32_0 = arith.constant 0 : i32
    %c0_i32_1 = arith.constant 0 : i32
    return %c0_i32, %c0_i32_0 : i32, i32
  }
  func.func @transform_14(%arg0: i32, %arg1: i32) -> (i32, i32) {
    %c0_i32 = arith.constant 0 : i32
    %c0_i32_0 = arith.constant 0 : i32
    %c0_i32_1 = arith.constant 0 : i32
    return %c0_i32, %c0_i32_0 : i32, i32
  }
  func.func @transform_15(%arg0: i32, %arg1: i32) -> (i32, i32) {
    %c0_i32 = arith.constant 0 : i32
    %c0_i32_0 = arith.constant 0 : i32
    %c0_i32_1 = arith.constant 0 : i32
    return %c0_i32, %c0_i32_0 : i32, i32
  }
  func.func @transform_16(%arg0: i32, %arg1: i32) -> (i32, i32) {
    %c0_i32 = arith.constant 0 : i32
    %c0_i32_0 = arith.constant 0 : i32
    %c0_i32_1 = arith.constant 0 : i32
    return %c0_i32, %c0_i32_0 : i32, i32
  }
  func.func @transform_17(%arg0: i32, %arg1: i32) -> (i32, i32, i32) {
    %c0_i32 = arith.constant 0 : i32
    %c0_i32_0 = arith.constant 0 : i32
    return %arg0, %arg1, %c0_i32 : i32, i32, i32
  }
}

</mosaic_0001>

<llo_original>
// kernel: dilated_res_block.3
$region0: #{dilated_res_block.3}
  #allocation0 [shape = 'u32[]', space=smem, size = 0x4, offset = 0x4, fixed_abs, tag = 'smem constant byte address 0x4 - core index']
  #allocation1 [shape = 'u32[144,128]{1,0:T(1,128)}', space=vmem, size = 0x12000, scoped, tag = 'internal scratch']
  %s0 = inlined_call_operand.vmem [shape: f32[32,8], index: 0, kind: input, shape index: {}]
  %s1 = inlined_call_operand.vmem [shape: f32[8,8], index: 1, kind: input, shape index: {}]
  %s2 = inlined_call_operand.vmem [shape: f32[1,8], index: 2, kind: input, shape index: {}]
  %s3 = inlined_call_operand.vmem [shape: f32[1,8], index: 3, kind: input, shape index: {}]
  %s4 = inlined_call_operand.vmem [shape: f32[32,8], index: 4, kind: output, shape index: {}]
  %s5 = sld [smem:[#allocation0]]
  $region26: #{dilated_res_block.3} parent=0
    _
  %s7 = ssub.s32 1, %s5
  %s8 = scalar_select 0, %s7, %s5
  // Predicated region
  $region2: #{dilated_res_block.3} parent=0 // pred_check
    _
  $region3: #{dilated_res_block.3} parent=0 // pred_check_branch
    %10 = sbr.rel (0) target = $region5
  $region4: #{dilated_res_block.3} parent=0 // pred_region
    _
  $region5: #{dilated_res_block.3} parent=0 // pred_fallthru
    _
  // Predicated region
  $region6: #{dilated_res_block.3} parent=0 // pred_check
    _
  $region7: #{dilated_res_block.3} parent=0 // pred_check_branch
    %12 = sbr.rel (0) target = $region9
  $region8: #{dilated_res_block.3} parent=0 // pred_region
    _
  $region9: #{dilated_res_block.3} parent=0 // pred_fallthru
    _
  // Predicated region
  $region10: #{dilated_res_block.3} parent=0 // pred_check
    _
  $region11: #{dilated_res_block.3} parent=0 // pred_check_branch
    %14 = sbr.rel (0) target = $region13
  $region12: #{dilated_res_block.3} parent=0 // pred_region
    _
  $region13: #{dilated_res_block.3} parent=0 // pred_fallthru
    _
  // Predicated region
  $region14: #{dilated_res_block.3} parent=0 // pred_check
    _
  $region15: #{dilated_res_block.3} parent=0 // pred_check_branch
    %16 = sbr.rel (0) target = $region17
  $region16: #{dilated_res_block.3} parent=0 // pred_region
    _
  $region17: #{dilated_res_block.3} parent=0 // pred_fallthru
    _
  %v17 = vld [vmem:[%s0] sm:$0xff]
  %v18 = vld [vmem:[%s0 + $0x8] sm:$0xff]
  %v19 = vld [vmem:[%s0 + $0x10] sm:$0xff]
  %v20 = vld [vmem:[%s0 + $0x18] sm:$0xff]
  %v21 = vld [vmem:[%s1] sm:$0xff]
  %vm22 = vcmask 64512
  %v24 = vsel %vm22, %v17, 0
  %v27 = vsel %vm22, %v18, 0
  %v30 = vsel %vm22, %v19, 0
  %v33 = vsel %vm22, %v20, 0
  %35 = vmatprep.subr.mxu0 0.0
  %36 = vmatpush1.msra.mxu0 0.0
  %37 = vmatprep.subr.mxu0 0.0
  %38 = vmatpush1.msra.mxu0 0.0
  %39 = vmatprep.subr.mxu0 0.0
  %40 = vmatpush1.msra.mxu0 0.0
  %41 = vmatprep.subr.mxu0 0.0
  %42 = vmatpush1.msra.mxu0 0.0
  %43 = vmatprep.subr.mxu0 0.0
  %44 = vmatpush1.msra.mxu0 0.0
  %45 = vmatprep.subr.mxu0 0.0
  %46 = vmatpush1.msra.mxu0 0.0
  %47 = vmatprep.subr.mxu0 0.0
  %48 = vmatpush1.msra.mxu0 0.0
  %49 = vmatprep.subr.mxu0 0.0
  %50 = vmatpush1.msra.mxu0 0.0
  %51 = vmatprep.subr.mxu0 0.0
  %52 = vmatpush1.msra.mxu0 0.0
  %53 = vmatprep.subr.mxu0 0.0
  %54 = vmatpush1.msra.mxu0 0.0
  %55 = vmatprep.subr.mxu0 0.0
  %56 = vmatpush1.msra.mxu0 0.0
  %57 = vmatprep.subr.mxu0 0.0
  %58 = vmatpush1.msra.mxu0 0.0
  %59 = vmatprep.subr.mxu0 0.0
  %60 = vmatpush1.msra.mxu0 0.0
  %61 = vmatprep.subr.mxu0 0.0
  %62 = vmatpush1.msra.mxu0 0.0
  %63 = vmatprep.subr.mxu0 0.0
  %64 = vmatpush1.msra.mxu0 0.0
  %65 = vmatprep.subr.mxu0 0.0
  %66 = vmatpush1.msra.mxu0 %v21
  %67 = vmatprep.subr.mxu0 0.0
  %68 = vmatpush2.msra.mxu0 0.0
  %69 = vmatprep.subr.mxu0 0.0
  %70 = vmatpush2.msra.mxu0 0.0
  %71 = vmatprep.subr.mxu0 0.0
  %72 = vmatpush2.msra.mxu0 0.0
  %73 = vmatprep.subr.mxu0 0.0
  %74 = vmatpush2.msra.mxu0 0.0
  %75 = vmatprep.subr.mxu0 0.0
  %76 = vmatpush2.msra.mxu0 0.0
  %77 = vmatprep.subr.mxu0 0.0
  %78 = vmatpush2.msra.mxu0 0.0
  %79 = vmatprep.subr.mxu0 0.0
  %80 = vmatpush2.msra.mxu0 0.0
  %81 = vmatprep.subr.mxu0 0.0
  %82 = vmatpush2.msra.mxu0 0.0
  %83 = vmatprep.subr.mxu0 0.0
  %84 = vmatpush2.msra.mxu0 0.0
  %85 = vmatprep.subr.mxu0 0.0
  %86 = vmatpush2.msra.mxu0 0.0
  %87 = vmatprep.subr.mxu0 0.0
  %88 = vmatpush2.msra.mxu0 0.0
  %89 = vmatprep.subr.mxu0 0.0
  %90 = vmatpush2.msra.mxu0 0.0
  %91 = vmatprep.subr.mxu0 0.0
  %92 = vmatpush2.msra.mxu0 0.0
  %93 = vmatprep.subr.mxu0 0.0
  %94 = vmatpush2.msra.mxu0 0.0
  %95 = vmatprep.subr.mxu0 0.0
  %96 = vmatpush2.msra.mxu0 0.0
  %97 = vmatprep.subr.mxu0 0.0
  %98 = vmatpush2.msra.mxu0 0.0
  %99 = vmatprep.mubr.f32.mxu0 0.0
  %100 = vmatmul.mubr.f32.gmra.mxu0 %v24
  %v101 = vpop.f32.mrf.mxu0
  %v102 = vadd.f32 0.0, %v101
  %v103 = vpop.f32.mrf.mxu0
  %104 = vmatprep.mubr.f32.mxu0 0.0
  %105 = vmatmul.mubr.f32.gmra.mxu0 %v27
  %v106 = vpop.f32.mrf.mxu0
  %v107 = vadd.f32 0.0, %v106
  %v108 = vpop.f32.mrf.mxu0
  %109 = vmatprep.mubr.f32.mxu0 0.0
  %110 = vmatmul.mubr.f32.gmra.mxu0 %v30
  %v111 = vpop.f32.mrf.mxu0
  %v112 = vadd.f32 0.0, %v111
  %v113 = vpop.f32.mrf.mxu0
  %114 = vmatprep.mubr.f32.mxu0 0.0
  %115 = vmatmul.mubr.f32.gmra.mxu0 %v33
  %v116 = vpop.f32.mrf.mxu0
  %v117 = vadd.f32 0.0, %v116
  %v118 = vpop.f32.mrf.mxu0
  %119 = vdwg.mxu0
  %v120 = vld [vmem:[%s2] sm:$0x1]
  %v122 = vlaneseq
  %v123 = vshrl.u32 %v122, 7
  %v124 = vsub.s32 0, %v123
  %v125 = vrot.slane %v120, %v124
  %v127 = vmul.f32 %v102, %v125
  %v128 = vmul.f32 %v107, %v125
  %v129 = vmul.f32 %v112, %v125
  %v130 = vmul.f32 %v117, %v125
  %v131 = vld [vmem:[%s3] sm:$0x1]
  %v133 = vlaneseq
  %v134 = vshrl.u32 %v133, 7
  %v135 = vsub.s32 0, %v134
  %v136 = vrot.slane %v131, %v135
  %v138 = vadd.f32 %v127, %v136
  %v139 = vadd.f32 %v128, %v136
  %v140 = vadd.f32 %v129, %v136
  %v141 = vadd.f32 %v130, %v136
  %v142 = vmax.f32 %v138, 0.0
  %v143 = vmax.f32 %v139, 0.0
  %v144 = vmax.f32 %v140, 0.0
  %v145 = vmax.f32 %v141, 0.0
  %146 = vst.msk [vmem:[%s4] sm:$0xff] %vm22, %v142
  %147 = vst.msk [vmem:[%s4 + $0x8] sm:$0xff] %vm22, %v143
  %148 = vst.msk [vmem:[%s4 + $0x10] sm:$0xff] %vm22, %v144
  %149 = vst.msk [vmem:[%s4 + $0x18] sm:$0xff] %vm22, %v145
  // Predicated region
  $region18: #{dilated_res_block.3} parent=0 // pred_check
    _
  $region19: #{dilated_res_block.3} parent=0 // pred_check_branch
    %151 = sbr.rel (0) target = $region21
  $region20: #{dilated_res_block.3} parent=0 // pred_region
    _
  $region21: #{dilated_res_block.3} parent=0 // pred_fallthru
    _
  // Predicated region
  $region22: #{dilated_res_block.3} parent=0 // pred_check
    _
  $region23: #{dilated_res_block.3} parent=0 // pred_check_branch
    %153 = sbr.rel (0) target = $region25
  $region24: #{dilated_res_block.3} parent=0 // pred_region
    _
  $region25: #{dilated_res_block.3} parent=0 // pred_fallthru
    _

// kernel: dilated_res_block.5
$region0: #{dilated_res_block.5}
  #allocation0 [shape = 'u32[]', space=smem, size = 0x4, offset = 0x4, fixed_abs, tag = 'smem constant byte address 0x4 - core index']
  #allocation1 [shape = 'u32[144,128]{1,0:T(1,128)}', space=vmem, size = 0x12000, scoped, tag = 'internal scratch']
  %s0 = inlined_call_operand.vmem [shape: f32[2,16,8,8], index: 0, kind: input, shape index: {}]
  %s1 = inlined_call_operand.vmem [shape: f32[2,16,8,8], index: 1, kind: input, shape index: {}]
  %s2 = inlined_call_operand.vmem [shape: f32[2,16,8], index: 2, kind: input, shape index: {}]
  %s3 = inlined_call_operand.vmem [shape: f32[8,8], index: 3, kind: input, shape index: {}]
  %s4 = inlined_call_operand.vmem [shape: f32[8,8], index: 4, kind: input, shape index: {}]
  %s5 = inlined_call_operand.vmem [shape: f32[8,8], index: 5, kind: input, shape index: {}]
  %s6 = inlined_call_operand.vmem [shape: f32[8,8], index: 6, kind: input, shape index: {}]
  %s7 = inlined_call_operand.vmem [shape: f32[8,16], index: 7, kind: input, shape index: {}]
  %s8 = inlined_call_operand.vmem [shape: f32[8,16], index: 8, kind: input, shape index: {}]
  %s9 = inlined_call_operand.vmem [shape: f32[1,16], index: 9, kind: input, shape index: {}]
  %s10 = inlined_call_operand.vmem [shape: f32[1,16], index: 10, kind: input, shape index: {}]
  %s11 = inlined_call_operand.vmem [shape: f32[16,32], index: 11, kind: input, shape index: {}]
  %s12 = inlined_call_operand.vmem [shape: f32[1,32], index: 12, kind: input, shape index: {}]
  %s13 = inlined_call_operand.vmem [shape: f32[1,32], index: 13, kind: input, shape index: {}]
  %s14 = inlined_call_operand.vmem [shape: f32[8,32], index: 14, kind: input, shape index: {}]
  %s15 = inlined_call_operand.vmem [shape: f32[1,32], index: 15, kind: input, shape index: {}]
  %s16 = inlined_call_operand.vmem [shape: f32[1,32], index: 16, kind: input, shape index: {}]
  %s17 = inlined_call_operand.hbm [shape: f32[2,16,32], index: 17, kind: output, shape index: {}]
  %s18 = sld [smem:[#allocation0]]
  $region101: #{dilated_res_block.5} parent=0
    _
  %s20 = ssub.s32 1, %s18
  %s21 = scalar_select 0, %s20, %s18
  $region1: #{dilated_res_block.5} parent=0
    #allocation2 [shape = 'u8[16384]{0}', space=vmem, size = 0x4000, scoped, tag = 'output window, operand 0']
    #allocation3 [shape = 's32[2]{0}', space=sflag, size = 0x8, scoped, tag = 'scoped memory for dilated_res_block.5']
    %22 = vsyncpa [#allocation3], 0
    %s23 = scalar_lea.sflag [#allocation3], 1
    %24 = vsyncpa %s23, 0
    loop: start=0, step=1, limit=4
    $region2: #{dilated_res_block.5} parent=1 // loop_pre_header
      _
    $region3: #{dilated_res_block.5} parent=1 // loop_header
      %s26 = sphi 0, %s30
      %p27 = scmp.ge.s32.totalorder %s26, 4
      %s33 = sphi 0, %s45
      %s34 = sphi 0, %s41
      %s35 = sphi 0, %s33
      %s36 = sphi 0, %s34
      %s37 = sphi 0, %s35
      %s38 = sphi 0, %s36
      %s50 = sphi 0, %s52
      %s53 = sphi 0, %s50
      %s54 = sphi 0, %s53
      %s70 = sphi 0, %s54
      %s78 = sphi 0, %s80
      %s81 = sphi 0, %s78
      %s82 = sphi 0, %s81
      %s98 = sphi 0, %s82
      %s106 = sphi 0, %s108
      %s109 = sphi 0, %s106
      %s110 = sphi 0, %s109
      %s126 = sphi 0, %s110
      %s130 = sphi 0, %s130
      %s132 = sphi 0, %s130
      %s133 = sphi 0, %s132
      %s147 = sphi 0, %s133
      %s151 = sphi 0, %s151
      %s153 = sphi 0, %s151
      %s154 = sphi 0, %s153
      %s168 = sphi 0, %s154
      %s172 = sphi 0, %s172
      %s174 = sphi 0, %s172
      %s175 = sphi 0, %s174
      %s189 = sphi 0, %s175
      %s193 = sphi 0, %s193
      %s195 = sphi 0, %s193
      %s196 = sphi 0, %s195
      %s210 = sphi 0, %s196
      %s214 = sphi 0, %s214
      %s216 = sphi 0, %s214
      %s217 = sphi 0, %s216
      %s231 = sphi 0, %s217
      %s235 = sphi 0, %s235
      %s237 = sphi 0, %s235
      %s238 = sphi 0, %s237
      %s252 = sphi 0, %s238
      %s256 = sphi 0, %s256
      %s258 = sphi 0, %s256
      %s259 = sphi 0, %s258
      %s273 = sphi 0, %s259
      %s277 = sphi 0, %s277
      %s279 = sphi 0, %s277
      %s280 = sphi 0, %s279
      %s294 = sphi 0, %s280
      %s298 = sphi 0, %s298
      %s300 = sphi 0, %s298
      %s301 = sphi 0, %s300
      %s315 = sphi 0, %s301
      %s319 = sphi 0, %s319
      %s321 = sphi 0, %s319
      %s322 = sphi 0, %s321
      %s336 = sphi 0, %s322
      %s340 = sphi 0, %s340
      %s342 = sphi 0, %s340
      %s343 = sphi 0, %s342
      %s357 = sphi 0, %s343
      %s361 = sphi 0, %s361
      %s363 = sphi 0, %s361
      %s364 = sphi 0, %s363
      %s378 = sphi 0, %s364
      %s382 = sphi 0, %s382
      %s384 = sphi 0, %s382
      %s385 = sphi 0, %s384
      %s399 = sphi 0, %s385
      %s403 = sphi 0, %s403
      %s405 = sphi 0, %s403
      %s406 = sphi 0, %s405
      %s420 = sphi 0, %s406
      %s428 = sphi 0, %s430
      %s431 = sphi 0, %s428
      %s432 = sphi 0, %s431
      %s448 = sphi 0, %s432
    $region4: #{dilated_res_block.5} parent=1 // loop_header_branch
      %29 = sbr.rel (%p27) target = $region8
    $region5: #{dilated_res_block.5} parent=1 // loop_body
      %s31 = ssub.s32 %s26, 1
      %s32 = ssub.s32 %s26, 2
      %s39 = sadd.s32 1, %s34
      %p40 = scmp.ge.s32.totalorder %s39, 1
      %s41 = scalar_select %p40, 0, %s39
      %s42 = sadd.s32 1, %s33
      %s43 = scalar_select %p40, %s42, %s33
      %p44 = scmp.ge.s32.totalorder %s43, 2
      %s45 = scalar_select %p44, 0, %s43
      %s46 = ssub.s32 %s33, %s45
      %s47 = ssub.s32 %s34, %s41
      %s48 = sor.u32 %s46, %s47
      %p49 = scmp.eq.s32.totalorder %s48, 0
      %s51 = sadd.s32 %s50, 1
      %s52 = scalar_select %p49, %s50, %s51
      %p55 = pneg %p49
      %p56 = scmp.eq.s32.totalorder %s26, 1
      %p57 = por %p55, %p56
      %p58 = scmp.ne.s32.totalorder %s50, %s53
      %p59 = scmp.eq.s32.totalorder %s26, 0
      %p60 = por %p58, %p59
      %p61 = scmp.ne.s32.totalorder %s50, %s53
      %p62 = scmp.eq.s32.totalorder %s31, 1
      %p63 = por %p61, %p62
      %p64 = scmp.ne.s32.totalorder %s53, %s54
      %p65 = scmp.eq.s32.totalorder %s31, 0
      %p66 = por %p64, %p65
      %p67 = scmp.ne.s32.totalorder %s53, %s54
      %p68 = scmp.eq.s32.totalorder %s32, 1
      %p69 = por %p67, %p68
      %p71 = scmp.ne.s32.totalorder %s54, %s70
      %p72 = scmp.eq.s32.totalorder %s32, 0
      %p73 = por %p71, %p72
      %s74 = ssub.s32 %s33, %s45
      %s75 = ssub.s32 %s34, %s41
      %s76 = sor.u32 %s74, %s75
      %p77 = scmp.eq.s32.totalorder %s76, 0
      %s79 = sadd.s32 %s78, 1
      %s80 = scalar_select %p77, %s78, %s79
      %p83 = pneg %p77
      %p84 = scmp.eq.s32.totalorder %s26, 1
      %p85 = por %p83, %p84
      %p86 = scmp.ne.s32.totalorder %s78, %s81
      %p87 = scmp.eq.s32.totalorder %s26, 0
      %p88 = por %p86, %p87
      %p89 = scmp.ne.s32.totalorder %s78, %s81
      %p90 = scmp.eq.s32.totalorder %s31, 1
      %p91 = por %p89, %p90
      %p92 = scmp.ne.s32.totalorder %s81, %s82
      %p93 = scmp.eq.s32.totalorder %s31, 0
      %p94 = por %p92, %p93
      %p95 = scmp.ne.s32.totalorder %s81, %s82
      %p96 = scmp.eq.s32.totalorder %s32, 1
      %p97 = por %p95, %p96
      %p99 = scmp.ne.s32.totalorder %s82, %s98
      %p100 = scmp.eq.s32.totalorder %s32, 0
      %p101 = por %p99, %p100
      %s102 = ssub.s32 %s33, %s45
      %s103 = ssub.s32 %s34, %s41
      %s104 = sor.u32 %s102, %s103
      %p105 = scmp.eq.s32.totalorder %s104, 0
      %s107 = sadd.s32 %s106, 1
      %s108 = scalar_select %p105, %s106, %s107
      %p111 = pneg %p105
      %p112 = scmp.eq.s32.totalorder %s26, 1
      %p113 = por %p111, %p112
      %p114 = scmp.ne.s32.totalorder %s106, %s109
      %p115 = scmp.eq.s32.totalorder %s26, 0
      %p116 = por %p114, %p115
      %p117 = scmp.ne.s32.totalorder %s106, %s109
      %p118 = scmp.eq.s32.totalorder %s31, 1
      %p119 = por %p117, %p118
      %p120 = scmp.ne.s32.totalorder %s109, %s110
      %p121 = scmp.eq.s32.totalorder %s31, 0
      %p122 = por %p120, %p121
      %p123 = scmp.ne.s32.totalorder %s109, %s110
      %p124 = scmp.eq.s32.totalorder %s32, 1
      %p125 = por %p123, %p124
      %p127 = scmp.ne.s32.totalorder %s110, %s126
      %p128 = scmp.eq.s32.totalorder %s32, 0
      %p129 = por %p127, %p128
      %s131 = sadd.s32 %s130, 1
      %p134 = scmp.eq.s32.totalorder %s26, 1
      %p135 = scmp.ne.s32.totalorder %s130, %s132
      %p136 = scmp.eq.s32.totalorder %s26, 0
      %p137 = por %p135, %p136
      %p138 = scmp.ne.s32.totalorder %s130, %s132
      %p139 = scmp.eq.s32.totalorder %s31, 1
      %p140 = por %p138, %p139
      %p141 = scmp.ne.s32.totalorder %s132, %s133
      %p142 = scmp.eq.s32.totalorder %s31, 0
      %p143 = por %p141, %p142
      %p144 = scmp.ne.s32.totalorder %s132, %s133
      %p145 = scmp.eq.s32.totalorder %s32, 1
      %p146 = por %p144, %p145
      %p148 = scmp.ne.s32.totalorder %s133, %s147
      %p149 = scmp.eq.s32.totalorder %s32, 0
      %p150 = por %p148, %p149
      %s152 = sadd.s32 %s151, 1
      %p155 = scmp.eq.s32.totalorder %s26, 1
      %p156 = scmp.ne.s32.totalorder %s151, %s153
      %p157 = scmp.eq.s32.totalorder %s26, 0
      %p158 = por %p156, %p157
      %p159 = scmp.ne.s32.totalorder %s151, %s153
      %p160 = scmp.eq.s32.totalorder %s31, 1
      %p161 = por %p159, %p160
      %p162 = scmp.ne.s32.totalorder %s153, %s154
      %p163 = scmp.eq.s32.totalorder %s31, 0
      %p164 = por %p162, %p163
      %p165 = scmp.ne.s32.totalorder %s153, %s154
      %p166 = scmp.eq.s32.totalorder %s32, 1
      %p167 = por %p165, %p166
      %p169 = scmp.ne.s32.totalorder %s154, %s168
      %p170 = scmp.eq.s32.totalorder %s32, 0
      %p171 = por %p169, %p170
      %s173 = sadd.s32 %s172, 1
      %p176 = scmp.eq.s32.totalorder %s26, 1
      %p177 = scmp.ne.s32.totalorder %s172, %s174
      %p178 = scmp.eq.s32.totalorder %s26, 0
      %p179 = por %p177, %p178
      %p180 = scmp.ne.s32.totalorder %s172, %s174
      %p181 = scmp.eq.s32.totalorder %s31, 1
      %p182 = por %p180, %p181
      %p183 = scmp.ne.s32.totalorder %s174, %s175
      %p184 = scmp.eq.s32.totalorder %s31, 0
      %p185 = por %p183, %p184
      %p186 = scmp.ne.s32.totalorder %s174, %s175
      %p187 = scmp.eq.s32.totalorder %s32, 1
      %p188 = por %p186, %p187
      %p190 = scmp.ne.s32.totalorder %s175, %s189
      %p191 = scmp.eq.s32.totalorder %s32, 0
      %p192 = por %p190, %p191
      %s194 = sadd.s32 %s193, 1
      %p197 = scmp.eq.s32.totalorder %s26, 1
      %p198 = scmp.ne.s32.totalorder %s193, %s195
      %p199 = scmp.eq.s32.totalorder %s26, 0
      %p200 = por %p198, %p199
      %p201 = scmp.ne.s32.totalorder %s193, %s195
      %p202 = scmp.eq.s32.totalorder %s31, 1
      %p203 = por %p201, %p202
      %p204 = scmp.ne.s32.totalorder %s195, %s196
      %p205 = scmp.eq.s32.totalorder %s31, 0
      %p206 = por %p204, %p205
      %p207 = scmp.ne.s32.totalorder %s195, %s196
      %p208 = scmp.eq.s32.totalorder %s32, 1
      %p209 = por %p207, %p208
      %p211 = scmp.ne.s32.totalorder %s196, %s210
      %p212 = scmp.eq.s32.totalorder %s32, 0
      %p213 = por %p211, %p212
      %s215 = sadd.s32 %s214, 1
      %p218 = scmp.eq.s32.totalorder %s26, 1
      %p219 = scmp.ne.s32.totalorder %s214, %s216
      %p220 = scmp.eq.s32.totalorder %s26, 0
      %p221 = por %p219, %p220
      %p222 = scmp.ne.s32.totalorder %s214, %s216
      %p223 = scmp.eq.s32.totalorder %s31, 1
      %p224 = por %p222, %p223
      %p225 = scmp.ne.s32.totalorder %s216, %s217
      %p226 = scmp.eq.s32.totalorder %s31, 0
      %p227 = por %p225, %p226
      %p228 = scmp.ne.s32.totalorder %s216, %s217
      %p229 = scmp.eq.s32.totalorder %s32, 1
      %p230 = por %p228, %p229
      %p232 = scmp.ne.s32.totalorder %s217, %s231
      %p233 = scmp.eq.s32.totalorder %s32, 0
      %p234 = por %p232, %p233
      %s236 = sadd.s32 %s235, 1
      %p239 = scmp.eq.s32.totalorder %s26, 1
      %p240 = scmp.ne.s32.totalorder %s235, %s237
      %p241 = scmp.eq.s32.totalorder %s26, 0
      %p242 = por %p240, %p241
      %p243 = scmp.ne.s32.totalorder %s235, %s237
      %p244 = scmp.eq.s32.totalorder %s31, 1
      %p245 = por %p243, %p244
      %p246 = scmp.ne.s32.totalorder %s237, %s238
      %p247 = scmp.eq.s32.totalorder %s31, 0
      %p248 = por %p246, %p247
      %p249 = scmp.ne.s32.totalorder %s237, %s238
      %p250 = scmp.eq.s32.totalorder %s32, 1
      %p251 = por %p249, %p250
      %p253 = scmp.ne.s32.totalorder %s238, %s252
      %p254 = scmp.eq.s32.totalorder %s32, 0
      %p255 = por %p253, %p254
      %s257 = sadd.s32 %s256, 1
      %p260 = scmp.eq.s32.totalorder %s26, 1
      %p261 = scmp.ne.s32.totalorder %s256, %s258
      %p262 = scmp.eq.s32.totalorder %s26, 0
      %p263 = por %p261, %p262
      %p264 = scmp.ne.s32.totalorder %s256, %s258
      %p265 = scmp.eq.s32.totalorder %s31, 1
      %p266 = por %p264, %p265
      %p267 = scmp.ne.s32.totalorder %s258, %s259
      %p268 = scmp.eq.s32.totalorder %s31, 0
      %p269 = por %p267, %p268
      %p270 = scmp.ne.s32.totalorder %s258, %s259
      %p271 = scmp.eq.s32.totalorder %s32, 1
      %p272 = por %p270, %p271
      %p274 = scmp.ne.s32.totalorder %s259, %s273
      %p275 = scmp.eq.s32.totalorder %s32, 0
      %p276 = por %p274, %p275
      %s278 = sadd.s32 %s277, 1
      %p281 = scmp.eq.s32.totalorder %s26, 1
      %p282 = scmp.ne.s32.totalorder %s277, %s279
      %p283 = scmp.eq.s32.totalorder %s26, 0
      %p284 = por %p282, %p283
      %p285 = scmp.ne.s32.totalorder %s277, %s279
      %p286 = scmp.eq.s32.totalorder %s31, 1
      %p287 = por %p285, %p286
      %p288 = scmp.ne.s32.totalorder %s279, %s280
      %p289 = scmp.eq.s32.totalorder %s31, 0
      %p290 = por %p288, %p289
      %p291 = scmp.ne.s32.totalorder %s279, %s280
      %p292 = scmp.eq.s32.totalorder %s32, 1
      %p293 = por %p291, %p292
      %p295 = scmp.ne.s32.totalorder %s280, %s294
      %p296 = scmp.eq.s32.totalorder %s32, 0
      %p297 = por %p295, %p296
      %s299 = sadd.s32 %s298, 1
      %p302 = scmp.eq.s32.totalorder %s26, 1
      %p303 = scmp.ne.s32.totalorder %s298, %s300
      %p304 = scmp.eq.s32.totalorder %s26, 0
      %p305 = por %p303, %p304
      %p306 = scmp.ne.s32.totalorder %s298, %s300
      %p307 = scmp.eq.s32.totalorder %s31, 1
      %p308 = por %p306, %p307
      %p309 = scmp.ne.s32.totalorder %s300, %s301
      %p310 = scmp.eq.s32.totalorder %s31, 0
      %p311 = por %p309, %p310
      %p312 = scmp.ne.s32.totalorder %s300, %s301
      %p313 = scmp.eq.s32.totalorder %s32, 1
      %p314 = por %p312, %p313
      %p316 = scmp.ne.s32.totalorder %s301, %s315
      %p317 = scmp.eq.s32.totalorder %s32, 0
      %p318 = por %p316, %p317
      %s320 = sadd.s32 %s319, 1
      %p323 = scmp.eq.s32.totalorder %s26, 1
      %p324 = scmp.ne.s32.totalorder %s319, %s321
      %p325 = scmp.eq.s32.totalorder %s26, 0
      %p326 = por %p324, %p325
      %p327 = scmp.ne.s32.totalorder %s319, %s321
      %p328 = scmp.eq.s32.totalorder %s31, 1
      %p329 = por %p327, %p328
      %p330 = scmp.ne.s32.totalorder %s321, %s322
      %p331 = scmp.eq.s32.totalorder %s31, 0
      %p332 = por %p330, %p331
      %p333 = scmp.ne.s32.totalorder %s321, %s322
      %p334 = scmp.eq.s32.totalorder %s32, 1
      %p335 = por %p333, %p334
      %p337 = scmp.ne.s32.totalorder %s322, %s336
      %p338 = scmp.eq.s32.totalorder %s32, 0
      %p339 = por %p337, %p338
      %s341 = sadd.s32 %s340, 1
      %p344 = scmp.eq.s32.totalorder %s26, 1
      %p345 = scmp.ne.s32.totalorder %s340, %s342
      %p346 = scmp.eq.s32.totalorder %s26, 0
      %p347 = por %p345, %p346
      %p348 = scmp.ne.s32.totalorder %s340, %s342
      %p349 = scmp.eq.s32.totalorder %s31, 1
      %p350 = por %p348, %p349
      %p351 = scmp.ne.s32.totalorder %s342, %s343
      %p352 = scmp.eq.s32.totalorder %s31, 0
      %p353 = por %p351, %p352
      %p354 = scmp.ne.s32.totalorder %s342, %s343
      %p355 = scmp.eq.s32.totalorder %s32, 1
      %p356 = por %p354, %p355
      %p358 = scmp.ne.s32.totalorder %s343, %s357
      %p359 = scmp.eq.s32.totalorder %s32, 0
      %p360 = por %p358, %p359
      %s362 = sadd.s32 %s361, 1
      %p365 = scmp.eq.s32.totalorder %s26, 1
      %p366 = scmp.ne.s32.totalorder %s361, %s363
      %p367 = scmp.eq.s32.totalorder %s26, 0
      %p368 = por %p366, %p367
      %p369 = scmp.ne.s32.totalorder %s361, %s363
      %p370 = scmp.eq.s32.totalorder %s31, 1
      %p371 = por %p369, %p370
      %p372 = scmp.ne.s32.totalorder %s363, %s364
      %p373 = scmp.eq.s32.totalorder %s31, 0
      %p374 = por %p372, %p373
      %p375 = scmp.ne.s32.totalorder %s363, %s364
      %p376 = scmp.eq.s32.totalorder %s32, 1
      %p377 = por %p375, %p376
      %p379 = scmp.ne.s32.totalorder %s364, %s378
      %p380 = scmp.eq.s32.totalorder %s32, 0
      %p381 = por %p379, %p380
      %s383 = sadd.s32 %s382, 1
      %p386 = scmp.eq.s32.totalorder %s26, 1
      %p387 = scmp.ne.s32.totalorder %s382, %s384
      %p388 = scmp.eq.s32.totalorder %s26, 0
      %p389 = por %p387, %p388
      %p390 = scmp.ne.s32.totalorder %s382, %s384
      %p391 = scmp.eq.s32.totalorder %s31, 1
      %p392 = por %p390, %p391
      %p393 = scmp.ne.s32.totalorder %s384, %s385
      %p394 = scmp.eq.s32.totalorder %s31, 0
      %p395 = por %p393, %p394
      %p396 = scmp.ne.s32.totalorder %s384, %s385
      %p397 = scmp.eq.s32.totalorder %s32, 1
      %p398 = por %p396, %p397
      %p400 = scmp.ne.s32.totalorder %s385, %s399
      %p401 = scmp.eq.s32.totalorder %s32, 0
      %p402 = por %p400, %p401
      %s404 = sadd.s32 %s403, 1
      %p407 = scmp.eq.s32.totalorder %s26, 1
      %p408 = scmp.ne.s32.totalorder %s403, %s405
      %p409 = scmp.eq.s32.totalorder %s26, 0
      %p410 = por %p408, %p409
      %p411 = scmp.ne.s32.totalorder %s403, %s405
      %p412 = scmp.eq.s32.totalorder %s31, 1
      %p413 = por %p411, %p412
      %p414 = scmp.ne.s32.totalorder %s405, %s406
      %p415 = scmp.eq.s32.totalorder %s31, 0
      %p416 = por %p414, %p415
      %p417 = scmp.ne.s32.totalorder %s405, %s406
      %p418 = scmp.eq.s32.totalorder %s32, 1
      %p419 = por %p417, %p418
      %p421 = scmp.ne.s32.totalorder %s406, %s420
      %p422 = scmp.eq.s32.totalorder %s32, 0
      %p423 = por %p421, %p422
      %s424 = ssub.s32 %s33, %s45
      %s425 = ssub.s32 %s34, %s41
      %s426 = sor.u32 %s424, %s425
      %p427 = scmp.eq.s32.totalorder %s426, 0
      %s429 = sadd.s32 %s428, 1
      %s430 = scalar_select %p427, %s428, %s429
      %p433 = pneg %p427
      %p434 = scmp.eq.s32.totalorder %s26, 1
      %p435 = por %p433, %p434
      %p436 = scmp.ne.s32.totalorder %s428, %s431
      %p437 = scmp.eq.s32.totalorder %s26, 0
      %p438 = por %p436, %p437
      %p439 = scmp.ne.s32.totalorder %s428, %s431
      %p440 = scmp.eq.s32.totalorder %s31, 1
      %p441 = por %p439, %p440
      %p442 = scmp.ne.s32.totalorder %s431, %s432
      %p443 = scmp.eq.s32.totalorder %s31, 0
      %p444 = por %p442, %p443
      %p445 = scmp.ne.s32.totalorder %s431, %s432
      %p446 = scmp.eq.s32.totalorder %s32, 1
      %p447 = por %p445, %p446
      %p449 = scmp.ne.s32.totalorder %s432, %s448
      %p450 = scmp.eq.s32.totalorder %s32, 0
      %p451 = por %p449, %p450
      %p452 = scmp.le.s32.totalorder 1, %s26
      %p453 = scmp.lt.s32.totalorder %s26, 3
      %p454 = pnand %p452, %p453
      %p455 = pneg %p454
      // Predicated region
      $region9: #{dilated_res_block.5} parent=5 // pred_check
        _
      $region10: #{dilated_res_block.5} parent=5 // pred_check_branch
        %457 = sbr.rel (%p454) target = $region12
      $region11: #{dilated_res_block.5} parent=5 // pred_region
        %s458 = ssub.s32 %s26, 1
        // Predicated region
        $region13: #{dilated_res_block.5} parent=11 // pred_check
          %p459 = pneg %p143
        $region14: #{dilated_res_block.5} parent=11 // pred_check_branch
          %461 = sbr.rel (%p459) target = $region16
        $region15: #{dilated_res_block.5} parent=11 // pred_region
          _
        $region16: #{dilated_res_block.5} parent=11 // pred_fallthru
          _
        // Predicated region
        $region17: #{dilated_res_block.5} parent=11 // pred_check
          %p462 = pneg %p164
        $region18: #{dilated_res_block.5} parent=11 // pred_check_branch
          %464 = sbr.rel (%p462) target = $region20
        $region19: #{dilated_res_block.5} parent=11 // pred_region
          _
        $region20: #{dilated_res_block.5} parent=11 // pred_fallthru
          _
        // Predicated region
        $region21: #{dilated_res_block.5} parent=11 // pred_check
          %p465 = pneg %p185
        $region22: #{dilated_res_block.5} parent=11 // pred_check_branch
          %467 = sbr.rel (%p465) target = $region24
        $region23: #{dilated_res_block.5} parent=11 // pred_region
          _
        $region24: #{dilated_res_block.5} parent=11 // pred_fallthru
          _
        // Predicated region
        $region25: #{dilated_res_block.5} parent=11 // pred_check
          %p468 = pneg %p206
        $region26: #{dilated_res_block.5} parent=11 // pred_check_branch
          %470 = sbr.rel (%p468) target = $region28
        $region27: #{dilated_res_block.5} parent=11 // pred_region
          _
        $region28: #{dilated_res_block.5} parent=11 // pred_fallthru
          _
        // Predicated region
        $region29: #{dilated_res_block.5} parent=11 // pred_check
          %p471 = pneg %p227
        $region30: #{dilated_res_block.5} parent=11 // pred_check_branch
          %473 = sbr.rel (%p471) target = $region32
        $region31: #{dilated_res_block.5} parent=11 // pred_region
          _
        $region32: #{dilated_res_block.5} parent=11 // pred_fallthru
          _
        // Predicated region
        $region33: #{dilated_res_block.5} parent=11 // pred_check
          %p474 = pneg %p248
        $region34: #{dilated_res_block.5} parent=11 // pred_check_branch
          %476 = sbr.rel (%p474) target = $region36
        $region35: #{dilated_res_block.5} parent=11 // pred_region
          _
        $region36: #{dilated_res_block.5} parent=11 // pred_fallthru
          _
        // Predicated region
        $region37: #{dilated_res_block.5} parent=11 // pred_check
          %p477 = pneg %p269
        $region38: #{dilated_res_block.5} parent=11 // pred_check_branch
          %479 = sbr.rel (%p477) target = $region40
        $region39: #{dilated_res_block.5} parent=11 // pred_region
          _
        $region40: #{dilated_res_block.5} parent=11 // pred_fallthru
          _
        // Predicated region
        $region41: #{dilated_res_block.5} parent=11 // pred_check
          %p480 = pneg %p290
        $region42: #{dilated_res_block.5} parent=11 // pred_check_branch
          %482 = sbr.rel (%p480) target = $region44
        $region43: #{dilated_res_block.5} parent=11 // pred_region
          _
        $region44: #{dilated_res_block.5} parent=11 // pred_fallthru
          _
        // Predicated region
        $region45: #{dilated_res_block.5} parent=11 // pred_check
          %p483 = pneg %p311
        $region46: #{dilated_res_block.5} parent=11 // pred_check_branch
          %485 = sbr.rel (%p483) target = $region48
        $region47: #{dilated_res_block.5} parent=11 // pred_region
          _
        $region48: #{dilated_res_block.5} parent=11 // pred_fallthru
          _
        // Predicated region
        $region49: #{dilated_res_block.5} parent=11 // pred_check
          %p486 = pneg %p332
        $region50: #{dilated_res_block.5} parent=11 // pred_check_branch
          %488 = sbr.rel (%p486) target = $region52
        $region51: #{dilated_res_block.5} parent=11 // pred_region
          _
        $region52: #{dilated_res_block.5} parent=11 // pred_fallthru
          _
        // Predicated region
        $region53: #{dilated_res_block.5} parent=11 // pred_check
          %p489 = pneg %p353
        $region54: #{dilated_res_block.5} parent=11 // pred_check_branch
          %491 = sbr.rel (%p489) target = $region56
        $region55: #{dilated_res_block.5} parent=11 // pred_region
          _
        $region56: #{dilated_res_block.5} parent=11 // pred_fallthru
          _
        // Predicated region
        $region57: #{dilated_res_block.5} parent=11 // pred_check
          %p492 = pneg %p374
        $region58: #{dilated_res_block.5} parent=11 // pred_check_branch
          %494 = sbr.rel (%p492) target = $region60
        $region59: #{dilated_res_block.5} parent=11 // pred_region
          _
        $region60: #{dilated_res_block.5} parent=11 // pred_fallthru
          _
        // Predicated region
        $region61: #{dilated_res_block.5} parent=11 // pred_check
          %p495 = pneg %p395
        $region62: #{dilated_res_block.5} parent=11 // pred_check_branch
          %497 = sbr.rel (%p495) target = $region64
        $region63: #{dilated_res_block.5} parent=11 // pred_region
          _
        $region64: #{dilated_res_block.5} parent=11 // pred_fallthru
          _
        // Predicated region
        $region65: #{dilated_res_block.5} parent=11 // pred_check
          %p498 = pneg %p416
        $region66: #{dilated_res_block.5} parent=11 // pred_check_branch
          %500 = sbr.rel (%p498) target = $region68
        $region67: #{dilated_res_block.5} parent=11 // pred_region
          _
        $region68: #{dilated_res_block.5} parent=11 // pred_fallthru
          _
      $region12: #{dilated_res_block.5} parent=5 // pred_fallthru
        _
      %p501 = scmp.lt.s32.totalorder %s26, 2
      // Predicated region
      $region69: #{dilated_res_block.5} parent=5 // pred_check
        %p502 = pneg %p501
      $region70: #{dilated_res_block.5} parent=5 // pred_check_branch
        %504 = sbr.rel (%p502) target = $region72
      $region71: #{dilated_res_block.5} parent=5 // pred_region
        // Predicated region
        $region73: #{dilated_res_block.5} parent=71 // pred_check
          %p505 = pneg %p60
        $region74: #{dilated_res_block.5} parent=71 // pred_check_branch
          %507 = sbr.rel (%p505) target = $region76
        $region75: #{dilated_res_block.5} parent=71 // pred_region
          %s508 = smul.u32 16, %s34
          %p509 = scmp.lt.s32.totalorder %s33, 1
          %s510 = scalar_select %p509, %s33, 1
          %p511 = scmp.lt.s32.totalorder %s508, 15
          %s512 = scalar_select %p511, %s508, 15
          %s513 = smul.addr %s510, 16
          %s514 = sadd.s32 %s512, %s513
          %s515 = smul.addr %s514, 8
          %s516 = scalar_lea.vmem %s0, %s515
          %s517 = smul.u32 16, %s34
        $region76: #{dilated_res_block.5} parent=71 // pred_fallthru
          _
        // Predicated region
        $region77: #{dilated_res_block.5} parent=71 // pred_check
          %p518 = pneg %p88
        $region78: #{dilated_res_block.5} parent=71 // pred_check_branch
          %520 = sbr.rel (%p518) target = $region80
        $region79: #{dilated_res_block.5} parent=71 // pred_region
          %s521 = smul.u32 16, %s34
          %p522 = scmp.lt.s32.totalorder %s33, 1
          %s523 = scalar_select %p522, %s33, 1
          %p524 = scmp.lt.s32.totalorder %s521, 15
          %s525 = scalar_select %p524, %s521, 15
          %s526 = smul.addr %s523, 16
          %s527 = sadd.s32 %s525, %s526
          %s528 = smul.addr %s527, 8
          %s529 = scalar_lea.vmem %s1, %s528
          %s530 = smul.u32 16, %s34
        $region80: #{dilated_res_block.5} parent=71 // pred_fallthru
          _
        // Predicated region
        $region81: #{dilated_res_block.5} parent=71 // pred_check
          %p531 = pneg %p116
        $region82: #{dilated_res_block.5} parent=71 // pred_check_branch
          %533 = sbr.rel (%p531) target = $region84
        $region83: #{dilated_res_block.5} parent=71 // pred_region
          %s534 = smul.u32 2, %s34
          %p535 = scmp.lt.s32.totalorder %s33, 1
          %s536 = scalar_select %p535, %s33, 1
          %p537 = scmp.lt.s32.totalorder %s534, 1
          %s538 = scalar_select %p537, %s534, 1
          %s539 = smul.addr %s536, 2
          %s540 = sadd.s32 %s538, %s539
          %s541 = smul.addr %s540, 8
          %s542 = scalar_lea.vmem %s2, %s541
          %s543 = smul.u32 2, %s34
        $region84: #{dilated_res_block.5} parent=71 // pred_fallthru
          _
      $region72: #{dilated_res_block.5} parent=5 // pred_fallthru
        _
      %p544 = scmp.le.s32.totalorder 1, %s26
      %p545 = scmp.lt.s32.totalorder %s26, 3
      %p546 = pnand %p544, %p545
      %p547 = pneg %p546
      // Predicated region
      $region85: #{dilated_res_block.5} parent=5 // pred_check
        _
      $region86: #{dilated_res_block.5} parent=5 // pred_check_branch
        %549 = sbr.rel (%p546) target = $region88
      $region87: #{dilated_res_block.5} parent=5 // pred_region
        %s550 = ssub.s32 %s26, 1
        %s551 = smul.u32 16, %s36
        %p552 = scmp.lt.s32.totalorder %s35, 1
        %s553 = scalar_select %p552, %s35, 1
        %p554 = scmp.lt.s32.totalorder %s551, 15
        %s555 = scalar_select %p554, %s551, 15
        %s556 = smul.addr %s553, 16
        %s557 = sadd.s32 %s555, %s556
        %s558 = smul.addr %s557, 8
        %s559 = scalar_lea.vmem %s0, %s558
        %p560 = pneg %p66
        %p561 = pneg %p63
        %s562 = smul.u32 16, %s36
        %p563 = scmp.lt.s32.totalorder %s35, 1
        %s564 = scalar_select %p563, %s35, 1
        %p565 = scmp.lt.s32.totalorder %s562, 15
        %s566 = scalar_select %p565, %s562, 15
        %s567 = smul.addr %s564, 16
        %s568 = sadd.s32 %s566, %s567
        %s569 = smul.addr %s568, 8
        %s570 = scalar_lea.vmem %s1, %s569
        %p571 = pneg %p94
        %p572 = pneg %p91
        %s573 = smul.u32 2, %s36
        %p574 = scmp.lt.s32.totalorder %s35, 1
        %s575 = scalar_select %p574, %s35, 1
        %p576 = scmp.lt.s32.totalorder %s573, 1
        %s577 = scalar_select %p576, %s573, 1
        %s578 = smul.addr %s575, 2
        %s579 = sadd.s32 %s577, %s578
        %s580 = smul.addr %s579, 8
        %s581 = scalar_lea.vmem %s2, %s580
        %p582 = pneg %p122
        %p583 = pneg %p119
        %p584 = pneg %p143
        %p585 = pneg %p140
        %p586 = pneg %p164
        %p587 = pneg %p161
        %p588 = pneg %p185
        %p589 = pneg %p182
        %p590 = pneg %p206
        %p591 = pneg %p203
        %p592 = pneg %p227
        %p593 = pneg %p224
        %p594 = pneg %p248
        %p595 = pneg %p245
        %p596 = pneg %p269
        %p597 = pneg %p266
        %p598 = pneg %p290
        %p599 = pneg %p287
        %p600 = pneg %p311
        %p601 = pneg %p308
        %p602 = pneg %p332
        %p603 = pneg %p329
        %p604 = pneg %p353
        %p605 = pneg %p350
        %p606 = pneg %p374
        %p607 = pneg %p371
        %p608 = pneg %p395
        %p609 = pneg %p392
        %p610 = pneg %p416
        %p611 = pneg %p413
        %p612 = pneg %p444
        %p613 = pneg %p441
        %s614 = sand.u32 %s431, 1
        %s615 = scalar_lea.sflag [#allocation3], %s614
        %s616 = sand.u32 %s431, 1
        %s617 = smul.addr %s616, 16
        %s618 = scalar_lea.vmem [#allocation2], %s617
        %s619 = smul.u32 16, %s36
        %p620 = scmp.lt.s32.totalorder %s35, 1
        %s621 = scalar_select %p620, %s35, 1
        %p622 = scmp.lt.s32.totalorder %s619, 15
        %s623 = scalar_select %p622, %s619, 15
        %s624 = smul.addr %s621, 16
        %s625 = sadd.s32 %s623, %s624
        %s626 = smul.addr %s625, 8
        %s627 = scalar_lea.vmem %s0, %s626
        %s628 = smul.u32 16, %s36
        %s629 = smul.u32 16, %s36
        %p630 = scmp.lt.s32.totalorder %s35, 1
        %s631 = scalar_select %p630, %s35, 1
        %p632 = scmp.lt.s32.totalorder %s629, 15
        %s633 = scalar_select %p632, %s629, 15
        %s634 = smul.addr %s631, 16
        %s635 = sadd.s32 %s633, %s634
        %s636 = smul.addr %s635, 8
        %s637 = scalar_lea.vmem %s1, %s636
        %s638 = smul.u32 16, %s36
        %s639 = smul.u32 2, %s36
        %p640 = scmp.lt.s32.totalorder %s35, 1
        %s641 = scalar_select %p640, %s35, 1
        %p642 = scmp.lt.s32.totalorder %s639, 1
        %s643 = scalar_select %p642, %s639, 1
        %s644 = smul.addr %s641, 2
        %s645 = sadd.s32 %s643, %s644
        %s646 = smul.addr %s645, 8
        %s647 = scalar_lea.vmem %s2, %s646
        %s648 = smul.u32 2, %s36
        %s649 = smul.u32 2, %s36
        %v650 = vld [vmem:[%s627] sm:$0xff]
        %v651 = vld [vmem:[%s627 + $0x8] sm:$0xff]
        %v652 = vld [vmem:[%s627 + $0x10] sm:$0xff]
        %v653 = vld [vmem:[%s627 + $0x18] sm:$0xff]
        %v654 = vld [vmem:[%s627 + $0x20] sm:$0xff]
        %v655 = vld [vmem:[%s627 + $0x28] sm:$0xff]
        %v656 = vld [vmem:[%s627 + $0x30] sm:$0xff]
        %v657 = vld [vmem:[%s627 + $0x38] sm:$0xff]
        %v658 = vld [vmem:[%s627 + $0x40] sm:$0xff]
        %v659 = vld [vmem:[%s627 + $0x48] sm:$0xff]
        %v660 = vld [vmem:[%s627 + $0x50] sm:$0xff]
        %v661 = vld [vmem:[%s627 + $0x58] sm:$0xff]
        %v662 = vld [vmem:[%s627 + $0x60] sm:$0xff]
        %v663 = vld [vmem:[%s627 + $0x68] sm:$0xff]
        %v664 = vld [vmem:[%s627 + $0x70] sm:$0xff]
        %v665 = vld [vmem:[%s627 + $0x78] sm:$0xff]
        %v666 = vld [vmem:[%s637] sm:$0xff]
        %v667 = vld [vmem:[%s637 + $0x8] sm:$0xff]
        %v668 = vld [vmem:[%s637 + $0x10] sm:$0xff]
        %v669 = vld [vmem:[%s637 + $0x18] sm:$0xff]
        %v670 = vld [vmem:[%s637 + $0x20] sm:$0xff]
        %v671 = vld [vmem:[%s637 + $0x28] sm:$0xff]
        %v672 = vld [vmem:[%s637 + $0x30] sm:$0xff]
        %v673 = vld [vmem:[%s637 + $0x38] sm:$0xff]
        %v674 = vld [vmem:[%s637 + $0x40] sm:$0xff]
        %v675 = vld [vmem:[%s637 + $0x48] sm:$0xff]
        %v676 = vld [vmem:[%s637 + $0x50] sm:$0xff]
        %v677 = vld [vmem:[%s637 + $0x58] sm:$0xff]
        %v678 = vld [vmem:[%s637 + $0x60] sm:$0xff]
        %v679 = vld [vmem:[%s637 + $0x68] sm:$0xff]
        %v680 = vld [vmem:[%s637 + $0x70] sm:$0xff]
        %v681 = vld [vmem:[%s637 + $0x78] sm:$0xff]
        %v682 = vld [vmem:[%s3] sm:$0xff]
        %v683 = vld [vmem:[%s4] sm:$0xff]
        %vm684 = vcmask 64512
        %v686 = vsel %vm684, %v666, 0
        %v689 = vsel %vm684, %v667, 0
        %v692 = vsel %vm684, %v668, 0
        %v695 = vsel %vm684, %v669, 0
        %v698 = vsel %vm684, %v670, 0
        %v701 = vsel %vm684, %v671, 0
        %v704 = vsel %vm684, %v672, 0
        %v707 = vsel %vm684, %v673, 0
        %v710 = vsel %vm684, %v674, 0
        %v713 = vsel %vm684, %v675, 0
        %v716 = vsel %vm684, %v676, 0
        %v719 = vsel %vm684, %v677, 0
        %v722 = vsel %vm684, %v678, 0
        %v725 = vsel %vm684, %v679, 0
        %v728 = vsel %vm684, %v680, 0
        %v731 = vsel %vm684, %v681, 0
        %733 = vmatprep.subr.mxu0 0.0
        %734 = vmatpush1.msra.mxu0 0.0
        %735 = vmatprep.subr.mxu0 0.0
        %736 = vmatpush1.msra.mxu0 0.0
        %737 = vmatprep.subr.mxu0 0.0
        %738 = vmatpush1.msra.mxu0 0.0
        %739 = vmatprep.subr.mxu0 0.0
        %740 = vmatpush1.msra.mxu0 0.0
        %741 = vmatprep.subr.mxu0 0.0
        %742 = vmatpush1.msra.mxu0 0.0
        %743 = vmatprep.subr.mxu0 0.0
        %744 = vmatpush1.msra.mxu0 0.0
        %745 = vmatprep.subr.mxu0 0.0
        %746 = vmatpush1.msra.mxu0 0.0
        %747 = vmatprep.subr.mxu0 0.0
        %748 = vmatpush1.msra.mxu0 0.0
        %749 = vmatprep.subr.mxu0 0.0
        %750 = vmatpush1.msra.mxu0 0.0
        %751 = vmatprep.subr.mxu0 0.0
        %752 = vmatpush1.msra.mxu0 0.0
        %753 = vmatprep.subr.mxu0 0.0
        %754 = vmatpush1.msra.mxu0 0.0
        %755 = vmatprep.subr.mxu0 0.0
        %756 = vmatpush1.msra.mxu0 0.0
        %757 = vmatprep.subr.mxu0 0.0
        %758 = vmatpush1.msra.mxu0 0.0
        %759 = vmatprep.subr.mxu0 0.0
        %760 = vmatpush1.msra.mxu0 0.0
        %761 = vmatprep.subr.mxu0 0.0
        %762 = vmatpush1.msra.mxu0 0.0
        %763 = vmatprep.subr.mxu0 0.0
        %764 = vmatpush1.msra.mxu0 %v683
        %765 = vmatprep.subr.mxu0 0.0
        %766 = vmatpush2.msra.mxu0 0.0
        %767 = vmatprep.subr.mxu0 0.0
        %768 = vmatpush2.msra.mxu0 0.0
        %769 = vmatprep.subr.mxu0 0.0
        %770 = vmatpush2.msra.mxu0 0.0
        %771 = vmatprep.subr.mxu0 0.0
        %772 = vmatpush2.msra.mxu0 0.0
        %773 = vmatprep.subr.mxu0 0.0
        %774 = vmatpush2.msra.mxu0 0.0
        %775 = vmatprep.subr.mxu0 0.0
        %776 = vmatpush2.msra.mxu0 0.0
        %777 = vmatprep.subr.mxu0 0.0
        %778 = vmatpush2.msra.mxu0 0.0
        %779 = vmatprep.subr.mxu0 0.0
        %780 = vmatpush2.msra.mxu0 0.0
        %781 = vmatprep.subr.mxu0 0.0
        %782 = vmatpush2.msra.mxu0 0.0
        %783 = vmatprep.subr.mxu0 0.0
        %784 = vmatpush2.msra.mxu0 0.0
        %785 = vmatprep.subr.mxu0 0.0
        %786 = vmatpush2.msra.mxu0 0.0
        %787 = vmatprep.subr.mxu0 0.0
        %788 = vmatpush2.msra.mxu0 0.0
        %789 = vmatprep.subr.mxu0 0.0
        %790 = vmatpush2.msra.mxu0 0.0
        %791 = vmatprep.subr.mxu0 0.0
        %792 = vmatpush2.msra.mxu0 0.0
        %793 = vmatprep.subr.mxu0 0.0
        %794 = vmatpush2.msra.mxu0 0.0
        %795 = vmatprep.subr.mxu0 0.0
        %796 = vmatpush2.msra.mxu0 0.0
        %797 = vmatprep.mubr.f32.mxu0 0.0
        %798 = vmatmul.mubr.f32.gmra.mxu0 %v686
        %v799 = vpop.f32.mrf.mxu0
        %v800 = vadd.f32 0.0, %v799
        %v801 = vpop.f32.mrf.mxu0
        %802 = vmatprep.mubr.f32.mxu0 0.0
        %803 = vmatmul.mubr.f32.gmra.mxu0 %v689
        %v804 = vpop.f32.mrf.mxu0
        %v805 = vadd.f32 0.0, %v804
        %v806 = vpop.f32.mrf.mxu0
        %807 = vmatprep.mubr.f32.mxu0 0.0
        %808 = vmatmul.mubr.f32.gmra.mxu0 %v692
        %v809 = vpop.f32.mrf.mxu0
        %v810 = vadd.f32 0.0, %v809
        %v811 = vpop.f32.mrf.mxu0
        %812 = vmatprep.mubr.f32.mxu0 0.0
        %813 = vmatmul.mubr.f32.gmra.mxu0 %v695
        %v814 = vpop.f32.mrf.mxu0
        %v815 = vadd.f32 0.0, %v814
        %v816 = vpop.f32.mrf.mxu0
        %817 = vmatprep.mubr.f32.mxu0 0.0
        %818 = vmatmul.mubr.f32.gmra.mxu0 %v698
        %v819 = vpop.f32.mrf.mxu0
        %v820 = vadd.f32 0.0, %v819
        %v821 = vpop.f32.mrf.mxu0
        %822 = vmatprep.mubr.f32.mxu0 0.0
        %823 = vmatmul.mubr.f32.gmra.mxu0 %v701
        %v824 = vpop.f32.mrf.mxu0
        %v825 = vadd.f32 0.0, %v824
        %v826 = vpop.f32.mrf.mxu0
        %827 = vmatprep.mubr.f32.mxu0 0.0
        %828 = vmatmul.mubr.f32.gmra.mxu0 %v704
        %v829 = vpop.f32.mrf.mxu0
        %v830 = vadd.f32 0.0, %v829
        %v831 = vpop.f32.mrf.mxu0
        %832 = vmatprep.mubr.f32.mxu0 0.0
        %833 = vmatmul.mubr.f32.gmra.mxu0 %v707
        %v834 = vpop.f32.mrf.mxu0
        %v835 = vadd.f32 0.0, %v834
        %v836 = vpop.f32.mrf.mxu0
        %837 = vmatprep.mubr.f32.mxu0 0.0
        %838 = vmatmul.mubr.f32.gmra.mxu0 %v710
        %v839 = vpop.f32.mrf.mxu0
        %v840 = vadd.f32 0.0, %v839
        %v841 = vpop.f32.mrf.mxu0
        %842 = vmatprep.mubr.f32.mxu0 0.0
        %843 = vmatmul.mubr.f32.gmra.mxu0 %v713
        %v844 = vpop.f32.mrf.mxu0
        %v845 = vadd.f32 0.0, %v844
        %v846 = vpop.f32.mrf.mxu0
        %847 = vmatprep.mubr.f32.mxu0 0.0
        %848 = vmatmul.mubr.f32.gmra.mxu0 %v716
        %v849 = vpop.f32.mrf.mxu0
        %v850 = vadd.f32 0.0, %v849
        %v851 = vpop.f32.mrf.mxu0
        %852 = vmatprep.mubr.f32.mxu0 0.0
        %853 = vmatmul.mubr.f32.gmra.mxu0 %v719
        %v854 = vpop.f32.mrf.mxu0
        %v855 = vadd.f32 0.0, %v854
        %v856 = vpop.f32.mrf.mxu0
        %857 = vmatprep.mubr.f32.mxu0 0.0
        %858 = vmatmul.mubr.f32.gmra.mxu0 %v722
        %v859 = vpop.f32.mrf.mxu0
        %v860 = vadd.f32 0.0, %v859
        %v861 = vpop.f32.mrf.mxu0
        %862 = vmatprep.mubr.f32.mxu0 0.0
        %863 = vmatmul.mubr.f32.gmra.mxu0 %v725
        %v864 = vpop.f32.mrf.mxu0
        %v865 = vadd.f32 0.0, %v864
        %v866 = vpop.f32.mrf.mxu0
        %867 = vmatprep.mubr.f32.mxu0 0.0
        %868 = vmatmul.mubr.f32.gmra.mxu0 %v728
        %v869 = vpop.f32.mrf.mxu0
        %v870 = vadd.f32 0.0, %v869
        %v871 = vpop.f32.mrf.mxu0
        %872 = vmatprep.mubr.f32.mxu0 0.0
        %873 = vmatmul.mubr.f32.gmra.mxu0 %v731
        %v874 = vpop.f32.mrf.mxu0
        %v875 = vadd.f32 0.0, %v874
        %v876 = vpop.f32.mrf.mxu0
        %877 = vdwg.mxu0
        %v879 = vsel %vm684, %v650, 0
        %v882 = vsel %vm684, %v651, 0
        %v885 = vsel %vm684, %v652, 0
        %v888 = vsel %vm684, %v653, 0
        %v891 = vsel %vm684, %v654, 0
        %v894 = vsel %vm684, %v655, 0
        %v897 = vsel %vm684, %v656, 0
        %v900 = vsel %vm684, %v657, 0
        %v903 = vsel %vm684, %v658, 0
        %v906 = vsel %vm684, %v659, 0
        %v909 = vsel %vm684, %v660, 0
        %v912 = vsel %vm684, %v661, 0
        %v915 = vsel %vm684, %v662, 0
        %v918 = vsel %vm684, %v663, 0
        %v921 = vsel %vm684, %v664, 0
        %v924 = vsel %vm684, %v665, 0
        %926 = vmatprep.subr.mxu0 0.0
        %927 = vmatpush1.msra.mxu0 0.0
        %928 = vmatprep.subr.mxu0 0.0
        %929 = vmatpush1.msra.mxu0 0.0
        %930 = vmatprep.subr.mxu0 0.0
        %931 = vmatpush1.msra.mxu0 0.0
        %932 = vmatprep.subr.mxu0 0.0
        %933 = vmatpush1.msra.mxu0 0.0
        %934 = vmatprep.subr.mxu0 0.0
        %935 = vmatpush1.msra.mxu0 0.0
        %936 = vmatprep.subr.mxu0 0.0
        %937 = vmatpush1.msra.mxu0 0.0
        %938 = vmatprep.subr.mxu0 0.0
        %939 = vmatpush1.msra.mxu0 0.0
        %940 = vmatprep.subr.mxu0 0.0
        %941 = vmatpush1.msra.mxu0 0.0
        %942 = vmatprep.subr.mxu0 0.0
        %943 = vmatpush1.msra.mxu0 0.0
        %944 = vmatprep.subr.mxu0 0.0
        %945 = vmatpush1.msra.mxu0 0.0
        %946 = vmatprep.subr.mxu0 0.0
        %947 = vmatpush1.msra.mxu0 0.0
        %948 = vmatprep.subr.mxu0 0.0
        %949 = vmatpush1.msra.mxu0 0.0
        %950 = vmatprep.subr.mxu0 0.0
        %951 = vmatpush1.msra.mxu0 0.0
        %952 = vmatprep.subr.mxu0 0.0
        %953 = vmatpush1.msra.mxu0 0.0
        %954 = vmatprep.subr.mxu0 0.0
        %955 = vmatpush1.msra.mxu0 0.0
        %956 = vmatprep.subr.mxu0 0.0
        %957 = vmatpush1.msra.mxu0 %v682
        %958 = vmatprep.subr.mxu0 0.0
        %959 = vmatpush2.msra.mxu0 0.0
        %960 = vmatprep.subr.mxu0 0.0
        %961 = vmatpush2.msra.mxu0 0.0
        %962 = vmatprep.subr.mxu0 0.0
        %963 = vmatpush2.msra.mxu0 0.0
        %964 = vmatprep.subr.mxu0 0.0
        %965 = vmatpush2.msra.mxu0 0.0
        %966 = vmatprep.subr.mxu0 0.0
        %967 = vmatpush2.msra.mxu0 0.0
        %968 = vmatprep.subr.mxu0 0.0
        %969 = vmatpush2.msra.mxu0 0.0
        %970 = vmatprep.subr.mxu0 0.0
        %971 = vmatpush2.msra.mxu0 0.0
        %972 = vmatprep.subr.mxu0 0.0
        %973 = vmatpush2.msra.mxu0 0.0
        %974 = vmatprep.subr.mxu0 0.0
        %975 = vmatpush2.msra.mxu0 0.0
        %976 = vmatprep.subr.mxu0 0.0
        %977 = vmatpush2.msra.mxu0 0.0
        %978 = vmatprep.subr.mxu0 0.0
        %979 = vmatpush2.msra.mxu0 0.0
        %980 = vmatprep.subr.mxu0 0.0
        %981 = vmatpush2.msra.mxu0 0.0
        %982 = vmatprep.subr.mxu0 0.0
        %983 = vmatpush2.msra.mxu0 0.0
        %984 = vmatprep.subr.mxu0 0.0
        %985 = vmatpush2.msra.mxu0 0.0
        %986 = vmatprep.subr.mxu0 0.0
        %987 = vmatpush2.msra.mxu0 0.0
        %988 = vmatprep.subr.mxu0 0.0
        %989 = vmatpush2.msra.mxu0 0.0
        %990 = vmatprep.mubr.f32.mxu0 0.0
        %991 = vmatmul.mubr.f32.gmra.mxu0 %v879
        %v992 = vpop.f32.mrf.mxu0
        %v993 = vadd.f32 %v800, %v992
        %v994 = vpop.f32.mrf.mxu0
        %995 = vmatprep.mubr.f32.mxu0 0.0
        %996 = vmatmul.mubr.f32.gmra.mxu0 %v882
        %v997 = vpop.f32.mrf.mxu0
        %v998 = vadd.f32 %v805, %v997
        %v999 = vpop.f32.mrf.mxu0
        %1000 = vmatprep.mubr.f32.mxu0 0.0
        %1001 = vmatmul.mubr.f32.gmra.mxu0 %v885
        %v1002 = vpop.f32.mrf.mxu0
        %v1003 = vadd.f32 %v810, %v1002
        %v1004 = vpop.f32.mrf.mxu0
        %1005 = vmatprep.mubr.f32.mxu0 0.0
        %1006 = vmatmul.mubr.f32.gmra.mxu0 %v888
        %v1007 = vpop.f32.mrf.mxu0
        %v1008 = vadd.f32 %v815, %v1007
        %v1009 = vpop.f32.mrf.mxu0
        %1010 = vmatprep.mubr.f32.mxu0 0.0
        %1011 = vmatmul.mubr.f32.gmra.mxu0 %v891
        %v1012 = vpop.f32.mrf.mxu0
        %v1013 = vadd.f32 %v820, %v1012
        %v1014 = vpop.f32.mrf.mxu0
        %1015 = vmatprep.mubr.f32.mxu0 0.0
        %1016 = vmatmul.mubr.f32.gmra.mxu0 %v894
        %v1017 = vpop.f32.mrf.mxu0
        %v1018 = vadd.f32 %v825, %v1017
        %v1019 = vpop.f32.mrf.mxu0
        %1020 = vmatprep.mubr.f32.mxu0 0.0
        %1021 = vmatmul.mubr.f32.gmra.mxu0 %v897
        %v1022 = vpop.f32.mrf.mxu0
        %v1023 = vadd.f32 %v830, %v1022
        %v1024 = vpop.f32.mrf.mxu0
        %1025 = vmatprep.mubr.f32.mxu0 0.0
        %1026 = vmatmul.mubr.f32.gmra.mxu0 %v900
        %v1027 = vpop.f32.mrf.mxu0
        %v1028 = vadd.f32 %v835, %v1027
        %v1029 = vpop.f32.mrf.mxu0
        %1030 = vmatprep.mubr.f32.mxu0 0.0
        %1031 = vmatmul.mubr.f32.gmra.mxu0 %v903
        %v1032 = vpop.f32.mrf.mxu0
        %v1033 = vadd.f32 %v840, %v1032
        %v1034 = vpop.f32.mrf.mxu0
        %1035 = vmatprep.mubr.f32.mxu0 0.0
        %1036 = vmatmul.mubr.f32.gmra.mxu0 %v906
        %v1037 = vpop.f32.mrf.mxu0
        %v1038 = vadd.f32 %v845, %v1037
        %v1039 = vpop.f32.mrf.mxu0
        %1040 = vmatprep.mubr.f32.mxu0 0.0
        %1041 = vmatmul.mubr.f32.gmra.mxu0 %v909
        %v1042 = vpop.f32.mrf.mxu0
        %v1043 = vadd.f32 %v850, %v1042
        %v1044 = vpop.f32.mrf.mxu0
        %1045 = vmatprep.mubr.f32.mxu0 0.0
        %1046 = vmatmul.mubr.f32.gmra.mxu0 %v912
        %v1047 = vpop.f32.mrf.mxu0
        %v1048 = vadd.f32 %v855, %v1047
        %v1049 = vpop.f32.mrf.mxu0
        %1050 = vmatprep.mubr.f32.mxu0 0.0
        %1051 = vmatmul.mubr.f32.gmra.mxu0 %v915
        %v1052 = vpop.f32.mrf.mxu0
        %v1053 = vadd.f32 %v860, %v1052
        %v1054 = vpop.f32.mrf.mxu0
        %1055 = vmatprep.mubr.f32.mxu0 0.0
        %1056 = vmatmul.mubr.f32.gmra.mxu0 %v918
        %v1057 = vpop.f32.mrf.mxu0
        %v1058 = vadd.f32 %v865, %v1057
        %v1059 = vpop.f32.mrf.mxu0
        %1060 = vmatprep.mubr.f32.mxu0 0.0
        %1061 = vmatmul.mubr.f32.gmra.mxu0 %v921
        %v1062 = vpop.f32.mrf.mxu0
        %v1063 = vadd.f32 %v870, %v1062
        %v1064 = vpop.f32.mrf.mxu0
        %1065 = vmatprep.mubr.f32.mxu0 0.0
        %1066 = vmatmul.mubr.f32.gmra.mxu0 %v924
        %v1067 = vpop.f32.mrf.mxu0
        %v1068 = vadd.f32 %v875, %v1067
        %v1069 = vpop.f32.mrf.mxu0
        %1070 = vdwg.mxu0
        %v1071 = vld [vmem:[%s5] sm:$0xff]
        %v1072 = vld [vmem:[%s6] sm:$0xff]
        %1073 = vmatprep.subr.mxu0 0.0
        %1074 = vmatpush1.msra.mxu0 0.0
        %1075 = vmatprep.subr.mxu0 0.0
        %1076 = vmatpush1.msra.mxu0 0.0
        %1077 = vmatprep.subr.mxu0 0.0
        %1078 = vmatpush1.msra.mxu0 0.0
        %1079 = vmatprep.subr.mxu0 0.0
        %1080 = vmatpush1.msra.mxu0 0.0
        %1081 = vmatprep.subr.mxu0 0.0
        %1082 = vmatpush1.msra.mxu0 0.0
        %1083 = vmatprep.subr.mxu0 0.0
        %1084 = vmatpush1.msra.mxu0 0.0
        %1085 = vmatprep.subr.mxu0 0.0
        %1086 = vmatpush1.msra.mxu0 0.0
        %1087 = vmatprep.subr.mxu0 0.0
        %1088 = vmatpush1.msra.mxu0 0.0
        %1089 = vmatprep.subr.mxu0 0.0
        %1090 = vmatpush1.msra.mxu0 0.0
        %1091 = vmatprep.subr.mxu0 0.0
        %1092 = vmatpush1.msra.mxu0 0.0
        %1093 = vmatprep.subr.mxu0 0.0
        %1094 = vmatpush1.msra.mxu0 0.0
        %1095 = vmatprep.subr.mxu0 0.0
        %1096 = vmatpush1.msra.mxu0 0.0
        %1097 = vmatprep.subr.mxu0 0.0
        %1098 = vmatpush1.msra.mxu0 0.0
        %1099 = vmatprep.subr.mxu0 0.0
        %1100 = vmatpush1.msra.mxu0 0.0
        %1101 = vmatprep.subr.mxu0 0.0
        %1102 = vmatpush1.msra.mxu0 0.0
        %1103 = vmatprep.subr.mxu0 0.0
        %1104 = vmatpush1.msra.mxu0 %v1072
        %1105 = vmatprep.subr.mxu0 0.0
        %1106 = vmatpush2.msra.mxu0 0.0
        %1107 = vmatprep.subr.mxu0 0.0
        %1108 = vmatpush2.msra.mxu0 0.0
        %1109 = vmatprep.subr.mxu0 0.0
        %1110 = vmatpush2.msra.mxu0 0.0
        %1111 = vmatprep.subr.mxu0 0.0
        %1112 = vmatpush2.msra.mxu0 0.0
        %1113 = vmatprep.subr.mxu0 0.0
        %1114 = vmatpush2.msra.mxu0 0.0
        %1115 = vmatprep.subr.mxu0 0.0
        %1116 = vmatpush2.msra.mxu0 0.0
        %1117 = vmatprep.subr.mxu0 0.0
        %1118 = vmatpush2.msra.mxu0 0.0
        %1119 = vmatprep.subr.mxu0 0.0
        %1120 = vmatpush2.msra.mxu0 0.0
        %1121 = vmatprep.subr.mxu0 0.0
        %1122 = vmatpush2.msra.mxu0 0.0
        %1123 = vmatprep.subr.mxu0 0.0
        %1124 = vmatpush2.msra.mxu0 0.0
        %1125 = vmatprep.subr.mxu0 0.0
        %1126 = vmatpush2.msra.mxu0 0.0
        %1127 = vmatprep.subr.mxu0 0.0
        %1128 = vmatpush2.msra.mxu0 0.0
        %1129 = vmatprep.subr.mxu0 0.0
        %1130 = vmatpush2.msra.mxu0 0.0
        %1131 = vmatprep.subr.mxu0 0.0
        %1132 = vmatpush2.msra.mxu0 0.0
        %1133 = vmatprep.subr.mxu0 0.0
        %1134 = vmatpush2.msra.mxu0 0.0
        %1135 = vmatprep.subr.mxu0 0.0
        %1136 = vmatpush2.msra.mxu0 0.0
        %1137 = vmatprep.mubr.f32.mxu0 0.0
        %1138 = vmatmul.mubr.f32.gmra.mxu0 %v686
        %v1139 = vpop.f32.mrf.mxu0
        %v1140 = vadd.f32 0.0, %v1139
        %v1141 = vpop.f32.mrf.mxu0
        %1142 = vmatprep.mubr.f32.mxu0 0.0
        %1143 = vmatmul.mubr.f32.gmra.mxu0 %v689
        %v1144 = vpop.f32.mrf.mxu0
        %v1145 = vadd.f32 0.0, %v1144
        %v1146 = vpop.f32.mrf.mxu0
        %1147 = vmatprep.mubr.f32.mxu0 0.0
        %1148 = vmatmul.mubr.f32.gmra.mxu0 %v692
        %v1149 = vpop.f32.mrf.mxu0
        %v1150 = vadd.f32 0.0, %v1149
        %v1151 = vpop.f32.mrf.mxu0
        %1152 = vmatprep.mubr.f32.mxu0 0.0
        %1153 = vmatmul.mubr.f32.gmra.mxu0 %v695
        %v1154 = vpop.f32.mrf.mxu0
        %v1155 = vadd.f32 0.0, %v1154
        %v1156 = vpop.f32.mrf.mxu0
        %1157 = vmatprep.mubr.f32.mxu0 0.0
        %1158 = vmatmul.mubr.f32.gmra.mxu0 %v698
        %v1159 = vpop.f32.mrf.mxu0
        %v1160 = vadd.f32 0.0, %v1159
        %v1161 = vpop.f32.mrf.mxu0
        %1162 = vmatprep.mubr.f32.mxu0 0.0
        %1163 = vmatmul.mubr.f32.gmra.mxu0 %v701
        %v1164 = vpop.f32.mrf.mxu0
        %v1165 = vadd.f32 0.0, %v1164
        %v1166 = vpop.f32.mrf.mxu0
        %1167 = vmatprep.mubr.f32.mxu0 0.0
        %1168 = vmatmul.mubr.f32.gmra.mxu0 %v704
        %v1169 = vpop.f32.mrf.mxu0
        %v1170 = vadd.f32 0.0, %v1169
        %v1171 = vpop.f32.mrf.mxu0
        %1172 = vmatprep.mubr.f32.mxu0 0.0
        %1173 = vmatmul.mubr.f32.gmra.mxu0 %v707
        %v1174 = vpop.f32.mrf.mxu0
        %v1175 = vadd.f32 0.0, %v1174
        %v1176 = vpop.f32.mrf.mxu0
        %1177 = vmatprep.mubr.f32.mxu0 0.0
        %1178 = vmatmul.mubr.f32.gmra.mxu0 %v710
        %v1179 = vpop.f32.mrf.mxu0
        %v1180 = vadd.f32 0.0, %v1179
        %v1181 = vpop.f32.mrf.mxu0
        %1182 = vmatprep.mubr.f32.mxu0 0.0
        %1183 = vmatmul.mubr.f32.gmra.mxu0 %v713
        %v1184 = vpop.f32.mrf.mxu0
        %v1185 = vadd.f32 0.0, %v1184
        %v1186 = vpop.f32.mrf.mxu0
        %1187 = vmatprep.mubr.f32.mxu0 0.0
        %1188 = vmatmul.mubr.f32.gmra.mxu0 %v716
        %v1189 = vpop.f32.mrf.mxu0
        %v1190 = vadd.f32 0.0, %v1189
        %v1191 = vpop.f32.mrf.mxu0
        %1192 = vmatprep.mubr.f32.mxu0 0.0
        %1193 = vmatmul.mubr.f32.gmra.mxu0 %v719
        %v1194 = vpop.f32.mrf.mxu0
        %v1195 = vadd.f32 0.0, %v1194
        %v1196 = vpop.f32.mrf.mxu0
        %1197 = vmatprep.mubr.f32.mxu0 0.0
        %1198 = vmatmul.mubr.f32.gmra.mxu0 %v722
        %v1199 = vpop.f32.mrf.mxu0
        %v1200 = vadd.f32 0.0, %v1199
        %v1201 = vpop.f32.mrf.mxu0
        %1202 = vmatprep.mubr.f32.mxu0 0.0
        %1203 = vmatmul.mubr.f32.gmra.mxu0 %v725
        %v1204 = vpop.f32.mrf.mxu0
        %v1205 = vadd.f32 0.0, %v1204
        %v1206 = vpop.f32.mrf.mxu0
        %1207 = vmatprep.mubr.f32.mxu0 0.0
        %1208 = vmatmul.mubr.f32.gmra.mxu0 %v728
        %v1209 = vpop.f32.mrf.mxu0
        %v1210 = vadd.f32 0.0, %v1209
        %v1211 = vpop.f32.mrf.mxu0
        %1212 = vmatprep.mubr.f32.mxu0 0.0
        %1213 = vmatmul.mubr.f32.gmra.mxu0 %v731
        %v1214 = vpop.f32.mrf.mxu0
        %v1215 = vadd.f32 0.0, %v1214
        %v1216 = vpop.f32.mrf.mxu0
        %1217 = vdwg.mxu0
        %1218 = vmatprep.subr.mxu0 0.0
        %1219 = vmatpush1.msra.mxu0 0.0
        %1220 = vmatprep.subr.mxu0 0.0
        %1221 = vmatpush1.msra.mxu0 0.0
        %1222 = vmatprep.subr.mxu0 0.0
        %1223 = vmatpush1.msra.mxu0 0.0
        %1224 = vmatprep.subr.mxu0 0.0
        %1225 = vmatpush1.msra.mxu0 0.0
        %1226 = vmatprep.subr.mxu0 0.0
        %1227 = vmatpush1.msra.mxu0 0.0
        %1228 = vmatprep.subr.mxu0 0.0
        %1229 = vmatpush1.msra.mxu0 0.0
        %1230 = vmatprep.subr.mxu0 0.0
        %1231 = vmatpush1.msra.mxu0 0.0
        %1232 = vmatprep.subr.mxu0 0.0
        %1233 = vmatpush1.msra.mxu0 0.0
        %1234 = vmatprep.subr.mxu0 0.0
        %1235 = vmatpush1.msra.mxu0 0.0
        %1236 = vmatprep.subr.mxu0 0.0
        %1237 = vmatpush1.msra.mxu0 0.0
        %1238 = vmatprep.subr.mxu0 0.0
        %1239 = vmatpush1.msra.mxu0 0.0
        %1240 = vmatprep.subr.mxu0 0.0
        %1241 = vmatpush1.msra.mxu0 0.0
        %1242 = vmatprep.subr.mxu0 0.0
        %1243 = vmatpush1.msra.mxu0 0.0
        %1244 = vmatprep.subr.mxu0 0.0
        %1245 = vmatpush1.msra.mxu0 0.0
        %1246 = vmatprep.subr.mxu0 0.0
        %1247 = vmatpush1.msra.mxu0 0.0
        %1248 = vmatprep.subr.mxu0 0.0
        %1249 = vmatpush1.msra.mxu0 %v1071
        %1250 = vmatprep.subr.mxu0 0.0
        %1251 = vmatpush2.msra.mxu0 0.0
        %1252 = vmatprep.subr.mxu0 0.0
        %1253 = vmatpush2.msra.mxu0 0.0
        %1254 = vmatprep.subr.mxu0 0.0
        %1255 = vmatpush2.msra.mxu0 0.0
        %1256 = vmatprep.subr.mxu0 0.0
        %1257 = vmatpush2.msra.mxu0 0.0
        %1258 = vmatprep.subr.mxu0 0.0
        %1259 = vmatpush2.msra.mxu0 0.0
        %1260 = vmatprep.subr.mxu0 0.0
        %1261 = vmatpush2.msra.mxu0 0.0
        %1262 = vmatprep.subr.mxu0 0.0
        %1263 = vmatpush2.msra.mxu0 0.0
        %1264 = vmatprep.subr.mxu0 0.0
        %1265 = vmatpush2.msra.mxu0 0.0
        %1266 = vmatprep.subr.mxu0 0.0
        %1267 = vmatpush2.msra.mxu0 0.0
        %1268 = vmatprep.subr.mxu0 0.0
        %1269 = vmatpush2.msra.mxu0 0.0
        %1270 = vmatprep.subr.mxu0 0.0
        %1271 = vmatpush2.msra.mxu0 0.0
        %1272 = vmatprep.subr.mxu0 0.0
        %1273 = vmatpush2.msra.mxu0 0.0
        %1274 = vmatprep.subr.mxu0 0.0
        %1275 = vmatpush2.msra.mxu0 0.0
        %1276 = vmatprep.subr.mxu0 0.0
        %1277 = vmatpush2.msra.mxu0 0.0
        %1278 = vmatprep.subr.mxu0 0.0
        %1279 = vmatpush2.msra.mxu0 0.0
        %1280 = vmatprep.subr.mxu0 0.0
        %1281 = vmatpush2.msra.mxu0 0.0
        %1282 = vmatprep.mubr.f32.mxu0 0.0
        %1283 = vmatmul.mubr.f32.gmra.mxu0 %v879
        %v1284 = vpop.f32.mrf.mxu0
        %v1285 = vadd.f32 %v1140, %v1284
        %v1286 = vpop.f32.mrf.mxu0
        %1287 = vmatprep.mubr.f32.mxu0 0.0
        %1288 = vmatmul.mubr.f32.gmra.mxu0 %v882
        %v1289 = vpop.f32.mrf.mxu0
        %v1290 = vadd.f32 %v1145, %v1289
        %v1291 = vpop.f32.mrf.mxu0
        %1292 = vmatprep.mubr.f32.mxu0 0.0
        %1293 = vmatmul.mubr.f32.gmra.mxu0 %v885
        %v1294 = vpop.f32.mrf.mxu0
        %v1295 = vadd.f32 %v1150, %v1294
        %v1296 = vpop.f32.mrf.mxu0
        %1297 = vmatprep.mubr.f32.mxu0 0.0
        %1298 = vmatmul.mubr.f32.gmra.mxu0 %v888
        %v1299 = vpop.f32.mrf.mxu0
        %v1300 = vadd.f32 %v1155, %v1299
        %v1301 = vpop.f32.mrf.mxu0
        %1302 = vmatprep.mubr.f32.mxu0 0.0
        %1303 = vmatmul.mubr.f32.gmra.mxu0 %v891
        %v1304 = vpop.f32.mrf.mxu0
        %v1305 = vadd.f32 %v1160, %v1304
        %v1306 = vpop.f32.mrf.mxu0
        %1307 = vmatprep.mubr.f32.mxu0 0.0
        %1308 = vmatmul.mubr.f32.gmra.mxu0 %v894
        %v1309 = vpop.f32.mrf.mxu0
        %v1310 = vadd.f32 %v1165, %v1309
        %v1311 = vpop.f32.mrf.mxu0
        %1312 = vmatprep.mubr.f32.mxu0 0.0
        %1313 = vmatmul.mubr.f32.gmra.mxu0 %v897
        %v1314 = vpop.f32.mrf.mxu0
        %v1315 = vadd.f32 %v1170, %v1314
        %v1316 = vpop.f32.mrf.mxu0
        %1317 = vmatprep.mubr.f32.mxu0 0.0
        %1318 = vmatmul.mubr.f32.gmra.mxu0 %v900
        %v1319 = vpop.f32.mrf.mxu0
        %v1320 = vadd.f32 %v1175, %v1319
        %v1321 = vpop.f32.mrf.mxu0
        %1322 = vmatprep.mubr.f32.mxu0 0.0
        %1323 = vmatmul.mubr.f32.gmra.mxu0 %v903
        %v1324 = vpop.f32.mrf.mxu0
        %v1325 = vadd.f32 %v1180, %v1324
        %v1326 = vpop.f32.mrf.mxu0
        %1327 = vmatprep.mubr.f32.mxu0 0.0
        %1328 = vmatmul.mubr.f32.gmra.mxu0 %v906
        %v1329 = vpop.f32.mrf.mxu0
        %v1330 = vadd.f32 %v1185, %v1329
        %v1331 = vpop.f32.mrf.mxu0
        %1332 = vmatprep.mubr.f32.mxu0 0.0
        %1333 = vmatmul.mubr.f32.gmra.mxu0 %v909
        %v1334 = vpop.f32.mrf.mxu0
        %v1335 = vadd.f32 %v1190, %v1334
        %v1336 = vpop.f32.mrf.mxu0
        %1337 = vmatprep.mubr.f32.mxu0 0.0
        %1338 = vmatmul.mubr.f32.gmra.mxu0 %v912
        %v1339 = vpop.f32.mrf.mxu0
        %v1340 = vadd.f32 %v1195, %v1339
        %v1341 = vpop.f32.mrf.mxu0
        %1342 = vmatprep.mubr.f32.mxu0 0.0
        %1343 = vmatmul.mubr.f32.gmra.mxu0 %v915
        %v1344 = vpop.f32.mrf.mxu0
        %v1345 = vadd.f32 %v1200, %v1344
        %v1346 = vpop.f32.mrf.mxu0
        %1347 = vmatprep.mubr.f32.mxu0 0.0
        %1348 = vmatmul.mubr.f32.gmra.mxu0 %v918
        %v1349 = vpop.f32.mrf.mxu0
        %v1350 = vadd.f32 %v1205, %v1349
        %v1351 = vpop.f32.mrf.mxu0
        %1352 = vmatprep.mubr.f32.mxu0 0.0
        %1353 = vmatmul.mubr.f32.gmra.mxu0 %v921
        %v1354 = vpop.f32.mrf.mxu0
        %v1355 = vadd.f32 %v1210, %v1354
        %v1356 = vpop.f32.mrf.mxu0
        %1357 = vmatprep.mubr.f32.mxu0 0.0
        %1358 = vmatmul.mubr.f32.gmra.mxu0 %v924
        %v1359 = vpop.f32.mrf.mxu0
        %v1360 = vadd.f32 %v1215, %v1359
        %v1361 = vpop.f32.mrf.mxu0
        %1362 = vdwg.mxu0
        %v1363 = vsel %vm684, %v993, -inf
        %v1364 = vrot.slane %v1363, 4
        %v1365 = vmax.f32 %v1363, %v1364
        %v1366 = vrot.slane %v1365, 2
        %v1367 = vmax.f32 %v1365, %v1366
        %v1368 = vrot.slane %v1367, 1
        %v1369 = vmax.f32 %v1367, %v1368
        %v1370 = vsel %vm684, %v998, -inf
        %v1371 = vrot.slane %v1370, 4
        %v1372 = vmax.f32 %v1370, %v1371
        %v1373 = vrot.slane %v1372, 2
        %v1374 = vmax.f32 %v1372, %v1373
        %v1375 = vrot.slane %v1374, 1
        %v1376 = vmax.f32 %v1374, %v1375
        %v1377 = vsel %vm684, %v1003, -inf
        %v1378 = vrot.slane %v1377, 4
        %v1379 = vmax.f32 %v1377, %v1378
        %v1380 = vrot.slane %v1379, 2
        %v1381 = vmax.f32 %v1379, %v1380
        %v1382 = vrot.slane %v1381, 1
        %v1383 = vmax.f32 %v1381, %v1382
        %v1384 = vsel %vm684, %v1008, -inf
        %v1385 = vrot.slane %v1384, 4
        %v1386 = vmax.f32 %v1384, %v1385
        %v1387 = vrot.slane %v1386, 2
        %v1388 = vmax.f32 %v1386, %v1387
        %v1389 = vrot.slane %v1388, 1
        %v1390 = vmax.f32 %v1388, %v1389
        %v1391 = vsel %vm684, %v1013, -inf
        %v1392 = vrot.slane %v1391, 4
        %v1393 = vmax.f32 %v1391, %v1392
        %v1394 = vrot.slane %v1393, 2
        %v1395 = vmax.f32 %v1393, %v1394
        %v1396 = vrot.slane %v1395, 1
        %v1397 = vmax.f32 %v1395, %v1396
        %v1398 = vsel %vm684, %v1018, -inf
        %v1399 = vrot.slane %v1398, 4
        %v1400 = vmax.f32 %v1398, %v1399
        %v1401 = vrot.slane %v1400, 2
        %v1402 = vmax.f32 %v1400, %v1401
        %v1403 = vrot.slane %v1402, 1
        %v1404 = vmax.f32 %v1402, %v1403
        %v1405 = vsel %vm684, %v1023, -inf
        %v1406 = vrot.slane %v1405, 4
        %v1407 = vmax.f32 %v1405, %v1406
        %v1408 = vrot.slane %v1407, 2
        %v1409 = vmax.f32 %v1407, %v1408
        %v1410 = vrot.slane %v1409, 1
        %v1411 = vmax.f32 %v1409, %v1410
        %v1412 = vsel %vm684, %v1028, -inf
        %v1413 = vrot.slane %v1412, 4
        %v1414 = vmax.f32 %v1412, %v1413
        %v1415 = vrot.slane %v1414, 2
        %v1416 = vmax.f32 %v1414, %v1415
        %v1417 = vrot.slane %v1416, 1
        %v1418 = vmax.f32 %v1416, %v1417
        %v1419 = vsel %vm684, %v1033, -inf
        %v1420 = vrot.slane %v1419, 4
        %v1421 = vmax.f32 %v1419, %v1420
        %v1422 = vrot.slane %v1421, 2
        %v1423 = vmax.f32 %v1421, %v1422
        %v1424 = vrot.slane %v1423, 1
        %v1425 = vmax.f32 %v1423, %v1424
        %v1426 = vsel %vm684, %v1038, -inf
        %v1427 = vrot.slane %v1426, 4
        %v1428 = vmax.f32 %v1426, %v1427
        %v1429 = vrot.slane %v1428, 2
        %v1430 = vmax.f32 %v1428, %v1429
        %v1431 = vrot.slane %v1430, 1
        %v1432 = vmax.f32 %v1430, %v1431
        %v1433 = vsel %vm684, %v1043, -inf
        %v1434 = vrot.slane %v1433, 4
        %v1435 = vmax.f32 %v1433, %v1434
        %v1436 = vrot.slane %v1435, 2
        %v1437 = vmax.f32 %v1435, %v1436
        %v1438 = vrot.slane %v1437, 1
        %v1439 = vmax.f32 %v1437, %v1438
        %v1440 = vsel %vm684, %v1048, -inf
        %v1441 = vrot.slane %v1440, 4
        %v1442 = vmax.f32 %v1440, %v1441
        %v1443 = vrot.slane %v1442, 2
        %v1444 = vmax.f32 %v1442, %v1443
        %v1445 = vrot.slane %v1444, 1
        %v1446 = vmax.f32 %v1444, %v1445
        %v1447 = vsel %vm684, %v1053, -inf
        %v1448 = vrot.slane %v1447, 4
        %v1449 = vmax.f32 %v1447, %v1448
        %v1450 = vrot.slane %v1449, 2
        %v1451 = vmax.f32 %v1449, %v1450
        %v1452 = vrot.slane %v1451, 1
        %v1453 = vmax.f32 %v1451, %v1452
        %v1454 = vsel %vm684, %v1058, -inf
        %v1455 = vrot.slane %v1454, 4
        %v1456 = vmax.f32 %v1454, %v1455
        %v1457 = vrot.slane %v1456, 2
        %v1458 = vmax.f32 %v1456, %v1457
        %v1459 = vrot.slane %v1458, 1
        %v1460 = vmax.f32 %v1458, %v1459
        %v1461 = vsel %vm684, %v1063, -inf
        %v1462 = vrot.slane %v1461, 4
        %v1463 = vmax.f32 %v1461, %v1462
        %v1464 = vrot.slane %v1463, 2
        %v1465 = vmax.f32 %v1463, %v1464
        %v1466 = vrot.slane %v1465, 1
        %v1467 = vmax.f32 %v1465, %v1466
        %v1468 = vsel %vm684, %v1068, -inf
        %v1469 = vrot.slane %v1468, 4
        %v1470 = vmax.f32 %v1468, %v1469
        %v1471 = vrot.slane %v1470, 2
        %v1472 = vmax.f32 %v1470, %v1471
        %v1473 = vrot.slane %v1472, 1
        %v1474 = vmax.f32 %v1472, %v1473
        %v1475 = vsub.f32 %v993, %v1369
        %v1476 = vsub.f32 %v998, %v1376
        %v1477 = vsub.f32 %v1003, %v1383
        %v1478 = vsub.f32 %v1008, %v1390
        %v1479 = vsub.f32 %v1013, %v1397
        %v1480 = vsub.f32 %v1018, %v1404
        %v1481 = vsub.f32 %v1023, %v1411
        %v1482 = vsub.f32 %v1028, %v1418
        %v1483 = vsub.f32 %v1033, %v1425
        %v1484 = vsub.f32 %v1038, %v1432
        %v1485 = vsub.f32 %v1043, %v1439
        %v1486 = vsub.f32 %v1048, %v1446
        %v1487 = vsub.f32 %v1053, %v1453
        %v1488 = vsub.f32 %v1058, %v1460
        %v1489 = vsub.f32 %v1063, %v1467
        %v1490 = vsub.f32 %v1068, %v1474
        %v1491 = vmul.f32 %v1475, 1.442695
        %v1492 = vpow.pop %v1491
        %v1493 = vmul.f32 %v1476, 1.442695
        %v1494 = vpow.pop %v1493
        %v1495 = vmul.f32 %v1477, 1.442695
        %v1496 = vpow.pop %v1495
        %v1497 = vmul.f32 %v1478, 1.442695
        %v1498 = vpow.pop %v1497
        %v1499 = vmul.f32 %v1479, 1.442695
        %v1500 = vpow.pop %v1499
        %v1501 = vmul.f32 %v1480, 1.442695
        %v1502 = vpow.pop %v1501
        %v1503 = vmul.f32 %v1481, 1.442695
        %v1504 = vpow.pop %v1503
        %v1505 = vmul.f32 %v1482, 1.442695
        %v1506 = vpow.pop %v1505
        %v1507 = vmul.f32 %v1483, 1.442695
        %v1508 = vpow.pop %v1507
        %v1509 = vmul.f32 %v1484, 1.442695
        %v1510 = vpow.pop %v1509
        %v1511 = vmul.f32 %v1485, 1.442695
        %v1512 = vpow.pop %v1511
        %v1513 = vmul.f32 %v1486, 1.442695
        %v1514 = vpow.pop %v1513
        %v1515 = vmul.f32 %v1487, 1.442695
        %v1516 = vpow.pop %v1515
        %v1517 = vmul.f32 %v1488, 1.442695
        %v1518 = vpow.pop %v1517
        %v1519 = vmul.f32 %v1489, 1.442695
        %v1520 = vpow.pop %v1519
        %v1521 = vmul.f32 %v1490, 1.442695
        %v1522 = vpow.pop %v1521
        %v1523 = vsel %vm684, %v1492, 0.0
        %v1524 = vrot.slane %v1523, 4
        %v1525 = vadd.f32 %v1523, %v1524
        %v1526 = vrot.slane %v1525, 2
        %v1527 = vadd.f32 %v1525, %v1526
        %v1528 = vrot.slane %v1527, 1
        %v1529 = vadd.f32 %v1527, %v1528
        %v1530 = vsel %vm684, %v1494, 0.0
        %v1531 = vrot.slane %v1530, 4
        %v1532 = vadd.f32 %v1530, %v1531
        %v1533 = vrot.slane %v1532, 2
        %v1534 = vadd.f32 %v1532, %v1533
        %v1535 = vrot.slane %v1534, 1
        %v1536 = vadd.f32 %v1534, %v1535
        %v1537 = vsel %vm684, %v1496, 0.0
        %v1538 = vrot.slane %v1537, 4
        %v1539 = vadd.f32 %v1537, %v1538
        %v1540 = vrot.slane %v1539, 2
        %v1541 = vadd.f32 %v1539, %v1540
        %v1542 = vrot.slane %v1541, 1
        %v1543 = vadd.f32 %v1541, %v1542
        %v1544 = vsel %vm684, %v1498, 0.0
        %v1545 = vrot.slane %v1544, 4
        %v1546 = vadd.f32 %v1544, %v1545
        %v1547 = vrot.slane %v1546, 2
        %v1548 = vadd.f32 %v1546, %v1547
        %v1549 = vrot.slane %v1548, 1
        %v1550 = vadd.f32 %v1548, %v1549
        %v1551 = vsel %vm684, %v1500, 0.0
        %v1552 = vrot.slane %v1551, 4
        %v1553 = vadd.f32 %v1551, %v1552
        %v1554 = vrot.slane %v1553, 2
        %v1555 = vadd.f32 %v1553, %v1554
        %v1556 = vrot.slane %v1555, 1
        %v1557 = vadd.f32 %v1555, %v1556
        %v1558 = vsel %vm684, %v1502, 0.0
        %v1559 = vrot.slane %v1558, 4
        %v1560 = vadd.f32 %v1558, %v1559
        %v1561 = vrot.slane %v1560, 2
        %v1562 = vadd.f32 %v1560, %v1561
        %v1563 = vrot.slane %v1562, 1
        %v1564 = vadd.f32 %v1562, %v1563
        %v1565 = vsel %vm684, %v1504, 0.0
        %v1566 = vrot.slane %v1565, 4
        %v1567 = vadd.f32 %v1565, %v1566
        %v1568 = vrot.slane %v1567, 2
        %v1569 = vadd.f32 %v1567, %v1568
        %v1570 = vrot.slane %v1569, 1
        %v1571 = vadd.f32 %v1569, %v1570
        %v1572 = vsel %vm684, %v1506, 0.0
        %v1573 = vrot.slane %v1572, 4
        %v1574 = vadd.f32 %v1572, %v1573
        %v1575 = vrot.slane %v1574, 2
        %v1576 = vadd.f32 %v1574, %v1575
        %v1577 = vrot.slane %v1576, 1
        %v1578 = vadd.f32 %v1576, %v1577
        %v1579 = vsel %vm684, %v1508, 0.0
        %v1580 = vrot.slane %v1579, 4
        %v1581 = vadd.f32 %v1579, %v1580
        %v1582 = vrot.slane %v1581, 2
        %v1583 = vadd.f32 %v1581, %v1582
        %v1584 = vrot.slane %v1583, 1
        %v1585 = vadd.f32 %v1583, %v1584
        %v1586 = vsel %vm684, %v1510, 0.0
        %v1587 = vrot.slane %v1586, 4
        %v1588 = vadd.f32 %v1586, %v1587
        %v1589 = vrot.slane %v1588, 2
        %v1590 = vadd.f32 %v1588, %v1589
        %v1591 = vrot.slane %v1590, 1
        %v1592 = vadd.f32 %v1590, %v1591
        %v1593 = vsel %vm684, %v1512, 0.0
        %v1594 = vrot.slane %v1593, 4
        %v1595 = vadd.f32 %v1593, %v1594
        %v1596 = vrot.slane %v1595, 2
        %v1597 = vadd.f32 %v1595, %v1596
        %v1598 = vrot.slane %v1597, 1
        %v1599 = vadd.f32 %v1597, %v1598
        %v1600 = vsel %vm684, %v1514, 0.0
        %v1601 = vrot.slane %v1600, 4
        %v1602 = vadd.f32 %v1600, %v1601
        %v1603 = vrot.slane %v1602, 2
        %v1604 = vadd.f32 %v1602, %v1603
        %v1605 = vrot.slane %v1604, 1
        %v1606 = vadd.f32 %v1604, %v1605
        %v1607 = vsel %vm684, %v1516, 0.0
        %v1608 = vrot.slane %v1607, 4
        %v1609 = vadd.f32 %v1607, %v1608
        %v1610 = vrot.slane %v1609, 2
        %v1611 = vadd.f32 %v1609, %v1610
        %v1612 = vrot.slane %v1611, 1
        %v1613 = vadd.f32 %v1611, %v1612
        %v1614 = vsel %vm684, %v1518, 0.0
        %v1615 = vrot.slane %v1614, 4
        %v1616 = vadd.f32 %v1614, %v1615
        %v1617 = vrot.slane %v1616, 2
        %v1618 = vadd.f32 %v1616, %v1617
        %v1619 = vrot.slane %v1618, 1
        %v1620 = vadd.f32 %v1618, %v1619
        %v1621 = vsel %vm684, %v1520, 0.0
        %v1622 = vrot.slane %v1621, 4
        %v1623 = vadd.f32 %v1621, %v1622
        %v1624 = vrot.slane %v1623, 2
        %v1625 = vadd.f32 %v1623, %v1624
        %v1626 = vrot.slane %v1625, 1
        %v1627 = vadd.f32 %v1625, %v1626
        %v1628 = vsel %vm684, %v1522, 0.0
        %v1629 = vrot.slane %v1628, 4
        %v1630 = vadd.f32 %v1628, %v1629
        %v1631 = vrot.slane %v1630, 2
        %v1632 = vadd.f32 %v1630, %v1631
        %v1633 = vrot.slane %v1632, 1
        %v1634 = vadd.f32 %v1632, %v1633
        %v1635 = vrcp.pop %v1529
        %v1636 = vmul.f32 %v1492, %v1635
        %v1637 = vrcp.pop %v1536
        %v1638 = vmul.f32 %v1494, %v1637
        %v1639 = vrcp.pop %v1543
        %v1640 = vmul.f32 %v1496, %v1639
        %v1641 = vrcp.pop %v1550
        %v1642 = vmul.f32 %v1498, %v1641
        %v1643 = vrcp.pop %v1557
        %v1644 = vmul.f32 %v1500, %v1643
        %v1645 = vrcp.pop %v1564
        %v1646 = vmul.f32 %v1502, %v1645
        %v1647 = vrcp.pop %v1571
        %v1648 = vmul.f32 %v1504, %v1647
        %v1649 = vrcp.pop %v1578
        %v1650 = vmul.f32 %v1506, %v1649
        %v1651 = vrcp.pop %v1585
        %v1652 = vmul.f32 %v1508, %v1651
        %v1653 = vrcp.pop %v1592
        %v1654 = vmul.f32 %v1510, %v1653
        %v1655 = vrcp.pop %v1599
        %v1656 = vmul.f32 %v1512, %v1655
        %v1657 = vrcp.pop %v1606
        %v1658 = vmul.f32 %v1514, %v1657
        %v1659 = vrcp.pop %v1613
        %v1660 = vmul.f32 %v1516, %v1659
        %v1661 = vrcp.pop %v1620
        %v1662 = vmul.f32 %v1518, %v1661
        %v1663 = vrcp.pop %v1627
        %v1664 = vmul.f32 %v1520, %v1663
        %v1665 = vrcp.pop %v1634
        %v1666 = vmul.f32 %v1522, %v1665
        %v1667 = vmul.f32 %v650, %v1636
        %v1668 = vmul.f32 %v651, %v1638
        %v1669 = vmul.f32 %v652, %v1640
        %v1670 = vmul.f32 %v653, %v1642
        %v1671 = vmul.f32 %v654, %v1644
        %v1672 = vmul.f32 %v655, %v1646
        %v1673 = vmul.f32 %v656, %v1648
        %v1674 = vmul.f32 %v657, %v1650
        %v1675 = vmul.f32 %v658, %v1652
        %v1676 = vmul.f32 %v659, %v1654
        %v1677 = vmul.f32 %v660, %v1656
        %v1678 = vmul.f32 %v661, %v1658
        %v1679 = vmul.f32 %v662, %v1660
        %v1680 = vmul.f32 %v663, %v1662
        %v1681 = vmul.f32 %v664, %v1664
        %v1682 = vmul.f32 %v665, %v1666
        %v1683 = vsel %vm684, %v1667, 0.0
        %v1684 = vrot.slane %v1683, 4
        %v1685 = vadd.f32 %v1683, %v1684
        %v1686 = vrot.slane %v1685, 2
        %v1687 = vadd.f32 %v1685, %v1686
        %v1688 = vrot.slane %v1687, 1
        %v1689 = vadd.f32 %v1687, %v1688
        %v1690 = vsel %vm684, %v1668, 0.0
        %v1691 = vrot.slane %v1690, 4
        %v1692 = vadd.f32 %v1690, %v1691
        %v1693 = vrot.slane %v1692, 2
        %v1694 = vadd.f32 %v1692, %v1693
        %v1695 = vrot.slane %v1694, 1
        %v1696 = vadd.f32 %v1694, %v1695
        %v1697 = vsel %vm684, %v1669, 0.0
        %v1698 = vrot.slane %v1697, 4
        %v1699 = vadd.f32 %v1697, %v1698
        %v1700 = vrot.slane %v1699, 2
        %v1701 = vadd.f32 %v1699, %v1700
        %v1702 = vrot.slane %v1701, 1
        %v1703 = vadd.f32 %v1701, %v1702
        %v1704 = vsel %vm684, %v1670, 0.0
        %v1705 = vrot.slane %v1704, 4
        %v1706 = vadd.f32 %v1704, %v1705
        %v1707 = vrot.slane %v1706, 2
        %v1708 = vadd.f32 %v1706, %v1707
        %v1709 = vrot.slane %v1708, 1
        %v1710 = vadd.f32 %v1708, %v1709
        %v1711 = vsel %vm684, %v1671, 0.0
        %v1712 = vrot.slane %v1711, 4
        %v1713 = vadd.f32 %v1711, %v1712
        %v1714 = vrot.slane %v1713, 2
        %v1715 = vadd.f32 %v1713, %v1714
        %v1716 = vrot.slane %v1715, 1
        %v1717 = vadd.f32 %v1715, %v1716
        %v1718 = vsel %vm684, %v1672, 0.0
        %v1719 = vrot.slane %v1718, 4
        %v1720 = vadd.f32 %v1718, %v1719
        %v1721 = vrot.slane %v1720, 2
        %v1722 = vadd.f32 %v1720, %v1721
        %v1723 = vrot.slane %v1722, 1
        %v1724 = vadd.f32 %v1722, %v1723
        %v1725 = vsel %vm684, %v1673, 0.0
        %v1726 = vrot.slane %v1725, 4
        %v1727 = vadd.f32 %v1725, %v1726
        %v1728 = vrot.slane %v1727, 2
        %v1729 = vadd.f32 %v1727, %v1728
        %v1730 = vrot.slane %v1729, 1
        %v1731 = vadd.f32 %v1729, %v1730
        %v1732 = vsel %vm684, %v1674, 0.0
        %v1733 = vrot.slane %v1732, 4
        %v1734 = vadd.f32 %v1732, %v1733
        %v1735 = vrot.slane %v1734, 2
        %v1736 = vadd.f32 %v1734, %v1735
        %v1737 = vrot.slane %v1736, 1
        %v1738 = vadd.f32 %v1736, %v1737
        %v1739 = vsel %vm684, %v1675, 0.0
        %v1740 = vrot.slane %v1739, 4
        %v1741 = vadd.f32 %v1739, %v1740
        %v1742 = vrot.slane %v1741, 2
        %v1743 = vadd.f32 %v1741, %v1742
        %v1744 = vrot.slane %v1743, 1
        %v1745 = vadd.f32 %v1743, %v1744
        %v1746 = vsel %vm684, %v1676, 0.0
        %v1747 = vrot.slane %v1746, 4
        %v1748 = vadd.f32 %v1746, %v1747
        %v1749 = vrot.slane %v1748, 2
        %v1750 = vadd.f32 %v1748, %v1749
        %v1751 = vrot.slane %v1750, 1
        %v1752 = vadd.f32 %v1750, %v1751
        %v1753 = vsel %vm684, %v1677, 0.0
        %v1754 = vrot.slane %v1753, 4
        %v1755 = vadd.f32 %v1753, %v1754
        %v1756 = vrot.slane %v1755, 2
        %v1757 = vadd.f32 %v1755, %v1756
        %v1758 = vrot.slane %v1757, 1
        %v1759 = vadd.f32 %v1757, %v1758
        %v1760 = vsel %vm684, %v1678, 0.0
        %v1761 = vrot.slane %v1760, 4
        %v1762 = vadd.f32 %v1760, %v1761
        %v1763 = vrot.slane %v1762, 2
        %v1764 = vadd.f32 %v1762, %v1763
        %v1765 = vrot.slane %v1764, 1
        %v1766 = vadd.f32 %v1764, %v1765
        %v1767 = vsel %vm684, %v1679, 0.0
        %v1768 = vrot.slane %v1767, 4
        %v1769 = vadd.f32 %v1767, %v1768
        %v1770 = vrot.slane %v1769, 2
        %v1771 = vadd.f32 %v1769, %v1770
        %v1772 = vrot.slane %v1771, 1
        %v1773 = vadd.f32 %v1771, %v1772
        %v1774 = vsel %vm684, %v1680, 0.0
        %v1775 = vrot.slane %v1774, 4
        %v1776 = vadd.f32 %v1774, %v1775
        %v1777 = vrot.slane %v1776, 2
        %v1778 = vadd.f32 %v1776, %v1777
        %v1779 = vrot.slane %v1778, 1
        %v1780 = vadd.f32 %v1778, %v1779
        %v1781 = vsel %vm684, %v1681, 0.0
        %v1782 = vrot.slane %v1781, 4
        %v1783 = vadd.f32 %v1781, %v1782
        %v1784 = vrot.slane %v1783, 2
        %v1785 = vadd.f32 %v1783, %v1784
        %v1786 = vrot.slane %v1785, 1
        %v1787 = vadd.f32 %v1785, %v1786
        %v1788 = vsel %vm684, %v1682, 0.0
        %v1789 = vrot.slane %v1788, 4
        %v1790 = vadd.f32 %v1788, %v1789
        %v1791 = vrot.slane %v1790, 2
        %v1792 = vadd.f32 %v1790, %v1791
        %v1793 = vrot.slane %v1792, 1
        %v1794 = vadd.f32 %v1792, %v1793
        %v1795 = vsel %vm684, %v1285, -inf
        %v1796 = vrot.slane %v1795, 4
        %v1797 = vmax.f32 %v1795, %v1796
        %v1798 = vrot.slane %v1797, 2
        %v1799 = vmax.f32 %v1797, %v1798
        %v1800 = vrot.slane %v1799, 1
        %v1801 = vmax.f32 %v1799, %v1800
        %v1802 = vsel %vm684, %v1290, -inf
        %v1803 = vrot.slane %v1802, 4
        %v1804 = vmax.f32 %v1802, %v1803
        %v1805 = vrot.slane %v1804, 2
        %v1806 = vmax.f32 %v1804, %v1805
        %v1807 = vrot.slane %v1806, 1
        %v1808 = vmax.f32 %v1806, %v1807
        %v1809 = vsel %vm684, %v1295, -inf
        %v1810 = vrot.slane %v1809, 4
        %v1811 = vmax.f32 %v1809, %v1810
        %v1812 = vrot.slane %v1811, 2
        %v1813 = vmax.f32 %v1811, %v1812
        %v1814 = vrot.slane %v1813, 1
        %v1815 = vmax.f32 %v1813, %v1814
        %v1816 = vsel %vm684, %v1300, -inf
        %v1817 = vrot.slane %v1816, 4
        %v1818 = vmax.f32 %v1816, %v1817
        %v1819 = vrot.slane %v1818, 2
        %v1820 = vmax.f32 %v1818, %v1819
        %v1821 = vrot.slane %v1820, 1
        %v1822 = vmax.f32 %v1820, %v1821
        %v1823 = vsel %vm684, %v1305, -inf
        %v1824 = vrot.slane %v1823, 4
        %v1825 = vmax.f32 %v1823, %v1824
        %v1826 = vrot.slane %v1825, 2
        %v1827 = vmax.f32 %v1825, %v1826
        %v1828 = vrot.slane %v1827, 1
        %v1829 = vmax.f32 %v1827, %v1828
        %v1830 = vsel %vm684, %v1310, -inf
        %v1831 = vrot.slane %v1830, 4
        %v1832 = vmax.f32 %v1830, %v1831
        %v1833 = vrot.slane %v1832, 2
        %v1834 = vmax.f32 %v1832, %v1833
        %v1835 = vrot.slane %v1834, 1
        %v1836 = vmax.f32 %v1834, %v1835
        %v1837 = vsel %vm684, %v1315, -inf
        %v1838 = vrot.slane %v1837, 4
        %v1839 = vmax.f32 %v1837, %v1838
        %v1840 = vrot.slane %v1839, 2
        %v1841 = vmax.f32 %v1839, %v1840
        %v1842 = vrot.slane %v1841, 1
        %v1843 = vmax.f32 %v1841, %v1842
        %v1844 = vsel %vm684, %v1320, -inf
        %v1845 = vrot.slane %v1844, 4
        %v1846 = vmax.f32 %v1844, %v1845
        %v1847 = vrot.slane %v1846, 2
        %v1848 = vmax.f32 %v1846, %v1847
        %v1849 = vrot.slane %v1848, 1
        %v1850 = vmax.f32 %v1848, %v1849
        %v1851 = vsel %vm684, %v1325, -inf
        %v1852 = vrot.slane %v1851, 4
        %v1853 = vmax.f32 %v1851, %v1852
        %v1854 = vrot.slane %v1853, 2
        %v1855 = vmax.f32 %v1853, %v1854
        %v1856 = vrot.slane %v1855, 1
        %v1857 = vmax.f32 %v1855, %v1856
        %v1858 = vsel %vm684, %v1330, -inf
        %v1859 = vrot.slane %v1858, 4
        %v1860 = vmax.f32 %v1858, %v1859
        %v1861 = vrot.slane %v1860, 2
        %v1862 = vmax.f32 %v1860, %v1861
        %v1863 = vrot.slane %v1862, 1
        %v1864 = vmax.f32 %v1862, %v1863
        %v1865 = vsel %vm684, %v1335, -inf
        %v1866 = vrot.slane %v1865, 4
        %v1867 = vmax.f32 %v1865, %v1866
        %v1868 = vrot.slane %v1867, 2
        %v1869 = vmax.f32 %v1867, %v1868
        %v1870 = vrot.slane %v1869, 1
        %v1871 = vmax.f32 %v1869, %v1870
        %v1872 = vsel %vm684, %v1340, -inf
        %v1873 = vrot.slane %v1872, 4
        %v1874 = vmax.f32 %v1872, %v1873
        %v1875 = vrot.slane %v1874, 2
        %v1876 = vmax.f32 %v1874, %v1875
        %v1877 = vrot.slane %v1876, 1
        %v1878 = vmax.f32 %v1876, %v1877
        %v1879 = vsel %vm684, %v1345, -inf
        %v1880 = vrot.slane %v1879, 4
        %v1881 = vmax.f32 %v1879, %v1880
        %v1882 = vrot.slane %v1881, 2
        %v1883 = vmax.f32 %v1881, %v1882
        %v1884 = vrot.slane %v1883, 1
        %v1885 = vmax.f32 %v1883, %v1884
        %v1886 = vsel %vm684, %v1350, -inf
        %v1887 = vrot.slane %v1886, 4
        %v1888 = vmax.f32 %v1886, %v1887
        %v1889 = vrot.slane %v1888, 2
        %v1890 = vmax.f32 %v1888, %v1889
        %v1891 = vrot.slane %v1890, 1
        %v1892 = vmax.f32 %v1890, %v1891
        %v1893 = vsel %vm684, %v1355, -inf
        %v1894 = vrot.slane %v1893, 4
        %v1895 = vmax.f32 %v1893, %v1894
        %v1896 = vrot.slane %v1895, 2
        %v1897 = vmax.f32 %v1895, %v1896
        %v1898 = vrot.slane %v1897, 1
        %v1899 = vmax.f32 %v1897, %v1898
        %v1900 = vsel %vm684, %v1360, -inf
        %v1901 = vrot.slane %v1900, 4
        %v1902 = vmax.f32 %v1900, %v1901
        %v1903 = vrot.slane %v1902, 2
        %v1904 = vmax.f32 %v1902, %v1903
        %v1905 = vrot.slane %v1904, 1
        %v1906 = vmax.f32 %v1904, %v1905
        %v1907 = vsub.f32 %v1285, %v1801
        %v1908 = vsub.f32 %v1290, %v1808
        %v1909 = vsub.f32 %v1295, %v1815
        %v1910 = vsub.f32 %v1300, %v1822
        %v1911 = vsub.f32 %v1305, %v1829
        %v1912 = vsub.f32 %v1310, %v1836
        %v1913 = vsub.f32 %v1315, %v1843
        %v1914 = vsub.f32 %v1320, %v1850
        %v1915 = vsub.f32 %v1325, %v1857
        %v1916 = vsub.f32 %v1330, %v1864
        %v1917 = vsub.f32 %v1335, %v1871
        %v1918 = vsub.f32 %v1340, %v1878
        %v1919 = vsub.f32 %v1345, %v1885
        %v1920 = vsub.f32 %v1350, %v1892
        %v1921 = vsub.f32 %v1355, %v1899
        %v1922 = vsub.f32 %v1360, %v1906
        %v1923 = vmul.f32 %v1907, 1.442695
        %v1924 = vpow.pop %v1923
        %v1925 = vmul.f32 %v1908, 1.442695
        %v1926 = vpow.pop %v1925
        %v1927 = vmul.f32 %v1909, 1.442695
        %v1928 = vpow.pop %v1927
        %v1929 = vmul.f32 %v1910, 1.442695
        %v1930 = vpow.pop %v1929
        %v1931 = vmul.f32 %v1911, 1.442695
        %v1932 = vpow.pop %v1931
        %v1933 = vmul.f32 %v1912, 1.442695
        %v1934 = vpow.pop %v1933
        %v1935 = vmul.f32 %v1913, 1.442695
        %v1936 = vpow.pop %v1935
        %v1937 = vmul.f32 %v1914, 1.442695
        %v1938 = vpow.pop %v1937
        %v1939 = vmul.f32 %v1915, 1.442695
        %v1940 = vpow.pop %v1939
        %v1941 = vmul.f32 %v1916, 1.442695
        %v1942 = vpow.pop %v1941
        %v1943 = vmul.f32 %v1917, 1.442695
        %v1944 = vpow.pop %v1943
        %v1945 = vmul.f32 %v1918, 1.442695
        %v1946 = vpow.pop %v1945
        %v1947 = vmul.f32 %v1919, 1.442695
        %v1948 = vpow.pop %v1947
        %v1949 = vmul.f32 %v1920, 1.442695
        %v1950 = vpow.pop %v1949
        %v1951 = vmul.f32 %v1921, 1.442695
        %v1952 = vpow.pop %v1951
        %v1953 = vmul.f32 %v1922, 1.442695
        %v1954 = vpow.pop %v1953
        %v1955 = vsel %vm684, %v1924, 0.0
        %v1956 = vrot.slane %v1955, 4
        %v1957 = vadd.f32 %v1955, %v1956
        %v1958 = vrot.slane %v1957, 2
        %v1959 = vadd.f32 %v1957, %v1958
        %v1960 = vrot.slane %v1959, 1
        %v1961 = vadd.f32 %v1959, %v1960
        %v1962 = vsel %vm684, %v1926, 0.0
        %v1963 = vrot.slane %v1962, 4
        %v1964 = vadd.f32 %v1962, %v1963
        %v1965 = vrot.slane %v1964, 2
        %v1966 = vadd.f32 %v1964, %v1965
        %v1967 = vrot.slane %v1966, 1
        %v1968 = vadd.f32 %v1966, %v1967
        %v1969 = vsel %vm684, %v1928, 0.0
        %v1970 = vrot.slane %v1969, 4
        %v1971 = vadd.f32 %v1969, %v1970
        %v1972 = vrot.slane %v1971, 2
        %v1973 = vadd.f32 %v1971, %v1972
        %v1974 = vrot.slane %v1973, 1
        %v1975 = vadd.f32 %v1973, %v1974
        %v1976 = vsel %vm684, %v1930, 0.0
        %v1977 = vrot.slane %v1976, 4
        %v1978 = vadd.f32 %v1976, %v1977
        %v1979 = vrot.slane %v1978, 2
        %v1980 = vadd.f32 %v1978, %v1979
        %v1981 = vrot.slane %v1980, 1
        %v1982 = vadd.f32 %v1980, %v1981
        %v1983 = vsel %vm684, %v1932, 0.0
        %v1984 = vrot.slane %v1983, 4
        %v1985 = vadd.f32 %v1983, %v1984
        %v1986 = vrot.slane %v1985, 2
        %v1987 = vadd.f32 %v1985, %v1986
        %v1988 = vrot.slane %v1987, 1
        %v1989 = vadd.f32 %v1987, %v1988
        %v1990 = vsel %vm684, %v1934, 0.0
        %v1991 = vrot.slane %v1990, 4
        %v1992 = vadd.f32 %v1990, %v1991
        %v1993 = vrot.slane %v1992, 2
        %v1994 = vadd.f32 %v1992, %v1993
        %v1995 = vrot.slane %v1994, 1
        %v1996 = vadd.f32 %v1994, %v1995
        %v1997 = vsel %vm684, %v1936, 0.0
        %v1998 = vrot.slane %v1997, 4
        %v1999 = vadd.f32 %v1997, %v1998
        %v2000 = vrot.slane %v1999, 2
        %v2001 = vadd.f32 %v1999, %v2000
        %v2002 = vrot.slane %v2001, 1
        %v2003 = vadd.f32 %v2001, %v2002
        %v2004 = vsel %vm684, %v1938, 0.0
        %v2005 = vrot.slane %v2004, 4
        %v2006 = vadd.f32 %v2004, %v2005
        %v2007 = vrot.slane %v2006, 2
        %v2008 = vadd.f32 %v2006, %v2007
        %v2009 = vrot.slane %v2008, 1
        %v2010 = vadd.f32 %v2008, %v2009
        %v2011 = vsel %vm684, %v1940, 0.0
        %v2012 = vrot.slane %v2011, 4
        %v2013 = vadd.f32 %v2011, %v2012
        %v2014 = vrot.slane %v2013, 2
        %v2015 = vadd.f32 %v2013, %v2014
        %v2016 = vrot.slane %v2015, 1
        %v2017 = vadd.f32 %v2015, %v2016
        %v2018 = vsel %vm684, %v1942, 0.0
        %v2019 = vrot.slane %v2018, 4
        %v2020 = vadd.f32 %v2018, %v2019
        %v2021 = vrot.slane %v2020, 2
        %v2022 = vadd.f32 %v2020, %v2021
        %v2023 = vrot.slane %v2022, 1
        %v2024 = vadd.f32 %v2022, %v2023
        %v2025 = vsel %vm684, %v1944, 0.0
        %v2026 = vrot.slane %v2025, 4
        %v2027 = vadd.f32 %v2025, %v2026
        %v2028 = vrot.slane %v2027, 2
        %v2029 = vadd.f32 %v2027, %v2028
        %v2030 = vrot.slane %v2029, 1
        %v2031 = vadd.f32 %v2029, %v2030
        %v2032 = vsel %vm684, %v1946, 0.0
        %v2033 = vrot.slane %v2032, 4
        %v2034 = vadd.f32 %v2032, %v2033
        %v2035 = vrot.slane %v2034, 2
        %v2036 = vadd.f32 %v2034, %v2035
        %v2037 = vrot.slane %v2036, 1
        %v2038 = vadd.f32 %v2036, %v2037
        %v2039 = vsel %vm684, %v1948, 0.0
        %v2040 = vrot.slane %v2039, 4
        %v2041 = vadd.f32 %v2039, %v2040
        %v2042 = vrot.slane %v2041, 2
        %v2043 = vadd.f32 %v2041, %v2042
        %v2044 = vrot.slane %v2043, 1
        %v2045 = vadd.f32 %v2043, %v2044
        %v2046 = vsel %vm684, %v1950, 0.0
        %v2047 = vrot.slane %v2046, 4
        %v2048 = vadd.f32 %v2046, %v2047
        %v2049 = vrot.slane %v2048, 2
        %v2050 = vadd.f32 %v2048, %v2049
        %v2051 = vrot.slane %v2050, 1
        %v2052 = vadd.f32 %v2050, %v2051
        %v2053 = vsel %vm684, %v1952, 0.0
        %v2054 = vrot.slane %v2053, 4
        %v2055 = vadd.f32 %v2053, %v2054
        %v2056 = vrot.slane %v2055, 2
        %v2057 = vadd.f32 %v2055, %v2056
        %v2058 = vrot.slane %v2057, 1
        %v2059 = vadd.f32 %v2057, %v2058
        %v2060 = vsel %vm684, %v1954, 0.0
        %v2061 = vrot.slane %v2060, 4
        %v2062 = vadd.f32 %v2060, %v2061
        %v2063 = vrot.slane %v2062, 2
        %v2064 = vadd.f32 %v2062, %v2063
        %v2065 = vrot.slane %v2064, 1
        %v2066 = vadd.f32 %v2064, %v2065
        %v2067 = vrcp.pop %v1961
        %v2068 = vmul.f32 %v1924, %v2067
        %v2069 = vrcp.pop %v1968
        %v2070 = vmul.f32 %v1926, %v2069
        %v2071 = vrcp.pop %v1975
        %v2072 = vmul.f32 %v1928, %v2071
        %v2073 = vrcp.pop %v1982
        %v2074 = vmul.f32 %v1930, %v2073
        %v2075 = vrcp.pop %v1989
        %v2076 = vmul.f32 %v1932, %v2075
        %v2077 = vrcp.pop %v1996
        %v2078 = vmul.f32 %v1934, %v2077
        %v2079 = vrcp.pop %v2003
        %v2080 = vmul.f32 %v1936, %v2079
        %v2081 = vrcp.pop %v2010
        %v2082 = vmul.f32 %v1938, %v2081
        %v2083 = vrcp.pop %v2017
        %v2084 = vmul.f32 %v1940, %v2083
        %v2085 = vrcp.pop %v2024
        %v2086 = vmul.f32 %v1942, %v2085
        %v2087 = vrcp.pop %v2031
        %v2088 = vmul.f32 %v1944, %v2087
        %v2089 = vrcp.pop %v2038
        %v2090 = vmul.f32 %v1946, %v2089
        %v2091 = vrcp.pop %v2045
        %v2092 = vmul.f32 %v1948, %v2091
        %v2093 = vrcp.pop %v2052
        %v2094 = vmul.f32 %v1950, %v2093
        %v2095 = vrcp.pop %v2059
        %v2096 = vmul.f32 %v1952, %v2095
        %v2097 = vrcp.pop %v2066
        %v2098 = vmul.f32 %v1954, %v2097
        %v2099 = vmul.f32 %v666, %v2068
        %v2100 = vmul.f32 %v667, %v2070
        %v2101 = vmul.f32 %v668, %v2072
        %v2102 = vmul.f32 %v669, %v2074
        %v2103 = vmul.f32 %v670, %v2076
        %v2104 = vmul.f32 %v671, %v2078
        %v2105 = vmul.f32 %v672, %v2080
        %v2106 = vmul.f32 %v673, %v2082
        %v2107 = vmul.f32 %v674, %v2084
        %v2108 = vmul.f32 %v675, %v2086
        %v2109 = vmul.f32 %v676, %v2088
        %v2110 = vmul.f32 %v677, %v2090
        %v2111 = vmul.f32 %v678, %v2092
        %v2112 = vmul.f32 %v679, %v2094
        %v2113 = vmul.f32 %v680, %v2096
        %v2114 = vmul.f32 %v681, %v2098
        %v2115 = vsel %vm684, %v2099, 0.0
        %v2116 = vrot.slane %v2115, 4
        %v2117 = vadd.f32 %v2115, %v2116
        %v2118 = vrot.slane %v2117, 2
        %v2119 = vadd.f32 %v2117, %v2118
        %v2120 = vrot.slane %v2119, 1
        %v2121 = vadd.f32 %v2119, %v2120
        %v2122 = vsel %vm684, %v2100, 0.0
        %v2123 = vrot.slane %v2122, 4
        %v2124 = vadd.f32 %v2122, %v2123
        %v2125 = vrot.slane %v2124, 2
        %v2126 = vadd.f32 %v2124, %v2125
        %v2127 = vrot.slane %v2126, 1
        %v2128 = vadd.f32 %v2126, %v2127
        %v2129 = vsel %vm684, %v2101, 0.0
        %v2130 = vrot.slane %v2129, 4
        %v2131 = vadd.f32 %v2129, %v2130
        %v2132 = vrot.slane %v2131, 2
        %v2133 = vadd.f32 %v2131, %v2132
        %v2134 = vrot.slane %v2133, 1
        %v2135 = vadd.f32 %v2133, %v2134
        %v2136 = vsel %vm684, %v2102, 0.0
        %v2137 = vrot.slane %v2136, 4
        %v2138 = vadd.f32 %v2136, %v2137
        %v2139 = vrot.slane %v2138, 2
        %v2140 = vadd.f32 %v2138, %v2139
        %v2141 = vrot.slane %v2140, 1
        %v2142 = vadd.f32 %v2140, %v2141
        %v2143 = vsel %vm684, %v2103, 0.0
        %v2144 = vrot.slane %v2143, 4
        %v2145 = vadd.f32 %v2143, %v2144
        %v2146 = vrot.slane %v2145, 2
        %v2147 = vadd.f32 %v2145, %v2146
        %v2148 = vrot.slane %v2147, 1
        %v2149 = vadd.f32 %v2147, %v2148
        %v2150 = vsel %vm684, %v2104, 0.0
        %v2151 = vrot.slane %v2150, 4
        %v2152 = vadd.f32 %v2150, %v2151
        %v2153 = vrot.slane %v2152, 2
        %v2154 = vadd.f32 %v2152, %v2153
        %v2155 = vrot.slane %v2154, 1
        %v2156 = vadd.f32 %v2154, %v2155
        %v2157 = vsel %vm684, %v2105, 0.0
        %v2158 = vrot.slane %v2157, 4
        %v2159 = vadd.f32 %v2157, %v2158
        %v2160 = vrot.slane %v2159, 2
        %v2161 = vadd.f32 %v2159, %v2160
        %v2162 = vrot.slane %v2161, 1
        %v2163 = vadd.f32 %v2161, %v2162
        %v2164 = vsel %vm684, %v2106, 0.0
        %v2165 = vrot.slane %v2164, 4
        %v2166 = vadd.f32 %v2164, %v2165
        %v2167 = vrot.slane %v2166, 2
        %v2168 = vadd.f32 %v2166, %v2167
        %v2169 = vrot.slane %v2168, 1
        %v2170 = vadd.f32 %v2168, %v2169
        %v2171 = vsel %vm684, %v2107, 0.0
        %v2172 = vrot.slane %v2171, 4
        %v2173 = vadd.f32 %v2171, %v2172
        %v2174 = vrot.slane %v2173, 2
        %v2175 = vadd.f32 %v2173, %v2174
        %v2176 = vrot.slane %v2175, 1
        %v2177 = vadd.f32 %v2175, %v2176
        %v2178 = vsel %vm684, %v2108, 0.0
        %v2179 = vrot.slane %v2178, 4
        %v2180 = vadd.f32 %v2178, %v2179
        %v2181 = vrot.slane %v2180, 2
        %v2182 = vadd.f32 %v2180, %v2181
        %v2183 = vrot.slane %v2182, 1
        %v2184 = vadd.f32 %v2182, %v2183
        %v2185 = vsel %vm684, %v2109, 0.0
        %v2186 = vrot.slane %v2185, 4
        %v2187 = vadd.f32 %v2185, %v2186
        %v2188 = vrot.slane %v2187, 2
        %v2189 = vadd.f32 %v2187, %v2188
        %v2190 = vrot.slane %v2189, 1
        %v2191 = vadd.f32 %v2189, %v2190
        %v2192 = vsel %vm684, %v2110, 0.0
        %v2193 = vrot.slane %v2192, 4
        %v2194 = vadd.f32 %v2192, %v2193
        %v2195 = vrot.slane %v2194, 2
        %v2196 = vadd.f32 %v2194, %v2195
        %v2197 = vrot.slane %v2196, 1
        %v2198 = vadd.f32 %v2196, %v2197
        %v2199 = vsel %vm684, %v2111, 0.0
        %v2200 = vrot.slane %v2199, 4
        %v2201 = vadd.f32 %v2199, %v2200
        %v2202 = vrot.slane %v2201, 2
        %v2203 = vadd.f32 %v2201, %v2202
        %v2204 = vrot.slane %v2203, 1
        %v2205 = vadd.f32 %v2203, %v2204
        %v2206 = vsel %vm684, %v2112, 0.0
        %v2207 = vrot.slane %v2206, 4
        %v2208 = vadd.f32 %v2206, %v2207
        %v2209 = vrot.slane %v2208, 2
        %v2210 = vadd.f32 %v2208, %v2209
        %v2211 = vrot.slane %v2210, 1
        %v2212 = vadd.f32 %v2210, %v2211
        %v2213 = vsel %vm684, %v2113, 0.0
        %v2214 = vrot.slane %v2213, 4
        %v2215 = vadd.f32 %v2213, %v2214
        %v2216 = vrot.slane %v2215, 2
        %v2217 = vadd.f32 %v2215, %v2216
        %v2218 = vrot.slane %v2217, 1
        %v2219 = vadd.f32 %v2217, %v2218
        %v2220 = vsel %vm684, %v2114, 0.0
        %v2221 = vrot.slane %v2220, 4
        %v2222 = vadd.f32 %v2220, %v2221
        %v2223 = vrot.slane %v2222, 2
        %v2224 = vadd.f32 %v2222, %v2223
        %v2225 = vrot.slane %v2224, 1
        %v2226 = vadd.f32 %v2224, %v2225
        %v2227 = vld [vmem:[%s7] sm:$0xff]
        %v2228 = vld [vmem:[%s8] sm:$0xff]
        %vm2245 = vcmask 1041409
        %v2246 = vsel %vm2245, %v2128, %v2121
        %vm2247 = vcmask 1042434
        %v2248 = vsel %vm2247, %v2135, %v2246
        %vm2249 = vcmask 1043459
        %v2250 = vsel %vm2249, %v2142, %v2248
        %vm2251 = vcmask 1044484
        %v2252 = vsel %vm2251, %v2149, %v2250
        %vm2253 = vcmask 1045509
        %v2254 = vsel %vm2253, %v2156, %v2252
        %vm2255 = vcmask 1046534
        %v2256 = vsel %vm2255, %v2163, %v2254
        %vm2257 = vcmask 1047559
        %v2258 = vsel %vm2257, %v2170, %v2256
        %v2259 = vsel %vm2245, %v2184, %v2177
        %v2260 = vsel %vm2247, %v2191, %v2259
        %v2261 = vsel %vm2249, %v2198, %v2260
        %v2262 = vsel %vm2251, %v2205, %v2261
        %v2263 = vsel %vm2253, %v2212, %v2262
        %v2264 = vsel %vm2255, %v2219, %v2263
        %v2265 = vsel %vm2257, %v2226, %v2264
        %v2266 = vsel %vm684, %v2258, 0
        %v2268 = vsel %vm684, %v2265, 0
        %2270 = vmatprep.subr.mxu0 0.0
        %2271 = vmatpush1.msra.mxu0 0.0
        %2272 = vmatprep.subr.mxu0 0.0
        %2273 = vmatpush1.msra.mxu0 0.0
        %2274 = vmatprep.subr.mxu0 0.0
        %2275 = vmatpush1.msra.mxu0 0.0
        %2276 = vmatprep.subr.mxu0 0.0
        %2277 = vmatpush1.msra.mxu0 0.0
        %2278 = vmatprep.subr.mxu0 0.0
        %2279 = vmatpush1.msra.mxu0 0.0
        %2280 = vmatprep.subr.mxu0 0.0
        %2281 = vmatpush1.msra.mxu0 0.0
        %2282 = vmatprep.subr.mxu0 0.0
        %2283 = vmatpush1.msra.mxu0 0.0
        %2284 = vmatprep.subr.mxu0 0.0
        %2285 = vmatpush1.msra.mxu0 0.0
        %2286 = vmatprep.subr.mxu0 0.0
        %2287 = vmatpush1.msra.mxu0 0.0
        %2288 = vmatprep.subr.mxu0 0.0
        %2289 = vmatpush1.msra.mxu0 0.0
        %2290 = vmatprep.subr.mxu0 0.0
        %2291 = vmatpush1.msra.mxu0 0.0
        %2292 = vmatprep.subr.mxu0 0.0
        %2293 = vmatpush1.msra.mxu0 0.0
        %2294 = vmatprep.subr.mxu0 0.0
        %2295 = vmatpush1.msra.mxu0 0.0
        %2296 = vmatprep.subr.mxu0 0.0
        %2297 = vmatpush1.msra.mxu0 0.0
        %2298 = vmatprep.subr.mxu0 0.0
        %2299 = vmatpush1.msra.mxu0 0.0
        %2300 = vmatprep.subr.mxu0 0.0
        %2301 = vmatpush1.msra.mxu0 %v2228
        %2302 = vmatprep.subr.mxu0 0.0
        %2303 = vmatpush2.msra.mxu0 0.0
        %2304 = vmatprep.subr.mxu0 0.0
        %2305 = vmatpush2.msra.mxu0 0.0
        %2306 = vmatprep.subr.mxu0 0.0
        %2307 = vmatpush2.msra.mxu0 0.0
        %2308 = vmatprep.subr.mxu0 0.0
        %2309 = vmatpush2.msra.mxu0 0.0
        %2310 = vmatprep.subr.mxu0 0.0
        %2311 = vmatpush2.msra.mxu0 0.0
        %2312 = vmatprep.subr.mxu0 0.0
        %2313 = vmatpush2.msra.mxu0 0.0
        %2314 = vmatprep.subr.mxu0 0.0
        %2315 = vmatpush2.msra.mxu0 0.0
        %2316 = vmatprep.subr.mxu0 0.0
        %2317 = vmatpush2.msra.mxu0 0.0
        %2318 = vmatprep.subr.mxu0 0.0
        %2319 = vmatpush2.msra.mxu0 0.0
        %2320 = vmatprep.subr.mxu0 0.0
        %2321 = vmatpush2.msra.mxu0 0.0
        %2322 = vmatprep.subr.mxu0 0.0
        %2323 = vmatpush2.msra.mxu0 0.0
        %2324 = vmatprep.subr.mxu0 0.0
        %2325 = vmatpush2.msra.mxu0 0.0
        %2326 = vmatprep.subr.mxu0 0.0
        %2327 = vmatpush2.msra.mxu0 0.0
        %2328 = vmatprep.subr.mxu0 0.0
        %2329 = vmatpush2.msra.mxu0 0.0
        %2330 = vmatprep.subr.mxu0 0.0
        %2331 = vmatpush2.msra.mxu0 0.0
        %2332 = vmatprep.subr.mxu0 0.0
        %2333 = vmatpush2.msra.mxu0 0.0
        %2334 = vmatprep.mubr.f32.mxu0 0.0
        %2335 = vmatmul.mubr.f32.gmra.mxu0 %v2266
        %v2336 = vpop.f32.mrf.mxu0
        %v2337 = vadd.f32 0.0, %v2336
        %v2338 = vpop.f32.mrf.mxu0
        %2339 = vmatprep.mubr.f32.mxu0 0.0
        %2340 = vmatmul.mubr.f32.gmra.mxu0 %v2268
        %v2341 = vpop.f32.mrf.mxu0
        %v2342 = vadd.f32 0.0, %v2341
        %v2343 = vpop.f32.mrf.mxu0
        %2344 = vdwg.mxu0
        %v2361 = vsel %vm2245, %v1696, %v1689
        %v2362 = vsel %vm2247, %v1703, %v2361
        %v2363 = vsel %vm2249, %v1710, %v2362
        %v2364 = vsel %vm2251, %v1717, %v2363
        %v2365 = vsel %vm2253, %v1724, %v2364
        %v2366 = vsel %vm2255, %v1731, %v2365
        %v2367 = vsel %vm2257, %v1738, %v2366
        %v2368 = vsel %vm2245, %v1752, %v1745
        %v2369 = vsel %vm2247, %v1759, %v2368
        %v2370 = vsel %vm2249, %v1766, %v2369
        %v2371 = vsel %vm2251, %v1773, %v2370
        %v2372 = vsel %vm2253, %v1780, %v2371
        %v2373 = vsel %vm2255, %v1787, %v2372
        %v2374 = vsel %vm2257, %v1794, %v2373
        %v2375 = vsel %vm684, %v2367, 0
        %v2377 = vsel %vm684, %v2374, 0
        %2379 = vmatprep.subr.mxu0 0.0
        %2380 = vmatpush1.msra.mxu0 0.0
        %2381 = vmatprep.subr.mxu0 0.0
        %2382 = vmatpush1.msra.mxu0 0.0
        %2383 = vmatprep.subr.mxu0 0.0
        %2384 = vmatpush1.msra.mxu0 0.0
        %2385 = vmatprep.subr.mxu0 0.0
        %2386 = vmatpush1.msra.mxu0 0.0
        %2387 = vmatprep.subr.mxu0 0.0
        %2388 = vmatpush1.msra.mxu0 0.0
        %2389 = vmatprep.subr.mxu0 0.0
        %2390 = vmatpush1.msra.mxu0 0.0
        %2391 = vmatprep.subr.mxu0 0.0
        %2392 = vmatpush1.msra.mxu0 0.0
        %2393 = vmatprep.subr.mxu0 0.0
        %2394 = vmatpush1.msra.mxu0 0.0
        %2395 = vmatprep.subr.mxu0 0.0
        %2396 = vmatpush1.msra.mxu0 0.0
        %2397 = vmatprep.subr.mxu0 0.0
        %2398 = vmatpush1.msra.mxu0 0.0
        %2399 = vmatprep.subr.mxu0 0.0
        %2400 = vmatpush1.msra.mxu0 0.0
        %2401 = vmatprep.subr.mxu0 0.0
        %2402 = vmatpush1.msra.mxu0 0.0
        %2403 = vmatprep.subr.mxu0 0.0
        %2404 = vmatpush1.msra.mxu0 0.0
        %2405 = vmatprep.subr.mxu0 0.0
        %2406 = vmatpush1.msra.mxu0 0.0
        %2407 = vmatprep.subr.mxu0 0.0
        %2408 = vmatpush1.msra.mxu0 0.0
        %2409 = vmatprep.subr.mxu0 0.0
        %2410 = vmatpush1.msra.mxu0 %v2227
        %2411 = vmatprep.subr.mxu0 0.0
        %2412 = vmatpush2.msra.mxu0 0.0
        %2413 = vmatprep.subr.mxu0 0.0
        %2414 = vmatpush2.msra.mxu0 0.0
        %2415 = vmatprep.subr.mxu0 0.0
        %2416 = vmatpush2.msra.mxu0 0.0
        %2417 = vmatprep.subr.mxu0 0.0
        %2418 = vmatpush2.msra.mxu0 0.0
        %2419 = vmatprep.subr.mxu0 0.0
        %2420 = vmatpush2.msra.mxu0 0.0
        %2421 = vmatprep.subr.mxu0 0.0
        %2422 = vmatpush2.msra.mxu0 0.0
        %2423 = vmatprep.subr.mxu0 0.0
        %2424 = vmatpush2.msra.mxu0 0.0
        %2425 = vmatprep.subr.mxu0 0.0
        %2426 = vmatpush2.msra.mxu0 0.0
        %2427 = vmatprep.subr.mxu0 0.0
        %2428 = vmatpush2.msra.mxu0 0.0
        %2429 = vmatprep.subr.mxu0 0.0
        %2430 = vmatpush2.msra.mxu0 0.0
        %2431 = vmatprep.subr.mxu0 0.0
        %2432 = vmatpush2.msra.mxu0 0.0
        %2433 = vmatprep.subr.mxu0 0.0
        %2434 = vmatpush2.msra.mxu0 0.0
        %2435 = vmatprep.subr.mxu0 0.0
        %2436 = vmatpush2.msra.mxu0 0.0
        %2437 = vmatprep.subr.mxu0 0.0
        %2438 = vmatpush2.msra.mxu0 0.0
        %2439 = vmatprep.subr.mxu0 0.0
        %2440 = vmatpush2.msra.mxu0 0.0
        %2441 = vmatprep.subr.mxu0 0.0
        %2442 = vmatpush2.msra.mxu0 0.0
        %2443 = vmatprep.mubr.f32.mxu0 0.0
        %2444 = vmatmul.mubr.f32.gmra.mxu0 %v2375
        %v2445 = vpop.f32.mrf.mxu0
        %v2446 = vadd.f32 %v2337, %v2445
        %v2447 = vpop.f32.mrf.mxu0
        %2448 = vmatprep.mubr.f32.mxu0 0.0
        %2449 = vmatmul.mubr.f32.gmra.mxu0 %v2377
        %v2450 = vpop.f32.mrf.mxu0
        %v2451 = vadd.f32 %v2342, %v2450
        %v2452 = vpop.f32.mrf.mxu0
        %2453 = vdwg.mxu0
        %v2454 = vld [vmem:[%s9] sm:$0x1]
        %v2456 = vlaneseq
        %v2457 = vshrl.u32 %v2456, 7
        %v2458 = vsub.s32 0, %v2457
        %v2459 = vrot.slane %v2454, %v2458
        %v2461 = vmul.f32 %v2446, %v2459
        %v2462 = vmul.f32 %v2451, %v2459
        %v2463 = vld [vmem:[%s10] sm:$0x1]
        %v2465 = vlaneseq
        %v2466 = vshrl.u32 %v2465, 7
        %v2467 = vsub.s32 0, %v2466
        %v2468 = vrot.slane %v2463, %v2467
        %v2470 = vadd.f32 %v2461, %v2468
        %v2471 = vadd.f32 %v2462, %v2468
        %v2472 = vmax.f32 %v2470, 0.0
        %v2473 = vmax.f32 %v2471, 0.0
        %v2474 = vld [vmem:[%s11] sm:$0xff]
        %v2475 = vld [vmem:[%s11 + $0x8] sm:$0xff]
        %vm2476 = vcmask 130048
        %v2478 = vsel %vm2476, %v2472, 0
        %v2481 = vsel %vm2476, %v2473, 0
        %2483 = vmatprep.subr.mxu0 0.0
        %2484 = vmatpush1.msra.mxu0 0.0
        %2485 = vmatprep.subr.mxu0 0.0
        %2486 = vmatpush1.msra.mxu0 0.0
        %2487 = vmatprep.subr.mxu0 0.0
        %2488 = vmatpush1.msra.mxu0 0.0
        %2489 = vmatprep.subr.mxu0 0.0
        %2490 = vmatpush1.msra.mxu0 0.0
        %2491 = vmatprep.subr.mxu0 0.0
        %2492 = vmatpush1.msra.mxu0 0.0
        %2493 = vmatprep.subr.mxu0 0.0
        %2494 = vmatpush1.msra.mxu0 0.0
        %2495 = vmatprep.subr.mxu0 0.0
        %2496 = vmatpush1.msra.mxu0 0.0
        %2497 = vmatprep.subr.mxu0 0.0
        %2498 = vmatpush1.msra.mxu0 0.0
        %2499 = vmatprep.subr.mxu0 0.0
        %2500 = vmatpush1.msra.mxu0 0.0
        %2501 = vmatprep.subr.mxu0 0.0
        %2502 = vmatpush1.msra.mxu0 0.0
        %2503 = vmatprep.subr.mxu0 0.0
        %2504 = vmatpush1.msra.mxu0 0.0
        %2505 = vmatprep.subr.mxu0 0.0
        %2506 = vmatpush1.msra.mxu0 0.0
        %2507 = vmatprep.subr.mxu0 0.0
        %2508 = vmatpush1.msra.mxu0 0.0
        %2509 = vmatprep.subr.mxu0 0.0
        %2510 = vmatpush1.msra.mxu0 0.0
        %2511 = vmatprep.subr.mxu0 0.0
        %2512 = vmatpush1.msra.mxu0 %v2475
        %2513 = vmatprep.subr.mxu0 0.0
        %2514 = vmatpush1.msra.mxu0 %v2474
        %2515 = vmatprep.subr.mxu0 0.0
        %2516 = vmatpush2.msra.mxu0 0.0
        %2517 = vmatprep.subr.mxu0 0.0
        %2518 = vmatpush2.msra.mxu0 0.0
        %2519 = vmatprep.subr.mxu0 0.0
        %2520 = vmatpush2.msra.mxu0 0.0
        %2521 = vmatprep.subr.mxu0 0.0
        %2522 = vmatpush2.msra.mxu0 0.0
        %2523 = vmatprep.subr.mxu0 0.0
        %2524 = vmatpush2.msra.mxu0 0.0
        %2525 = vmatprep.subr.mxu0 0.0
        %2526 = vmatpush2.msra.mxu0 0.0
        %2527 = vmatprep.subr.mxu0 0.0
        %2528 = vmatpush2.msra.mxu0 0.0
        %2529 = vmatprep.subr.mxu0 0.0
        %2530 = vmatpush2.msra.mxu0 0.0
        %2531 = vmatprep.subr.mxu0 0.0
        %2532 = vmatpush2.msra.mxu0 0.0
        %2533 = vmatprep.subr.mxu0 0.0
        %2534 = vmatpush2.msra.mxu0 0.0
        %2535 = vmatprep.subr.mxu0 0.0
        %2536 = vmatpush2.msra.mxu0 0.0
        %2537 = vmatprep.subr.mxu0 0.0
        %2538 = vmatpush2.msra.mxu0 0.0
        %2539 = vmatprep.subr.mxu0 0.0
        %2540 = vmatpush2.msra.mxu0 0.0
        %2541 = vmatprep.subr.mxu0 0.0
        %2542 = vmatpush2.msra.mxu0 0.0
        %2543 = vmatprep.subr.mxu0 0.0
        %2544 = vmatpush2.msra.mxu0 0.0
        %2545 = vmatprep.subr.mxu0 0.0
        %2546 = vmatpush2.msra.mxu0 0.0
        %2547 = vmatprep.mubr.f32.mxu0 0.0
        %2548 = vmatmul.mubr.f32.gmra.mxu0 %v2478
        %v2549 = vpop.f32.mrf.mxu0
        %v2550 = vadd.f32 0.0, %v2549
        %v2551 = vpop.f32.mrf.mxu0
        %2552 = vmatprep.mubr.f32.mxu0 0.0
        %2553 = vmatmul.mubr.f32.gmra.mxu0 %v2481
        %v2554 = vpop.f32.mrf.mxu0
        %v2555 = vadd.f32 0.0, %v2554
        %v2556 = vpop.f32.mrf.mxu0
        %2557 = vdwg.mxu0
        %v2558 = vld [vmem:[%s12] sm:$0x1]
        %v2560 = vlaneseq
        %v2561 = vshrl.u32 %v2560, 7
        %v2562 = vsub.s32 0, %v2561
        %v2563 = vrot.slane %v2558, %v2562
        %v2565 = vmul.f32 %v2550, %v2563
        %v2566 = vmul.f32 %v2555, %v2563
        %v2567 = vld [vmem:[%s13] sm:$0x1]
        %v2569 = vlaneseq
        %v2570 = vshrl.u32 %v2569, 7
        %v2571 = vsub.s32 0, %v2570
        %v2572 = vrot.slane %v2567, %v2571
        %v2574 = vadd.f32 %v2565, %v2572
        %v2575 = vadd.f32 %v2566, %v2572
        %v2576 = vld [vmem:[%s647] sm:$0xff]
        %v2577 = vld [vmem:[%s647 + $0x8] sm:$0xff]
        %v2578 = vld [vmem:[%s14] sm:$0xff]
        %v2580 = vsel %vm684, %v2576, 0
        %v2583 = vsel %vm684, %v2577, 0
        %2585 = vmatprep.subr.mxu0 0.0
        %2586 = vmatpush1.msra.mxu0 0.0
        %2587 = vmatprep.subr.mxu0 0.0
        %2588 = vmatpush1.msra.mxu0 0.0
        %2589 = vmatprep.subr.mxu0 0.0
        %2590 = vmatpush1.msra.mxu0 0.0
        %2591 = vmatprep.subr.mxu0 0.0
        %2592 = vmatpush1.msra.mxu0 0.0
        %2593 = vmatprep.subr.mxu0 0.0
        %2594 = vmatpush1.msra.mxu0 0.0
        %2595 = vmatprep.subr.mxu0 0.0
        %2596 = vmatpush1.msra.mxu0 0.0
        %2597 = vmatprep.subr.mxu0 0.0
        %2598 = vmatpush1.msra.mxu0 0.0
        %2599 = vmatprep.subr.mxu0 0.0
        %2600 = vmatpush1.msra.mxu0 0.0
        %2601 = vmatprep.subr.mxu0 0.0
        %2602 = vmatpush1.msra.mxu0 0.0
        %2603 = vmatprep.subr.mxu0 0.0
        %2604 = vmatpush1.msra.mxu0 0.0
        %2605 = vmatprep.subr.mxu0 0.0
        %2606 = vmatpush1.msra.mxu0 0.0
        %2607 = vmatprep.subr.mxu0 0.0
        %2608 = vmatpush1.msra.mxu0 0.0
        %2609 = vmatprep.subr.mxu0 0.0
        %2610 = vmatpush1.msra.mxu0 0.0
        %2611 = vmatprep.subr.mxu0 0.0
        %2612 = vmatpush1.msra.mxu0 0.0
        %2613 = vmatprep.subr.mxu0 0.0
        %2614 = vmatpush1.msra.mxu0 0.0
        %2615 = vmatprep.subr.mxu0 0.0
        %2616 = vmatpush1.msra.mxu0 %v2578
        %2617 = vmatprep.subr.mxu0 0.0
        %2618 = vmatpush2.msra.mxu0 0.0
        %2619 = vmatprep.subr.mxu0 0.0
        %2620 = vmatpush2.msra.mxu0 0.0
        %2621 = vmatprep.subr.mxu0 0.0
        %2622 = vmatpush2.msra.mxu0 0.0
        %2623 = vmatprep.subr.mxu0 0.0
        %2624 = vmatpush2.msra.mxu0 0.0
        %2625 = vmatprep.subr.mxu0 0.0
        %2626 = vmatpush2.msra.mxu0 0.0
        %2627 = vmatprep.subr.mxu0 0.0
        %2628 = vmatpush2.msra.mxu0 0.0
        %2629 = vmatprep.subr.mxu0 0.0
        %2630 = vmatpush2.msra.mxu0 0.0
        %2631 = vmatprep.subr.mxu0 0.0
        %2632 = vmatpush2.msra.mxu0 0.0
        %2633 = vmatprep.subr.mxu0 0.0
        %2634 = vmatpush2.msra.mxu0 0.0
        %2635 = vmatprep.subr.mxu0 0.0
        %2636 = vmatpush2.msra.mxu0 0.0
        %2637 = vmatprep.subr.mxu0 0.0
        %2638 = vmatpush2.msra.mxu0 0.0
        %2639 = vmatprep.subr.mxu0 0.0
        %2640 = vmatpush2.msra.mxu0 0.0
        %2641 = vmatprep.subr.mxu0 0.0
        %2642 = vmatpush2.msra.mxu0 0.0
        %2643 = vmatprep.subr.mxu0 0.0
        %2644 = vmatpush2.msra.mxu0 0.0
        %2645 = vmatprep.subr.mxu0 0.0
        %2646 = vmatpush2.msra.mxu0 0.0
        %2647 = vmatprep.subr.mxu0 0.0
        %2648 = vmatpush2.msra.mxu0 0.0
        %2649 = vmatprep.mubr.f32.mxu0 0.0
        %2650 = vmatmul.mubr.f32.gmra.mxu0 %v2580
        %v2651 = vpop.f32.mrf.mxu0
        %v2652 = vadd.f32 0.0, %v2651
        %v2653 = vpop.f32.mrf.mxu0
        %2654 = vmatprep.mubr.f32.mxu0 0.0
        %2655 = vmatmul.mubr.f32.gmra.mxu0 %v2583
        %v2656 = vpop.f32.mrf.mxu0
        %v2657 = vadd.f32 0.0, %v2656
        %v2658 = vpop.f32.mrf.mxu0
        %2659 = vdwg.mxu0
        %v2660 = vld [vmem:[%s15] sm:$0x1]
        %v2662 = vlaneseq
        %v2663 = vshrl.u32 %v2662, 7
        %v2664 = vsub.s32 0, %v2663
        %v2665 = vrot.slane %v2660, %v2664
        %v2667 = vmul.f32 %v2652, %v2665
        %v2668 = vmul.f32 %v2657, %v2665
        %v2669 = vld [vmem:[%s16] sm:$0x1]
        %v2671 = vlaneseq
        %v2672 = vshrl.u32 %v2671, 7
        %v2673 = vsub.s32 0, %v2672
        %v2674 = vrot.slane %v2669, %v2673
        %v2676 = vadd.f32 %v2667, %v2674
        %v2677 = vadd.f32 %v2668, %v2674
        %v2678 = vadd.f32 %v2574, %v2676
        %v2679 = vadd.f32 %v2575, %v2677
        %vm2680 = vcmp.ge.f32.partialorder %v2678, 0.0
        %vm2681 = vcmp.ge.f32.partialorder %v2679, 0.0
        %v2682 = vmul.f32 %v2678, 0.2
        %v2683 = vmul.f32 %v2679, 0.2
        %v2684 = vsel %vm2680, %v2678, %v2682
        %v2685 = vsel %vm2681, %v2679, %v2683
        %vm2686 = vcmask 261120
        %2687 = vst.msk [vmem:[%s618] sm:$0xff] %vm2686, %v2684
        %2688 = vst.msk [vmem:[%s618 + $0x8] sm:$0xff] %vm2686, %v2685
        %s2689 = sand.u32 %s431, 1
        %s2690 = scalar_lea.sflag [#allocation3], %s2689
        %s2691 = sand.u32 %s431, 1
        %s2692 = smul.addr %s2691, 16
        %s2693 = scalar_lea.vmem [#allocation2], %s2692
        // Predicated region
        $region89: #{dilated_res_block.5} parent=87 // pred_check
          %p2694 = pneg %p441
        $region90: #{dilated_res_block.5} parent=87 // pred_check_branch
          %2696 = sbr.rel (%p2694) target = $region92
        $region91: #{dilated_res_block.5} parent=87 // pred_region
          %s2697 = smul.u32 2, %s36
          %s2699 = ssub.s32 256, 256
          %2700 = vsyncadd %s2690, %s2699
          %s2701 = smul.addr %s35, 2
          %s2702 = sadd.s32 %s2697, %s2701
          %s2703 = smul.addr %s2702, 128
          %s2704 = scalar_lea.hbm %s17, %s2703
          %s2705 = sshll.u32 %s2693, 4
          %s2706 = int_to_ptr.vmem [resolvable:$true] %s2705
          %2711 = dma.vmem_to_hbm [thread:$0]  %s2706, 256, %s2704, %s2690, 128, 128, 8
        $region92: #{dilated_res_block.5} parent=87 // pred_fallthru
          _
      $region88: #{dilated_res_block.5} parent=5 // pred_fallthru
        _
      %p2712 = scmp.le.s32.totalorder 2, %s26
      // Predicated region
      $region93: #{dilated_res_block.5} parent=5 // pred_check
        %p2713 = pneg %p2712
      $region94: #{dilated_res_block.5} parent=5 // pred_check_branch
        %2715 = sbr.rel (%p2713) target = $region96
      $region95: #{dilated_res_block.5} parent=5 // pred_region
        %s2716 = ssub.s32 %s26, 2
        // Predicated region
        $region97: #{dilated_res_block.5} parent=95 // pred_check
          %p2717 = pneg %p447
        $region98: #{dilated_res_block.5} parent=95 // pred_check_branch
          %2719 = sbr.rel (%p2717) target = $region100
        $region99: #{dilated_res_block.5} parent=95 // pred_region
          %s2720 = sand.u32 %s432, 1
          %s2721 = scalar_lea.sflag [#allocation3], %s2720
          %s2722 = sand.u32 %s432, 1
          %s2723 = smul.addr %s2722, 16
          %s2724 = scalar_lea.vmem [#allocation2], %s2723
          %2725 = dma.done %s2721, 256
        $region100: #{dilated_res_block.5} parent=95 // pred_fallthru
          _
      $region96: #{dilated_res_block.5} parent=5 // pred_fallthru
        _
    $region6: #{dilated_res_block.5} parent=1 // loop_footer
      %s30 = sadd.s32 1, %s26
    $region7: #{dilated_res_block.5} parent=1 // loop_footer_branch
      %25 = sbr.rel target = $region3
    $region8: #{dilated_res_block.5} parent=1 // loop_exit
      _
    %2726 = vsyncpa [#allocation3], 1
    %s2727 = scalar_lea.sflag [#allocation3], 1
    %2728 = vsyncpa %s2727, 1

// kernel: dilated_res_block.4
$region0: #{dilated_res_block.4}
  #allocation0 [shape = 'u32[]', space=smem, size = 0x4, offset = 0x4, fixed_abs, tag = 'smem constant byte address 0x4 - core index']
  #allocation1 [shape = 'u32[144,128]{1,0:T(1,128)}', space=vmem, size = 0x12000, scoped, tag = 'internal scratch']
  %s0 = inlined_call_operand.vmem [shape: f32[2,16,8,10], index: 0, kind: input, shape index: {}]
  %s1 = inlined_call_operand.vmem [shape: f32[2,16,8,8], index: 1, kind: input, shape index: {}]
  %s2 = inlined_call_operand.vmem [shape: f32[10,8], index: 2, kind: input, shape index: {}]
  %s3 = inlined_call_operand.vmem [shape: f32[1,8], index: 3, kind: input, shape index: {}]
  %s4 = inlined_call_operand.vmem [shape: f32[1,8], index: 4, kind: input, shape index: {}]
  %s5 = inlined_call_operand.vmem [shape: f32[8,8], index: 5, kind: input, shape index: {}]
  %s6 = inlined_call_operand.vmem [shape: f32[8,8], index: 6, kind: input, shape index: {}]
  %s7 = inlined_call_operand.vmem [shape: f32[8,8], index: 7, kind: input, shape index: {}]
  %s8 = inlined_call_operand.vmem [shape: f32[8,8], index: 8, kind: input, shape index: {}]
  %s9 = inlined_call_operand.vmem [shape: f32[8,8], index: 9, kind: input, shape index: {}]
  %s10 = inlined_call_operand.vmem [shape: f32[8,8], index: 10, kind: input, shape index: {}]
  %s11 = inlined_call_operand.vmem [shape: f32[1,8], index: 11, kind: input, shape index: {}]
  %s12 = inlined_call_operand.vmem [shape: f32[1,8], index: 12, kind: input, shape index: {}]
  %s13 = inlined_call_operand.vmem [shape: f32[8,8], index: 13, kind: input, shape index: {}]
  %s14 = inlined_call_operand.vmem [shape: f32[1,8], index: 14, kind: input, shape index: {}]
  %s15 = inlined_call_operand.vmem [shape: f32[1,8], index: 15, kind: input, shape index: {}]
  %s16 = inlined_call_operand.vmem [shape: f32[2,16,8], index: 16, kind: output, shape index: {0}]
  %s17 = inlined_call_operand.vmem [shape: f32[2,16,8,8], index: 17, kind: output, shape index: {1}]
  %18 = xla_tuple %s16, %s17
  %s19 = sld [smem:[#allocation0]]
  $region105: #{dilated_res_block.4} parent=0
    _
  %s21 = ssub.s32 1, %s19
  %s22 = scalar_select 0, %s21, %s19
  loop: start=0, step=1, limit=4
  $region2: #{dilated_res_block.4} parent=0 // loop_pre_header
    _
  $region3: #{dilated_res_block.4} parent=0 // loop_header
    %s24 = sphi 0, %s28
    %p25 = scmp.ge.s32.totalorder %s24, 4
    %s31 = sphi 0, %s43
    %s32 = sphi 0, %s39
    %s33 = sphi 0, %s31
    %s34 = sphi 0, %s32
    %s35 = sphi 0, %s33
    %s36 = sphi 0, %s34
    %s48 = sphi 0, %s50
    %s51 = sphi 0, %s48
    %s52 = sphi 0, %s51
    %s68 = sphi 0, %s52
    %s76 = sphi 0, %s78
    %s79 = sphi 0, %s76
    %s80 = sphi 0, %s79
    %s96 = sphi 0, %s80
    %s100 = sphi 0, %s100
    %s102 = sphi 0, %s100
    %s103 = sphi 0, %s102
    %s117 = sphi 0, %s103
    %s121 = sphi 0, %s121
    %s123 = sphi 0, %s121
    %s124 = sphi 0, %s123
    %s138 = sphi 0, %s124
    %s142 = sphi 0, %s142
    %s144 = sphi 0, %s142
    %s145 = sphi 0, %s144
    %s159 = sphi 0, %s145
    %s163 = sphi 0, %s163
    %s165 = sphi 0, %s163
    %s166 = sphi 0, %s165
    %s180 = sphi 0, %s166
    %s184 = sphi 0, %s184
    %s186 = sphi 0, %s184
    %s187 = sphi 0, %s186
    %s201 = sphi 0, %s187
    %s205 = sphi 0, %s205
    %s207 = sphi 0, %s205
    %s208 = sphi 0, %s207
    %s222 = sphi 0, %s208
    %s226 = sphi 0, %s226
    %s228 = sphi 0, %s226
    %s229 = sphi 0, %s228
    %s243 = sphi 0, %s229
    %s247 = sphi 0, %s247
    %s249 = sphi 0, %s247
    %s250 = sphi 0, %s249
    %s264 = sphi 0, %s250
    %s268 = sphi 0, %s268
    %s270 = sphi 0, %s268
    %s271 = sphi 0, %s270
    %s285 = sphi 0, %s271
    %s289 = sphi 0, %s289
    %s291 = sphi 0, %s289
    %s292 = sphi 0, %s291
    %s306 = sphi 0, %s292
    %s310 = sphi 0, %s310
    %s312 = sphi 0, %s310
    %s313 = sphi 0, %s312
    %s327 = sphi 0, %s313
    %s331 = sphi 0, %s331
    %s333 = sphi 0, %s331
    %s334 = sphi 0, %s333
    %s348 = sphi 0, %s334
    %s352 = sphi 0, %s352
    %s354 = sphi 0, %s352
    %s355 = sphi 0, %s354
    %s369 = sphi 0, %s355
    %s373 = sphi 0, %s373
    %s375 = sphi 0, %s373
    %s376 = sphi 0, %s375
    %s390 = sphi 0, %s376
    %s398 = sphi 0, %s400
    %s401 = sphi 0, %s398
    %s402 = sphi 0, %s401
    %s418 = sphi 0, %s402
    %s426 = sphi 0, %s428
    %s429 = sphi 0, %s426
    %s430 = sphi 0, %s429
    %s446 = sphi 0, %s430
  $region4: #{dilated_res_block.4} parent=0 // loop_header_branch
    %27 = sbr.rel (%p25) target = $region8
  $region5: #{dilated_res_block.4} parent=0 // loop_body
    %s29 = ssub.s32 %s24, 1
    %s30 = ssub.s32 %s24, 2
    %s37 = sadd.s32 1, %s32
    %p38 = scmp.ge.s32.totalorder %s37, 1
    %s39 = scalar_select %p38, 0, %s37
    %s40 = sadd.s32 1, %s31
    %s41 = scalar_select %p38, %s40, %s31
    %p42 = scmp.ge.s32.totalorder %s41, 2
    %s43 = scalar_select %p42, 0, %s41
    %s44 = ssub.s32 %s31, %s43
    %s45 = ssub.s32 %s32, %s39
    %s46 = sor.u32 %s44, %s45
    %p47 = scmp.eq.s32.totalorder %s46, 0
    %s49 = sadd.s32 %s48, 1
    %s50 = scalar_select %p47, %s48, %s49
    %p53 = pneg %p47
    %p54 = scmp.eq.s32.totalorder %s24, 1
    %p55 = por %p53, %p54
    %p56 = scmp.ne.s32.totalorder %s48, %s51
    %p57 = scmp.eq.s32.totalorder %s24, 0
    %p58 = por %p56, %p57
    %p59 = scmp.ne.s32.totalorder %s48, %s51
    %p60 = scmp.eq.s32.totalorder %s29, 1
    %p61 = por %p59, %p60
    %p62 = scmp.ne.s32.totalorder %s51, %s52
    %p63 = scmp.eq.s32.totalorder %s29, 0
    %p64 = por %p62, %p63
    %p65 = scmp.ne.s32.totalorder %s51, %s52
    %p66 = scmp.eq.s32.totalorder %s30, 1
    %p67 = por %p65, %p66
    %p69 = scmp.ne.s32.totalorder %s52, %s68
    %p70 = scmp.eq.s32.totalorder %s30, 0
    %p71 = por %p69, %p70
    %s72 = ssub.s32 %s31, %s43
    %s73 = ssub.s32 %s32, %s39
    %s74 = sor.u32 %s72, %s73
    %p75 = scmp.eq.s32.totalorder %s74, 0
    %s77 = sadd.s32 %s76, 1
    %s78 = scalar_select %p75, %s76, %s77
    %p81 = pneg %p75
    %p82 = scmp.eq.s32.totalorder %s24, 1
    %p83 = por %p81, %p82
    %p84 = scmp.ne.s32.totalorder %s76, %s79
    %p85 = scmp.eq.s32.totalorder %s24, 0
    %p86 = por %p84, %p85
    %p87 = scmp.ne.s32.totalorder %s76, %s79
    %p88 = scmp.eq.s32.totalorder %s29, 1
    %p89 = por %p87, %p88
    %p90 = scmp.ne.s32.totalorder %s79, %s80
    %p91 = scmp.eq.s32.totalorder %s29, 0
    %p92 = por %p90, %p91
    %p93 = scmp.ne.s32.totalorder %s79, %s80
    %p94 = scmp.eq.s32.totalorder %s30, 1
    %p95 = por %p93, %p94
    %p97 = scmp.ne.s32.totalorder %s80, %s96
    %p98 = scmp.eq.s32.totalorder %s30, 0
    %p99 = por %p97, %p98
    %s101 = sadd.s32 %s100, 1
    %p104 = scmp.eq.s32.totalorder %s24, 1
    %p105 = scmp.ne.s32.totalorder %s100, %s102
    %p106 = scmp.eq.s32.totalorder %s24, 0
    %p107 = por %p105, %p106
    %p108 = scmp.ne.s32.totalorder %s100, %s102
    %p109 = scmp.eq.s32.totalorder %s29, 1
    %p110 = por %p108, %p109
    %p111 = scmp.ne.s32.totalorder %s102, %s103
    %p112 = scmp.eq.s32.totalorder %s29, 0
    %p113 = por %p111, %p112
    %p114 = scmp.ne.s32.totalorder %s102, %s103
    %p115 = scmp.eq.s32.totalorder %s30, 1
    %p116 = por %p114, %p115
    %p118 = scmp.ne.s32.totalorder %s103, %s117
    %p119 = scmp.eq.s32.totalorder %s30, 0
    %p120 = por %p118, %p119
    %s122 = sadd.s32 %s121, 1
    %p125 = scmp.eq.s32.totalorder %s24, 1
    %p126 = scmp.ne.s32.totalorder %s121, %s123
    %p127 = scmp.eq.s32.totalorder %s24, 0
    %p128 = por %p126, %p127
    %p129 = scmp.ne.s32.totalorder %s121, %s123
    %p130 = scmp.eq.s32.totalorder %s29, 1
    %p131 = por %p129, %p130
    %p132 = scmp.ne.s32.totalorder %s123, %s124
    %p133 = scmp.eq.s32.totalorder %s29, 0
    %p134 = por %p132, %p133
    %p135 = scmp.ne.s32.totalorder %s123, %s124
    %p136 = scmp.eq.s32.totalorder %s30, 1
    %p137 = por %p135, %p136
    %p139 = scmp.ne.s32.totalorder %s124, %s138
    %p140 = scmp.eq.s32.totalorder %s30, 0
    %p141 = por %p139, %p140
    %s143 = sadd.s32 %s142, 1
    %p146 = scmp.eq.s32.totalorder %s24, 1
    %p147 = scmp.ne.s32.totalorder %s142, %s144
    %p148 = scmp.eq.s32.totalorder %s24, 0
    %p149 = por %p147, %p148
    %p150 = scmp.ne.s32.totalorder %s142, %s144
    %p151 = scmp.eq.s32.totalorder %s29, 1
    %p152 = por %p150, %p151
    %p153 = scmp.ne.s32.totalorder %s144, %s145
    %p154 = scmp.eq.s32.totalorder %s29, 0
    %p155 = por %p153, %p154
    %p156 = scmp.ne.s32.totalorder %s144, %s145
    %p157 = scmp.eq.s32.totalorder %s30, 1
    %p158 = por %p156, %p157
    %p160 = scmp.ne.s32.totalorder %s145, %s159
    %p161 = scmp.eq.s32.totalorder %s30, 0
    %p162 = por %p160, %p161
    %s164 = sadd.s32 %s163, 1
    %p167 = scmp.eq.s32.totalorder %s24, 1
    %p168 = scmp.ne.s32.totalorder %s163, %s165
    %p169 = scmp.eq.s32.totalorder %s24, 0
    %p170 = por %p168, %p169
    %p171 = scmp.ne.s32.totalorder %s163, %s165
    %p172 = scmp.eq.s32.totalorder %s29, 1
    %p173 = por %p171, %p172
    %p174 = scmp.ne.s32.totalorder %s165, %s166
    %p175 = scmp.eq.s32.totalorder %s29, 0
    %p176 = por %p174, %p175
    %p177 = scmp.ne.s32.totalorder %s165, %s166
    %p178 = scmp.eq.s32.totalorder %s30, 1
    %p179 = por %p177, %p178
    %p181 = scmp.ne.s32.totalorder %s166, %s180
    %p182 = scmp.eq.s32.totalorder %s30, 0
    %p183 = por %p181, %p182
    %s185 = sadd.s32 %s184, 1
    %p188 = scmp.eq.s32.totalorder %s24, 1
    %p189 = scmp.ne.s32.totalorder %s184, %s186
    %p190 = scmp.eq.s32.totalorder %s24, 0
    %p191 = por %p189, %p190
    %p192 = scmp.ne.s32.totalorder %s184, %s186
    %p193 = scmp.eq.s32.totalorder %s29, 1
    %p194 = por %p192, %p193
    %p195 = scmp.ne.s32.totalorder %s186, %s187
    %p196 = scmp.eq.s32.totalorder %s29, 0
    %p197 = por %p195, %p196
    %p198 = scmp.ne.s32.totalorder %s186, %s187
    %p199 = scmp.eq.s32.totalorder %s30, 1
    %p200 = por %p198, %p199
    %p202 = scmp.ne.s32.totalorder %s187, %s201
    %p203 = scmp.eq.s32.totalorder %s30, 0
    %p204 = por %p202, %p203
    %s206 = sadd.s32 %s205, 1
    %p209 = scmp.eq.s32.totalorder %s24, 1
    %p210 = scmp.ne.s32.totalorder %s205, %s207
    %p211 = scmp.eq.s32.totalorder %s24, 0
    %p212 = por %p210, %p211
    %p213 = scmp.ne.s32.totalorder %s205, %s207
    %p214 = scmp.eq.s32.totalorder %s29, 1
    %p215 = por %p213, %p214
    %p216 = scmp.ne.s32.totalorder %s207, %s208
    %p217 = scmp.eq.s32.totalorder %s29, 0
    %p218 = por %p216, %p217
    %p219 = scmp.ne.s32.totalorder %s207, %s208
    %p220 = scmp.eq.s32.totalorder %s30, 1
    %p221 = por %p219, %p220
    %p223 = scmp.ne.s32.totalorder %s208, %s222
    %p224 = scmp.eq.s32.totalorder %s30, 0
    %p225 = por %p223, %p224
    %s227 = sadd.s32 %s226, 1
    %p230 = scmp.eq.s32.totalorder %s24, 1
    %p231 = scmp.ne.s32.totalorder %s226, %s228
    %p232 = scmp.eq.s32.totalorder %s24, 0
    %p233 = por %p231, %p232
    %p234 = scmp.ne.s32.totalorder %s226, %s228
    %p235 = scmp.eq.s32.totalorder %s29, 1
    %p236 = por %p234, %p235
    %p237 = scmp.ne.s32.totalorder %s228, %s229
    %p238 = scmp.eq.s32.totalorder %s29, 0
    %p239 = por %p237, %p238
    %p240 = scmp.ne.s32.totalorder %s228, %s229
    %p241 = scmp.eq.s32.totalorder %s30, 1
    %p242 = por %p240, %p241
    %p244 = scmp.ne.s32.totalorder %s229, %s243
    %p245 = scmp.eq.s32.totalorder %s30, 0
    %p246 = por %p244, %p245
    %s248 = sadd.s32 %s247, 1
    %p251 = scmp.eq.s32.totalorder %s24, 1
    %p252 = scmp.ne.s32.totalorder %s247, %s249
    %p253 = scmp.eq.s32.totalorder %s24, 0
    %p254 = por %p252, %p253
    %p255 = scmp.ne.s32.totalorder %s247, %s249
    %p256 = scmp.eq.s32.totalorder %s29, 1
    %p257 = por %p255, %p256
    %p258 = scmp.ne.s32.totalorder %s249, %s250
    %p259 = scmp.eq.s32.totalorder %s29, 0
    %p260 = por %p258, %p259
    %p261 = scmp.ne.s32.totalorder %s249, %s250
    %p262 = scmp.eq.s32.totalorder %s30, 1
    %p263 = por %p261, %p262
    %p265 = scmp.ne.s32.totalorder %s250, %s264
    %p266 = scmp.eq.s32.totalorder %s30, 0
    %p267 = por %p265, %p266
    %s269 = sadd.s32 %s268, 1
    %p272 = scmp.eq.s32.totalorder %s24, 1
    %p273 = scmp.ne.s32.totalorder %s268, %s270
    %p274 = scmp.eq.s32.totalorder %s24, 0
    %p275 = por %p273, %p274
    %p276 = scmp.ne.s32.totalorder %s268, %s270
    %p277 = scmp.eq.s32.totalorder %s29, 1
    %p278 = por %p276, %p277
    %p279 = scmp.ne.s32.totalorder %s270, %s271
    %p280 = scmp.eq.s32.totalorder %s29, 0
    %p281 = por %p279, %p280
    %p282 = scmp.ne.s32.totalorder %s270, %s271
    %p283 = scmp.eq.s32.totalorder %s30, 1
    %p284 = por %p282, %p283
    %p286 = scmp.ne.s32.totalorder %s271, %s285
    %p287 = scmp.eq.s32.totalorder %s30, 0
    %p288 = por %p286, %p287
    %s290 = sadd.s32 %s289, 1
    %p293 = scmp.eq.s32.totalorder %s24, 1
    %p294 = scmp.ne.s32.totalorder %s289, %s291
    %p295 = scmp.eq.s32.totalorder %s24, 0
    %p296 = por %p294, %p295
    %p297 = scmp.ne.s32.totalorder %s289, %s291
    %p298 = scmp.eq.s32.totalorder %s29, 1
    %p299 = por %p297, %p298
    %p300 = scmp.ne.s32.totalorder %s291, %s292
    %p301 = scmp.eq.s32.totalorder %s29, 0
    %p302 = por %p300, %p301
    %p303 = scmp.ne.s32.totalorder %s291, %s292
    %p304 = scmp.eq.s32.totalorder %s30, 1
    %p305 = por %p303, %p304
    %p307 = scmp.ne.s32.totalorder %s292, %s306
    %p308 = scmp.eq.s32.totalorder %s30, 0
    %p309 = por %p307, %p308
    %s311 = sadd.s32 %s310, 1
    %p314 = scmp.eq.s32.totalorder %s24, 1
    %p315 = scmp.ne.s32.totalorder %s310, %s312
    %p316 = scmp.eq.s32.totalorder %s24, 0
    %p317 = por %p315, %p316
    %p318 = scmp.ne.s32.totalorder %s310, %s312
    %p319 = scmp.eq.s32.totalorder %s29, 1
    %p320 = por %p318, %p319
    %p321 = scmp.ne.s32.totalorder %s312, %s313
    %p322 = scmp.eq.s32.totalorder %s29, 0
    %p323 = por %p321, %p322
    %p324 = scmp.ne.s32.totalorder %s312, %s313
    %p325 = scmp.eq.s32.totalorder %s30, 1
    %p326 = por %p324, %p325
    %p328 = scmp.ne.s32.totalorder %s313, %s327
    %p329 = scmp.eq.s32.totalorder %s30, 0
    %p330 = por %p328, %p329
    %s332 = sadd.s32 %s331, 1
    %p335 = scmp.eq.s32.totalorder %s24, 1
    %p336 = scmp.ne.s32.totalorder %s331, %s333
    %p337 = scmp.eq.s32.totalorder %s24, 0
    %p338 = por %p336, %p337
    %p339 = scmp.ne.s32.totalorder %s331, %s333
    %p340 = scmp.eq.s32.totalorder %s29, 1
    %p341 = por %p339, %p340
    %p342 = scmp.ne.s32.totalorder %s333, %s334
    %p343 = scmp.eq.s32.totalorder %s29, 0
    %p344 = por %p342, %p343
    %p345 = scmp.ne.s32.totalorder %s333, %s334
    %p346 = scmp.eq.s32.totalorder %s30, 1
    %p347 = por %p345, %p346
    %p349 = scmp.ne.s32.totalorder %s334, %s348
    %p350 = scmp.eq.s32.totalorder %s30, 0
    %p351 = por %p349, %p350
    %s353 = sadd.s32 %s352, 1
    %p356 = scmp.eq.s32.totalorder %s24, 1
    %p357 = scmp.ne.s32.totalorder %s352, %s354
    %p358 = scmp.eq.s32.totalorder %s24, 0
    %p359 = por %p357, %p358
    %p360 = scmp.ne.s32.totalorder %s352, %s354
    %p361 = scmp.eq.s32.totalorder %s29, 1
    %p362 = por %p360, %p361
    %p363 = scmp.ne.s32.totalorder %s354, %s355
    %p364 = scmp.eq.s32.totalorder %s29, 0
    %p365 = por %p363, %p364
    %p366 = scmp.ne.s32.totalorder %s354, %s355
    %p367 = scmp.eq.s32.totalorder %s30, 1
    %p368 = por %p366, %p367
    %p370 = scmp.ne.s32.totalorder %s355, %s369
    %p371 = scmp.eq.s32.totalorder %s30, 0
    %p372 = por %p370, %p371
    %s374 = sadd.s32 %s373, 1
    %p377 = scmp.eq.s32.totalorder %s24, 1
    %p378 = scmp.ne.s32.totalorder %s373, %s375
    %p379 = scmp.eq.s32.totalorder %s24, 0
    %p380 = por %p378, %p379
    %p381 = scmp.ne.s32.totalorder %s373, %s375
    %p382 = scmp.eq.s32.totalorder %s29, 1
    %p383 = por %p381, %p382
    %p384 = scmp.ne.s32.totalorder %s375, %s376
    %p385 = scmp.eq.s32.totalorder %s29, 0
    %p386 = por %p384, %p385
    %p387 = scmp.ne.s32.totalorder %s375, %s376
    %p388 = scmp.eq.s32.totalorder %s30, 1
    %p389 = por %p387, %p388
    %p391 = scmp.ne.s32.totalorder %s376, %s390
    %p392 = scmp.eq.s32.totalorder %s30, 0
    %p393 = por %p391, %p392
    %s394 = ssub.s32 %s31, %s43
    %s395 = ssub.s32 %s32, %s39
    %s396 = sor.u32 %s394, %s395
    %p397 = scmp.eq.s32.totalorder %s396, 0
    %s399 = sadd.s32 %s398, 1
    %s400 = scalar_select %p397, %s398, %s399
    %p403 = pneg %p397
    %p404 = scmp.eq.s32.totalorder %s24, 1
    %p405 = por %p403, %p404
    %p406 = scmp.ne.s32.totalorder %s398, %s401
    %p407 = scmp.eq.s32.totalorder %s24, 0
    %p408 = por %p406, %p407
    %p409 = scmp.ne.s32.totalorder %s398, %s401
    %p410 = scmp.eq.s32.totalorder %s29, 1
    %p411 = por %p409, %p410
    %p412 = scmp.ne.s32.totalorder %s401, %s402
    %p413 = scmp.eq.s32.totalorder %s29, 0
    %p414 = por %p412, %p413
    %p415 = scmp.ne.s32.totalorder %s401, %s402
    %p416 = scmp.eq.s32.totalorder %s30, 1
    %p417 = por %p415, %p416
    %p419 = scmp.ne.s32.totalorder %s402, %s418
    %p420 = scmp.eq.s32.totalorder %s30, 0
    %p421 = por %p419, %p420
    %s422 = ssub.s32 %s31, %s43
    %s423 = ssub.s32 %s32, %s39
    %s424 = sor.u32 %s422, %s423
    %p425 = scmp.eq.s32.totalorder %s424, 0
    %s427 = sadd.s32 %s426, 1
    %s428 = scalar_select %p425, %s426, %s427
    %p431 = pneg %p425
    %p432 = scmp.eq.s32.totalorder %s24, 1
    %p433 = por %p431, %p432
    %p434 = scmp.ne.s32.totalorder %s426, %s429
    %p435 = scmp.eq.s32.totalorder %s24, 0
    %p436 = por %p434, %p435
    %p437 = scmp.ne.s32.totalorder %s426, %s429
    %p438 = scmp.eq.s32.totalorder %s29, 1
    %p439 = por %p437, %p438
    %p440 = scmp.ne.s32.totalorder %s429, %s430
    %p441 = scmp.eq.s32.totalorder %s29, 0
    %p442 = por %p440, %p441
    %p443 = scmp.ne.s32.totalorder %s429, %s430
    %p444 = scmp.eq.s32.totalorder %s30, 1
    %p445 = por %p443, %p444
    %p447 = scmp.ne.s32.totalorder %s430, %s446
    %p448 = scmp.eq.s32.totalorder %s30, 0
    %p449 = por %p447, %p448
    %p450 = scmp.le.s32.totalorder 1, %s24
    %p451 = scmp.lt.s32.totalorder %s24, 3
    %p452 = pnand %p450, %p451
    %p453 = pneg %p452
    // Predicated region
    $region9: #{dilated_res_block.4} parent=5 // pred_check
      _
    $region10: #{dilated_res_block.4} parent=5 // pred_check_branch
      %455 = sbr.rel (%p452) target = $region12
    $region11: #{dilated_res_block.4} parent=5 // pred_region
      %s456 = ssub.s32 %s24, 1
      // Predicated region
      $region13: #{dilated_res_block.4} parent=11 // pred_check
        %p457 = pneg %p113
      $region14: #{dilated_res_block.4} parent=11 // pred_check_branch
        %459 = sbr.rel (%p457) target = $region16
      $region15: #{dilated_res_block.4} parent=11 // pred_region
        _
      $region16: #{dilated_res_block.4} parent=11 // pred_fallthru
        _
      // Predicated region
      $region17: #{dilated_res_block.4} parent=11 // pred_check
        %p460 = pneg %p134
      $region18: #{dilated_res_block.4} parent=11 // pred_check_branch
        %462 = sbr.rel (%p460) target = $region20
      $region19: #{dilated_res_block.4} parent=11 // pred_region
        _
      $region20: #{dilated_res_block.4} parent=11 // pred_fallthru
        _
      // Predicated region
      $region21: #{dilated_res_block.4} parent=11 // pred_check
        %p463 = pneg %p155
      $region22: #{dilated_res_block.4} parent=11 // pred_check_branch
        %465 = sbr.rel (%p463) target = $region24
      $region23: #{dilated_res_block.4} parent=11 // pred_region
        _
      $region24: #{dilated_res_block.4} parent=11 // pred_fallthru
        _
      // Predicated region
      $region25: #{dilated_res_block.4} parent=11 // pred_check
        %p466 = pneg %p176
      $region26: #{dilated_res_block.4} parent=11 // pred_check_branch
        %468 = sbr.rel (%p466) target = $region28
      $region27: #{dilated_res_block.4} parent=11 // pred_region
        _
      $region28: #{dilated_res_block.4} parent=11 // pred_fallthru
        _
      // Predicated region
      $region29: #{dilated_res_block.4} parent=11 // pred_check
        %p469 = pneg %p197
      $region30: #{dilated_res_block.4} parent=11 // pred_check_branch
        %471 = sbr.rel (%p469) target = $region32
      $region31: #{dilated_res_block.4} parent=11 // pred_region
        _
      $region32: #{dilated_res_block.4} parent=11 // pred_fallthru
        _
      // Predicated region
      $region33: #{dilated_res_block.4} parent=11 // pred_check
        %p472 = pneg %p218
      $region34: #{dilated_res_block.4} parent=11 // pred_check_branch
        %474 = sbr.rel (%p472) target = $region36
      $region35: #{dilated_res_block.4} parent=11 // pred_region
        _
      $region36: #{dilated_res_block.4} parent=11 // pred_fallthru
        _
      // Predicated region
      $region37: #{dilated_res_block.4} parent=11 // pred_check
        %p475 = pneg %p239
      $region38: #{dilated_res_block.4} parent=11 // pred_check_branch
        %477 = sbr.rel (%p475) target = $region40
      $region39: #{dilated_res_block.4} parent=11 // pred_region
        _
      $region40: #{dilated_res_block.4} parent=11 // pred_fallthru
        _
      // Predicated region
      $region41: #{dilated_res_block.4} parent=11 // pred_check
        %p478 = pneg %p260
      $region42: #{dilated_res_block.4} parent=11 // pred_check_branch
        %480 = sbr.rel (%p478) target = $region44
      $region43: #{dilated_res_block.4} parent=11 // pred_region
        _
      $region44: #{dilated_res_block.4} parent=11 // pred_fallthru
        _
      // Predicated region
      $region45: #{dilated_res_block.4} parent=11 // pred_check
        %p481 = pneg %p281
      $region46: #{dilated_res_block.4} parent=11 // pred_check_branch
        %483 = sbr.rel (%p481) target = $region48
      $region47: #{dilated_res_block.4} parent=11 // pred_region
        _
      $region48: #{dilated_res_block.4} parent=11 // pred_fallthru
        _
      // Predicated region
      $region49: #{dilated_res_block.4} parent=11 // pred_check
        %p484 = pneg %p302
      $region50: #{dilated_res_block.4} parent=11 // pred_check_branch
        %486 = sbr.rel (%p484) target = $region52
      $region51: #{dilated_res_block.4} parent=11 // pred_region
        _
      $region52: #{dilated_res_block.4} parent=11 // pred_fallthru
        _
      // Predicated region
      $region53: #{dilated_res_block.4} parent=11 // pred_check
        %p487 = pneg %p323
      $region54: #{dilated_res_block.4} parent=11 // pred_check_branch
        %489 = sbr.rel (%p487) target = $region56
      $region55: #{dilated_res_block.4} parent=11 // pred_region
        _
      $region56: #{dilated_res_block.4} parent=11 // pred_fallthru
        _
      // Predicated region
      $region57: #{dilated_res_block.4} parent=11 // pred_check
        %p490 = pneg %p344
      $region58: #{dilated_res_block.4} parent=11 // pred_check_branch
        %492 = sbr.rel (%p490) target = $region60
      $region59: #{dilated_res_block.4} parent=11 // pred_region
        _
      $region60: #{dilated_res_block.4} parent=11 // pred_fallthru
        _
      // Predicated region
      $region61: #{dilated_res_block.4} parent=11 // pred_check
        %p493 = pneg %p365
      $region62: #{dilated_res_block.4} parent=11 // pred_check_branch
        %495 = sbr.rel (%p493) target = $region64
      $region63: #{dilated_res_block.4} parent=11 // pred_region
        _
      $region64: #{dilated_res_block.4} parent=11 // pred_fallthru
        _
      // Predicated region
      $region65: #{dilated_res_block.4} parent=11 // pred_check
        %p496 = pneg %p386
      $region66: #{dilated_res_block.4} parent=11 // pred_check_branch
        %498 = sbr.rel (%p496) target = $region68
      $region67: #{dilated_res_block.4} parent=11 // pred_region
        _
      $region68: #{dilated_res_block.4} parent=11 // pred_fallthru
        _
    $region12: #{dilated_res_block.4} parent=5 // pred_fallthru
      _
    %p499 = scmp.lt.s32.totalorder %s24, 2
    // Predicated region
    $region69: #{dilated_res_block.4} parent=5 // pred_check
      %p500 = pneg %p499
    $region70: #{dilated_res_block.4} parent=5 // pred_check_branch
      %502 = sbr.rel (%p500) target = $region72
    $region71: #{dilated_res_block.4} parent=5 // pred_region
      // Predicated region
      $region73: #{dilated_res_block.4} parent=71 // pred_check
        %p503 = pneg %p58
      $region74: #{dilated_res_block.4} parent=71 // pred_check_branch
        %505 = sbr.rel (%p503) target = $region76
      $region75: #{dilated_res_block.4} parent=71 // pred_region
        %s506 = smul.u32 16, %s32
        %p507 = scmp.lt.s32.totalorder %s31, 1
        %s508 = scalar_select %p507, %s31, 1
        %p509 = scmp.lt.s32.totalorder %s506, 15
        %s510 = scalar_select %p509, %s506, 15
        %s511 = smul.addr %s508, 16
        %s512 = sadd.s32 %s510, %s511
        %s513 = smul.addr %s512, 8
        %s514 = scalar_lea.vmem %s0, %s513
        %s515 = smul.u32 16, %s32
      $region76: #{dilated_res_block.4} parent=71 // pred_fallthru
        _
      // Predicated region
      $region77: #{dilated_res_block.4} parent=71 // pred_check
        %p516 = pneg %p86
      $region78: #{dilated_res_block.4} parent=71 // pred_check_branch
        %518 = sbr.rel (%p516) target = $region80
      $region79: #{dilated_res_block.4} parent=71 // pred_region
        %s519 = smul.u32 16, %s32
        %p520 = scmp.lt.s32.totalorder %s31, 1
        %s521 = scalar_select %p520, %s31, 1
        %p522 = scmp.lt.s32.totalorder %s519, 15
        %s523 = scalar_select %p522, %s519, 15
        %s524 = smul.addr %s521, 16
        %s525 = sadd.s32 %s523, %s524
        %s526 = smul.addr %s525, 8
        %s527 = scalar_lea.vmem %s1, %s526
        %s528 = smul.u32 16, %s32
      $region80: #{dilated_res_block.4} parent=71 // pred_fallthru
        _
    $region72: #{dilated_res_block.4} parent=5 // pred_fallthru
      _
    %p529 = scmp.le.s32.totalorder 1, %s24
    %p530 = scmp.lt.s32.totalorder %s24, 3
    %p531 = pnand %p529, %p530
    %p532 = pneg %p531
    // Predicated region
    $region81: #{dilated_res_block.4} parent=5 // pred_check
      _
    $region82: #{dilated_res_block.4} parent=5 // pred_check_branch
      %534 = sbr.rel (%p531) target = $region84
    $region83: #{dilated_res_block.4} parent=5 // pred_region
      %s535 = ssub.s32 %s24, 1
      %s536 = smul.u32 16, %s34
      %p537 = scmp.lt.s32.totalorder %s33, 1
      %s538 = scalar_select %p537, %s33, 1
      %p539 = scmp.lt.s32.totalorder %s536, 15
      %s540 = scalar_select %p539, %s536, 15
      %s541 = smul.addr %s538, 16
      %s542 = sadd.s32 %s540, %s541
      %s543 = smul.addr %s542, 8
      %s544 = scalar_lea.vmem %s0, %s543
      %p545 = pneg %p64
      %p546 = pneg %p61
      %s547 = smul.u32 16, %s34
      %p548 = scmp.lt.s32.totalorder %s33, 1
      %s549 = scalar_select %p548, %s33, 1
      %p550 = scmp.lt.s32.totalorder %s547, 15
      %s551 = scalar_select %p550, %s547, 15
      %s552 = smul.addr %s549, 16
      %s553 = sadd.s32 %s551, %s552
      %s554 = smul.addr %s553, 8
      %s555 = scalar_lea.vmem %s1, %s554
      %p556 = pneg %p92
      %p557 = pneg %p89
      %p558 = pneg %p113
      %p559 = pneg %p110
      %p560 = pneg %p134
      %p561 = pneg %p131
      %p562 = pneg %p155
      %p563 = pneg %p152
      %p564 = pneg %p176
      %p565 = pneg %p173
      %p566 = pneg %p197
      %p567 = pneg %p194
      %p568 = pneg %p218
      %p569 = pneg %p215
      %p570 = pneg %p239
      %p571 = pneg %p236
      %p572 = pneg %p260
      %p573 = pneg %p257
      %p574 = pneg %p281
      %p575 = pneg %p278
      %p576 = pneg %p302
      %p577 = pneg %p299
      %p578 = pneg %p323
      %p579 = pneg %p320
      %p580 = pneg %p344
      %p581 = pneg %p341
      %p582 = pneg %p365
      %p583 = pneg %p362
      %p584 = pneg %p386
      %p585 = pneg %p383
      %p586 = pneg %p414
      %p587 = pneg %p411
      %s588 = smul.u32 2, %s34
      %p589 = scmp.lt.s32.totalorder %s33, 1
      %s590 = scalar_select %p589, %s33, 1
      %p591 = scmp.lt.s32.totalorder %s588, 1
      %s592 = scalar_select %p591, %s588, 1
      %s593 = smul.addr %s590, 2
      %s594 = sadd.s32 %s592, %s593
      %s595 = smul.addr %s594, 8
      %s596 = scalar_lea.vmem %s16, %s595
      %p597 = pneg %p442
      %p598 = pneg %p439
      %s599 = smul.u32 16, %s34
      %p600 = scmp.lt.s32.totalorder %s33, 1
      %s601 = scalar_select %p600, %s33, 1
      %p602 = scmp.lt.s32.totalorder %s599, 15
      %s603 = scalar_select %p602, %s599, 15
      %s604 = smul.addr %s601, 16
      %s605 = sadd.s32 %s603, %s604
      %s606 = smul.addr %s605, 8
      %s607 = scalar_lea.vmem %s17, %s606
      %s608 = smul.u32 16, %s34
      %p609 = scmp.lt.s32.totalorder %s33, 1
      %s610 = scalar_select %p609, %s33, 1
      %p611 = scmp.lt.s32.totalorder %s608, 15
      %s612 = scalar_select %p611, %s608, 15
      %s613 = smul.addr %s610, 16
      %s614 = sadd.s32 %s612, %s613
      %s615 = smul.addr %s614, 8
      %s616 = scalar_lea.vmem %s0, %s615
      %s617 = smul.u32 16, %s34
      %s618 = smul.u32 16, %s34
      %p619 = scmp.lt.s32.totalorder %s33, 1
      %s620 = scalar_select %p619, %s33, 1
      %p621 = scmp.lt.s32.totalorder %s618, 15
      %s622 = scalar_select %p621, %s618, 15
      %s623 = smul.addr %s620, 16
      %s624 = sadd.s32 %s622, %s623
      %s625 = smul.addr %s624, 8
      %s626 = scalar_lea.vmem %s1, %s625
      %s627 = smul.u32 16, %s34
      %s628 = smul.u32 2, %s34
      %p629 = scmp.lt.s32.totalorder %s33, 1
      %s630 = scalar_select %p629, %s33, 1
      %p631 = scmp.lt.s32.totalorder %s628, 1
      %s632 = scalar_select %p631, %s628, 1
      %s633 = smul.addr %s630, 2
      %s634 = sadd.s32 %s632, %s633
      %s635 = smul.addr %s634, 8
      %s636 = scalar_lea.vmem %s16, %s635
      %s637 = smul.u32 2, %s34
      %s638 = smul.u32 16, %s34
      %p639 = scmp.lt.s32.totalorder %s33, 1
      %s640 = scalar_select %p639, %s33, 1
      %p641 = scmp.lt.s32.totalorder %s638, 15
      %s642 = scalar_select %p641, %s638, 15
      %s643 = smul.addr %s640, 16
      %s644 = sadd.s32 %s642, %s643
      %s645 = smul.addr %s644, 8
      %s646 = scalar_lea.vmem %s17, %s645
      %s647 = smul.u32 16, %s34
      %v648 = vld [vmem:[%s616] sm:$0xff]
      %v649 = vld [vmem:[%s616 + $0x8] sm:$0xff]
      %v650 = vld [vmem:[%s616 + $0x10] sm:$0xff]
      %v651 = vld [vmem:[%s616 + $0x18] sm:$0xff]
      %v652 = vld [vmem:[%s616 + $0x20] sm:$0xff]
      %v653 = vld [vmem:[%s616 + $0x28] sm:$0xff]
      %v654 = vld [vmem:[%s616 + $0x30] sm:$0xff]
      %v655 = vld [vmem:[%s616 + $0x38] sm:$0xff]
      %v656 = vld [vmem:[%s616 + $0x40] sm:$0xff]
      %v657 = vld [vmem:[%s616 + $0x48] sm:$0xff]
      %v658 = vld [vmem:[%s616 + $0x50] sm:$0xff]
      %v659 = vld [vmem:[%s616 + $0x58] sm:$0xff]
      %v660 = vld [vmem:[%s616 + $0x60] sm:$0xff]
      %v661 = vld [vmem:[%s616 + $0x68] sm:$0xff]
      %v662 = vld [vmem:[%s616 + $0x70] sm:$0xff]
      %v663 = vld [vmem:[%s616 + $0x78] sm:$0xff]
      %v664 = vld [vmem:[%s626] sm:$0xff]
      %v665 = vld [vmem:[%s626 + $0x8] sm:$0xff]
      %v666 = vld [vmem:[%s626 + $0x10] sm:$0xff]
      %v667 = vld [vmem:[%s626 + $0x18] sm:$0xff]
      %v668 = vld [vmem:[%s626 + $0x20] sm:$0xff]
      %v669 = vld [vmem:[%s626 + $0x28] sm:$0xff]
      %v670 = vld [vmem:[%s626 + $0x30] sm:$0xff]
      %v671 = vld [vmem:[%s626 + $0x38] sm:$0xff]
      %v672 = vld [vmem:[%s626 + $0x40] sm:$0xff]
      %v673 = vld [vmem:[%s626 + $0x48] sm:$0xff]
      %v674 = vld [vmem:[%s626 + $0x50] sm:$0xff]
      %v675 = vld [vmem:[%s626 + $0x58] sm:$0xff]
      %v676 = vld [vmem:[%s626 + $0x60] sm:$0xff]
      %v677 = vld [vmem:[%s626 + $0x68] sm:$0xff]
      %v678 = vld [vmem:[%s626 + $0x70] sm:$0xff]
      %v679 = vld [vmem:[%s626 + $0x78] sm:$0xff]
      %v680 = vld [vmem:[%s2] sm:$0xff]
      %v681 = vld [vmem:[%s2 + $0x8] sm:$0x3]
      %vm682 = vcmask 80896
      %v684 = vsel %vm682, %v648, 0
      %v687 = vsel %vm682, %v649, 0
      %v690 = vsel %vm682, %v650, 0
      %v693 = vsel %vm682, %v651, 0
      %v696 = vsel %vm682, %v652, 0
      %v699 = vsel %vm682, %v653, 0
      %v702 = vsel %vm682, %v654, 0
      %v705 = vsel %vm682, %v655, 0
      %v708 = vsel %vm682, %v656, 0
      %v711 = vsel %vm682, %v657, 0
      %v714 = vsel %vm682, %v658, 0
      %v717 = vsel %vm682, %v659, 0
      %v720 = vsel %vm682, %v660, 0
      %v723 = vsel %vm682, %v661, 0
      %v726 = vsel %vm682, %v662, 0
      %v729 = vsel %vm682, %v663, 0
      %vm731 = vcmask 1041408
      %v733 = vsel %vm731, %v681, 0
      %735 = vmatprep.subr.mxu0 0.0
      %736 = vmatpush1.msra.mxu0 0.0
      %737 = vmatprep.subr.mxu0 0.0
      %738 = vmatpush1.msra.mxu0 0.0
      %739 = vmatprep.subr.mxu0 0.0
      %740 = vmatpush1.msra.mxu0 0.0
      %741 = vmatprep.subr.mxu0 0.0
      %742 = vmatpush1.msra.mxu0 0.0
      %743 = vmatprep.subr.mxu0 0.0
      %744 = vmatpush1.msra.mxu0 0.0
      %745 = vmatprep.subr.mxu0 0.0
      %746 = vmatpush1.msra.mxu0 0.0
      %747 = vmatprep.subr.mxu0 0.0
      %748 = vmatpush1.msra.mxu0 0.0
      %749 = vmatprep.subr.mxu0 0.0
      %750 = vmatpush1.msra.mxu0 0.0
      %751 = vmatprep.subr.mxu0 0.0
      %752 = vmatpush1.msra.mxu0 0.0
      %753 = vmatprep.subr.mxu0 0.0
      %754 = vmatpush1.msra.mxu0 0.0
      %755 = vmatprep.subr.mxu0 0.0
      %756 = vmatpush1.msra.mxu0 0.0
      %757 = vmatprep.subr.mxu0 0.0
      %758 = vmatpush1.msra.mxu0 0.0
      %759 = vmatprep.subr.mxu0 0.0
      %760 = vmatpush1.msra.mxu0 0.0
      %761 = vmatprep.subr.mxu0 0.0
      %762 = vmatpush1.msra.mxu0 0.0
      %763 = vmatprep.subr.mxu0 0.0
      %764 = vmatpush1.msra.mxu0 %v733
      %765 = vmatprep.subr.mxu0 0.0
      %766 = vmatpush1.msra.mxu0 %v680
      %767 = vmatprep.subr.mxu0 0.0
      %768 = vmatpush2.msra.mxu0 0.0
      %769 = vmatprep.subr.mxu0 0.0
      %770 = vmatpush2.msra.mxu0 0.0
      %771 = vmatprep.subr.mxu0 0.0
      %772 = vmatpush2.msra.mxu0 0.0
      %773 = vmatprep.subr.mxu0 0.0
      %774 = vmatpush2.msra.mxu0 0.0
      %775 = vmatprep.subr.mxu0 0.0
      %776 = vmatpush2.msra.mxu0 0.0
      %777 = vmatprep.subr.mxu0 0.0
      %778 = vmatpush2.msra.mxu0 0.0
      %779 = vmatprep.subr.mxu0 0.0
      %780 = vmatpush2.msra.mxu0 0.0
      %781 = vmatprep.subr.mxu0 0.0
      %782 = vmatpush2.msra.mxu0 0.0
      %783 = vmatprep.subr.mxu0 0.0
      %784 = vmatpush2.msra.mxu0 0.0
      %785 = vmatprep.subr.mxu0 0.0
      %786 = vmatpush2.msra.mxu0 0.0
      %787 = vmatprep.subr.mxu0 0.0
      %788 = vmatpush2.msra.mxu0 0.0
      %789 = vmatprep.subr.mxu0 0.0
      %790 = vmatpush2.msra.mxu0 0.0
      %791 = vmatprep.subr.mxu0 0.0
      %792 = vmatpush2.msra.mxu0 0.0
      %793 = vmatprep.subr.mxu0 0.0
      %794 = vmatpush2.msra.mxu0 0.0
      %795 = vmatprep.subr.mxu0 0.0
      %796 = vmatpush2.msra.mxu0 0.0
      %797 = vmatprep.subr.mxu0 0.0
      %798 = vmatpush2.msra.mxu0 0.0
      %799 = vmatprep.mubr.f32.mxu0 0.0
      %800 = vmatmul.mubr.f32.gmra.mxu0 %v684
      %v801 = vpop.f32.mrf.mxu0
      %v802 = vadd.f32 0.0, %v801
      %v803 = vpop.f32.mrf.mxu0
      %804 = vmatprep.mubr.f32.mxu0 0.0
      %805 = vmatmul.mubr.f32.gmra.mxu0 %v687
      %v806 = vpop.f32.mrf.mxu0
      %v807 = vadd.f32 0.0, %v806
      %v808 = vpop.f32.mrf.mxu0
      %809 = vmatprep.mubr.f32.mxu0 0.0
      %810 = vmatmul.mubr.f32.gmra.mxu0 %v690
      %v811 = vpop.f32.mrf.mxu0
      %v812 = vadd.f32 0.0, %v811
      %v813 = vpop.f32.mrf.mxu0
      %814 = vmatprep.mubr.f32.mxu0 0.0
      %815 = vmatmul.mubr.f32.gmra.mxu0 %v693
      %v816 = vpop.f32.mrf.mxu0
      %v817 = vadd.f32 0.0, %v816
      %v818 = vpop.f32.mrf.mxu0
      %819 = vmatprep.mubr.f32.mxu0 0.0
      %820 = vmatmul.mubr.f32.gmra.mxu0 %v696
      %v821 = vpop.f32.mrf.mxu0
      %v822 = vadd.f32 0.0, %v821
      %v823 = vpop.f32.mrf.mxu0
      %824 = vmatprep.mubr.f32.mxu0 0.0
      %825 = vmatmul.mubr.f32.gmra.mxu0 %v699
      %v826 = vpop.f32.mrf.mxu0
      %v827 = vadd.f32 0.0, %v826
      %v828 = vpop.f32.mrf.mxu0
      %829 = vmatprep.mubr.f32.mxu0 0.0
      %830 = vmatmul.mubr.f32.gmra.mxu0 %v702
      %v831 = vpop.f32.mrf.mxu0
      %v832 = vadd.f32 0.0, %v831
      %v833 = vpop.f32.mrf.mxu0
      %834 = vmatprep.mubr.f32.mxu0 0.0
      %835 = vmatmul.mubr.f32.gmra.mxu0 %v705
      %v836 = vpop.f32.mrf.mxu0
      %v837 = vadd.f32 0.0, %v836
      %v838 = vpop.f32.mrf.mxu0
      %839 = vmatprep.mubr.f32.mxu0 0.0
      %840 = vmatmul.mubr.f32.gmra.mxu0 %v708
      %v841 = vpop.f32.mrf.mxu0
      %v842 = vadd.f32 0.0, %v841
      %v843 = vpop.f32.mrf.mxu0
      %844 = vmatprep.mubr.f32.mxu0 0.0
      %845 = vmatmul.mubr.f32.gmra.mxu0 %v711
      %v846 = vpop.f32.mrf.mxu0
      %v847 = vadd.f32 0.0, %v846
      %v848 = vpop.f32.mrf.mxu0
      %849 = vmatprep.mubr.f32.mxu0 0.0
      %850 = vmatmul.mubr.f32.gmra.mxu0 %v714
      %v851 = vpop.f32.mrf.mxu0
      %v852 = vadd.f32 0.0, %v851
      %v853 = vpop.f32.mrf.mxu0
      %854 = vmatprep.mubr.f32.mxu0 0.0
      %855 = vmatmul.mubr.f32.gmra.mxu0 %v717
      %v856 = vpop.f32.mrf.mxu0
      %v857 = vadd.f32 0.0, %v856
      %v858 = vpop.f32.mrf.mxu0
      %859 = vmatprep.mubr.f32.mxu0 0.0
      %860 = vmatmul.mubr.f32.gmra.mxu0 %v720
      %v861 = vpop.f32.mrf.mxu0
      %v862 = vadd.f32 0.0, %v861
      %v863 = vpop.f32.mrf.mxu0
      %864 = vmatprep.mubr.f32.mxu0 0.0
      %865 = vmatmul.mubr.f32.gmra.mxu0 %v723
      %v866 = vpop.f32.mrf.mxu0
      %v867 = vadd.f32 0.0, %v866
      %v868 = vpop.f32.mrf.mxu0
      %869 = vmatprep.mubr.f32.mxu0 0.0
      %870 = vmatmul.mubr.f32.gmra.mxu0 %v726
      %v871 = vpop.f32.mrf.mxu0
      %v872 = vadd.f32 0.0, %v871
      %v873 = vpop.f32.mrf.mxu0
      %874 = vmatprep.mubr.f32.mxu0 0.0
      %875 = vmatmul.mubr.f32.gmra.mxu0 %v729
      %v876 = vpop.f32.mrf.mxu0
      %v877 = vadd.f32 0.0, %v876
      %v878 = vpop.f32.mrf.mxu0
      %879 = vdwg.mxu0
      %v880 = vld [vmem:[%s3] sm:$0x1]
      %v882 = vlaneseq
      %v883 = vshrl.u32 %v882, 7
      %v884 = vsub.s32 0, %v883
      %v885 = vrot.slane %v880, %v884
      %v887 = vmul.f32 %v802, %v885
      %v888 = vmul.f32 %v807, %v885
      %v889 = vmul.f32 %v812, %v885
      %v890 = vmul.f32 %v817, %v885
      %v891 = vmul.f32 %v822, %v885
      %v892 = vmul.f32 %v827, %v885
      %v893 = vmul.f32 %v832, %v885
      %v894 = vmul.f32 %v837, %v885
      %v895 = vmul.f32 %v842, %v885
      %v896 = vmul.f32 %v847, %v885
      %v897 = vmul.f32 %v852, %v885
      %v898 = vmul.f32 %v857, %v885
      %v899 = vmul.f32 %v862, %v885
      %v900 = vmul.f32 %v867, %v885
      %v901 = vmul.f32 %v872, %v885
      %v902 = vmul.f32 %v877, %v885
      %v903 = vld [vmem:[%s4] sm:$0x1]
      %v905 = vlaneseq
      %v906 = vshrl.u32 %v905, 7
      %v907 = vsub.s32 0, %v906
      %v908 = vrot.slane %v903, %v907
      %v910 = vadd.f32 %v887, %v908
      %v911 = vadd.f32 %v888, %v908
      %v912 = vadd.f32 %v889, %v908
      %v913 = vadd.f32 %v890, %v908
      %v914 = vadd.f32 %v891, %v908
      %v915 = vadd.f32 %v892, %v908
      %v916 = vadd.f32 %v893, %v908
      %v917 = vadd.f32 %v894, %v908
      %v918 = vadd.f32 %v895, %v908
      %v919 = vadd.f32 %v896, %v908
      %v920 = vadd.f32 %v897, %v908
      %v921 = vadd.f32 %v898, %v908
      %v922 = vadd.f32 %v899, %v908
      %v923 = vadd.f32 %v900, %v908
      %v924 = vadd.f32 %v901, %v908
      %v925 = vadd.f32 %v902, %v908
      %v926 = vmax.f32 %v910, 0.0
      %v927 = vmax.f32 %v911, 0.0
      %v928 = vmax.f32 %v912, 0.0
      %v929 = vmax.f32 %v913, 0.0
      %v930 = vmax.f32 %v914, 0.0
      %v931 = vmax.f32 %v915, 0.0
      %v932 = vmax.f32 %v916, 0.0
      %v933 = vmax.f32 %v917, 0.0
      %v934 = vmax.f32 %v918, 0.0
      %v935 = vmax.f32 %v919, 0.0
      %v936 = vmax.f32 %v920, 0.0
      %v937 = vmax.f32 %v921, 0.0
      %v938 = vmax.f32 %v922, 0.0
      %v939 = vmax.f32 %v923, 0.0
      %v940 = vmax.f32 %v924, 0.0
      %v941 = vmax.f32 %v925, 0.0
      %v942 = vld [vmem:[%s5] sm:$0xff]
      %v943 = vld [vmem:[%s6] sm:$0xff]
      %vm944 = vcmask 64512
      %v946 = vsel %vm944, %v926, 0
      %v949 = vsel %vm944, %v927, 0
      %v952 = vsel %vm944, %v928, 0
      %v955 = vsel %vm944, %v929, 0
      %v958 = vsel %vm944, %v930, 0
      %v961 = vsel %vm944, %v931, 0
      %v964 = vsel %vm944, %v932, 0
      %v967 = vsel %vm944, %v933, 0
      %v970 = vsel %vm944, %v934, 0
      %v973 = vsel %vm944, %v935, 0
      %v976 = vsel %vm944, %v936, 0
      %v979 = vsel %vm944, %v937, 0
      %v982 = vsel %vm944, %v938, 0
      %v985 = vsel %vm944, %v939, 0
      %v988 = vsel %vm944, %v940, 0
      %v991 = vsel %vm944, %v941, 0
      %993 = vmatprep.subr.mxu0 0.0
      %994 = vmatpush1.msra.mxu0 0.0
      %995 = vmatprep.subr.mxu0 0.0
      %996 = vmatpush1.msra.mxu0 0.0
      %997 = vmatprep.subr.mxu0 0.0
      %998 = vmatpush1.msra.mxu0 0.0
      %999 = vmatprep.subr.mxu0 0.0
      %1000 = vmatpush1.msra.mxu0 0.0
      %1001 = vmatprep.subr.mxu0 0.0
      %1002 = vmatpush1.msra.mxu0 0.0
      %1003 = vmatprep.subr.mxu0 0.0
      %1004 = vmatpush1.msra.mxu0 0.0
      %1005 = vmatprep.subr.mxu0 0.0
      %1006 = vmatpush1.msra.mxu0 0.0
      %1007 = vmatprep.subr.mxu0 0.0
      %1008 = vmatpush1.msra.mxu0 0.0
      %1009 = vmatprep.subr.mxu0 0.0
      %1010 = vmatpush1.msra.mxu0 0.0
      %1011 = vmatprep.subr.mxu0 0.0
      %1012 = vmatpush1.msra.mxu0 0.0
      %1013 = vmatprep.subr.mxu0 0.0
      %1014 = vmatpush1.msra.mxu0 0.0
      %1015 = vmatprep.subr.mxu0 0.0
      %1016 = vmatpush1.msra.mxu0 0.0
      %1017 = vmatprep.subr.mxu0 0.0
      %1018 = vmatpush1.msra.mxu0 0.0
      %1019 = vmatprep.subr.mxu0 0.0
      %1020 = vmatpush1.msra.mxu0 0.0
      %1021 = vmatprep.subr.mxu0 0.0
      %1022 = vmatpush1.msra.mxu0 0.0
      %1023 = vmatprep.subr.mxu0 0.0
      %1024 = vmatpush1.msra.mxu0 %v943
      %1025 = vmatprep.subr.mxu0 0.0
      %1026 = vmatpush2.msra.mxu0 0.0
      %1027 = vmatprep.subr.mxu0 0.0
      %1028 = vmatpush2.msra.mxu0 0.0
      %1029 = vmatprep.subr.mxu0 0.0
      %1030 = vmatpush2.msra.mxu0 0.0
      %1031 = vmatprep.subr.mxu0 0.0
      %1032 = vmatpush2.msra.mxu0 0.0
      %1033 = vmatprep.subr.mxu0 0.0
      %1034 = vmatpush2.msra.mxu0 0.0
      %1035 = vmatprep.subr.mxu0 0.0
      %1036 = vmatpush2.msra.mxu0 0.0
      %1037 = vmatprep.subr.mxu0 0.0
      %1038 = vmatpush2.msra.mxu0 0.0
      %1039 = vmatprep.subr.mxu0 0.0
      %1040 = vmatpush2.msra.mxu0 0.0
      %1041 = vmatprep.subr.mxu0 0.0
      %1042 = vmatpush2.msra.mxu0 0.0
      %1043 = vmatprep.subr.mxu0 0.0
      %1044 = vmatpush2.msra.mxu0 0.0
      %1045 = vmatprep.subr.mxu0 0.0
      %1046 = vmatpush2.msra.mxu0 0.0
      %1047 = vmatprep.subr.mxu0 0.0
      %1048 = vmatpush2.msra.mxu0 0.0
      %1049 = vmatprep.subr.mxu0 0.0
      %1050 = vmatpush2.msra.mxu0 0.0
      %1051 = vmatprep.subr.mxu0 0.0
      %1052 = vmatpush2.msra.mxu0 0.0
      %1053 = vmatprep.subr.mxu0 0.0
      %1054 = vmatpush2.msra.mxu0 0.0
      %1055 = vmatprep.subr.mxu0 0.0
      %1056 = vmatpush2.msra.mxu0 0.0
      %1057 = vmatprep.mubr.f32.mxu0 0.0
      %1058 = vmatmul.mubr.f32.gmra.mxu0 %v946
      %v1059 = vpop.f32.mrf.mxu0
      %v1060 = vadd.f32 0.0, %v1059
      %v1061 = vpop.f32.mrf.mxu0
      %1062 = vmatprep.mubr.f32.mxu0 0.0
      %1063 = vmatmul.mubr.f32.gmra.mxu0 %v949
      %v1064 = vpop.f32.mrf.mxu0
      %v1065 = vadd.f32 0.0, %v1064
      %v1066 = vpop.f32.mrf.mxu0
      %1067 = vmatprep.mubr.f32.mxu0 0.0
      %1068 = vmatmul.mubr.f32.gmra.mxu0 %v952
      %v1069 = vpop.f32.mrf.mxu0
      %v1070 = vadd.f32 0.0, %v1069
      %v1071 = vpop.f32.mrf.mxu0
      %1072 = vmatprep.mubr.f32.mxu0 0.0
      %1073 = vmatmul.mubr.f32.gmra.mxu0 %v955
      %v1074 = vpop.f32.mrf.mxu0
      %v1075 = vadd.f32 0.0, %v1074
      %v1076 = vpop.f32.mrf.mxu0
      %1077 = vmatprep.mubr.f32.mxu0 0.0
      %1078 = vmatmul.mubr.f32.gmra.mxu0 %v958
      %v1079 = vpop.f32.mrf.mxu0
      %v1080 = vadd.f32 0.0, %v1079
      %v1081 = vpop.f32.mrf.mxu0
      %1082 = vmatprep.mubr.f32.mxu0 0.0
      %1083 = vmatmul.mubr.f32.gmra.mxu0 %v961
      %v1084 = vpop.f32.mrf.mxu0
      %v1085 = vadd.f32 0.0, %v1084
      %v1086 = vpop.f32.mrf.mxu0
      %1087 = vmatprep.mubr.f32.mxu0 0.0
      %1088 = vmatmul.mubr.f32.gmra.mxu0 %v964
      %v1089 = vpop.f32.mrf.mxu0
      %v1090 = vadd.f32 0.0, %v1089
      %v1091 = vpop.f32.mrf.mxu0
      %1092 = vmatprep.mubr.f32.mxu0 0.0
      %1093 = vmatmul.mubr.f32.gmra.mxu0 %v967
      %v1094 = vpop.f32.mrf.mxu0
      %v1095 = vadd.f32 0.0, %v1094
      %v1096 = vpop.f32.mrf.mxu0
      %1097 = vmatprep.mubr.f32.mxu0 0.0
      %1098 = vmatmul.mubr.f32.gmra.mxu0 %v970
      %v1099 = vpop.f32.mrf.mxu0
      %v1100 = vadd.f32 0.0, %v1099
      %v1101 = vpop.f32.mrf.mxu0
      %1102 = vmatprep.mubr.f32.mxu0 0.0
      %1103 = vmatmul.mubr.f32.gmra.mxu0 %v973
      %v1104 = vpop.f32.mrf.mxu0
      %v1105 = vadd.f32 0.0, %v1104
      %v1106 = vpop.f32.mrf.mxu0
      %1107 = vmatprep.mubr.f32.mxu0 0.0
      %1108 = vmatmul.mubr.f32.gmra.mxu0 %v976
      %v1109 = vpop.f32.mrf.mxu0
      %v1110 = vadd.f32 0.0, %v1109
      %v1111 = vpop.f32.mrf.mxu0
      %1112 = vmatprep.mubr.f32.mxu0 0.0
      %1113 = vmatmul.mubr.f32.gmra.mxu0 %v979
      %v1114 = vpop.f32.mrf.mxu0
      %v1115 = vadd.f32 0.0, %v1114
      %v1116 = vpop.f32.mrf.mxu0
      %1117 = vmatprep.mubr.f32.mxu0 0.0
      %1118 = vmatmul.mubr.f32.gmra.mxu0 %v982
      %v1119 = vpop.f32.mrf.mxu0
      %v1120 = vadd.f32 0.0, %v1119
      %v1121 = vpop.f32.mrf.mxu0
      %1122 = vmatprep.mubr.f32.mxu0 0.0
      %1123 = vmatmul.mubr.f32.gmra.mxu0 %v985
      %v1124 = vpop.f32.mrf.mxu0
      %v1125 = vadd.f32 0.0, %v1124
      %v1126 = vpop.f32.mrf.mxu0
      %1127 = vmatprep.mubr.f32.mxu0 0.0
      %1128 = vmatmul.mubr.f32.gmra.mxu0 %v988
      %v1129 = vpop.f32.mrf.mxu0
      %v1130 = vadd.f32 0.0, %v1129
      %v1131 = vpop.f32.mrf.mxu0
      %1132 = vmatprep.mubr.f32.mxu0 0.0
      %1133 = vmatmul.mubr.f32.gmra.mxu0 %v991
      %v1134 = vpop.f32.mrf.mxu0
      %v1135 = vadd.f32 0.0, %v1134
      %v1136 = vpop.f32.mrf.mxu0
      %1137 = vdwg.mxu0
      %v1139 = vsel %vm944, %v664, 0
      %v1142 = vsel %vm944, %v665, 0
      %v1145 = vsel %vm944, %v666, 0
      %v1148 = vsel %vm944, %v667, 0
      %v1151 = vsel %vm944, %v668, 0
      %v1154 = vsel %vm944, %v669, 0
      %v1157 = vsel %vm944, %v670, 0
      %v1160 = vsel %vm944, %v671, 0
      %v1163 = vsel %vm944, %v672, 0
      %v1166 = vsel %vm944, %v673, 0
      %v1169 = vsel %vm944, %v674, 0
      %v1172 = vsel %vm944, %v675, 0
      %v1175 = vsel %vm944, %v676, 0
      %v1178 = vsel %vm944, %v677, 0
      %v1181 = vsel %vm944, %v678, 0
      %v1184 = vsel %vm944, %v679, 0
      %1186 = vmatprep.subr.mxu0 0.0
      %1187 = vmatpush1.msra.mxu0 0.0
      %1188 = vmatprep.subr.mxu0 0.0
      %1189 = vmatpush1.msra.mxu0 0.0
      %1190 = vmatprep.subr.mxu0 0.0
      %1191 = vmatpush1.msra.mxu0 0.0
      %1192 = vmatprep.subr.mxu0 0.0
      %1193 = vmatpush1.msra.mxu0 0.0
      %1194 = vmatprep.subr.mxu0 0.0
      %1195 = vmatpush1.msra.mxu0 0.0
      %1196 = vmatprep.subr.mxu0 0.0
      %1197 = vmatpush1.msra.mxu0 0.0
      %1198 = vmatprep.subr.mxu0 0.0
      %1199 = vmatpush1.msra.mxu0 0.0
      %1200 = vmatprep.subr.mxu0 0.0
      %1201 = vmatpush1.msra.mxu0 0.0
      %1202 = vmatprep.subr.mxu0 0.0
      %1203 = vmatpush1.msra.mxu0 0.0
      %1204 = vmatprep.subr.mxu0 0.0
      %1205 = vmatpush1.msra.mxu0 0.0
      %1206 = vmatprep.subr.mxu0 0.0
      %1207 = vmatpush1.msra.mxu0 0.0
      %1208 = vmatprep.subr.mxu0 0.0
      %1209 = vmatpush1.msra.mxu0 0.0
      %1210 = vmatprep.subr.mxu0 0.0
      %1211 = vmatpush1.msra.mxu0 0.0
      %1212 = vmatprep.subr.mxu0 0.0
      %1213 = vmatpush1.msra.mxu0 0.0
      %1214 = vmatprep.subr.mxu0 0.0
      %1215 = vmatpush1.msra.mxu0 0.0
      %1216 = vmatprep.subr.mxu0 0.0
      %1217 = vmatpush1.msra.mxu0 %v942
      %1218 = vmatprep.subr.mxu0 0.0
      %1219 = vmatpush2.msra.mxu0 0.0
      %1220 = vmatprep.subr.mxu0 0.0
      %1221 = vmatpush2.msra.mxu0 0.0
      %1222 = vmatprep.subr.mxu0 0.0
      %1223 = vmatpush2.msra.mxu0 0.0
      %1224 = vmatprep.subr.mxu0 0.0
      %1225 = vmatpush2.msra.mxu0 0.0
      %1226 = vmatprep.subr.mxu0 0.0
      %1227 = vmatpush2.msra.mxu0 0.0
      %1228 = vmatprep.subr.mxu0 0.0
      %1229 = vmatpush2.msra.mxu0 0.0
      %1230 = vmatprep.subr.mxu0 0.0
      %1231 = vmatpush2.msra.mxu0 0.0
      %1232 = vmatprep.subr.mxu0 0.0
      %1233 = vmatpush2.msra.mxu0 0.0
      %1234 = vmatprep.subr.mxu0 0.0
      %1235 = vmatpush2.msra.mxu0 0.0
      %1236 = vmatprep.subr.mxu0 0.0
      %1237 = vmatpush2.msra.mxu0 0.0
      %1238 = vmatprep.subr.mxu0 0.0
      %1239 = vmatpush2.msra.mxu0 0.0
      %1240 = vmatprep.subr.mxu0 0.0
      %1241 = vmatpush2.msra.mxu0 0.0
      %1242 = vmatprep.subr.mxu0 0.0
      %1243 = vmatpush2.msra.mxu0 0.0
      %1244 = vmatprep.subr.mxu0 0.0
      %1245 = vmatpush2.msra.mxu0 0.0
      %1246 = vmatprep.subr.mxu0 0.0
      %1247 = vmatpush2.msra.mxu0 0.0
      %1248 = vmatprep.subr.mxu0 0.0
      %1249 = vmatpush2.msra.mxu0 0.0
      %1250 = vmatprep.mubr.f32.mxu0 0.0
      %1251 = vmatmul.mubr.f32.gmra.mxu0 %v1139
      %v1252 = vpop.f32.mrf.mxu0
      %v1253 = vadd.f32 %v1060, %v1252
      %v1254 = vpop.f32.mrf.mxu0
      %1255 = vmatprep.mubr.f32.mxu0 0.0
      %1256 = vmatmul.mubr.f32.gmra.mxu0 %v1142
      %v1257 = vpop.f32.mrf.mxu0
      %v1258 = vadd.f32 %v1065, %v1257
      %v1259 = vpop.f32.mrf.mxu0
      %1260 = vmatprep.mubr.f32.mxu0 0.0
      %1261 = vmatmul.mubr.f32.gmra.mxu0 %v1145
      %v1262 = vpop.f32.mrf.mxu0
      %v1263 = vadd.f32 %v1070, %v1262
      %v1264 = vpop.f32.mrf.mxu0
      %1265 = vmatprep.mubr.f32.mxu0 0.0
      %1266 = vmatmul.mubr.f32.gmra.mxu0 %v1148
      %v1267 = vpop.f32.mrf.mxu0
      %v1268 = vadd.f32 %v1075, %v1267
      %v1269 = vpop.f32.mrf.mxu0
      %1270 = vmatprep.mubr.f32.mxu0 0.0
      %1271 = vmatmul.mubr.f32.gmra.mxu0 %v1151
      %v1272 = vpop.f32.mrf.mxu0
      %v1273 = vadd.f32 %v1080, %v1272
      %v1274 = vpop.f32.mrf.mxu0
      %1275 = vmatprep.mubr.f32.mxu0 0.0
      %1276 = vmatmul.mubr.f32.gmra.mxu0 %v1154
      %v1277 = vpop.f32.mrf.mxu0
      %v1278 = vadd.f32 %v1085, %v1277
      %v1279 = vpop.f32.mrf.mxu0
      %1280 = vmatprep.mubr.f32.mxu0 0.0
      %1281 = vmatmul.mubr.f32.gmra.mxu0 %v1157
      %v1282 = vpop.f32.mrf.mxu0
      %v1283 = vadd.f32 %v1090, %v1282
      %v1284 = vpop.f32.mrf.mxu0
      %1285 = vmatprep.mubr.f32.mxu0 0.0
      %1286 = vmatmul.mubr.f32.gmra.mxu0 %v1160
      %v1287 = vpop.f32.mrf.mxu0
      %v1288 = vadd.f32 %v1095, %v1287
      %v1289 = vpop.f32.mrf.mxu0
      %1290 = vmatprep.mubr.f32.mxu0 0.0
      %1291 = vmatmul.mubr.f32.gmra.mxu0 %v1163
      %v1292 = vpop.f32.mrf.mxu0
      %v1293 = vadd.f32 %v1100, %v1292
      %v1294 = vpop.f32.mrf.mxu0
      %1295 = vmatprep.mubr.f32.mxu0 0.0
      %1296 = vmatmul.mubr.f32.gmra.mxu0 %v1166
      %v1297 = vpop.f32.mrf.mxu0
      %v1298 = vadd.f32 %v1105, %v1297
      %v1299 = vpop.f32.mrf.mxu0
      %1300 = vmatprep.mubr.f32.mxu0 0.0
      %1301 = vmatmul.mubr.f32.gmra.mxu0 %v1169
      %v1302 = vpop.f32.mrf.mxu0
      %v1303 = vadd.f32 %v1110, %v1302
      %v1304 = vpop.f32.mrf.mxu0
      %1305 = vmatprep.mubr.f32.mxu0 0.0
      %1306 = vmatmul.mubr.f32.gmra.mxu0 %v1172
      %v1307 = vpop.f32.mrf.mxu0
      %v1308 = vadd.f32 %v1115, %v1307
      %v1309 = vpop.f32.mrf.mxu0
      %1310 = vmatprep.mubr.f32.mxu0 0.0
      %1311 = vmatmul.mubr.f32.gmra.mxu0 %v1175
      %v1312 = vpop.f32.mrf.mxu0
      %v1313 = vadd.f32 %v1120, %v1312
      %v1314 = vpop.f32.mrf.mxu0
      %1315 = vmatprep.mubr.f32.mxu0 0.0
      %1316 = vmatmul.mubr.f32.gmra.mxu0 %v1178
      %v1317 = vpop.f32.mrf.mxu0
      %v1318 = vadd.f32 %v1125, %v1317
      %v1319 = vpop.f32.mrf.mxu0
      %1320 = vmatprep.mubr.f32.mxu0 0.0
      %1321 = vmatmul.mubr.f32.gmra.mxu0 %v1181
      %v1322 = vpop.f32.mrf.mxu0
      %v1323 = vadd.f32 %v1130, %v1322
      %v1324 = vpop.f32.mrf.mxu0
      %1325 = vmatprep.mubr.f32.mxu0 0.0
      %1326 = vmatmul.mubr.f32.gmra.mxu0 %v1184
      %v1327 = vpop.f32.mrf.mxu0
      %v1328 = vadd.f32 %v1135, %v1327
      %v1329 = vpop.f32.mrf.mxu0
      %1330 = vdwg.mxu0
      %v1331 = vld [vmem:[%s7] sm:$0xff]
      %v1332 = vld [vmem:[%s8] sm:$0xff]
      %1333 = vmatprep.subr.mxu0 0.0
      %1334 = vmatpush1.msra.mxu0 0.0
      %1335 = vmatprep.subr.mxu0 0.0
      %1336 = vmatpush1.msra.mxu0 0.0
      %1337 = vmatprep.subr.mxu0 0.0
      %1338 = vmatpush1.msra.mxu0 0.0
      %1339 = vmatprep.subr.mxu0 0.0
      %1340 = vmatpush1.msra.mxu0 0.0
      %1341 = vmatprep.subr.mxu0 0.0
      %1342 = vmatpush1.msra.mxu0 0.0
      %1343 = vmatprep.subr.mxu0 0.0
      %1344 = vmatpush1.msra.mxu0 0.0
      %1345 = vmatprep.subr.mxu0 0.0
      %1346 = vmatpush1.msra.mxu0 0.0
      %1347 = vmatprep.subr.mxu0 0.0
      %1348 = vmatpush1.msra.mxu0 0.0
      %1349 = vmatprep.subr.mxu0 0.0
      %1350 = vmatpush1.msra.mxu0 0.0
      %1351 = vmatprep.subr.mxu0 0.0
      %1352 = vmatpush1.msra.mxu0 0.0
      %1353 = vmatprep.subr.mxu0 0.0
      %1354 = vmatpush1.msra.mxu0 0.0
      %1355 = vmatprep.subr.mxu0 0.0
      %1356 = vmatpush1.msra.mxu0 0.0
      %1357 = vmatprep.subr.mxu0 0.0
      %1358 = vmatpush1.msra.mxu0 0.0
      %1359 = vmatprep.subr.mxu0 0.0
      %1360 = vmatpush1.msra.mxu0 0.0
      %1361 = vmatprep.subr.mxu0 0.0
      %1362 = vmatpush1.msra.mxu0 0.0
      %1363 = vmatprep.subr.mxu0 0.0
      %1364 = vmatpush1.msra.mxu0 %v1332
      %1365 = vmatprep.subr.mxu0 0.0
      %1366 = vmatpush2.msra.mxu0 0.0
      %1367 = vmatprep.subr.mxu0 0.0
      %1368 = vmatpush2.msra.mxu0 0.0
      %1369 = vmatprep.subr.mxu0 0.0
      %1370 = vmatpush2.msra.mxu0 0.0
      %1371 = vmatprep.subr.mxu0 0.0
      %1372 = vmatpush2.msra.mxu0 0.0
      %1373 = vmatprep.subr.mxu0 0.0
      %1374 = vmatpush2.msra.mxu0 0.0
      %1375 = vmatprep.subr.mxu0 0.0
      %1376 = vmatpush2.msra.mxu0 0.0
      %1377 = vmatprep.subr.mxu0 0.0
      %1378 = vmatpush2.msra.mxu0 0.0
      %1379 = vmatprep.subr.mxu0 0.0
      %1380 = vmatpush2.msra.mxu0 0.0
      %1381 = vmatprep.subr.mxu0 0.0
      %1382 = vmatpush2.msra.mxu0 0.0
      %1383 = vmatprep.subr.mxu0 0.0
      %1384 = vmatpush2.msra.mxu0 0.0
      %1385 = vmatprep.subr.mxu0 0.0
      %1386 = vmatpush2.msra.mxu0 0.0
      %1387 = vmatprep.subr.mxu0 0.0
      %1388 = vmatpush2.msra.mxu0 0.0
      %1389 = vmatprep.subr.mxu0 0.0
      %1390 = vmatpush2.msra.mxu0 0.0
      %1391 = vmatprep.subr.mxu0 0.0
      %1392 = vmatpush2.msra.mxu0 0.0
      %1393 = vmatprep.subr.mxu0 0.0
      %1394 = vmatpush2.msra.mxu0 0.0
      %1395 = vmatprep.subr.mxu0 0.0
      %1396 = vmatpush2.msra.mxu0 0.0
      %1397 = vmatprep.mubr.f32.mxu0 0.0
      %1398 = vmatmul.mubr.f32.gmra.mxu0 %v946
      %v1399 = vpop.f32.mrf.mxu0
      %v1400 = vadd.f32 0.0, %v1399
      %v1401 = vpop.f32.mrf.mxu0
      %1402 = vmatprep.mubr.f32.mxu0 0.0
      %1403 = vmatmul.mubr.f32.gmra.mxu0 %v949
      %v1404 = vpop.f32.mrf.mxu0
      %v1405 = vadd.f32 0.0, %v1404
      %v1406 = vpop.f32.mrf.mxu0
      %1407 = vmatprep.mubr.f32.mxu0 0.0
      %1408 = vmatmul.mubr.f32.gmra.mxu0 %v952
      %v1409 = vpop.f32.mrf.mxu0
      %v1410 = vadd.f32 0.0, %v1409
      %v1411 = vpop.f32.mrf.mxu0
      %1412 = vmatprep.mubr.f32.mxu0 0.0
      %1413 = vmatmul.mubr.f32.gmra.mxu0 %v955
      %v1414 = vpop.f32.mrf.mxu0
      %v1415 = vadd.f32 0.0, %v1414
      %v1416 = vpop.f32.mrf.mxu0
      %1417 = vmatprep.mubr.f32.mxu0 0.0
      %1418 = vmatmul.mubr.f32.gmra.mxu0 %v958
      %v1419 = vpop.f32.mrf.mxu0
      %v1420 = vadd.f32 0.0, %v1419
      %v1421 = vpop.f32.mrf.mxu0
      %1422 = vmatprep.mubr.f32.mxu0 0.0
      %1423 = vmatmul.mubr.f32.gmra.mxu0 %v961
      %v1424 = vpop.f32.mrf.mxu0
      %v1425 = vadd.f32 0.0, %v1424
      %v1426 = vpop.f32.mrf.mxu0
      %1427 = vmatprep.mubr.f32.mxu0 0.0
      %1428 = vmatmul.mubr.f32.gmra.mxu0 %v964
      %v1429 = vpop.f32.mrf.mxu0
      %v1430 = vadd.f32 0.0, %v1429
      %v1431 = vpop.f32.mrf.mxu0
      %1432 = vmatprep.mubr.f32.mxu0 0.0
      %1433 = vmatmul.mubr.f32.gmra.mxu0 %v967
      %v1434 = vpop.f32.mrf.mxu0
      %v1435 = vadd.f32 0.0, %v1434
      %v1436 = vpop.f32.mrf.mxu0
      %1437 = vmatprep.mubr.f32.mxu0 0.0
      %1438 = vmatmul.mubr.f32.gmra.mxu0 %v970
      %v1439 = vpop.f32.mrf.mxu0
      %v1440 = vadd.f32 0.0, %v1439
      %v1441 = vpop.f32.mrf.mxu0
      %1442 = vmatprep.mubr.f32.mxu0 0.0
      %1443 = vmatmul.mubr.f32.gmra.mxu0 %v973
      %v1444 = vpop.f32.mrf.mxu0
      %v1445 = vadd.f32 0.0, %v1444
      %v1446 = vpop.f32.mrf.mxu0
      %1447 = vmatprep.mubr.f32.mxu0 0.0
      %1448 = vmatmul.mubr.f32.gmra.mxu0 %v976
      %v1449 = vpop.f32.mrf.mxu0
      %v1450 = vadd.f32 0.0, %v1449
      %v1451 = vpop.f32.mrf.mxu0
      %1452 = vmatprep.mubr.f32.mxu0 0.0
      %1453 = vmatmul.mubr.f32.gmra.mxu0 %v979
      %v1454 = vpop.f32.mrf.mxu0
      %v1455 = vadd.f32 0.0, %v1454
      %v1456 = vpop.f32.mrf.mxu0
      %1457 = vmatprep.mubr.f32.mxu0 0.0
      %1458 = vmatmul.mubr.f32.gmra.mxu0 %v982
      %v1459 = vpop.f32.mrf.mxu0
      %v1460 = vadd.f32 0.0, %v1459
      %v1461 = vpop.f32.mrf.mxu0
      %1462 = vmatprep.mubr.f32.mxu0 0.0
      %1463 = vmatmul.mubr.f32.gmra.mxu0 %v985
      %v1464 = vpop.f32.mrf.mxu0
      %v1465 = vadd.f32 0.0, %v1464
      %v1466 = vpop.f32.mrf.mxu0
      %1467 = vmatprep.mubr.f32.mxu0 0.0
      %1468 = vmatmul.mubr.f32.gmra.mxu0 %v988
      %v1469 = vpop.f32.mrf.mxu0
      %v1470 = vadd.f32 0.0, %v1469
      %v1471 = vpop.f32.mrf.mxu0
      %1472 = vmatprep.mubr.f32.mxu0 0.0
      %1473 = vmatmul.mubr.f32.gmra.mxu0 %v991
      %v1474 = vpop.f32.mrf.mxu0
      %v1475 = vadd.f32 0.0, %v1474
      %v1476 = vpop.f32.mrf.mxu0
      %1477 = vdwg.mxu0
      %1478 = vmatprep.subr.mxu0 0.0
      %1479 = vmatpush1.msra.mxu0 0.0
      %1480 = vmatprep.subr.mxu0 0.0
      %1481 = vmatpush1.msra.mxu0 0.0
      %1482 = vmatprep.subr.mxu0 0.0
      %1483 = vmatpush1.msra.mxu0 0.0
      %1484 = vmatprep.subr.mxu0 0.0
      %1485 = vmatpush1.msra.mxu0 0.0
      %1486 = vmatprep.subr.mxu0 0.0
      %1487 = vmatpush1.msra.mxu0 0.0
      %1488 = vmatprep.subr.mxu0 0.0
      %1489 = vmatpush1.msra.mxu0 0.0
      %1490 = vmatprep.subr.mxu0 0.0
      %1491 = vmatpush1.msra.mxu0 0.0
      %1492 = vmatprep.subr.mxu0 0.0
      %1493 = vmatpush1.msra.mxu0 0.0
      %1494 = vmatprep.subr.mxu0 0.0
      %1495 = vmatpush1.msra.mxu0 0.0
      %1496 = vmatprep.subr.mxu0 0.0
      %1497 = vmatpush1.msra.mxu0 0.0
      %1498 = vmatprep.subr.mxu0 0.0
      %1499 = vmatpush1.msra.mxu0 0.0
      %1500 = vmatprep.subr.mxu0 0.0
      %1501 = vmatpush1.msra.mxu0 0.0
      %1502 = vmatprep.subr.mxu0 0.0
      %1503 = vmatpush1.msra.mxu0 0.0
      %1504 = vmatprep.subr.mxu0 0.0
      %1505 = vmatpush1.msra.mxu0 0.0
      %1506 = vmatprep.subr.mxu0 0.0
      %1507 = vmatpush1.msra.mxu0 0.0
      %1508 = vmatprep.subr.mxu0 0.0
      %1509 = vmatpush1.msra.mxu0 %v1331
      %1510 = vmatprep.subr.mxu0 0.0
      %1511 = vmatpush2.msra.mxu0 0.0
      %1512 = vmatprep.subr.mxu0 0.0
      %1513 = vmatpush2.msra.mxu0 0.0
      %1514 = vmatprep.subr.mxu0 0.0
      %1515 = vmatpush2.msra.mxu0 0.0
      %1516 = vmatprep.subr.mxu0 0.0
      %1517 = vmatpush2.msra.mxu0 0.0
      %1518 = vmatprep.subr.mxu0 0.0
      %1519 = vmatpush2.msra.mxu0 0.0
      %1520 = vmatprep.subr.mxu0 0.0
      %1521 = vmatpush2.msra.mxu0 0.0
      %1522 = vmatprep.subr.mxu0 0.0
      %1523 = vmatpush2.msra.mxu0 0.0
      %1524 = vmatprep.subr.mxu0 0.0
      %1525 = vmatpush2.msra.mxu0 0.0
      %1526 = vmatprep.subr.mxu0 0.0
      %1527 = vmatpush2.msra.mxu0 0.0
      %1528 = vmatprep.subr.mxu0 0.0
      %1529 = vmatpush2.msra.mxu0 0.0
      %1530 = vmatprep.subr.mxu0 0.0
      %1531 = vmatpush2.msra.mxu0 0.0
      %1532 = vmatprep.subr.mxu0 0.0
      %1533 = vmatpush2.msra.mxu0 0.0
      %1534 = vmatprep.subr.mxu0 0.0
      %1535 = vmatpush2.msra.mxu0 0.0
      %1536 = vmatprep.subr.mxu0 0.0
      %1537 = vmatpush2.msra.mxu0 0.0
      %1538 = vmatprep.subr.mxu0 0.0
      %1539 = vmatpush2.msra.mxu0 0.0
      %1540 = vmatprep.subr.mxu0 0.0
      %1541 = vmatpush2.msra.mxu0 0.0
      %1542 = vmatprep.mubr.f32.mxu0 0.0
      %1543 = vmatmul.mubr.f32.gmra.mxu0 %v1139
      %v1544 = vpop.f32.mrf.mxu0
      %v1545 = vadd.f32 %v1400, %v1544
      %v1546 = vpop.f32.mrf.mxu0
      %1547 = vmatprep.mubr.f32.mxu0 0.0
      %1548 = vmatmul.mubr.f32.gmra.mxu0 %v1142
      %v1549 = vpop.f32.mrf.mxu0
      %v1550 = vadd.f32 %v1405, %v1549
      %v1551 = vpop.f32.mrf.mxu0
      %1552 = vmatprep.mubr.f32.mxu0 0.0
      %1553 = vmatmul.mubr.f32.gmra.mxu0 %v1145
      %v1554 = vpop.f32.mrf.mxu0
      %v1555 = vadd.f32 %v1410, %v1554
      %v1556 = vpop.f32.mrf.mxu0
      %1557 = vmatprep.mubr.f32.mxu0 0.0
      %1558 = vmatmul.mubr.f32.gmra.mxu0 %v1148
      %v1559 = vpop.f32.mrf.mxu0
      %v1560 = vadd.f32 %v1415, %v1559
      %v1561 = vpop.f32.mrf.mxu0
      %1562 = vmatprep.mubr.f32.mxu0 0.0
      %1563 = vmatmul.mubr.f32.gmra.mxu0 %v1151
      %v1564 = vpop.f32.mrf.mxu0
      %v1565 = vadd.f32 %v1420, %v1564
      %v1566 = vpop.f32.mrf.mxu0
      %1567 = vmatprep.mubr.f32.mxu0 0.0
      %1568 = vmatmul.mubr.f32.gmra.mxu0 %v1154
      %v1569 = vpop.f32.mrf.mxu0
      %v1570 = vadd.f32 %v1425, %v1569
      %v1571 = vpop.f32.mrf.mxu0
      %1572 = vmatprep.mubr.f32.mxu0 0.0
      %1573 = vmatmul.mubr.f32.gmra.mxu0 %v1157
      %v1574 = vpop.f32.mrf.mxu0
      %v1575 = vadd.f32 %v1430, %v1574
      %v1576 = vpop.f32.mrf.mxu0
      %1577 = vmatprep.mubr.f32.mxu0 0.0
      %1578 = vmatmul.mubr.f32.gmra.mxu0 %v1160
      %v1579 = vpop.f32.mrf.mxu0
      %v1580 = vadd.f32 %v1435, %v1579
      %v1581 = vpop.f32.mrf.mxu0
      %1582 = vmatprep.mubr.f32.mxu0 0.0
      %1583 = vmatmul.mubr.f32.gmra.mxu0 %v1163
      %v1584 = vpop.f32.mrf.mxu0
      %v1585 = vadd.f32 %v1440, %v1584
      %v1586 = vpop.f32.mrf.mxu0
      %1587 = vmatprep.mubr.f32.mxu0 0.0
      %1588 = vmatmul.mubr.f32.gmra.mxu0 %v1166
      %v1589 = vpop.f32.mrf.mxu0
      %v1590 = vadd.f32 %v1445, %v1589
      %v1591 = vpop.f32.mrf.mxu0
      %1592 = vmatprep.mubr.f32.mxu0 0.0
      %1593 = vmatmul.mubr.f32.gmra.mxu0 %v1169
      %v1594 = vpop.f32.mrf.mxu0
      %v1595 = vadd.f32 %v1450, %v1594
      %v1596 = vpop.f32.mrf.mxu0
      %1597 = vmatprep.mubr.f32.mxu0 0.0
      %1598 = vmatmul.mubr.f32.gmra.mxu0 %v1172
      %v1599 = vpop.f32.mrf.mxu0
      %v1600 = vadd.f32 %v1455, %v1599
      %v1601 = vpop.f32.mrf.mxu0
      %1602 = vmatprep.mubr.f32.mxu0 0.0
      %1603 = vmatmul.mubr.f32.gmra.mxu0 %v1175
      %v1604 = vpop.f32.mrf.mxu0
      %v1605 = vadd.f32 %v1460, %v1604
      %v1606 = vpop.f32.mrf.mxu0
      %1607 = vmatprep.mubr.f32.mxu0 0.0
      %1608 = vmatmul.mubr.f32.gmra.mxu0 %v1178
      %v1609 = vpop.f32.mrf.mxu0
      %v1610 = vadd.f32 %v1465, %v1609
      %v1611 = vpop.f32.mrf.mxu0
      %1612 = vmatprep.mubr.f32.mxu0 0.0
      %1613 = vmatmul.mubr.f32.gmra.mxu0 %v1181
      %v1614 = vpop.f32.mrf.mxu0
      %v1615 = vadd.f32 %v1470, %v1614
      %v1616 = vpop.f32.mrf.mxu0
      %1617 = vmatprep.mubr.f32.mxu0 0.0
      %1618 = vmatmul.mubr.f32.gmra.mxu0 %v1184
      %v1619 = vpop.f32.mrf.mxu0
      %v1620 = vadd.f32 %v1475, %v1619
      %v1621 = vpop.f32.mrf.mxu0
      %1622 = vdwg.mxu0
      %v1623 = vsel %vm944, %v1253, -inf
      %v1624 = vrot.slane %v1623, 4
      %v1625 = vmax.f32 %v1623, %v1624
      %v1626 = vrot.slane %v1625, 2
      %v1627 = vmax.f32 %v1625, %v1626
      %v1628 = vrot.slane %v1627, 1
      %v1629 = vmax.f32 %v1627, %v1628
      %v1630 = vsel %vm944, %v1258, -inf
      %v1631 = vrot.slane %v1630, 4
      %v1632 = vmax.f32 %v1630, %v1631
      %v1633 = vrot.slane %v1632, 2
      %v1634 = vmax.f32 %v1632, %v1633
      %v1635 = vrot.slane %v1634, 1
      %v1636 = vmax.f32 %v1634, %v1635
      %v1637 = vsel %vm944, %v1263, -inf
      %v1638 = vrot.slane %v1637, 4
      %v1639 = vmax.f32 %v1637, %v1638
      %v1640 = vrot.slane %v1639, 2
      %v1641 = vmax.f32 %v1639, %v1640
      %v1642 = vrot.slane %v1641, 1
      %v1643 = vmax.f32 %v1641, %v1642
      %v1644 = vsel %vm944, %v1268, -inf
      %v1645 = vrot.slane %v1644, 4
      %v1646 = vmax.f32 %v1644, %v1645
      %v1647 = vrot.slane %v1646, 2
      %v1648 = vmax.f32 %v1646, %v1647
      %v1649 = vrot.slane %v1648, 1
      %v1650 = vmax.f32 %v1648, %v1649
      %v1651 = vsel %vm944, %v1273, -inf
      %v1652 = vrot.slane %v1651, 4
      %v1653 = vmax.f32 %v1651, %v1652
      %v1654 = vrot.slane %v1653, 2
      %v1655 = vmax.f32 %v1653, %v1654
      %v1656 = vrot.slane %v1655, 1
      %v1657 = vmax.f32 %v1655, %v1656
      %v1658 = vsel %vm944, %v1278, -inf
      %v1659 = vrot.slane %v1658, 4
      %v1660 = vmax.f32 %v1658, %v1659
      %v1661 = vrot.slane %v1660, 2
      %v1662 = vmax.f32 %v1660, %v1661
      %v1663 = vrot.slane %v1662, 1
      %v1664 = vmax.f32 %v1662, %v1663
      %v1665 = vsel %vm944, %v1283, -inf
      %v1666 = vrot.slane %v1665, 4
      %v1667 = vmax.f32 %v1665, %v1666
      %v1668 = vrot.slane %v1667, 2
      %v1669 = vmax.f32 %v1667, %v1668
      %v1670 = vrot.slane %v1669, 1
      %v1671 = vmax.f32 %v1669, %v1670
      %v1672 = vsel %vm944, %v1288, -inf
      %v1673 = vrot.slane %v1672, 4
      %v1674 = vmax.f32 %v1672, %v1673
      %v1675 = vrot.slane %v1674, 2
      %v1676 = vmax.f32 %v1674, %v1675
      %v1677 = vrot.slane %v1676, 1
      %v1678 = vmax.f32 %v1676, %v1677
      %v1679 = vsel %vm944, %v1293, -inf
      %v1680 = vrot.slane %v1679, 4
      %v1681 = vmax.f32 %v1679, %v1680
      %v1682 = vrot.slane %v1681, 2
      %v1683 = vmax.f32 %v1681, %v1682
      %v1684 = vrot.slane %v1683, 1
      %v1685 = vmax.f32 %v1683, %v1684
      %v1686 = vsel %vm944, %v1298, -inf
      %v1687 = vrot.slane %v1686, 4
      %v1688 = vmax.f32 %v1686, %v1687
      %v1689 = vrot.slane %v1688, 2
      %v1690 = vmax.f32 %v1688, %v1689
      %v1691 = vrot.slane %v1690, 1
      %v1692 = vmax.f32 %v1690, %v1691
      %v1693 = vsel %vm944, %v1303, -inf
      %v1694 = vrot.slane %v1693, 4
      %v1695 = vmax.f32 %v1693, %v1694
      %v1696 = vrot.slane %v1695, 2
      %v1697 = vmax.f32 %v1695, %v1696
      %v1698 = vrot.slane %v1697, 1
      %v1699 = vmax.f32 %v1697, %v1698
      %v1700 = vsel %vm944, %v1308, -inf
      %v1701 = vrot.slane %v1700, 4
      %v1702 = vmax.f32 %v1700, %v1701
      %v1703 = vrot.slane %v1702, 2
      %v1704 = vmax.f32 %v1702, %v1703
      %v1705 = vrot.slane %v1704, 1
      %v1706 = vmax.f32 %v1704, %v1705
      %v1707 = vsel %vm944, %v1313, -inf
      %v1708 = vrot.slane %v1707, 4
      %v1709 = vmax.f32 %v1707, %v1708
      %v1710 = vrot.slane %v1709, 2
      %v1711 = vmax.f32 %v1709, %v1710
      %v1712 = vrot.slane %v1711, 1
      %v1713 = vmax.f32 %v1711, %v1712
      %v1714 = vsel %vm944, %v1318, -inf
      %v1715 = vrot.slane %v1714, 4
      %v1716 = vmax.f32 %v1714, %v1715
      %v1717 = vrot.slane %v1716, 2
      %v1718 = vmax.f32 %v1716, %v1717
      %v1719 = vrot.slane %v1718, 1
      %v1720 = vmax.f32 %v1718, %v1719
      %v1721 = vsel %vm944, %v1323, -inf
      %v1722 = vrot.slane %v1721, 4
      %v1723 = vmax.f32 %v1721, %v1722
      %v1724 = vrot.slane %v1723, 2
      %v1725 = vmax.f32 %v1723, %v1724
      %v1726 = vrot.slane %v1725, 1
      %v1727 = vmax.f32 %v1725, %v1726
      %v1728 = vsel %vm944, %v1328, -inf
      %v1729 = vrot.slane %v1728, 4
      %v1730 = vmax.f32 %v1728, %v1729
      %v1731 = vrot.slane %v1730, 2
      %v1732 = vmax.f32 %v1730, %v1731
      %v1733 = vrot.slane %v1732, 1
      %v1734 = vmax.f32 %v1732, %v1733
      %v1735 = vsub.f32 %v1253, %v1629
      %v1736 = vsub.f32 %v1258, %v1636
      %v1737 = vsub.f32 %v1263, %v1643
      %v1738 = vsub.f32 %v1268, %v1650
      %v1739 = vsub.f32 %v1273, %v1657
      %v1740 = vsub.f32 %v1278, %v1664
      %v1741 = vsub.f32 %v1283, %v1671
      %v1742 = vsub.f32 %v1288, %v1678
      %v1743 = vsub.f32 %v1293, %v1685
      %v1744 = vsub.f32 %v1298, %v1692
      %v1745 = vsub.f32 %v1303, %v1699
      %v1746 = vsub.f32 %v1308, %v1706
      %v1747 = vsub.f32 %v1313, %v1713
      %v1748 = vsub.f32 %v1318, %v1720
      %v1749 = vsub.f32 %v1323, %v1727
      %v1750 = vsub.f32 %v1328, %v1734
      %v1751 = vmul.f32 %v1735, 1.442695
      %v1752 = vpow.pop %v1751
      %v1753 = vmul.f32 %v1736, 1.442695
      %v1754 = vpow.pop %v1753
      %v1755 = vmul.f32 %v1737, 1.442695
      %v1756 = vpow.pop %v1755
      %v1757 = vmul.f32 %v1738, 1.442695
      %v1758 = vpow.pop %v1757
      %v1759 = vmul.f32 %v1739, 1.442695
      %v1760 = vpow.pop %v1759
      %v1761 = vmul.f32 %v1740, 1.442695
      %v1762 = vpow.pop %v1761
      %v1763 = vmul.f32 %v1741, 1.442695
      %v1764 = vpow.pop %v1763
      %v1765 = vmul.f32 %v1742, 1.442695
      %v1766 = vpow.pop %v1765
      %v1767 = vmul.f32 %v1743, 1.442695
      %v1768 = vpow.pop %v1767
      %v1769 = vmul.f32 %v1744, 1.442695
      %v1770 = vpow.pop %v1769
      %v1771 = vmul.f32 %v1745, 1.442695
      %v1772 = vpow.pop %v1771
      %v1773 = vmul.f32 %v1746, 1.442695
      %v1774 = vpow.pop %v1773
      %v1775 = vmul.f32 %v1747, 1.442695
      %v1776 = vpow.pop %v1775
      %v1777 = vmul.f32 %v1748, 1.442695
      %v1778 = vpow.pop %v1777
      %v1779 = vmul.f32 %v1749, 1.442695
      %v1780 = vpow.pop %v1779
      %v1781 = vmul.f32 %v1750, 1.442695
      %v1782 = vpow.pop %v1781
      %v1783 = vsel %vm944, %v1752, 0.0
      %v1784 = vrot.slane %v1783, 4
      %v1785 = vadd.f32 %v1783, %v1784
      %v1786 = vrot.slane %v1785, 2
      %v1787 = vadd.f32 %v1785, %v1786
      %v1788 = vrot.slane %v1787, 1
      %v1789 = vadd.f32 %v1787, %v1788
      %v1790 = vsel %vm944, %v1754, 0.0
      %v1791 = vrot.slane %v1790, 4
      %v1792 = vadd.f32 %v1790, %v1791
      %v1793 = vrot.slane %v1792, 2
      %v1794 = vadd.f32 %v1792, %v1793
      %v1795 = vrot.slane %v1794, 1
      %v1796 = vadd.f32 %v1794, %v1795
      %v1797 = vsel %vm944, %v1756, 0.0
      %v1798 = vrot.slane %v1797, 4
      %v1799 = vadd.f32 %v1797, %v1798
      %v1800 = vrot.slane %v1799, 2
      %v1801 = vadd.f32 %v1799, %v1800
      %v1802 = vrot.slane %v1801, 1
      %v1803 = vadd.f32 %v1801, %v1802
      %v1804 = vsel %vm944, %v1758, 0.0
      %v1805 = vrot.slane %v1804, 4
      %v1806 = vadd.f32 %v1804, %v1805
      %v1807 = vrot.slane %v1806, 2
      %v1808 = vadd.f32 %v1806, %v1807
      %v1809 = vrot.slane %v1808, 1
      %v1810 = vadd.f32 %v1808, %v1809
      %v1811 = vsel %vm944, %v1760, 0.0
      %v1812 = vrot.slane %v1811, 4
      %v1813 = vadd.f32 %v1811, %v1812
      %v1814 = vrot.slane %v1813, 2
      %v1815 = vadd.f32 %v1813, %v1814
      %v1816 = vrot.slane %v1815, 1
      %v1817 = vadd.f32 %v1815, %v1816
      %v1818 = vsel %vm944, %v1762, 0.0
      %v1819 = vrot.slane %v1818, 4
      %v1820 = vadd.f32 %v1818, %v1819
      %v1821 = vrot.slane %v1820, 2
      %v1822 = vadd.f32 %v1820, %v1821
      %v1823 = vrot.slane %v1822, 1
      %v1824 = vadd.f32 %v1822, %v1823
      %v1825 = vsel %vm944, %v1764, 0.0
      %v1826 = vrot.slane %v1825, 4
      %v1827 = vadd.f32 %v1825, %v1826
      %v1828 = vrot.slane %v1827, 2
      %v1829 = vadd.f32 %v1827, %v1828
      %v1830 = vrot.slane %v1829, 1
      %v1831 = vadd.f32 %v1829, %v1830
      %v1832 = vsel %vm944, %v1766, 0.0
      %v1833 = vrot.slane %v1832, 4
      %v1834 = vadd.f32 %v1832, %v1833
      %v1835 = vrot.slane %v1834, 2
      %v1836 = vadd.f32 %v1834, %v1835
      %v1837 = vrot.slane %v1836, 1
      %v1838 = vadd.f32 %v1836, %v1837
      %v1839 = vsel %vm944, %v1768, 0.0
      %v1840 = vrot.slane %v1839, 4
      %v1841 = vadd.f32 %v1839, %v1840
      %v1842 = vrot.slane %v1841, 2
      %v1843 = vadd.f32 %v1841, %v1842
      %v1844 = vrot.slane %v1843, 1
      %v1845 = vadd.f32 %v1843, %v1844
      %v1846 = vsel %vm944, %v1770, 0.0
      %v1847 = vrot.slane %v1846, 4
      %v1848 = vadd.f32 %v1846, %v1847
      %v1849 = vrot.slane %v1848, 2
      %v1850 = vadd.f32 %v1848, %v1849
      %v1851 = vrot.slane %v1850, 1
      %v1852 = vadd.f32 %v1850, %v1851
      %v1853 = vsel %vm944, %v1772, 0.0
      %v1854 = vrot.slane %v1853, 4
      %v1855 = vadd.f32 %v1853, %v1854
      %v1856 = vrot.slane %v1855, 2
      %v1857 = vadd.f32 %v1855, %v1856
      %v1858 = vrot.slane %v1857, 1
      %v1859 = vadd.f32 %v1857, %v1858
      %v1860 = vsel %vm944, %v1774, 0.0
      %v1861 = vrot.slane %v1860, 4
      %v1862 = vadd.f32 %v1860, %v1861
      %v1863 = vrot.slane %v1862, 2
      %v1864 = vadd.f32 %v1862, %v1863
      %v1865 = vrot.slane %v1864, 1
      %v1866 = vadd.f32 %v1864, %v1865
      %v1867 = vsel %vm944, %v1776, 0.0
      %v1868 = vrot.slane %v1867, 4
      %v1869 = vadd.f32 %v1867, %v1868
      %v1870 = vrot.slane %v1869, 2
      %v1871 = vadd.f32 %v1869, %v1870
      %v1872 = vrot.slane %v1871, 1
      %v1873 = vadd.f32 %v1871, %v1872
      %v1874 = vsel %vm944, %v1778, 0.0
      %v1875 = vrot.slane %v1874, 4
      %v1876 = vadd.f32 %v1874, %v1875
      %v1877 = vrot.slane %v1876, 2
      %v1878 = vadd.f32 %v1876, %v1877
      %v1879 = vrot.slane %v1878, 1
      %v1880 = vadd.f32 %v1878, %v1879
      %v1881 = vsel %vm944, %v1780, 0.0
      %v1882 = vrot.slane %v1881, 4
      %v1883 = vadd.f32 %v1881, %v1882
      %v1884 = vrot.slane %v1883, 2
      %v1885 = vadd.f32 %v1883, %v1884
      %v1886 = vrot.slane %v1885, 1
      %v1887 = vadd.f32 %v1885, %v1886
      %v1888 = vsel %vm944, %v1782, 0.0
      %v1889 = vrot.slane %v1888, 4
      %v1890 = vadd.f32 %v1888, %v1889
      %v1891 = vrot.slane %v1890, 2
      %v1892 = vadd.f32 %v1890, %v1891
      %v1893 = vrot.slane %v1892, 1
      %v1894 = vadd.f32 %v1892, %v1893
      %v1895 = vrcp.pop %v1789
      %v1896 = vmul.f32 %v1752, %v1895
      %v1897 = vrcp.pop %v1796
      %v1898 = vmul.f32 %v1754, %v1897
      %v1899 = vrcp.pop %v1803
      %v1900 = vmul.f32 %v1756, %v1899
      %v1901 = vrcp.pop %v1810
      %v1902 = vmul.f32 %v1758, %v1901
      %v1903 = vrcp.pop %v1817
      %v1904 = vmul.f32 %v1760, %v1903
      %v1905 = vrcp.pop %v1824
      %v1906 = vmul.f32 %v1762, %v1905
      %v1907 = vrcp.pop %v1831
      %v1908 = vmul.f32 %v1764, %v1907
      %v1909 = vrcp.pop %v1838
      %v1910 = vmul.f32 %v1766, %v1909
      %v1911 = vrcp.pop %v1845
      %v1912 = vmul.f32 %v1768, %v1911
      %v1913 = vrcp.pop %v1852
      %v1914 = vmul.f32 %v1770, %v1913
      %v1915 = vrcp.pop %v1859
      %v1916 = vmul.f32 %v1772, %v1915
      %v1917 = vrcp.pop %v1866
      %v1918 = vmul.f32 %v1774, %v1917
      %v1919 = vrcp.pop %v1873
      %v1920 = vmul.f32 %v1776, %v1919
      %v1921 = vrcp.pop %v1880
      %v1922 = vmul.f32 %v1778, %v1921
      %v1923 = vrcp.pop %v1887
      %v1924 = vmul.f32 %v1780, %v1923
      %v1925 = vrcp.pop %v1894
      %v1926 = vmul.f32 %v1782, %v1925
      %v1927 = vmul.f32 %v664, %v1896
      %v1928 = vmul.f32 %v665, %v1898
      %v1929 = vmul.f32 %v666, %v1900
      %v1930 = vmul.f32 %v667, %v1902
      %v1931 = vmul.f32 %v668, %v1904
      %v1932 = vmul.f32 %v669, %v1906
      %v1933 = vmul.f32 %v670, %v1908
      %v1934 = vmul.f32 %v671, %v1910
      %v1935 = vmul.f32 %v672, %v1912
      %v1936 = vmul.f32 %v673, %v1914
      %v1937 = vmul.f32 %v674, %v1916
      %v1938 = vmul.f32 %v675, %v1918
      %v1939 = vmul.f32 %v676, %v1920
      %v1940 = vmul.f32 %v677, %v1922
      %v1941 = vmul.f32 %v678, %v1924
      %v1942 = vmul.f32 %v679, %v1926
      %v1943 = vsel %vm944, %v1927, 0.0
      %v1944 = vrot.slane %v1943, 4
      %v1945 = vadd.f32 %v1943, %v1944
      %v1946 = vrot.slane %v1945, 2
      %v1947 = vadd.f32 %v1945, %v1946
      %v1948 = vrot.slane %v1947, 1
      %v1949 = vadd.f32 %v1947, %v1948
      %v1950 = vsel %vm944, %v1928, 0.0
      %v1951 = vrot.slane %v1950, 4
      %v1952 = vadd.f32 %v1950, %v1951
      %v1953 = vrot.slane %v1952, 2
      %v1954 = vadd.f32 %v1952, %v1953
      %v1955 = vrot.slane %v1954, 1
      %v1956 = vadd.f32 %v1954, %v1955
      %v1957 = vsel %vm944, %v1929, 0.0
      %v1958 = vrot.slane %v1957, 4
      %v1959 = vadd.f32 %v1957, %v1958
      %v1960 = vrot.slane %v1959, 2
      %v1961 = vadd.f32 %v1959, %v1960
      %v1962 = vrot.slane %v1961, 1
      %v1963 = vadd.f32 %v1961, %v1962
      %v1964 = vsel %vm944, %v1930, 0.0
      %v1965 = vrot.slane %v1964, 4
      %v1966 = vadd.f32 %v1964, %v1965
      %v1967 = vrot.slane %v1966, 2
      %v1968 = vadd.f32 %v1966, %v1967
      %v1969 = vrot.slane %v1968, 1
      %v1970 = vadd.f32 %v1968, %v1969
      %v1971 = vsel %vm944, %v1931, 0.0
      %v1972 = vrot.slane %v1971, 4
      %v1973 = vadd.f32 %v1971, %v1972
      %v1974 = vrot.slane %v1973, 2
      %v1975 = vadd.f32 %v1973, %v1974
      %v1976 = vrot.slane %v1975, 1
      %v1977 = vadd.f32 %v1975, %v1976
      %v1978 = vsel %vm944, %v1932, 0.0
      %v1979 = vrot.slane %v1978, 4
      %v1980 = vadd.f32 %v1978, %v1979
      %v1981 = vrot.slane %v1980, 2
      %v1982 = vadd.f32 %v1980, %v1981
      %v1983 = vrot.slane %v1982, 1
      %v1984 = vadd.f32 %v1982, %v1983
      %v1985 = vsel %vm944, %v1933, 0.0
      %v1986 = vrot.slane %v1985, 4
      %v1987 = vadd.f32 %v1985, %v1986
      %v1988 = vrot.slane %v1987, 2
      %v1989 = vadd.f32 %v1987, %v1988
      %v1990 = vrot.slane %v1989, 1
      %v1991 = vadd.f32 %v1989, %v1990
      %v1992 = vsel %vm944, %v1934, 0.0
      %v1993 = vrot.slane %v1992, 4
      %v1994 = vadd.f32 %v1992, %v1993
      %v1995 = vrot.slane %v1994, 2
      %v1996 = vadd.f32 %v1994, %v1995
      %v1997 = vrot.slane %v1996, 1
      %v1998 = vadd.f32 %v1996, %v1997
      %v1999 = vsel %vm944, %v1935, 0.0
      %v2000 = vrot.slane %v1999, 4
      %v2001 = vadd.f32 %v1999, %v2000
      %v2002 = vrot.slane %v2001, 2
      %v2003 = vadd.f32 %v2001, %v2002
      %v2004 = vrot.slane %v2003, 1
      %v2005 = vadd.f32 %v2003, %v2004
      %v2006 = vsel %vm944, %v1936, 0.0
      %v2007 = vrot.slane %v2006, 4
      %v2008 = vadd.f32 %v2006, %v2007
      %v2009 = vrot.slane %v2008, 2
      %v2010 = vadd.f32 %v2008, %v2009
      %v2011 = vrot.slane %v2010, 1
      %v2012 = vadd.f32 %v2010, %v2011
      %v2013 = vsel %vm944, %v1937, 0.0
      %v2014 = vrot.slane %v2013, 4
      %v2015 = vadd.f32 %v2013, %v2014
      %v2016 = vrot.slane %v2015, 2
      %v2017 = vadd.f32 %v2015, %v2016
      %v2018 = vrot.slane %v2017, 1
      %v2019 = vadd.f32 %v2017, %v2018
      %v2020 = vsel %vm944, %v1938, 0.0
      %v2021 = vrot.slane %v2020, 4
      %v2022 = vadd.f32 %v2020, %v2021
      %v2023 = vrot.slane %v2022, 2
      %v2024 = vadd.f32 %v2022, %v2023
      %v2025 = vrot.slane %v2024, 1
      %v2026 = vadd.f32 %v2024, %v2025
      %v2027 = vsel %vm944, %v1939, 0.0
      %v2028 = vrot.slane %v2027, 4
      %v2029 = vadd.f32 %v2027, %v2028
      %v2030 = vrot.slane %v2029, 2
      %v2031 = vadd.f32 %v2029, %v2030
      %v2032 = vrot.slane %v2031, 1
      %v2033 = vadd.f32 %v2031, %v2032
      %v2034 = vsel %vm944, %v1940, 0.0
      %v2035 = vrot.slane %v2034, 4
      %v2036 = vadd.f32 %v2034, %v2035
      %v2037 = vrot.slane %v2036, 2
      %v2038 = vadd.f32 %v2036, %v2037
      %v2039 = vrot.slane %v2038, 1
      %v2040 = vadd.f32 %v2038, %v2039
      %v2041 = vsel %vm944, %v1941, 0.0
      %v2042 = vrot.slane %v2041, 4
      %v2043 = vadd.f32 %v2041, %v2042
      %v2044 = vrot.slane %v2043, 2
      %v2045 = vadd.f32 %v2043, %v2044
      %v2046 = vrot.slane %v2045, 1
      %v2047 = vadd.f32 %v2045, %v2046
      %v2048 = vsel %vm944, %v1942, 0.0
      %v2049 = vrot.slane %v2048, 4
      %v2050 = vadd.f32 %v2048, %v2049
      %v2051 = vrot.slane %v2050, 2
      %v2052 = vadd.f32 %v2050, %v2051
      %v2053 = vrot.slane %v2052, 1
      %v2054 = vadd.f32 %v2052, %v2053
      %v2055 = vsel %vm944, %v1545, -inf
      %v2056 = vrot.slane %v2055, 4
      %v2057 = vmax.f32 %v2055, %v2056
      %v2058 = vrot.slane %v2057, 2
      %v2059 = vmax.f32 %v2057, %v2058
      %v2060 = vrot.slane %v2059, 1
      %v2061 = vmax.f32 %v2059, %v2060
      %v2062 = vsel %vm944, %v1550, -inf
      %v2063 = vrot.slane %v2062, 4
      %v2064 = vmax.f32 %v2062, %v2063
      %v2065 = vrot.slane %v2064, 2
      %v2066 = vmax.f32 %v2064, %v2065
      %v2067 = vrot.slane %v2066, 1
      %v2068 = vmax.f32 %v2066, %v2067
      %v2069 = vsel %vm944, %v1555, -inf
      %v2070 = vrot.slane %v2069, 4
      %v2071 = vmax.f32 %v2069, %v2070
      %v2072 = vrot.slane %v2071, 2
      %v2073 = vmax.f32 %v2071, %v2072
      %v2074 = vrot.slane %v2073, 1
      %v2075 = vmax.f32 %v2073, %v2074
      %v2076 = vsel %vm944, %v1560, -inf
      %v2077 = vrot.slane %v2076, 4
      %v2078 = vmax.f32 %v2076, %v2077
      %v2079 = vrot.slane %v2078, 2
      %v2080 = vmax.f32 %v2078, %v2079
      %v2081 = vrot.slane %v2080, 1
      %v2082 = vmax.f32 %v2080, %v2081
      %v2083 = vsel %vm944, %v1565, -inf
      %v2084 = vrot.slane %v2083, 4
      %v2085 = vmax.f32 %v2083, %v2084
      %v2086 = vrot.slane %v2085, 2
      %v2087 = vmax.f32 %v2085, %v2086
      %v2088 = vrot.slane %v2087, 1
      %v2089 = vmax.f32 %v2087, %v2088
      %v2090 = vsel %vm944, %v1570, -inf
      %v2091 = vrot.slane %v2090, 4
      %v2092 = vmax.f32 %v2090, %v2091
      %v2093 = vrot.slane %v2092, 2
      %v2094 = vmax.f32 %v2092, %v2093
      %v2095 = vrot.slane %v2094, 1
      %v2096 = vmax.f32 %v2094, %v2095
      %v2097 = vsel %vm944, %v1575, -inf
      %v2098 = vrot.slane %v2097, 4
      %v2099 = vmax.f32 %v2097, %v2098
      %v2100 = vrot.slane %v2099, 2
      %v2101 = vmax.f32 %v2099, %v2100
      %v2102 = vrot.slane %v2101, 1
      %v2103 = vmax.f32 %v2101, %v2102
      %v2104 = vsel %vm944, %v1580, -inf
      %v2105 = vrot.slane %v2104, 4
      %v2106 = vmax.f32 %v2104, %v2105
      %v2107 = vrot.slane %v2106, 2
      %v2108 = vmax.f32 %v2106, %v2107
      %v2109 = vrot.slane %v2108, 1
      %v2110 = vmax.f32 %v2108, %v2109
      %v2111 = vsel %vm944, %v1585, -inf
      %v2112 = vrot.slane %v2111, 4
      %v2113 = vmax.f32 %v2111, %v2112
      %v2114 = vrot.slane %v2113, 2
      %v2115 = vmax.f32 %v2113, %v2114
      %v2116 = vrot.slane %v2115, 1
      %v2117 = vmax.f32 %v2115, %v2116
      %v2118 = vsel %vm944, %v1590, -inf
      %v2119 = vrot.slane %v2118, 4
      %v2120 = vmax.f32 %v2118, %v2119
      %v2121 = vrot.slane %v2120, 2
      %v2122 = vmax.f32 %v2120, %v2121
      %v2123 = vrot.slane %v2122, 1
      %v2124 = vmax.f32 %v2122, %v2123
      %v2125 = vsel %vm944, %v1595, -inf
      %v2126 = vrot.slane %v2125, 4
      %v2127 = vmax.f32 %v2125, %v2126
      %v2128 = vrot.slane %v2127, 2
      %v2129 = vmax.f32 %v2127, %v2128
      %v2130 = vrot.slane %v2129, 1
      %v2131 = vmax.f32 %v2129, %v2130
      %v2132 = vsel %vm944, %v1600, -inf
      %v2133 = vrot.slane %v2132, 4
      %v2134 = vmax.f32 %v2132, %v2133
      %v2135 = vrot.slane %v2134, 2
      %v2136 = vmax.f32 %v2134, %v2135
      %v2137 = vrot.slane %v2136, 1
      %v2138 = vmax.f32 %v2136, %v2137
      %v2139 = vsel %vm944, %v1605, -inf
      %v2140 = vrot.slane %v2139, 4
      %v2141 = vmax.f32 %v2139, %v2140
      %v2142 = vrot.slane %v2141, 2
      %v2143 = vmax.f32 %v2141, %v2142
      %v2144 = vrot.slane %v2143, 1
      %v2145 = vmax.f32 %v2143, %v2144
      %v2146 = vsel %vm944, %v1610, -inf
      %v2147 = vrot.slane %v2146, 4
      %v2148 = vmax.f32 %v2146, %v2147
      %v2149 = vrot.slane %v2148, 2
      %v2150 = vmax.f32 %v2148, %v2149
      %v2151 = vrot.slane %v2150, 1
      %v2152 = vmax.f32 %v2150, %v2151
      %v2153 = vsel %vm944, %v1615, -inf
      %v2154 = vrot.slane %v2153, 4
      %v2155 = vmax.f32 %v2153, %v2154
      %v2156 = vrot.slane %v2155, 2
      %v2157 = vmax.f32 %v2155, %v2156
      %v2158 = vrot.slane %v2157, 1
      %v2159 = vmax.f32 %v2157, %v2158
      %v2160 = vsel %vm944, %v1620, -inf
      %v2161 = vrot.slane %v2160, 4
      %v2162 = vmax.f32 %v2160, %v2161
      %v2163 = vrot.slane %v2162, 2
      %v2164 = vmax.f32 %v2162, %v2163
      %v2165 = vrot.slane %v2164, 1
      %v2166 = vmax.f32 %v2164, %v2165
      %v2167 = vsub.f32 %v1545, %v2061
      %v2168 = vsub.f32 %v1550, %v2068
      %v2169 = vsub.f32 %v1555, %v2075
      %v2170 = vsub.f32 %v1560, %v2082
      %v2171 = vsub.f32 %v1565, %v2089
      %v2172 = vsub.f32 %v1570, %v2096
      %v2173 = vsub.f32 %v1575, %v2103
      %v2174 = vsub.f32 %v1580, %v2110
      %v2175 = vsub.f32 %v1585, %v2117
      %v2176 = vsub.f32 %v1590, %v2124
      %v2177 = vsub.f32 %v1595, %v2131
      %v2178 = vsub.f32 %v1600, %v2138
      %v2179 = vsub.f32 %v1605, %v2145
      %v2180 = vsub.f32 %v1610, %v2152
      %v2181 = vsub.f32 %v1615, %v2159
      %v2182 = vsub.f32 %v1620, %v2166
      %v2183 = vmul.f32 %v2167, 1.442695
      %v2184 = vpow.pop %v2183
      %v2185 = vmul.f32 %v2168, 1.442695
      %v2186 = vpow.pop %v2185
      %v2187 = vmul.f32 %v2169, 1.442695
      %v2188 = vpow.pop %v2187
      %v2189 = vmul.f32 %v2170, 1.442695
      %v2190 = vpow.pop %v2189
      %v2191 = vmul.f32 %v2171, 1.442695
      %v2192 = vpow.pop %v2191
      %v2193 = vmul.f32 %v2172, 1.442695
      %v2194 = vpow.pop %v2193
      %v2195 = vmul.f32 %v2173, 1.442695
      %v2196 = vpow.pop %v2195
      %v2197 = vmul.f32 %v2174, 1.442695
      %v2198 = vpow.pop %v2197
      %v2199 = vmul.f32 %v2175, 1.442695
      %v2200 = vpow.pop %v2199
      %v2201 = vmul.f32 %v2176, 1.442695
      %v2202 = vpow.pop %v2201
      %v2203 = vmul.f32 %v2177, 1.442695
      %v2204 = vpow.pop %v2203
      %v2205 = vmul.f32 %v2178, 1.442695
      %v2206 = vpow.pop %v2205
      %v2207 = vmul.f32 %v2179, 1.442695
      %v2208 = vpow.pop %v2207
      %v2209 = vmul.f32 %v2180, 1.442695
      %v2210 = vpow.pop %v2209
      %v2211 = vmul.f32 %v2181, 1.442695
      %v2212 = vpow.pop %v2211
      %v2213 = vmul.f32 %v2182, 1.442695
      %v2214 = vpow.pop %v2213
      %v2215 = vsel %vm944, %v2184, 0.0
      %v2216 = vrot.slane %v2215, 4
      %v2217 = vadd.f32 %v2215, %v2216
      %v2218 = vrot.slane %v2217, 2
      %v2219 = vadd.f32 %v2217, %v2218
      %v2220 = vrot.slane %v2219, 1
      %v2221 = vadd.f32 %v2219, %v2220
      %v2222 = vsel %vm944, %v2186, 0.0
      %v2223 = vrot.slane %v2222, 4
      %v2224 = vadd.f32 %v2222, %v2223
      %v2225 = vrot.slane %v2224, 2
      %v2226 = vadd.f32 %v2224, %v2225
      %v2227 = vrot.slane %v2226, 1
      %v2228 = vadd.f32 %v2226, %v2227
      %v2229 = vsel %vm944, %v2188, 0.0
      %v2230 = vrot.slane %v2229, 4
      %v2231 = vadd.f32 %v2229, %v2230
      %v2232 = vrot.slane %v2231, 2
      %v2233 = vadd.f32 %v2231, %v2232
      %v2234 = vrot.slane %v2233, 1
      %v2235 = vadd.f32 %v2233, %v2234
      %v2236 = vsel %vm944, %v2190, 0.0
      %v2237 = vrot.slane %v2236, 4
      %v2238 = vadd.f32 %v2236, %v2237
      %v2239 = vrot.slane %v2238, 2
      %v2240 = vadd.f32 %v2238, %v2239
      %v2241 = vrot.slane %v2240, 1
      %v2242 = vadd.f32 %v2240, %v2241
      %v2243 = vsel %vm944, %v2192, 0.0
      %v2244 = vrot.slane %v2243, 4
      %v2245 = vadd.f32 %v2243, %v2244
      %v2246 = vrot.slane %v2245, 2
      %v2247 = vadd.f32 %v2245, %v2246
      %v2248 = vrot.slane %v2247, 1
      %v2249 = vadd.f32 %v2247, %v2248
      %v2250 = vsel %vm944, %v2194, 0.0
      %v2251 = vrot.slane %v2250, 4
      %v2252 = vadd.f32 %v2250, %v2251
      %v2253 = vrot.slane %v2252, 2
      %v2254 = vadd.f32 %v2252, %v2253
      %v2255 = vrot.slane %v2254, 1
      %v2256 = vadd.f32 %v2254, %v2255
      %v2257 = vsel %vm944, %v2196, 0.0
      %v2258 = vrot.slane %v2257, 4
      %v2259 = vadd.f32 %v2257, %v2258
      %v2260 = vrot.slane %v2259, 2
      %v2261 = vadd.f32 %v2259, %v2260
      %v2262 = vrot.slane %v2261, 1
      %v2263 = vadd.f32 %v2261, %v2262
      %v2264 = vsel %vm944, %v2198, 0.0
      %v2265 = vrot.slane %v2264, 4
      %v2266 = vadd.f32 %v2264, %v2265
      %v2267 = vrot.slane %v2266, 2
      %v2268 = vadd.f32 %v2266, %v2267
      %v2269 = vrot.slane %v2268, 1
      %v2270 = vadd.f32 %v2268, %v2269
      %v2271 = vsel %vm944, %v2200, 0.0
      %v2272 = vrot.slane %v2271, 4
      %v2273 = vadd.f32 %v2271, %v2272
      %v2274 = vrot.slane %v2273, 2
      %v2275 = vadd.f32 %v2273, %v2274
      %v2276 = vrot.slane %v2275, 1
      %v2277 = vadd.f32 %v2275, %v2276
      %v2278 = vsel %vm944, %v2202, 0.0
      %v2279 = vrot.slane %v2278, 4
      %v2280 = vadd.f32 %v2278, %v2279
      %v2281 = vrot.slane %v2280, 2
      %v2282 = vadd.f32 %v2280, %v2281
      %v2283 = vrot.slane %v2282, 1
      %v2284 = vadd.f32 %v2282, %v2283
      %v2285 = vsel %vm944, %v2204, 0.0
      %v2286 = vrot.slane %v2285, 4
      %v2287 = vadd.f32 %v2285, %v2286
      %v2288 = vrot.slane %v2287, 2
      %v2289 = vadd.f32 %v2287, %v2288
      %v2290 = vrot.slane %v2289, 1
      %v2291 = vadd.f32 %v2289, %v2290
      %v2292 = vsel %vm944, %v2206, 0.0
      %v2293 = vrot.slane %v2292, 4
      %v2294 = vadd.f32 %v2292, %v2293
      %v2295 = vrot.slane %v2294, 2
      %v2296 = vadd.f32 %v2294, %v2295
      %v2297 = vrot.slane %v2296, 1
      %v2298 = vadd.f32 %v2296, %v2297
      %v2299 = vsel %vm944, %v2208, 0.0
      %v2300 = vrot.slane %v2299, 4
      %v2301 = vadd.f32 %v2299, %v2300
      %v2302 = vrot.slane %v2301, 2
      %v2303 = vadd.f32 %v2301, %v2302
      %v2304 = vrot.slane %v2303, 1
      %v2305 = vadd.f32 %v2303, %v2304
      %v2306 = vsel %vm944, %v2210, 0.0
      %v2307 = vrot.slane %v2306, 4
      %v2308 = vadd.f32 %v2306, %v2307
      %v2309 = vrot.slane %v2308, 2
      %v2310 = vadd.f32 %v2308, %v2309
      %v2311 = vrot.slane %v2310, 1
      %v2312 = vadd.f32 %v2310, %v2311
      %v2313 = vsel %vm944, %v2212, 0.0
      %v2314 = vrot.slane %v2313, 4
      %v2315 = vadd.f32 %v2313, %v2314
      %v2316 = vrot.slane %v2315, 2
      %v2317 = vadd.f32 %v2315, %v2316
      %v2318 = vrot.slane %v2317, 1
      %v2319 = vadd.f32 %v2317, %v2318
      %v2320 = vsel %vm944, %v2214, 0.0
      %v2321 = vrot.slane %v2320, 4
      %v2322 = vadd.f32 %v2320, %v2321
      %v2323 = vrot.slane %v2322, 2
      %v2324 = vadd.f32 %v2322, %v2323
      %v2325 = vrot.slane %v2324, 1
      %v2326 = vadd.f32 %v2324, %v2325
      %v2327 = vrcp.pop %v2221
      %v2328 = vmul.f32 %v2184, %v2327
      %v2329 = vrcp.pop %v2228
      %v2330 = vmul.f32 %v2186, %v2329
      %v2331 = vrcp.pop %v2235
      %v2332 = vmul.f32 %v2188, %v2331
      %v2333 = vrcp.pop %v2242
      %v2334 = vmul.f32 %v2190, %v2333
      %v2335 = vrcp.pop %v2249
      %v2336 = vmul.f32 %v2192, %v2335
      %v2337 = vrcp.pop %v2256
      %v2338 = vmul.f32 %v2194, %v2337
      %v2339 = vrcp.pop %v2263
      %v2340 = vmul.f32 %v2196, %v2339
      %v2341 = vrcp.pop %v2270
      %v2342 = vmul.f32 %v2198, %v2341
      %v2343 = vrcp.pop %v2277
      %v2344 = vmul.f32 %v2200, %v2343
      %v2345 = vrcp.pop %v2284
      %v2346 = vmul.f32 %v2202, %v2345
      %v2347 = vrcp.pop %v2291
      %v2348 = vmul.f32 %v2204, %v2347
      %v2349 = vrcp.pop %v2298
      %v2350 = vmul.f32 %v2206, %v2349
      %v2351 = vrcp.pop %v2305
      %v2352 = vmul.f32 %v2208, %v2351
      %v2353 = vrcp.pop %v2312
      %v2354 = vmul.f32 %v2210, %v2353
      %v2355 = vrcp.pop %v2319
      %v2356 = vmul.f32 %v2212, %v2355
      %v2357 = vrcp.pop %v2326
      %v2358 = vmul.f32 %v2214, %v2357
      %v2359 = vmul.f32 %v926, %v2328
      %v2360 = vmul.f32 %v927, %v2330
      %v2361 = vmul.f32 %v928, %v2332
      %v2362 = vmul.f32 %v929, %v2334
      %v2363 = vmul.f32 %v930, %v2336
      %v2364 = vmul.f32 %v931, %v2338
      %v2365 = vmul.f32 %v932, %v2340
      %v2366 = vmul.f32 %v933, %v2342
      %v2367 = vmul.f32 %v934, %v2344
      %v2368 = vmul.f32 %v935, %v2346
      %v2369 = vmul.f32 %v936, %v2348
      %v2370 = vmul.f32 %v937, %v2350
      %v2371 = vmul.f32 %v938, %v2352
      %v2372 = vmul.f32 %v939, %v2354
      %v2373 = vmul.f32 %v940, %v2356
      %v2374 = vmul.f32 %v941, %v2358
      %v2375 = vsel %vm944, %v2359, 0.0
      %v2376 = vrot.slane %v2375, 4
      %v2377 = vadd.f32 %v2375, %v2376
      %v2378 = vrot.slane %v2377, 2
      %v2379 = vadd.f32 %v2377, %v2378
      %v2380 = vrot.slane %v2379, 1
      %v2381 = vadd.f32 %v2379, %v2380
      %v2382 = vsel %vm944, %v2360, 0.0
      %v2383 = vrot.slane %v2382, 4
      %v2384 = vadd.f32 %v2382, %v2383
      %v2385 = vrot.slane %v2384, 2
      %v2386 = vadd.f32 %v2384, %v2385
      %v2387 = vrot.slane %v2386, 1
      %v2388 = vadd.f32 %v2386, %v2387
      %v2389 = vsel %vm944, %v2361, 0.0
      %v2390 = vrot.slane %v2389, 4
      %v2391 = vadd.f32 %v2389, %v2390
      %v2392 = vrot.slane %v2391, 2
      %v2393 = vadd.f32 %v2391, %v2392
      %v2394 = vrot.slane %v2393, 1
      %v2395 = vadd.f32 %v2393, %v2394
      %v2396 = vsel %vm944, %v2362, 0.0
      %v2397 = vrot.slane %v2396, 4
      %v2398 = vadd.f32 %v2396, %v2397
      %v2399 = vrot.slane %v2398, 2
      %v2400 = vadd.f32 %v2398, %v2399
      %v2401 = vrot.slane %v2400, 1
      %v2402 = vadd.f32 %v2400, %v2401
      %v2403 = vsel %vm944, %v2363, 0.0
      %v2404 = vrot.slane %v2403, 4
      %v2405 = vadd.f32 %v2403, %v2404
      %v2406 = vrot.slane %v2405, 2
      %v2407 = vadd.f32 %v2405, %v2406
      %v2408 = vrot.slane %v2407, 1
      %v2409 = vadd.f32 %v2407, %v2408
      %v2410 = vsel %vm944, %v2364, 0.0
      %v2411 = vrot.slane %v2410, 4
      %v2412 = vadd.f32 %v2410, %v2411
      %v2413 = vrot.slane %v2412, 2
      %v2414 = vadd.f32 %v2412, %v2413
      %v2415 = vrot.slane %v2414, 1
      %v2416 = vadd.f32 %v2414, %v2415
      %v2417 = vsel %vm944, %v2365, 0.0
      %v2418 = vrot.slane %v2417, 4
      %v2419 = vadd.f32 %v2417, %v2418
      %v2420 = vrot.slane %v2419, 2
      %v2421 = vadd.f32 %v2419, %v2420
      %v2422 = vrot.slane %v2421, 1
      %v2423 = vadd.f32 %v2421, %v2422
      %v2424 = vsel %vm944, %v2366, 0.0
      %v2425 = vrot.slane %v2424, 4
      %v2426 = vadd.f32 %v2424, %v2425
      %v2427 = vrot.slane %v2426, 2
      %v2428 = vadd.f32 %v2426, %v2427
      %v2429 = vrot.slane %v2428, 1
      %v2430 = vadd.f32 %v2428, %v2429
      %v2431 = vsel %vm944, %v2367, 0.0
      %v2432 = vrot.slane %v2431, 4
      %v2433 = vadd.f32 %v2431, %v2432
      %v2434 = vrot.slane %v2433, 2
      %v2435 = vadd.f32 %v2433, %v2434
      %v2436 = vrot.slane %v2435, 1
      %v2437 = vadd.f32 %v2435, %v2436
      %v2438 = vsel %vm944, %v2368, 0.0
      %v2439 = vrot.slane %v2438, 4
      %v2440 = vadd.f32 %v2438, %v2439
      %v2441 = vrot.slane %v2440, 2
      %v2442 = vadd.f32 %v2440, %v2441
      %v2443 = vrot.slane %v2442, 1
      %v2444 = vadd.f32 %v2442, %v2443
      %v2445 = vsel %vm944, %v2369, 0.0
      %v2446 = vrot.slane %v2445, 4
      %v2447 = vadd.f32 %v2445, %v2446
      %v2448 = vrot.slane %v2447, 2
      %v2449 = vadd.f32 %v2447, %v2448
      %v2450 = vrot.slane %v2449, 1
      %v2451 = vadd.f32 %v2449, %v2450
      %v2452 = vsel %vm944, %v2370, 0.0
      %v2453 = vrot.slane %v2452, 4
      %v2454 = vadd.f32 %v2452, %v2453
      %v2455 = vrot.slane %v2454, 2
      %v2456 = vadd.f32 %v2454, %v2455
      %v2457 = vrot.slane %v2456, 1
      %v2458 = vadd.f32 %v2456, %v2457
      %v2459 = vsel %vm944, %v2371, 0.0
      %v2460 = vrot.slane %v2459, 4
      %v2461 = vadd.f32 %v2459, %v2460
      %v2462 = vrot.slane %v2461, 2
      %v2463 = vadd.f32 %v2461, %v2462
      %v2464 = vrot.slane %v2463, 1
      %v2465 = vadd.f32 %v2463, %v2464
      %v2466 = vsel %vm944, %v2372, 0.0
      %v2467 = vrot.slane %v2466, 4
      %v2468 = vadd.f32 %v2466, %v2467
      %v2469 = vrot.slane %v2468, 2
      %v2470 = vadd.f32 %v2468, %v2469
      %v2471 = vrot.slane %v2470, 1
      %v2472 = vadd.f32 %v2470, %v2471
      %v2473 = vsel %vm944, %v2373, 0.0
      %v2474 = vrot.slane %v2473, 4
      %v2475 = vadd.f32 %v2473, %v2474
      %v2476 = vrot.slane %v2475, 2
      %v2477 = vadd.f32 %v2475, %v2476
      %v2478 = vrot.slane %v2477, 1
      %v2479 = vadd.f32 %v2477, %v2478
      %v2480 = vsel %vm944, %v2374, 0.0
      %v2481 = vrot.slane %v2480, 4
      %v2482 = vadd.f32 %v2480, %v2481
      %v2483 = vrot.slane %v2482, 2
      %v2484 = vadd.f32 %v2482, %v2483
      %v2485 = vrot.slane %v2484, 1
      %v2486 = vadd.f32 %v2484, %v2485
      %v2487 = vld [vmem:[%s9] sm:$0xff]
      %v2488 = vld [vmem:[%s10] sm:$0xff]
      %vm2505 = vcmask 1041409
      %v2506 = vsel %vm2505, %v2388, %v2381
      %vm2507 = vcmask 1042434
      %v2508 = vsel %vm2507, %v2395, %v2506
      %vm2509 = vcmask 1043459
      %v2510 = vsel %vm2509, %v2402, %v2508
      %vm2511 = vcmask 1044484
      %v2512 = vsel %vm2511, %v2409, %v2510
      %vm2513 = vcmask 1045509
      %v2514 = vsel %vm2513, %v2416, %v2512
      %vm2515 = vcmask 1046534
      %v2516 = vsel %vm2515, %v2423, %v2514
      %vm2517 = vcmask 1047559
      %v2518 = vsel %vm2517, %v2430, %v2516
      %v2519 = vsel %vm2505, %v2444, %v2437
      %v2520 = vsel %vm2507, %v2451, %v2519
      %v2521 = vsel %vm2509, %v2458, %v2520
      %v2522 = vsel %vm2511, %v2465, %v2521
      %v2523 = vsel %vm2513, %v2472, %v2522
      %v2524 = vsel %vm2515, %v2479, %v2523
      %v2525 = vsel %vm2517, %v2486, %v2524
      %v2526 = vsel %vm944, %v2518, 0
      %v2528 = vsel %vm944, %v2525, 0
      %2530 = vmatprep.subr.mxu0 0.0
      %2531 = vmatpush1.msra.mxu0 0.0
      %2532 = vmatprep.subr.mxu0 0.0
      %2533 = vmatpush1.msra.mxu0 0.0
      %2534 = vmatprep.subr.mxu0 0.0
      %2535 = vmatpush1.msra.mxu0 0.0
      %2536 = vmatprep.subr.mxu0 0.0
      %2537 = vmatpush1.msra.mxu0 0.0
      %2538 = vmatprep.subr.mxu0 0.0
      %2539 = vmatpush1.msra.mxu0 0.0
      %2540 = vmatprep.subr.mxu0 0.0
      %2541 = vmatpush1.msra.mxu0 0.0
      %2542 = vmatprep.subr.mxu0 0.0
      %2543 = vmatpush1.msra.mxu0 0.0
      %2544 = vmatprep.subr.mxu0 0.0
      %2545 = vmatpush1.msra.mxu0 0.0
      %2546 = vmatprep.subr.mxu0 0.0
      %2547 = vmatpush1.msra.mxu0 0.0
      %2548 = vmatprep.subr.mxu0 0.0
      %2549 = vmatpush1.msra.mxu0 0.0
      %2550 = vmatprep.subr.mxu0 0.0
      %2551 = vmatpush1.msra.mxu0 0.0
      %2552 = vmatprep.subr.mxu0 0.0
      %2553 = vmatpush1.msra.mxu0 0.0
      %2554 = vmatprep.subr.mxu0 0.0
      %2555 = vmatpush1.msra.mxu0 0.0
      %2556 = vmatprep.subr.mxu0 0.0
      %2557 = vmatpush1.msra.mxu0 0.0
      %2558 = vmatprep.subr.mxu0 0.0
      %2559 = vmatpush1.msra.mxu0 0.0
      %2560 = vmatprep.subr.mxu0 0.0
      %2561 = vmatpush1.msra.mxu0 %v2488
      %2562 = vmatprep.subr.mxu0 0.0
      %2563 = vmatpush2.msra.mxu0 0.0
      %2564 = vmatprep.subr.mxu0 0.0
      %2565 = vmatpush2.msra.mxu0 0.0
      %2566 = vmatprep.subr.mxu0 0.0
      %2567 = vmatpush2.msra.mxu0 0.0
      %2568 = vmatprep.subr.mxu0 0.0
      %2569 = vmatpush2.msra.mxu0 0.0
      %2570 = vmatprep.subr.mxu0 0.0
      %2571 = vmatpush2.msra.mxu0 0.0
      %2572 = vmatprep.subr.mxu0 0.0
      %2573 = vmatpush2.msra.mxu0 0.0
      %2574 = vmatprep.subr.mxu0 0.0
      %2575 = vmatpush2.msra.mxu0 0.0
      %2576 = vmatprep.subr.mxu0 0.0
      %2577 = vmatpush2.msra.mxu0 0.0
      %2578 = vmatprep.subr.mxu0 0.0
      %2579 = vmatpush2.msra.mxu0 0.0
      %2580 = vmatprep.subr.mxu0 0.0
      %2581 = vmatpush2.msra.mxu0 0.0
      %2582 = vmatprep.subr.mxu0 0.0
      %2583 = vmatpush2.msra.mxu0 0.0
      %2584 = vmatprep.subr.mxu0 0.0
      %2585 = vmatpush2.msra.mxu0 0.0
      %2586 = vmatprep.subr.mxu0 0.0
      %2587 = vmatpush2.msra.mxu0 0.0
      %2588 = vmatprep.subr.mxu0 0.0
      %2589 = vmatpush2.msra.mxu0 0.0
      %2590 = vmatprep.subr.mxu0 0.0
      %2591 = vmatpush2.msra.mxu0 0.0
      %2592 = vmatprep.subr.mxu0 0.0
      %2593 = vmatpush2.msra.mxu0 0.0
      %2594 = vmatprep.mubr.f32.mxu0 0.0
      %2595 = vmatmul.mubr.f32.gmra.mxu0 %v2526
      %v2596 = vpop.f32.mrf.mxu0
      %v2597 = vadd.f32 0.0, %v2596
      %v2598 = vpop.f32.mrf.mxu0
      %2599 = vmatprep.mubr.f32.mxu0 0.0
      %2600 = vmatmul.mubr.f32.gmra.mxu0 %v2528
      %v2601 = vpop.f32.mrf.mxu0
      %v2602 = vadd.f32 0.0, %v2601
      %v2603 = vpop.f32.mrf.mxu0
      %2604 = vdwg.mxu0
      %v2621 = vsel %vm2505, %v1956, %v1949
      %v2622 = vsel %vm2507, %v1963, %v2621
      %v2623 = vsel %vm2509, %v1970, %v2622
      %v2624 = vsel %vm2511, %v1977, %v2623
      %v2625 = vsel %vm2513, %v1984, %v2624
      %v2626 = vsel %vm2515, %v1991, %v2625
      %v2627 = vsel %vm2517, %v1998, %v2626
      %v2628 = vsel %vm2505, %v2012, %v2005
      %v2629 = vsel %vm2507, %v2019, %v2628
      %v2630 = vsel %vm2509, %v2026, %v2629
      %v2631 = vsel %vm2511, %v2033, %v2630
      %v2632 = vsel %vm2513, %v2040, %v2631
      %v2633 = vsel %vm2515, %v2047, %v2632
      %v2634 = vsel %vm2517, %v2054, %v2633
      %v2635 = vsel %vm944, %v2627, 0
      %v2637 = vsel %vm944, %v2634, 0
      %2639 = vmatprep.subr.mxu0 0.0
      %2640 = vmatpush1.msra.mxu0 0.0
      %2641 = vmatprep.subr.mxu0 0.0
      %2642 = vmatpush1.msra.mxu0 0.0
      %2643 = vmatprep.subr.mxu0 0.0
      %2644 = vmatpush1.msra.mxu0 0.0
      %2645 = vmatprep.subr.mxu0 0.0
      %2646 = vmatpush1.msra.mxu0 0.0
      %2647 = vmatprep.subr.mxu0 0.0
      %2648 = vmatpush1.msra.mxu0 0.0
      %2649 = vmatprep.subr.mxu0 0.0
      %2650 = vmatpush1.msra.mxu0 0.0
      %2651 = vmatprep.subr.mxu0 0.0
      %2652 = vmatpush1.msra.mxu0 0.0
      %2653 = vmatprep.subr.mxu0 0.0
      %2654 = vmatpush1.msra.mxu0 0.0
      %2655 = vmatprep.subr.mxu0 0.0
      %2656 = vmatpush1.msra.mxu0 0.0
      %2657 = vmatprep.subr.mxu0 0.0
      %2658 = vmatpush1.msra.mxu0 0.0
      %2659 = vmatprep.subr.mxu0 0.0
      %2660 = vmatpush1.msra.mxu0 0.0
      %2661 = vmatprep.subr.mxu0 0.0
      %2662 = vmatpush1.msra.mxu0 0.0
      %2663 = vmatprep.subr.mxu0 0.0
      %2664 = vmatpush1.msra.mxu0 0.0
      %2665 = vmatprep.subr.mxu0 0.0
      %2666 = vmatpush1.msra.mxu0 0.0
      %2667 = vmatprep.subr.mxu0 0.0
      %2668 = vmatpush1.msra.mxu0 0.0
      %2669 = vmatprep.subr.mxu0 0.0
      %2670 = vmatpush1.msra.mxu0 %v2487
      %2671 = vmatprep.subr.mxu0 0.0
      %2672 = vmatpush2.msra.mxu0 0.0
      %2673 = vmatprep.subr.mxu0 0.0
      %2674 = vmatpush2.msra.mxu0 0.0
      %2675 = vmatprep.subr.mxu0 0.0
      %2676 = vmatpush2.msra.mxu0 0.0
      %2677 = vmatprep.subr.mxu0 0.0
      %2678 = vmatpush2.msra.mxu0 0.0
      %2679 = vmatprep.subr.mxu0 0.0
      %2680 = vmatpush2.msra.mxu0 0.0
      %2681 = vmatprep.subr.mxu0 0.0
      %2682 = vmatpush2.msra.mxu0 0.0
      %2683 = vmatprep.subr.mxu0 0.0
      %2684 = vmatpush2.msra.mxu0 0.0
      %2685 = vmatprep.subr.mxu0 0.0
      %2686 = vmatpush2.msra.mxu0 0.0
      %2687 = vmatprep.subr.mxu0 0.0
      %2688 = vmatpush2.msra.mxu0 0.0
      %2689 = vmatprep.subr.mxu0 0.0
      %2690 = vmatpush2.msra.mxu0 0.0
      %2691 = vmatprep.subr.mxu0 0.0
      %2692 = vmatpush2.msra.mxu0 0.0
      %2693 = vmatprep.subr.mxu0 0.0
      %2694 = vmatpush2.msra.mxu0 0.0
      %2695 = vmatprep.subr.mxu0 0.0
      %2696 = vmatpush2.msra.mxu0 0.0
      %2697 = vmatprep.subr.mxu0 0.0
      %2698 = vmatpush2.msra.mxu0 0.0
      %2699 = vmatprep.subr.mxu0 0.0
      %2700 = vmatpush2.msra.mxu0 0.0
      %2701 = vmatprep.subr.mxu0 0.0
      %2702 = vmatpush2.msra.mxu0 0.0
      %2703 = vmatprep.mubr.f32.mxu0 0.0
      %2704 = vmatmul.mubr.f32.gmra.mxu0 %v2635
      %v2705 = vpop.f32.mrf.mxu0
      %v2706 = vadd.f32 %v2597, %v2705
      %v2707 = vpop.f32.mrf.mxu0
      %2708 = vmatprep.mubr.f32.mxu0 0.0
      %2709 = vmatmul.mubr.f32.gmra.mxu0 %v2637
      %v2710 = vpop.f32.mrf.mxu0
      %v2711 = vadd.f32 %v2602, %v2710
      %v2712 = vpop.f32.mrf.mxu0
      %2713 = vdwg.mxu0
      %v2714 = vld [vmem:[%s11] sm:$0x1]
      %v2716 = vlaneseq
      %v2717 = vshrl.u32 %v2716, 7
      %v2718 = vsub.s32 0, %v2717
      %v2719 = vrot.slane %v2714, %v2718
      %v2721 = vmul.f32 %v2706, %v2719
      %v2722 = vmul.f32 %v2711, %v2719
      %v2723 = vld [vmem:[%s12] sm:$0x1]
      %v2725 = vlaneseq
      %v2726 = vshrl.u32 %v2725, 7
      %v2727 = vsub.s32 0, %v2726
      %v2728 = vrot.slane %v2723, %v2727
      %v2730 = vadd.f32 %v2721, %v2728
      %v2731 = vadd.f32 %v2722, %v2728
      %v2732 = vmax.f32 %v2730, 0.0
      %v2733 = vmax.f32 %v2731, 0.0
      %2734 = vst.msk [vmem:[%s636] sm:$0xff] %vm944, %v2732
      %2735 = vst.msk [vmem:[%s636 + $0x8] sm:$0xff] %vm944, %v2733
      %v2736 = vld [vmem:[%s13] sm:$0xff]
      %2737 = vmatprep.subr.mxu0 0.0
      %2738 = vmatpush1.msra.mxu0 0.0
      %2739 = vmatprep.subr.mxu0 0.0
      %2740 = vmatpush1.msra.mxu0 0.0
      %2741 = vmatprep.subr.mxu0 0.0
      %2742 = vmatpush1.msra.mxu0 0.0
      %2743 = vmatprep.subr.mxu0 0.0
      %2744 = vmatpush1.msra.mxu0 0.0
      %2745 = vmatprep.subr.mxu0 0.0
      %2746 = vmatpush1.msra.mxu0 0.0
      %2747 = vmatprep.subr.mxu0 0.0
      %2748 = vmatpush1.msra.mxu0 0.0
      %2749 = vmatprep.subr.mxu0 0.0
      %2750 = vmatpush1.msra.mxu0 0.0
      %2751 = vmatprep.subr.mxu0 0.0
      %2752 = vmatpush1.msra.mxu0 0.0
      %2753 = vmatprep.subr.mxu0 0.0
      %2754 = vmatpush1.msra.mxu0 0.0
      %2755 = vmatprep.subr.mxu0 0.0
      %2756 = vmatpush1.msra.mxu0 0.0
      %2757 = vmatprep.subr.mxu0 0.0
      %2758 = vmatpush1.msra.mxu0 0.0
      %2759 = vmatprep.subr.mxu0 0.0
      %2760 = vmatpush1.msra.mxu0 0.0
      %2761 = vmatprep.subr.mxu0 0.0
      %2762 = vmatpush1.msra.mxu0 0.0
      %2763 = vmatprep.subr.mxu0 0.0
      %2764 = vmatpush1.msra.mxu0 0.0
      %2765 = vmatprep.subr.mxu0 0.0
      %2766 = vmatpush1.msra.mxu0 0.0
      %2767 = vmatprep.subr.mxu0 0.0
      %2768 = vmatpush1.msra.mxu0 %v2736
      %2769 = vmatprep.subr.mxu0 0.0
      %2770 = vmatpush2.msra.mxu0 0.0
      %2771 = vmatprep.subr.mxu0 0.0
      %2772 = vmatpush2.msra.mxu0 0.0
      %2773 = vmatprep.subr.mxu0 0.0
      %2774 = vmatpush2.msra.mxu0 0.0
      %2775 = vmatprep.subr.mxu0 0.0
      %2776 = vmatpush2.msra.mxu0 0.0
      %2777 = vmatprep.subr.mxu0 0.0
      %2778 = vmatpush2.msra.mxu0 0.0
      %2779 = vmatprep.subr.mxu0 0.0
      %2780 = vmatpush2.msra.mxu0 0.0
      %2781 = vmatprep.subr.mxu0 0.0
      %2782 = vmatpush2.msra.mxu0 0.0
      %2783 = vmatprep.subr.mxu0 0.0
      %2784 = vmatpush2.msra.mxu0 0.0
      %2785 = vmatprep.subr.mxu0 0.0
      %2786 = vmatpush2.msra.mxu0 0.0
      %2787 = vmatprep.subr.mxu0 0.0
      %2788 = vmatpush2.msra.mxu0 0.0
      %2789 = vmatprep.subr.mxu0 0.0
      %2790 = vmatpush2.msra.mxu0 0.0
      %2791 = vmatprep.subr.mxu0 0.0
      %2792 = vmatpush2.msra.mxu0 0.0
      %2793 = vmatprep.subr.mxu0 0.0
      %2794 = vmatpush2.msra.mxu0 0.0
      %2795 = vmatprep.subr.mxu0 0.0
      %2796 = vmatpush2.msra.mxu0 0.0
      %2797 = vmatprep.subr.mxu0 0.0
      %2798 = vmatpush2.msra.mxu0 0.0
      %2799 = vmatprep.subr.mxu0 0.0
      %2800 = vmatpush2.msra.mxu0 0.0
      %2801 = vmatprep.mubr.f32.mxu0 0.0
      %2802 = vmatmul.mubr.f32.gmra.mxu0 %v946
      %v2803 = vpop.f32.mrf.mxu0
      %v2804 = vadd.f32 0.0, %v2803
      %v2805 = vpop.f32.mrf.mxu0
      %2806 = vmatprep.mubr.f32.mxu0 0.0
      %2807 = vmatmul.mubr.f32.gmra.mxu0 %v949
      %v2808 = vpop.f32.mrf.mxu0
      %v2809 = vadd.f32 0.0, %v2808
      %v2810 = vpop.f32.mrf.mxu0
      %2811 = vmatprep.mubr.f32.mxu0 0.0
      %2812 = vmatmul.mubr.f32.gmra.mxu0 %v952
      %v2813 = vpop.f32.mrf.mxu0
      %v2814 = vadd.f32 0.0, %v2813
      %v2815 = vpop.f32.mrf.mxu0
      %2816 = vmatprep.mubr.f32.mxu0 0.0
      %2817 = vmatmul.mubr.f32.gmra.mxu0 %v955
      %v2818 = vpop.f32.mrf.mxu0
      %v2819 = vadd.f32 0.0, %v2818
      %v2820 = vpop.f32.mrf.mxu0
      %2821 = vmatprep.mubr.f32.mxu0 0.0
      %2822 = vmatmul.mubr.f32.gmra.mxu0 %v958
      %v2823 = vpop.f32.mrf.mxu0
      %v2824 = vadd.f32 0.0, %v2823
      %v2825 = vpop.f32.mrf.mxu0
      %2826 = vmatprep.mubr.f32.mxu0 0.0
      %2827 = vmatmul.mubr.f32.gmra.mxu0 %v961
      %v2828 = vpop.f32.mrf.mxu0
      %v2829 = vadd.f32 0.0, %v2828
      %v2830 = vpop.f32.mrf.mxu0
      %2831 = vmatprep.mubr.f32.mxu0 0.0
      %2832 = vmatmul.mubr.f32.gmra.mxu0 %v964
      %v2833 = vpop.f32.mrf.mxu0
      %v2834 = vadd.f32 0.0, %v2833
      %v2835 = vpop.f32.mrf.mxu0
      %2836 = vmatprep.mubr.f32.mxu0 0.0
      %2837 = vmatmul.mubr.f32.gmra.mxu0 %v967
      %v2838 = vpop.f32.mrf.mxu0
      %v2839 = vadd.f32 0.0, %v2838
      %v2840 = vpop.f32.mrf.mxu0
      %2841 = vmatprep.mubr.f32.mxu0 0.0
      %2842 = vmatmul.mubr.f32.gmra.mxu0 %v970
      %v2843 = vpop.f32.mrf.mxu0
      %v2844 = vadd.f32 0.0, %v2843
      %v2845 = vpop.f32.mrf.mxu0
      %2846 = vmatprep.mubr.f32.mxu0 0.0
      %2847 = vmatmul.mubr.f32.gmra.mxu0 %v973
      %v2848 = vpop.f32.mrf.mxu0
      %v2849 = vadd.f32 0.0, %v2848
      %v2850 = vpop.f32.mrf.mxu0
      %2851 = vmatprep.mubr.f32.mxu0 0.0
      %2852 = vmatmul.mubr.f32.gmra.mxu0 %v976
      %v2853 = vpop.f32.mrf.mxu0
      %v2854 = vadd.f32 0.0, %v2853
      %v2855 = vpop.f32.mrf.mxu0
      %2856 = vmatprep.mubr.f32.mxu0 0.0
      %2857 = vmatmul.mubr.f32.gmra.mxu0 %v979
      %v2858 = vpop.f32.mrf.mxu0
      %v2859 = vadd.f32 0.0, %v2858
      %v2860 = vpop.f32.mrf.mxu0
      %2861 = vmatprep.mubr.f32.mxu0 0.0
      %2862 = vmatmul.mubr.f32.gmra.mxu0 %v982
      %v2863 = vpop.f32.mrf.mxu0
      %v2864 = vadd.f32 0.0, %v2863
      %v2865 = vpop.f32.mrf.mxu0
      %2866 = vmatprep.mubr.f32.mxu0 0.0
      %2867 = vmatmul.mubr.f32.gmra.mxu0 %v985
      %v2868 = vpop.f32.mrf.mxu0
      %v2869 = vadd.f32 0.0, %v2868
      %v2870 = vpop.f32.mrf.mxu0
      %2871 = vmatprep.mubr.f32.mxu0 0.0
      %2872 = vmatmul.mubr.f32.gmra.mxu0 %v988
      %v2873 = vpop.f32.mrf.mxu0
      %v2874 = vadd.f32 0.0, %v2873
      %v2875 = vpop.f32.mrf.mxu0
      %2876 = vmatprep.mubr.f32.mxu0 0.0
      %2877 = vmatmul.mubr.f32.gmra.mxu0 %v991
      %v2878 = vpop.f32.mrf.mxu0
      %v2879 = vadd.f32 0.0, %v2878
      %v2880 = vpop.f32.mrf.mxu0
      %2881 = vdwg.mxu0
      %v2882 = vld [vmem:[%s14] sm:$0x1]
      %v2884 = vlaneseq
      %v2885 = vshrl.u32 %v2884, 7
      %v2886 = vsub.s32 0, %v2885
      %v2887 = vrot.slane %v2882, %v2886
      %v2889 = vmul.f32 %v2804, %v2887
      %v2890 = vmul.f32 %v2809, %v2887
      %v2891 = vmul.f32 %v2814, %v2887
      %v2892 = vmul.f32 %v2819, %v2887
      %v2893 = vmul.f32 %v2824, %v2887
      %v2894 = vmul.f32 %v2829, %v2887
      %v2895 = vmul.f32 %v2834, %v2887
      %v2896 = vmul.f32 %v2839, %v2887
      %v2897 = vmul.f32 %v2844, %v2887
      %v2898 = vmul.f32 %v2849, %v2887
      %v2899 = vmul.f32 %v2854, %v2887
      %v2900 = vmul.f32 %v2859, %v2887
      %v2901 = vmul.f32 %v2864, %v2887
      %v2902 = vmul.f32 %v2869, %v2887
      %v2903 = vmul.f32 %v2874, %v2887
      %v2904 = vmul.f32 %v2879, %v2887
      %v2905 = vld [vmem:[%s15] sm:$0x1]
      %v2907 = vlaneseq
      %v2908 = vshrl.u32 %v2907, 7
      %v2909 = vsub.s32 0, %v2908
      %v2910 = vrot.slane %v2905, %v2909
      %v2912 = vadd.f32 %v2889, %v2910
      %v2913 = vadd.f32 %v2890, %v2910
      %v2914 = vadd.f32 %v2891, %v2910
      %v2915 = vadd.f32 %v2892, %v2910
      %v2916 = vadd.f32 %v2893, %v2910
      %v2917 = vadd.f32 %v2894, %v2910
      %v2918 = vadd.f32 %v2895, %v2910
      %v2919 = vadd.f32 %v2896, %v2910
      %v2920 = vadd.f32 %v2897, %v2910
      %v2921 = vadd.f32 %v2898, %v2910
      %v2922 = vadd.f32 %v2899, %v2910
      %v2923 = vadd.f32 %v2900, %v2910
      %v2924 = vadd.f32 %v2901, %v2910
      %v2925 = vadd.f32 %v2902, %v2910
      %v2926 = vadd.f32 %v2903, %v2910
      %v2927 = vadd.f32 %v2904, %v2910
      %v2928 = vmax.f32 %v2912, 0.0
      %v2929 = vmax.f32 %v2913, 0.0
      %v2930 = vmax.f32 %v2914, 0.0
      %v2931 = vmax.f32 %v2915, 0.0
      %v2932 = vmax.f32 %v2916, 0.0
      %v2933 = vmax.f32 %v2917, 0.0
      %v2934 = vmax.f32 %v2918, 0.0
      %v2935 = vmax.f32 %v2919, 0.0
      %v2936 = vmax.f32 %v2920, 0.0
      %v2937 = vmax.f32 %v2921, 0.0
      %v2938 = vmax.f32 %v2922, 0.0
      %v2939 = vmax.f32 %v2923, 0.0
      %v2940 = vmax.f32 %v2924, 0.0
      %v2941 = vmax.f32 %v2925, 0.0
      %v2942 = vmax.f32 %v2926, 0.0
      %v2943 = vmax.f32 %v2927, 0.0
      %2944 = vst.msk [vmem:[%s646] sm:$0xff] %vm944, %v2928
      %2945 = vst.msk [vmem:[%s646 + $0x8] sm:$0xff] %vm944, %v2929
      %2946 = vst.msk [vmem:[%s646 + $0x10] sm:$0xff] %vm944, %v2930
      %2947 = vst.msk [vmem:[%s646 + $0x18] sm:$0xff] %vm944, %v2931
      %2948 = vst.msk [vmem:[%s646 + $0x20] sm:$0xff] %vm944, %v2932
      %2949 = vst.msk [vmem:[%s646 + $0x28] sm:$0xff] %vm944, %v2933
      %2950 = vst.msk [vmem:[%s646 + $0x30] sm:$0xff] %vm944, %v2934
      %2951 = vst.msk [vmem:[%s646 + $0x38] sm:$0xff] %vm944, %v2935
      %2952 = vst.msk [vmem:[%s646 + $0x40] sm:$0xff] %vm944, %v2936
      %2953 = vst.msk [vmem:[%s646 + $0x48] sm:$0xff] %vm944, %v2937
      %2954 = vst.msk [vmem:[%s646 + $0x50] sm:$0xff] %vm944, %v2938
      %2955 = vst.msk [vmem:[%s646 + $0x58] sm:$0xff] %vm944, %v2939
      %2956 = vst.msk [vmem:[%s646 + $0x60] sm:$0xff] %vm944, %v2940
      %2957 = vst.msk [vmem:[%s646 + $0x68] sm:$0xff] %vm944, %v2941
      %2958 = vst.msk [vmem:[%s646 + $0x70] sm:$0xff] %vm944, %v2942
      %2959 = vst.msk [vmem:[%s646 + $0x78] sm:$0xff] %vm944, %v2943
      %s2960 = smul.u32 2, %s34
      %p2961 = scmp.lt.s32.totalorder %s33, 1
      %s2962 = scalar_select %p2961, %s33, 1
      %p2963 = scmp.lt.s32.totalorder %s2960, 1
      %s2964 = scalar_select %p2963, %s2960, 1
      %s2965 = smul.addr %s2962, 2
      %s2966 = sadd.s32 %s2964, %s2965
      %s2967 = smul.addr %s2966, 8
      %s2968 = scalar_lea.vmem %s16, %s2967
      %s2969 = smul.u32 16, %s34
      %p2970 = scmp.lt.s32.totalorder %s33, 1
      %s2971 = scalar_select %p2970, %s33, 1
      %p2972 = scmp.lt.s32.totalorder %s2969, 15
      %s2973 = scalar_select %p2972, %s2969, 15
      %s2974 = smul.addr %s2971, 16
      %s2975 = sadd.s32 %s2973, %s2974
      %s2976 = smul.addr %s2975, 8
      %s2977 = scalar_lea.vmem %s17, %s2976
      // Predicated region
      $region85: #{dilated_res_block.4} parent=83 // pred_check
        %p2978 = pneg %p411
      $region86: #{dilated_res_block.4} parent=83 // pred_check_branch
        %2980 = sbr.rel (%p2978) target = $region88
      $region87: #{dilated_res_block.4} parent=83 // pred_region
        %s2981 = smul.u32 2, %s34
      $region88: #{dilated_res_block.4} parent=83 // pred_fallthru
        _
      // Predicated region
      $region89: #{dilated_res_block.4} parent=83 // pred_check
        %p2982 = pneg %p439
      $region90: #{dilated_res_block.4} parent=83 // pred_check_branch
        %2984 = sbr.rel (%p2982) target = $region92
      $region91: #{dilated_res_block.4} parent=83 // pred_region
        %s2985 = smul.u32 16, %s34
      $region92: #{dilated_res_block.4} parent=83 // pred_fallthru
        _
    $region84: #{dilated_res_block.4} parent=5 // pred_fallthru
      _
    %p2986 = scmp.le.s32.totalorder 2, %s24
    // Predicated region
    $region93: #{dilated_res_block.4} parent=5 // pred_check
      %p2987 = pneg %p2986
    $region94: #{dilated_res_block.4} parent=5 // pred_check_branch
      %2989 = sbr.rel (%p2987) target = $region96
    $region95: #{dilated_res_block.4} parent=5 // pred_region
      %s2990 = ssub.s32 %s24, 2
      // Predicated region
      $region97: #{dilated_res_block.4} parent=95 // pred_check
        %p2991 = pneg %p417
      $region98: #{dilated_res_block.4} parent=95 // pred_check_branch
        %2993 = sbr.rel (%p2991) target = $region100
      $region99: #{dilated_res_block.4} parent=95 // pred_region
        %s2994 = smul.u32 2, %s36
        %p2995 = scmp.lt.s32.totalorder %s35, 1
        %s2996 = scalar_select %p2995, %s35, 1
        %p2997 = scmp.lt.s32.totalorder %s2994, 1
        %s2998 = scalar_select %p2997, %s2994, 1
        %s2999 = smul.addr %s2996, 2
        %s3000 = sadd.s32 %s2998, %s2999
        %s3001 = smul.addr %s3000, 8
        %s3002 = scalar_lea.vmem %s16, %s3001
      $region100: #{dilated_res_block.4} parent=95 // pred_fallthru
        _
      // Predicated region
      $region101: #{dilated_res_block.4} parent=95 // pred_check
        %p3003 = pneg %p445
      $region102: #{dilated_res_block.4} parent=95 // pred_check_branch
        %3005 = sbr.rel (%p3003) target = $region104
      $region103: #{dilated_res_block.4} parent=95 // pred_region
        %s3006 = smul.u32 16, %s36
        %p3007 = scmp.lt.s32.totalorder %s35, 1
        %s3008 = scalar_select %p3007, %s35, 1
        %p3009 = scmp.lt.s32.totalorder %s3006, 15
        %s3010 = scalar_select %p3009, %s3006, 15
        %s3011 = smul.addr %s3008, 16
        %s3012 = sadd.s32 %s3010, %s3011
        %s3013 = smul.addr %s3012, 8
        %s3014 = scalar_lea.vmem %s17, %s3013
      $region104: #{dilated_res_block.4} parent=95 // pred_fallthru
        _
    $region96: #{dilated_res_block.4} parent=5 // pred_fallthru
      _
  $region6: #{dilated_res_block.4} parent=0 // loop_footer
    %s28 = sadd.s32 1, %s24
  $region7: #{dilated_res_block.4} parent=0 // loop_footer_branch
    %23 = sbr.rel target = $region3
  $region8: #{dilated_res_block.4} parent=0 // loop_exit
    _

</llo_original>
